<compile_context>
chip_gen: v5e
topology: v5e:2x2
jax: 0.10.0
libtpu: 0.0.40
codegen_flags: <defaults>
</compile_context>

<pallas_src>
import functools

import jax
import jax.numpy as jnp
import numpy as np
from jax.experimental import pallas as pl
from jax.experimental.pallas import tpu as pltpu


# bf16 MXU operands on all generations (full-rate MXU on v6e/v7x, halves weight
# DMA on v5e).  Accumulation is always f32 via preferred_element_type and every
# epilogue / softmax / masking stays f32.  Set to jnp.float32 for bit-exact
# reference numerics.
MATMUL_DTYPE = jnp.bfloat16

KP = 16              # padded key count for co-attention (full bf16 sublane tile)
KPAD = 256           # gene feature dim (200) pre-padded to 2x128 clean MXU passes
_VMEM_LIMIT = 32 * 1024 * 1024   # explicit scoped-VMEM budget (safe on v7x 64 MiB)


def _row_tile(n, cap=512):
    """Largest multiple of 8 <= cap that divides n (sublane-tiled row axis)."""
    if n <= cap:
        return n
    best = None
    for t in range(8, cap + 1, 8):
        if n % t == 0:
            best = t
    return best if best is not None else n


def _lane_tile(n, cap=512):
    """Largest multiple of 128 <= cap dividing n (also used as a lane axis)."""
    if n <= cap:
        return n
    for t in (cap, 384, 256, 128):
        if n % t == 0:
            return t
    return n


# ----------------------------------------------------------------------------
# Kernel 1: gene MLP (the +bias "snn" add and the 200->256 pad happen in JAX)
#   g1 = g0_pad @ W1_pad + b1 ;  g = leaky_relu(g1 @ W2 + b2)
# ----------------------------------------------------------------------------

def _gene_path_kernel(g0_ref, w1_ref, b1_ref, w2_ref, b2_ref, g_ref):
    g0 = g0_ref[...]
    g1 = jnp.dot(g0.astype(w1_ref.dtype), w1_ref[...],
                 preferred_element_type=jnp.float32) + b1_ref[...]
    g2 = jnp.dot(g1.astype(w2_ref.dtype), w2_ref[...],
                 preferred_element_type=jnp.float32) + b2_ref[...]
    g_ref[...] = jnp.where(g2 > 0, g2, 0.01 * g2).astype(g_ref.dtype)


def gene_path(g0_pad, p):
    G, Kp = g0_pad.shape
    D = p["gene_w1"].shape[1]
    tg = _row_tile(G)
    assert G % tg == 0
    return pl.pallas_call(
        _gene_path_kernel,
        out_shape=jax.ShapeDtypeStruct((G, D), jnp.float32),
        grid=(G // tg,),
        in_specs=[
            pl.BlockSpec((tg, Kp), lambda i: (i, 0)),
            pl.BlockSpec((Kp, D), lambda i: (0, 0)),
            pl.BlockSpec((1, D), lambda i: (0, 0)),
            pl.BlockSpec((D, D), lambda i: (0, 0)),
            pl.BlockSpec((1, D), lambda i: (0, 0)),
        ],
        out_specs=pl.BlockSpec((tg, D), lambda i: (i, 0)),
        compiler_params=pltpu.CompilerParams(
            dimension_semantics=("parallel",),
            vmem_limit_bytes=_VMEM_LIMIT),
    )(g0_pad, p["gene_w1"], p["gene_b1"], p["gene_w2"], p["gene_b2"])


# ----------------------------------------------------------------------------
# Kernel 2: WSI Linear+ReLU + shared gated attention, grid over (scale, N tile)
#   h = relu(x @ Wwsi + b);  gate = tanh(.)*sigmoid(.) from ONE fused Wa|Wb
#   A^T = Wc^T @ gate^T  -> lane-dense [1, tn] scores
# ----------------------------------------------------------------------------

def _wsi_attn_kernel(x_ref, w_ref, b_ref, wab_ref, bab_ref, wct_ref, bc_ref,
                     h_out_ref, a_ref):
    x = x_ref[0]                                                  # [tn, IN]
    h = jnp.dot(x.astype(w_ref.dtype), w_ref[...],
                preferred_element_type=jnp.float32) + b_ref[...]
    h = jnp.maximum(h, 0.0)                                       # ReLU (+Dropout=id)
    ab = jnp.dot(h.astype(wab_ref.dtype), wab_ref[...],
                 preferred_element_type=jnp.float32) + bab_ref[...]
    d = ab.shape[1] // 2
    gate = jnp.tanh(ab[:, :d]) * jax.nn.sigmoid(ab[:, d:])
    # lane-dense scores: [1, D] x [tn, D]^T -> [1, tn]; bc is an SMEM scalar
    a_t = jax.lax.dot_general(wct_ref[...], gate.astype(wct_ref.dtype),
                              (((1,), (1,)), ((), ())),
                              preferred_element_type=jnp.float32) + bc_ref[0]
    h_out_ref[0] = h.astype(h_out_ref.dtype)
    a_ref[0] = a_t.astype(a_ref.dtype)


def wsi_gated_attn(x_all, p):
    S, N, IN = x_all.shape
    D = p["wsi_w"].shape[1]
    tn = _lane_tile(N)
    assert N % tn == 0
    return pl.pallas_call(
        _wsi_attn_kernel,
        out_shape=(jax.ShapeDtypeStruct((S, N, D), jnp.float32),   # h per scale
                   jax.ShapeDtypeStruct((S, 1, N), jnp.float32)),  # attn scores
        grid=(S, N // tn),
        in_specs=[
            pl.BlockSpec((1, tn, IN), lambda s, n: (s, n, 0)),
            pl.BlockSpec((IN, D), lambda s, n: (0, 0)),
            pl.BlockSpec((1, D), lambda s, n: (0, 0)),
            pl.BlockSpec((D, 2 * D), lambda s, n: (0, 0)),
            pl.BlockSpec((1, 2 * D), lambda s, n: (0, 0)),
            pl.BlockSpec((1, D), lambda s, n: (0, 0)),
            pl.BlockSpec(memory_space=pltpu.MemorySpace.SMEM),     # bc scalar
        ],
        out_specs=(pl.BlockSpec((1, tn, D), lambda s, n: (s, n, 0)),
                   pl.BlockSpec((1, 1, tn), lambda s, n: (s, 0, n))),
        compiler_params=pltpu.CompilerParams(
            dimension_semantics=("parallel", "parallel"),
            vmem_limit_bytes=_VMEM_LIMIT),
    )(x_all, p["wsi_w"], p["wsi_b"], p["attn_wab"], p["attn_bab"],
      p["attn_wct"], p["attn_bc"])


# ----------------------------------------------------------------------------
# Kernel 3: co-attention + gene-attention pooling, grid=(3, G//tg)
#   q,k,v,o : single-head MultiheadAttention against the k gathered patches
#   A_gene  : fused Wa|Wb gate -> [1, tg] scores -> ONLINE softmax over G tiles
#   out     : sum_G softmax(A_gene) * coattn   (one [1, 256] row per scale)
# ----------------------------------------------------------------------------

def _coattn_pool_kernel(g_ref, kv_ref, wq_ref, bq_ref, wkv_ref, bkv_ref,
                        wo_ref, bo_ref, gwab_ref, gbab_ref, gwct_ref, gbc_ref,
                        o_ref, m_sc, l_sc, acc_sc, *, k_valid, scale):
    j = pl.program_id(1)

    @pl.when(j == 0)
    def _():
        m_sc[...] = jnp.full_like(m_sc[...], -jnp.inf)
        l_sc[...] = jnp.zeros_like(l_sc[...])
        acc_sc[...] = jnp.zeros_like(acc_sc[...])

    g = g_ref[...]                                                # [tg, D]
    kv = kv_ref[0]                                                # [KP, D]
    wq = wq_ref[0]
    wkv = wkv_ref[0]
    wo = wo_ref[0]

    q = jnp.dot(g.astype(wq.dtype), wq,
                preferred_element_type=jnp.float32) + bq_ref[0]   # [tg, D]
    kvp = jnp.dot(kv.astype(wkv.dtype), wkv,
                  preferred_element_type=jnp.float32) + bkv_ref[0]  # [KP, 2D]
    d = kvp.shape[1] // 2
    k = kvp[:, :d]
    v = kvp[:, d:]

    # co-attention scores [tg, KP] kept in f32; padded key rows masked
    s = jax.lax.dot_general(q, k, (((1,), (1,)), ((), ())),
                            preferred_element_type=jnp.float32) * scale
    valid = jax.lax.broadcasted_iota(jnp.int32, s.shape, 1) < k_valid
    s = jnp.where(valid, s, -1e30)
    s = s - jnp.max(s, axis=-1, keepdims=True)
    pk = jnp.exp(s)
    pk = pk / jnp.sum(pk, axis=-1, keepdims=True)
    ctx = jnp.dot(pk, v, preferred_element_type=jnp.float32)      # [tg, D]
    co = jnp.dot(ctx.astype(wo.dtype), wo,
                 preferred_element_type=jnp.float32) + bo_ref[0]  # [tg, D]

    # gene_attention_head (fused Wa|Wb) + ONLINE softmax over genes + pooling
    gab = jnp.dot(co.astype(gwab_ref.dtype), gwab_ref[...],
                  preferred_element_type=jnp.float32) + gbab_ref[...]
    dg = gab.shape[1] // 2
    gate = jnp.tanh(gab[:, :dg]) * jax.nn.sigmoid(gab[:, dg:])
    a_t = jax.lax.dot_general(gwct_ref[...], gate.astype(gwct_ref.dtype),
                              (((1,), (1,)), ((), ())),
                              preferred_element_type=jnp.float32) + gbc_ref[0]

    m_prev = m_sc[...]                                            # [1, 1]
    m_new = jnp.maximum(m_prev, jnp.max(a_t, axis=-1, keepdims=True))
    alpha = jnp.exp(m_prev - m_new)
    pg = jnp.exp(a_t - m_new)                                     # [1, tg]
    l_sc[...] = alpha * l_sc[...] + jnp.sum(pg, axis=-1, keepdims=True)
    acc_sc[...] = alpha * acc_sc[...] + jnp.dot(
        pg, co, preferred_element_type=jnp.float32)               # [1, D]
    m_sc[...] = m_new

    @pl.when(j == pl.num_programs(1) - 1)
    def _():
        o_ref[0] = (acc_sc[...] / l_sc[...]).astype(o_ref.dtype)


def coattn_pool(g, kv, p, k_valid):
    G, D = g.shape
    S = kv.shape[0]
    tg = _row_tile(G)
    assert G % tg == 0
    kernel = functools.partial(_coattn_pool_kernel, k_valid=k_valid,
                               scale=1.0 / float(np.sqrt(D)))
    out = pl.pallas_call(
        kernel,
        out_shape=jax.ShapeDtypeStruct((S, 1, D), jnp.float32),
        grid=(S, G // tg),
        in_specs=[
            pl.BlockSpec((tg, D), lambda s, j: (j, 0)),            # gene tiles
            pl.BlockSpec((1, KP, D), lambda s, j: (s, 0, 0)),      # gathered kv
            pl.BlockSpec((1, D, D), lambda s, j: (s, 0, 0)),       # Wq
            pl.BlockSpec((1, 1, D), lambda s, j: (s, 0, 0)),       # bq
            pl.BlockSpec((1, D, 2 * D), lambda s, j: (s, 0, 0)),   # Wk|Wv
            pl.BlockSpec((1, 1, 2 * D), lambda s, j: (s, 0, 0)),   # bk|bv
            pl.BlockSpec((1, D, D), lambda s, j: (s, 0, 0)),       # Wo
            pl.BlockSpec((1, 1, D), lambda s, j: (s, 0, 0)),       # bo
            pl.BlockSpec((D, 2 * D), lambda s, j: (0, 0)),         # gene attn Wa|Wb
            pl.BlockSpec((1, 2 * D), lambda s, j: (0, 0)),
            pl.BlockSpec((1, D), lambda s, j: (0, 0)),             # gene attn Wc^T
            pl.BlockSpec(memory_space=pltpu.MemorySpace.SMEM),     # gene attn bc
        ],
        out_specs=pl.BlockSpec((1, 1, D), lambda s, j: (s, 0, 0)),
        scratch_shapes=[pltpu.VMEM((1, 1), jnp.float32),   # running max
                        pltpu.VMEM((1, 1), jnp.float32),   # running sum
                        pltpu.VMEM((1, D), jnp.float32)],  # running pooled acc
        compiler_params=pltpu.CompilerParams(
            dimension_semantics=("parallel", "arbitrary"),
            vmem_limit_bytes=_VMEM_LIMIT),
    )(g, kv, p["co_wq"], p["co_bq"], p["co_wkv"], p["co_bkv"],
      p["co_wo"], p["co_bo"], p["gattn_wab"], p["gattn_bab"],
      p["gattn_wct"], p["gattn_bc"])
    return out[:, 0, :]


# ----------------------------------------------------------------------------
# Parameters (deterministic synthetic init mirroring the module's shapes)
# ----------------------------------------------------------------------------

def _lin(key, fan_in, fan_out):
    k1, k2 = jax.random.split(key)
    bound = 1.0 / float(np.sqrt(fan_in))
    w = jax.random.uniform(k1, (fan_in, fan_out), jnp.float32, -bound, bound)
    b = jax.random.uniform(k2, (1, fan_out), jnp.float32, -bound, bound)
    return w, b


def init_params(key, input_dim, all_gene_dim, n_classes):
    d = 256
    keys = iter(jax.random.split(key, 48))
    p = {}
    p["wsi"] = _lin(next(keys), input_dim, d)        # shared wsi_net_5x/10x/20x
    p["gene_proj"] = _lin(next(keys), 200, d)
    p["fine_tune"] = _lin(next(keys), d, d)          # fine_tune_net_1
    p["attn_a"] = _lin(next(keys), d, d)             # attention_net (shared)
    p["attn_b"] = _lin(next(keys), d, d)
    p["attn_c"] = _lin(next(keys), d, 1)
    p["gattn_a"] = _lin(next(keys), d, d)            # gene_attention_head
    p["gattn_b"] = _lin(next(keys), d, d)
    p["gattn_c"] = _lin(next(keys), d, 1)
    p["gene_rho"] = _lin(next(keys), d, d)
    for s in ("5x", "10x", "20x"):                   # per-scale co-attention
        p[f"co_{s}"] = {k: _lin(next(keys), d, d) for k in ("q", "k", "v", "o")}
    p["gene_vec_bias"] = jnp.zeros((all_gene_dim, 200), jnp.float32)
    p["W_wf_5x"] = jax.random.uniform(next(keys), (d, 1), jnp.float32)
    p["b_wf_5x"] = jax.random.uniform(next(keys), (1,), jnp.float32)
    p["W_wf_10x"] = jax.random.uniform(next(keys), (d, 1), jnp.float32)
    p["b_wf_10x"] = jax.random.uniform(next(keys), (1,), jnp.float32)
    p["classifier"] = _lin(next(keys), d, n_classes)
    return p


def prepare_params(p, matmul_dtype=MATMUL_DTYPE):
    """Kernel-ready layout: fused Wa|Wb and Wk|Wv, transposed 1-column heads,
    200->256 padded gene projection, per-scale weights stacked on a leading
    scale axis, scalar biases as (1,) SMEM arrays, optional bf16 cast of
    matmul operands (biases / epilogues stay f32)."""
    cast = lambda w: w.astype(matmul_dtype)
    q = {}
    q["gene_vec_bias"] = p["gene_vec_bias"]                       # [G,200] (snn add)
    w1, b1 = p["gene_proj"]
    w1p = jnp.pad(w1, ((0, KPAD - w1.shape[0]), (0, 0)))          # 200 -> 256 rows
    q["gene_w1"], q["gene_b1"] = cast(w1p), b1
    q["gene_w2"], q["gene_b2"] = cast(p["fine_tune"][0]), p["fine_tune"][1]
    q["wsi_w"], q["wsi_b"] = cast(p["wsi"][0]), p["wsi"][1]

    def fuse_gated(a, b, c):
        wab = jnp.concatenate([a[0], b[0]], axis=1)               # [D, 2D]
        bab = jnp.concatenate([a[1], b[1]], axis=1)               # [1, 2D]
        return cast(wab), bab, cast(c[0].T), c[1].reshape(1)      # Wc^T, bc (SMEM)

    (q["attn_wab"], q["attn_bab"], q["attn_wct"], q["attn_bc"]) = fuse_gated(
        p["attn_a"], p["attn_b"], p["attn_c"])
    (q["gattn_wab"], q["gattn_bab"], q["gattn_wct"], q["gattn_bc"]) = fuse_gated(
        p["gattn_a"], p["gattn_b"], p["gattn_c"])
    # gene_rho hoisted into the JAX tail (single [3,256]x[256,256] matmul)
    q["rho_w"], q["rho_b"] = p["gene_rho"]

    wq, bq, wkv, bkv, wo, bo = [], [], [], [], [], []
    for s in ("5x", "10x", "20x"):
        co = p[f"co_{s}"]
        wq.append(co["q"][0]); bq.append(co["q"][1])
        wkv.append(jnp.concatenate([co["k"][0], co["v"][0]], axis=1))
        bkv.append(jnp.concatenate([co["k"][1], co["v"][1]], axis=1))
        wo.append(co["o"][0]); bo.append(co["o"][1])
    q["co_wq"] = cast(jnp.stack(wq)); q["co_bq"] = jnp.stack(bq)
    q["co_wkv"] = cast(jnp.stack(wkv)); q["co_bkv"] = jnp.stack(bkv)
    q["co_wo"] = cast(jnp.stack(wo)); q["co_bo"] = jnp.stack(bo)

    for k in ("W_wf_5x", "b_wf_5x", "W_wf_10x", "b_wf_10x", "classifier"):
        q[k] = p[k]
    return q


# ----------------------------------------------------------------------------
# Forward (main path: ablation_geneexp=False, use_cossim=False, eval dropout)
# ----------------------------------------------------------------------------

def _pad_patches(xs):
    """Pad per-scale patch counts to a common N (rounded to 512 when large) so
    all three scales can share one tiled kernel; returns valid counts."""
    ns = [x.shape[0] for x in xs]
    n_pad = max(ns)
    if n_pad > 512:
        n_pad = ((n_pad + 511) // 512) * 512
    xs_p = [jnp.pad(x, ((0, n_pad - x.shape[0]), (0, 0))) for x in xs]
    return jnp.stack(xs_p, axis=0), jnp.asarray(ns, jnp.int32)


def msad_forward(params, x_path_5x, x_path_10x, x_path_20x, gene_vec,
                 ablation_k=6):
    assert ablation_k <= KP
    # --- gene path: snn add + 200->256 pad in plain JAX, MLP in kernel 1 ---
    gene_vec_snn = gene_vec + params["gene_vec_bias"]              # [G, 200]
    g0_pad = jnp.pad(gene_vec_snn,
                     ((0, 0), (0, KPAD - gene_vec_snn.shape[1])))  # [G, 256]
    g = gene_path(g0_pad, params)                                  # [G, 256]

    # --- WSI path + shared gated attention, tiled over (scale, patch tiles) ---
    if x_path_5x.shape[0] < ablation_k:   # module fallback; wsi nets share weights
        x_path_5x = x_path_10x
    x_all, n_valid = _pad_patches([x_path_5x, x_path_10x, x_path_20x])
    h_all, A = wsi_gated_attn(x_all, params)       # h_all [3,N,256], A [3,1,N]

    # --- top-k patch selection + index gather (K3 never touches full h_all) ---
    scores = A[:, 0, :]
    patch_ids = jnp.arange(scores.shape[1], dtype=jnp.int32)[None, :]
    scores = jnp.where(patch_ids < n_valid[:, None], scores, -jnp.inf)
    idx = jax.lax.top_k(scores, ablation_k)[1]                     # [3, k]
    kv = jnp.take_along_axis(h_all, idx[:, :, None], axis=1)       # [3, k, 256]
    kv = jnp.pad(kv, ((0, 0), (0, KP - ablation_k), (0, 0)))       # [3, KP, 256]

    # --- co-attention + gene-attention pooling (kernel 3) ---
    pooled = coattn_pool(g, kv, params, k_valid=ablation_k)        # [3, 256]

    # --- gene_rho (hoisted): one [3,256]x[256,256] matmul + ReLU (Dropout=id) ---
    h_path = jax.nn.relu(pooled @ params["rho_w"] + params["rho_b"])

    # --- cross-scale gated fusion + classifier (tiny 256-dim tail) ---
    h5p, h10p, h20p = h_path[0], h_path[1], h_path[2]
    c5 = jax.nn.sigmoid(h10p @ params["W_wf_5x"][:, 0] + params["b_wf_5x"][0])
    h10p = h10p + c5 * h5p
    c10 = jax.nn.sigmoid(h20p @ params["W_wf_10x"][:, 0] + params["b_wf_10x"][0])
    h20p = h20p + c10 * h10p
    h_final = h20p

    wcls, bcls = params["classifier"]
    logits = (h_final @ wcls + bcls[0])[None, :]           # [1, n_classes]
    Y_hat = jnp.argmax(logits, axis=1, keepdims=True)      # torch.topk(logits,1)[1]
    hazards = jax.nn.sigmoid(logits)
    S = jnp.cumprod(1.0 - hazards, axis=1)
    # TODO(synk): use_cossim / train_visual branches (cosine-sim losses, torch.save,
    # os.makedirs side effects) omitted.
    return hazards, S, Y_hat, h_final, None, None, None, gene_vec_snn


# ----------------------------------------------------------------------------

if __name__ == "__main__":
    INPUT_DIM = 128      # WSI feature dim (module arg input_dim)
    ALL_GENE_DIM = 128   # module arg all_gene_dim (kept small for the demo)
    N_PATCH = 16         # patches per scale (>= ablation_k)
    N_CLASSES = 4
    ABLATION_K = 6

    key = jax.random.PRNGKey(0)
    kparam, k1, k2, k3, k4 = jax.random.split(key, 5)
    raw_params = init_params(kparam, INPUT_DIM, ALL_GENE_DIM, N_CLASSES)
    params = prepare_params(raw_params, matmul_dtype=MATMUL_DTYPE)

    x5 = jax.random.normal(k1, (N_PATCH, INPUT_DIM), jnp.float32)
    x10 = jax.random.normal(k2, (N_PATCH, INPUT_DIM), jnp.float32)
    x20 = jax.random.normal(k3, (N_PATCH, INPUT_DIM), jnp.float32)
    gene_vec = jax.random.normal(k4, (ALL_GENE_DIM, 200), jnp.float32)

    fwd = jax.jit(functools.partial(msad_forward, ablation_k=ABLATION_K))
    hazards, Surv, Y_hat, h_final, *_rest, gene_vec_snn = fwd(
        params, x5, x10, x20, gene_vec)
    jax.block_until_ready((hazards, Surv, Y_hat, h_final, gene_vec_snn))
    print("KERNEL_OK")
</pallas_src>

<mosaic_0001>
module attributes {stable_mosaic.version = 11 : i64} {
  func.func @_gene_path_kernel(%arg0: i32, %arg1: memref<128x256xf32, #tpu.memory_space<vmem>>, %arg2: memref<256x256xbf16, #tpu.memory_space<vmem>>, %arg3: memref<1x256xf32, #tpu.memory_space<vmem>>, %arg4: memref<256x256xbf16, #tpu.memory_space<vmem>>, %arg5: memref<1x256xf32, #tpu.memory_space<vmem>>, %arg6: memref<128x256xf32, #tpu.memory_space<vmem>>) attributes {dimension_semantics = [#tpu.dimension_semantics<parallel>], iteration_bounds = array<i64: 1>, scalar_prefetch = 0 : i64, scratch_operands = 0 : i64, tpu.core_type = #tpu.core_type<tc>, window_params = [{transform_indices = @transform_0, window_bounds = array<i64: 128, 256>}, {pipeline_mode = #tpu.pipeline_mode<synchronous>, transform_indices = @transform_1, window_bounds = array<i64: 256, 256>}, {pipeline_mode = #tpu.pipeline_mode<synchronous>, transform_indices = @transform_2, window_bounds = array<i64: 1, 256>}, {pipeline_mode = #tpu.pipeline_mode<synchronous>, transform_indices = @transform_3, window_bounds = array<i64: 256, 256>}, {pipeline_mode = #tpu.pipeline_mode<synchronous>, transform_indices = @transform_4, window_bounds = array<i64: 1, 256>}, {transform_indices = @transform_5, window_bounds = array<i64: 128, 256>}]} {
    %c0 = arith.constant 0 : index
    %c0_0 = arith.constant 0 : index
    %0 = vector.load %arg1[%c0, %c0_0] : memref<128x256xf32, #tpu.memory_space<vmem>>, vector<128x256xf32>
    %1 = arith.truncf %0 : vector<128x256xf32> to vector<128x256xbf16>
    %c0_1 = arith.constant 0 : index
    %c0_2 = arith.constant 0 : index
    %2 = vector.load %arg2[%c0_1, %c0_2] : memref<256x256xbf16, #tpu.memory_space<vmem>>, vector<256x256xbf16>
    %cst = arith.constant dense<0.000000e+00> : vector<128x256xf32>
    %3 = tpu.matmul %1, %2, %cst {dimension_numbers = #tpu.dot_dimension_numbers<[1], [0], [0], [1], [0, 0, 1, 1], [], []>} : vector<128x256xbf16>, vector<256x256xbf16>, vector<128x256xf32> -> vector<128x256xf32>
    %c0_3 = arith.constant 0 : index
    %c0_4 = arith.constant 0 : index
    %4 = vector.load %arg3[%c0_3, %c0_4] : memref<1x256xf32, #tpu.memory_space<vmem>>, vector<1x256xf32>
    %5 = vector.broadcast %4 : vector<1x256xf32> to vector<128x256xf32>
    %6 = arith.addf %3, %5 : vector<128x256xf32>
    %7 = arith.truncf %6 : vector<128x256xf32> to vector<128x256xbf16>
    %c0_5 = arith.constant 0 : index
    %c0_6 = arith.constant 0 : index
    %8 = vector.load %arg4[%c0_5, %c0_6] : memref<256x256xbf16, #tpu.memory_space<vmem>>, vector<256x256xbf16>
    %cst_7 = arith.constant dense<0.000000e+00> : vector<128x256xf32>
    %9 = tpu.matmul %7, %8, %cst_7 {dimension_numbers = #tpu.dot_dimension_numbers<[1], [0], [0], [1], [0, 0, 1, 1], [], []>} : vector<128x256xbf16>, vector<256x256xbf16>, vector<128x256xf32> -> vector<128x256xf32>
    %c0_8 = arith.constant 0 : index
    %c0_9 = arith.constant 0 : index
    %10 = vector.load %arg5[%c0_8, %c0_9] : memref<1x256xf32, #tpu.memory_space<vmem>>, vector<1x256xf32>
    %11 = vector.broadcast %10 : vector<1x256xf32> to vector<128x256xf32>
    %12 = arith.addf %9, %11 : vector<128x256xf32>
    %cst_10 = arith.constant 0.000000e+00 : f32
    %13 = vector.broadcast %cst_10 : f32 to vector<128x256xf32>
    %14 = arith.cmpf ogt, %12, %13 : vector<128x256xf32>
    %cst_11 = arith.constant 0.00999999977 : f32
    %15 = vector.broadcast %cst_11 : f32 to vector<128x256xf32>
    %16 = arith.mulf %15, %12 : vector<128x256xf32>
    %17 = arith.select %14, %12, %16 : vector<128x256xi1>, vector<128x256xf32>
    %c0_12 = arith.constant 0 : index
    %c0_13 = arith.constant 0 : index
    %18 = vector.load %arg6[%c0_12, %c0_13] : memref<128x256xf32, #tpu.memory_space<vmem>>, vector<128x256xf32>
    tpu.vector_store %arg6[%c0_12, %c0_13], %17 {strides = array<i32>} : memref<128x256xf32, #tpu.memory_space<vmem>>, vector<128x256xf32>,
    return
  }
  func.func @transform_0(%arg0: i32) -> (i32, i32) {
    %c0_i32 = arith.constant 0 : i32
    %c0_i32_0 = arith.constant 0 : i32
    return %arg0, %c0_i32 : i32, i32
  }
  func.func @transform_1(%arg0: i32) -> (i32, i32) {
    %c0_i32 = arith.constant 0 : i32
    %c0_i32_0 = arith.constant 0 : i32
    %c0_i32_1 = arith.constant 0 : i32
    return %c0_i32, %c0_i32_0 : i32, i32
  }
  func.func @transform_2(%arg0: i32) -> (i32, i32) {
    %c0_i32 = arith.constant 0 : i32
    %c0_i32_0 = arith.constant 0 : i32
    %c0_i32_1 = arith.constant 0 : i32
    return %c0_i32, %c0_i32_0 : i32, i32
  }
  func.func @transform_3(%arg0: i32) -> (i32, i32) {
    %c0_i32 = arith.constant 0 : i32
    %c0_i32_0 = arith.constant 0 : i32
    %c0_i32_1 = arith.constant 0 : i32
    return %c0_i32, %c0_i32_0 : i32, i32
  }
  func.func @transform_4(%arg0: i32) -> (i32, i32) {
    %c0_i32 = arith.constant 0 : i32
    %c0_i32_0 = arith.constant 0 : i32
    %c0_i32_1 = arith.constant 0 : i32
    return %c0_i32, %c0_i32_0 : i32, i32
  }
  func.func @transform_5(%arg0: i32) -> (i32, i32) {
    %c0_i32 = arith.constant 0 : i32
    %c0_i32_0 = arith.constant 0 : i32
    return %arg0, %c0_i32 : i32, i32
  }
}

module attributes {stable_mosaic.version = 11 : i64} {
  func.func @_wsi_attn_kernel(%arg0: i32, %arg1: i32, %arg2: memref<1x16x128xf32, #tpu.memory_space<vmem>>, %arg3: memref<128x256xbf16, #tpu.memory_space<vmem>>, %arg4: memref<1x256xf32, #tpu.memory_space<vmem>>, %arg5: memref<256x512xbf16, #tpu.memory_space<vmem>>, %arg6: memref<1x512xf32, #tpu.memory_space<vmem>>, %arg7: memref<1x256xbf16, #tpu.memory_space<vmem>>, %arg8: memref<1xf32, #tpu.memory_space<smem>>, %arg9: memref<1x16x256xf32, #tpu.memory_space<vmem>>, %arg10: memref<1x1x16xf32, #tpu.memory_space<vmem>>) attributes {dimension_semantics = [#tpu.dimension_semantics<parallel>, #tpu.dimension_semantics<parallel>], iteration_bounds = array<i64: 3, 1>, scalar_prefetch = 0 : i64, scratch_operands = 0 : i64, tpu.core_type = #tpu.core_type<tc>, window_params = [{transform_indices = @transform_0, window_bounds = array<i64: 1, 16, 128>}, {pipeline_mode = #tpu.pipeline_mode<synchronous>, transform_indices = @transform_1, window_bounds = array<i64: 128, 256>}, {pipeline_mode = #tpu.pipeline_mode<synchronous>, transform_indices = @transform_2, window_bounds = array<i64: 1, 256>}, {pipeline_mode = #tpu.pipeline_mode<synchronous>, transform_indices = @transform_3, window_bounds = array<i64: 256, 512>}, {pipeline_mode = #tpu.pipeline_mode<synchronous>, transform_indices = @transform_4, window_bounds = array<i64: 1, 512>}, {pipeline_mode = #tpu.pipeline_mode<synchronous>, transform_indices = @transform_5, window_bounds = array<i64: 1, 256>}, {transform_indices = @transform_6, window_bounds = array<i64: 1>}, {transform_indices = @transform_7, window_bounds = array<i64: 1, 16, 256>}, {transform_indices = @transform_8, window_bounds = array<i64: 1, 1, 16>}]} {
    %c0 = arith.constant 0 : index
    %c0_0 = arith.constant 0 : index
    %c0_1 = arith.constant 0 : index
    %0 = vector.load %arg2[%c0, %c0_0, %c0_1] : memref<1x16x128xf32, #tpu.memory_space<vmem>>, vector<1x16x128xf32>
    %1 = vector.shape_cast %0 : vector<1x16x128xf32> to vector<16x128xf32>
    %2 = arith.truncf %1 : vector<16x128xf32> to vector<16x128xbf16>
    %c0_2 = arith.constant 0 : index
    %c0_3 = arith.constant 0 : index
    %3 = vector.load %arg3[%c0_2, %c0_3] : memref<128x256xbf16, #tpu.memory_space<vmem>>, vector<128x256xbf16>
    %cst = arith.constant dense<0.000000e+00> : vector<16x256xf32>
    %4 = tpu.matmul %2, %3, %cst {dimension_numbers = #tpu.dot_dimension_numbers<[1], [0], [0], [1], [0, 0, 1, 1], [], []>} : vector<16x128xbf16>, vector<128x256xbf16>, vector<16x256xf32> -> vector<16x256xf32>
    %c0_4 = arith.constant 0 : index
    %c0_5 = arith.constant 0 : index
    %5 = vector.load %arg4[%c0_4, %c0_5] : memref<1x256xf32, #tpu.memory_space<vmem>>, vector<1x256xf32>
    %6 = vector.broadcast %5 : vector<1x256xf32> to vector<16x256xf32>
    %7 = arith.addf %4, %6 : vector<16x256xf32>
    %cst_6 = arith.constant 0.000000e+00 : f32
    %8 = vector.broadcast %cst_6 : f32 to vector<16x256xf32>
    %9 = arith.maximumf %7, %8 : vector<16x256xf32>
    %10 = arith.truncf %9 : vector<16x256xf32> to vector<16x256xbf16>
    %c0_7 = arith.constant 0 : index
    %c0_8 = arith.constant 0 : index
    %11 = vector.load %arg5[%c0_7, %c0_8] : memref<256x512xbf16, #tpu.memory_space<vmem>>, vector<256x512xbf16>
    %cst_9 = arith.constant dense<0.000000e+00> : vector<16x512xf32>
    %12 = tpu.matmul %10, %11, %cst_9 {dimension_numbers = #tpu.dot_dimension_numbers<[1], [0], [0], [1], [0, 0, 1, 1], [], []>} : vector<16x256xbf16>, vector<256x512xbf16>, vector<16x512xf32> -> vector<16x512xf32>
    %c0_10 = arith.constant 0 : index
    %c0_11 = arith.constant 0 : index
    %13 = vector.load %arg6[%c0_10, %c0_11] : memref<1x512xf32, #tpu.memory_space<vmem>>, vector<1x512xf32>
    %14 = vector.broadcast %13 : vector<1x512xf32> to vector<16x512xf32>
    %15 = arith.addf %12, %14 : vector<16x512xf32>
    %16 = vector.extract_strided_slice %15 {offsets = [0, 0], sizes = [16, 256], strides = [1, 1]} : vector<16x512xf32> to vector<16x256xf32>
    %17 = math.tanh %16 : vector<16x256xf32>
    %18 = vector.extract_strided_slice %15 {offsets = [0, 256], sizes = [16, 256], strides = [1, 1]} : vector<16x512xf32> to vector<16x256xf32>
    %19 = arith.negf %18 : vector<16x256xf32>
    %20 = math.exp %19 : vector<16x256xf32>
    %cst_12 = arith.constant 1.000000e+00 : f32
    %21 = vector.broadcast %cst_12 : f32 to vector<16x256xf32>
    %22 = arith.addf %21, %20 : vector<16x256xf32>
    %23 = arith.divf %21, %22 : vector<16x256xf32>
    %24 = arith.mulf %17, %23 : vector<16x256xf32>
    %c0_13 = arith.constant 0 : index
    %c0_14 = arith.constant 0 : index
    %25 = vector.load %arg7[%c0_13, %c0_14] : memref<1x256xbf16, #tpu.memory_space<vmem>>, vector<1x256xbf16>
    %26 = arith.truncf %24 : vector<16x256xf32> to vector<16x256xbf16>
    %cst_15 = arith.constant dense<0.000000e+00> : vector<1x16xf32>
    %27 = tpu.matmul %25, %26, %cst_15 {dimension_numbers = #tpu.dot_dimension_numbers<[1], [1], [0], [0], [0, 0, 1, 0], [], []>} : vector<1x256xbf16>, vector<16x256xbf16>, vector<1x16xf32> -> vector<1x16xf32>
    %c0_16 = arith.constant 0 : index
    %28 = memref.load %arg8[%c0_16] : memref<1xf32, #tpu.memory_space<smem>>
    %29 = vector.broadcast %28 : f32 to vector<1x16xf32>
    %30 = arith.addf %27, %29 : vector<1x16xf32>
    %c0_17 = arith.constant 0 : index
    %c0_18 = arith.constant 0 : index
    %c0_19 = arith.constant 0 : index
    %31 = vector.load %arg9[%c0_17, %c0_18, %c0_19] : memref<1x16x256xf32, #tpu.memory_space<vmem>>, vector<1x16x256xf32>
    %32 = vector.shape_cast %31 : vector<1x16x256xf32> to vector<16x256xf32>
    %33 = vector.shape_cast %9 : vector<16x256xf32> to vector<1x16x256xf32>
    tpu.vector_store %arg9[%c0_17, %c0_18, %c0_19], %33 {strides = array<i32>} : memref<1x16x256xf32, #tpu.memory_space<vmem>>, vector<1x16x256xf32>,
    %c0_20 = arith.constant 0 : index
    %c0_21 = arith.constant 0 : index
    %c0_22 = arith.constant 0 : index
    %34 = vector.load %arg10[%c0_20, %c0_21, %c0_22] : memref<1x1x16xf32, #tpu.memory_space<vmem>>, vector<1x1x16xf32>
    %35 = vector.shape_cast %34 : vector<1x1x16xf32> to vector<1x16xf32>
    %36 = vector.shape_cast %30 : vector<1x16xf32> to vector<1x1x16xf32>
    tpu.vector_store %arg10[%c0_20, %c0_21, %c0_22], %36 {strides = array<i32>} : memref<1x1x16xf32, #tpu.memory_space<vmem>>, vector<1x1x16xf32>,
    return
  }
  func.func @transform_0(%arg0: i32, %arg1: i32) -> (i32, i32, i32) {
    %c0_i32 = arith.constant 0 : i32
    %c0_i32_0 = arith.constant 0 : i32
    return %arg0, %arg1, %c0_i32 : i32, i32, i32
  }
  func.func @transform_1(%arg0: i32, %arg1: i32) -> (i32, i32) {
    %c0_i32 = arith.constant 0 : i32
    %c0_i32_0 = arith.constant 0 : i32
    %c0_i32_1 = arith.constant 0 : i32
    return %c0_i32, %c0_i32_0 : i32, i32
  }
  func.func @transform_2(%arg0: i32, %arg1: i32) -> (i32, i32) {
    %c0_i32 = arith.constant 0 : i32
    %c0_i32_0 = arith.constant 0 : i32
    %c0_i32_1 = arith.constant 0 : i32
    return %c0_i32, %c0_i32_0 : i32, i32
  }
  func.func @transform_3(%arg0: i32, %arg1: i32) -> (i32, i32) {
    %c0_i32 = arith.constant 0 : i32
    %c0_i32_0 = arith.constant 0 : i32
    %c0_i32_1 = arith.constant 0 : i32
    return %c0_i32, %c0_i32_0 : i32, i32
  }
  func.func @transform_4(%arg0: i32, %arg1: i32) -> (i32, i32) {
    %c0_i32 = arith.constant 0 : i32
    %c0_i32_0 = arith.constant 0 : i32
    %c0_i32_1 = arith.constant 0 : i32
    return %c0_i32, %c0_i32_0 : i32, i32
  }
  func.func @transform_5(%arg0: i32, %arg1: i32) -> (i32, i32) {
    %c0_i32 = arith.constant 0 : i32
    %c0_i32_0 = arith.constant 0 : i32
    %c0_i32_1 = arith.constant 0 : i32
    return %c0_i32, %c0_i32_0 : i32, i32
  }
  func.func @transform_6(%arg0: i32, %arg1: i32) -> i32 {
    %c0_i32 = arith.constant 0 : i32
    %c0_i32_0 = arith.constant 0 : i32
    return %c0_i32 : i32
  }
  func.func @transform_7(%arg0: i32, %arg1: i32) -> (i32, i32, i32) {
    %c0_i32 = arith.constant 0 : i32
    %c0_i32_0 = arith.constant 0 : i32
    return %arg0, %arg1, %c0_i32 : i32, i32, i32
  }
  func.func @transform_8(%arg0: i32, %arg1: i32) -> (i32, i32, i32) {
    %c0_i32 = arith.constant 0 : i32
    %c0_i32_0 = arith.constant 0 : i32
    return %arg0, %c0_i32, %arg1 : i32, i32, i32
  }
}

module attributes {stable_mosaic.version = 11 : i64} {
  func.func @_coattn_pool_kernel(%arg0: i32, %arg1: i32, %arg2: memref<128x256xf32, #tpu.memory_space<vmem>>, %arg3: memref<1x16x256xf32, #tpu.memory_space<vmem>>, %arg4: memref<1x256x256xbf16, #tpu.memory_space<vmem>>, %arg5: memref<1x1x256xf32, #tpu.memory_space<vmem>>, %arg6: memref<1x256x512xbf16, #tpu.memory_space<vmem>>, %arg7: memref<1x1x512xf32, #tpu.memory_space<vmem>>, %arg8: memref<1x256x256xbf16, #tpu.memory_space<vmem>>, %arg9: memref<1x1x256xf32, #tpu.memory_space<vmem>>, %arg10: memref<256x512xbf16, #tpu.memory_space<vmem>>, %arg11: memref<1x512xf32, #tpu.memory_space<vmem>>, %arg12: memref<1x256xbf16, #tpu.memory_space<vmem>>, %arg13: memref<1xf32, #tpu.memory_space<smem>>, %arg14: memref<1x1x256xf32, #tpu.memory_space<vmem>>, %arg15: memref<1x1xf32, #tpu.memory_space<vmem>>, %arg16: memref<1x1xf32, #tpu.memory_space<vmem>>, %arg17: memref<1x256xf32, #tpu.memory_space<vmem>>) attributes {dimension_semantics = [#tpu.dimension_semantics<parallel>, #tpu.dimension_semantics<arbitrary>], iteration_bounds = array<i64: 3, 1>, scalar_prefetch = 0 : i64, scratch_operands = 3 : i64, tpu.core_type = #tpu.core_type<tc>, window_params = [{transform_indices = @transform_0, window_bounds = array<i64: 128, 256>}, {transform_indices = @transform_1, window_bounds = array<i64: 1, 16, 256>}, {transform_indices = @transform_2, window_bounds = array<i64: 1, 256, 256>}, {transform_indices = @transform_3, window_bounds = array<i64: 1, 1, 256>}, {transform_indices = @transform_4, window_bounds = array<i64: 1, 256, 512>}, {transform_indices = @transform_5, window_bounds = array<i64: 1, 1, 512>}, {transform_indices = @transform_6, window_bounds = array<i64: 1, 256, 256>}, {transform_indices = @transform_7, window_bounds = array<i64: 1, 1, 256>}, {pipeline_mode = #tpu.pipeline_mode<synchronous>, transform_indices = @transform_8, window_bounds = array<i64: 256, 512>}, {pipeline_mode = #tpu.pipeline_mode<synchronous>, transform_indices = @transform_9, window_bounds = array<i64: 1, 512>}, {pipeline_mode = #tpu.pipeline_mode<synchronous>, transform_indices = @transform_10, window_bounds = array<i64: 1, 256>}, {transform_indices = @transform_11, window_bounds = array<i64: 1>}, {transform_indices = @transform_12, window_bounds = array<i64: 1, 1, 256>}]} {
    %c0_i32 = arith.constant 0 : i32
    %0 = arith.cmpi eq, %arg1, %c0_i32 : i32
    %1 = arith.extui %0 : i1 to i32
    %c0_i32_0 = arith.constant 0 : i32
    %2 = arith.cmpi ne, %1, %c0_i32_0 : i32
    scf.if %2 {
      %cst_58 = arith.constant 0xFF800000 : f32
      %96 = vector.broadcast %cst_58 : f32 to vector<1x1xf32>
      %c0_59 = arith.constant 0 : index
      %c0_60 = arith.constant 0 : index
      %97 = vector.load %arg15[%c0_59, %c0_60] : memref<1x1xf32, #tpu.memory_space<vmem>>, vector<1x1xf32>
      tpu.vector_store %arg15[%c0_59, %c0_60], %96 {strides = array<i32>} : memref<1x1xf32, #tpu.memory_space<vmem>>, vector<1x1xf32>,
      %cst_61 = arith.constant 0.000000e+00 : f32
      %98 = vector.broadcast %cst_61 : f32 to vector<1x1xf32>
      %c0_62 = arith.constant 0 : index
      %c0_63 = arith.constant 0 : index
      %99 = vector.load %arg16[%c0_62, %c0_63] : memref<1x1xf32, #tpu.memory_space<vmem>>, vector<1x1xf32>
      tpu.vector_store %arg16[%c0_62, %c0_63], %98 {strides = array<i32>} : memref<1x1xf32, #tpu.memory_space<vmem>>, vector<1x1xf32>,
      %cst_64 = arith.constant 0.000000e+00 : f32
      %100 = vector.broadcast %cst_64 : f32 to vector<1x256xf32>
      %c0_65 = arith.constant 0 : index
      %c0_66 = arith.constant 0 : index
      %101 = vector.load %arg17[%c0_65, %c0_66] : memref<1x256xf32, #tpu.memory_space<vmem>>, vector<1x256xf32>
      tpu.vector_store %arg17[%c0_65, %c0_66], %100 {strides = array<i32>} : memref<1x256xf32, #tpu.memory_space<vmem>>, vector<1x256xf32>,
    } else {
    }
    %c0 = arith.constant 0 : index
    %c0_1 = arith.constant 0 : index
    %3 = vector.load %arg2[%c0, %c0_1] : memref<128x256xf32, #tpu.memory_space<vmem>>, vector<128x256xf32>
    %c0_2 = arith.constant 0 : index
    %c0_3 = arith.constant 0 : index
    %c0_4 = arith.constant 0 : index
    %4 = vector.load %arg3[%c0_2, %c0_3, %c0_4] : memref<1x16x256xf32, #tpu.memory_space<vmem>>, vector<1x16x256xf32>
    %5 = vector.shape_cast %4 : vector<1x16x256xf32> to vector<16x256xf32>
    %c0_5 = arith.constant 0 : index
    %c0_6 = arith.constant 0 : index
    %c0_7 = arith.constant 0 : index
    %6 = vector.load %arg4[%c0_5, %c0_6, %c0_7] : memref<1x256x256xbf16, #tpu.memory_space<vmem>>, vector<1x256x256xbf16>
    %7 = vector.shape_cast %6 : vector<1x256x256xbf16> to vector<256x256xbf16>
    %c0_8 = arith.constant 0 : index
    %c0_9 = arith.constant 0 : index
    %c0_10 = arith.constant 0 : index
    %8 = vector.load %arg6[%c0_8, %c0_9, %c0_10] : memref<1x256x512xbf16, #tpu.memory_space<vmem>>, vector<1x256x512xbf16>
    %9 = vector.shape_cast %8 : vector<1x256x512xbf16> to vector<256x512xbf16>
    %c0_11 = arith.constant 0 : index
    %c0_12 = arith.constant 0 : index
    %c0_13 = arith.constant 0 : index
    %10 = vector.load %arg8[%c0_11, %c0_12, %c0_13] : memref<1x256x256xbf16, #tpu.memory_space<vmem>>, vector<1x256x256xbf16>
    %11 = vector.shape_cast %10 : vector<1x256x256xbf16> to vector<256x256xbf16>
    %12 = arith.truncf %3 : vector<128x256xf32> to vector<128x256xbf16>
    %cst = arith.constant dense<0.000000e+00> : vector<128x256xf32>
    %13 = tpu.matmul %12, %7, %cst {dimension_numbers = #tpu.dot_dimension_numbers<[1], [0], [0], [1], [0, 0, 1, 1], [], []>} : vector<128x256xbf16>, vector<256x256xbf16>, vector<128x256xf32> -> vector<128x256xf32>
    %c0_14 = arith.constant 0 : index
    %c0_15 = arith.constant 0 : index
    %c0_16 = arith.constant 0 : index
    %14 = vector.load %arg5[%c0_14, %c0_15, %c0_16] : memref<1x1x256xf32, #tpu.memory_space<vmem>>, vector<1x1x256xf32>
    %15 = vector.shape_cast %14 : vector<1x1x256xf32> to vector<1x256xf32>
    %16 = vector.broadcast %15 : vector<1x256xf32> to vector<128x256xf32>
    %17 = arith.addf %13, %16 : vector<128x256xf32>
    %18 = arith.truncf %5 : vector<16x256xf32> to vector<16x256xbf16>
    %cst_17 = arith.constant dense<0.000000e+00> : vector<16x512xf32>
    %19 = tpu.matmul %18, %9, %cst_17 {dimension_numbers = #tpu.dot_dimension_numbers<[1], [0], [0], [1], [0, 0, 1, 1], [], []>} : vector<16x256xbf16>, vector<256x512xbf16>, vector<16x512xf32> -> vector<16x512xf32>
    %c0_18 = arith.constant 0 : index
    %c0_19 = arith.constant 0 : index
    %c0_20 = arith.constant 0 : index
    %20 = vector.load %arg7[%c0_18, %c0_19, %c0_20] : memref<1x1x512xf32, #tpu.memory_space<vmem>>, vector<1x1x512xf32>
    %21 = vector.shape_cast %20 : vector<1x1x512xf32> to vector<1x512xf32>
    %22 = vector.broadcast %21 : vector<1x512xf32> to vector<16x512xf32>
    %23 = arith.addf %19, %22 : vector<16x512xf32>
    %24 = vector.extract_strided_slice %23 {offsets = [0, 0], sizes = [16, 256], strides = [1, 1]} : vector<16x512xf32> to vector<16x256xf32>
    %25 = vector.extract_strided_slice %23 {offsets = [0, 256], sizes = [16, 256], strides = [1, 1]} : vector<16x512xf32> to vector<16x256xf32>
    %cst_21 = arith.constant dense<0.000000e+00> : vector<128x16xf32>
    %26 = tpu.matmul %17, %24, %cst_21 {dimension_numbers = #tpu.dot_dimension_numbers<[1], [1], [0], [0], [0, 0, 1, 0], [], []>} : vector<128x256xf32>, vector<16x256xf32>, vector<128x16xf32> -> vector<128x16xf32>
    %cst_22 = arith.constant 6.250000e-02 : f32
    %27 = vector.broadcast %cst_22 : f32 to vector<128x16xf32>
    %28 = arith.mulf %26, %27 : vector<128x16xf32>
    %29 = tpu.iota {dimensions = array<i32: 1>} : vector<128x16xi32>
    %c6_i32 = arith.constant 6 : i32
    %30 = vector.broadcast %c6_i32 : i32 to vector<128x16xi32>
    %31 = arith.cmpi slt, %29, %30 : vector<128x16xi32>
    %cst_23 = arith.constant -1.000000e+30 : f32
    %32 = vector.broadcast %cst_23 : f32 to vector<128x16xf32>
    %33 = arith.select %31, %28, %32 : vector<128x16xi1>, vector<128x16xf32>
    %cst_24 = arith.constant dense<0xFF800000> : vector<128xf32>
    %34 = vector.multi_reduction <maximumf>, %33, %cst_24 [1] : vector<128x16xf32> to vector<128xf32>
    %35 = vector.shape_cast %34 : vector<128xf32> to vector<128x1xf32>
    %36 = vector.broadcast %35 : vector<128x1xf32> to vector<128x16xf32>
    %37 = arith.subf %33, %36 : vector<128x16xf32>
    %38 = math.exp %37 : vector<128x16xf32>
    %cst_25 = arith.constant dense<0.000000e+00> : vector<128xf32>
    %39 = vector.multi_reduction <add>, %38, %cst_25 [1] : vector<128x16xf32> to vector<128xf32>
    %40 = vector.shape_cast %39 : vector<128xf32> to vector<128x1xf32>
    %41 = vector.broadcast %40 : vector<128x1xf32> to vector<128x16xf32>
    %42 = arith.divf %38, %41 : vector<128x16xf32>
    %cst_26 = arith.constant dense<0.000000e+00> : vector<128x256xf32>
    %43 = tpu.matmul %42, %25, %cst_26 {dimension_numbers = #tpu.dot_dimension_numbers<[1], [0], [0], [1], [0, 0, 1, 1], [], []>} : vector<128x16xf32>, vector<16x256xf32>, vector<128x256xf32> -> vector<128x256xf32>
    %44 = arith.truncf %43 : vector<128x256xf32> to vector<128x256xbf16>
    %cst_27 = arith.constant dense<0.000000e+00> : vector<128x256xf32>
    %45 = tpu.matmul %44, %11, %cst_27 {dimension_numbers = #tpu.dot_dimension_numbers<[1], [0], [0], [1], [0, 0, 1, 1], [], []>} : vector<128x256xbf16>, vector<256x256xbf16>, vector<128x256xf32> -> vector<128x256xf32>
    %c0_28 = arith.constant 0 : index
    %c0_29 = arith.constant 0 : index
    %c0_30 = arith.constant 0 : index
    %46 = vector.load %arg9[%c0_28, %c0_29, %c0_30] : memref<1x1x256xf32, #tpu.memory_space<vmem>>, vector<1x1x256xf32>
    %47 = vector.shape_cast %46 : vector<1x1x256xf32> to vector<1x256xf32>
    %48 = vector.broadcast %47 : vector<1x256xf32> to vector<128x256xf32>
    %49 = arith.addf %45, %48 : vector<128x256xf32>
    %50 = arith.truncf %49 : vector<128x256xf32> to vector<128x256xbf16>
    %c0_31 = arith.constant 0 : index
    %c0_32 = arith.constant 0 : index
    %51 = vector.load %arg10[%c0_31, %c0_32] : memref<256x512xbf16, #tpu.memory_space<vmem>>, vector<256x512xbf16>
    %cst_33 = arith.constant dense<0.000000e+00> : vector<128x512xf32>
    %52 = tpu.matmul %50, %51, %cst_33 {dimension_numbers = #tpu.dot_dimension_numbers<[1], [0], [0], [1], [0, 0, 1, 1], [], []>} : vector<128x256xbf16>, vector<256x512xbf16>, vector<128x512xf32> -> vector<128x512xf32>
    %c0_34 = arith.constant 0 : index
    %c0_35 = arith.constant 0 : index
    %53 = vector.load %arg11[%c0_34, %c0_35] : memref<1x512xf32, #tpu.memory_space<vmem>>, vector<1x512xf32>
    %54 = vector.broadcast %53 : vector<1x512xf32> to vector<128x512xf32>
    %55 = arith.addf %52, %54 : vector<128x512xf32>
    %56 = vector.extract_strided_slice %55 {offsets = [0, 0], sizes = [128, 256], strides = [1, 1]} : vector<128x512xf32> to vector<128x256xf32>
    %57 = math.tanh %56 : vector<128x256xf32>
    %58 = vector.extract_strided_slice %55 {offsets = [0, 256], sizes = [128, 256], strides = [1, 1]} : vector<128x512xf32> to vector<128x256xf32>
    %59 = arith.negf %58 : vector<128x256xf32>
    %60 = math.exp %59 : vector<128x256xf32>
    %cst_36 = arith.constant 1.000000e+00 : f32
    %61 = vector.broadcast %cst_36 : f32 to vector<128x256xf32>
    %62 = arith.addf %61, %60 : vector<128x256xf32>
    %63 = arith.divf %61, %62 : vector<128x256xf32>
    %64 = arith.mulf %57, %63 : vector<128x256xf32>
    %c0_37 = arith.constant 0 : index
    %c0_38 = arith.constant 0 : index
    %65 = vector.load %arg12[%c0_37, %c0_38] : memref<1x256xbf16, #tpu.memory_space<vmem>>, vector<1x256xbf16>
    %66 = arith.truncf %64 : vector<128x256xf32> to vector<128x256xbf16>
    %cst_39 = arith.constant dense<0.000000e+00> : vector<1x128xf32>
    %67 = tpu.matmul %65, %66, %cst_39 {dimension_numbers = #tpu.dot_dimension_numbers<[1], [1], [0], [0], [0, 0, 1, 0], [], []>} : vector<1x256xbf16>, vector<128x256xbf16>, vector<1x128xf32> -> vector<1x128xf32>
    %c0_40 = arith.constant 0 : index
    %68 = memref.load %arg13[%c0_40] : memref<1xf32, #tpu.memory_space<smem>>
    %69 = vector.broadcast %68 : f32 to vector<1x128xf32>
    %70 = arith.addf %67, %69 : vector<1x128xf32>
    %c0_41 = arith.constant 0 : index
    %c0_42 = arith.constant 0 : index
    %71 = vector.load %arg15[%c0_41, %c0_42] : memref<1x1xf32, #tpu.memory_space<vmem>>, vector<1x1xf32>
    %cst_43 = arith.constant dense<0xFF800000> : vector<1xf32>
    %72 = vector.multi_reduction <maximumf>, %70, %cst_43 [1] : vector<1x128xf32> to vector<1xf32>
    %73 = vector.shape_cast %72 : vector<1xf32> to vector<1x1xf32>
    %74 = arith.maximumf %71, %73 : vector<1x1xf32>
    %75 = arith.subf %71, %74 : vector<1x1xf32>
    %76 = math.exp %75 : vector<1x1xf32>
    %77 = vector.broadcast %74 : vector<1x1xf32> to vector<1x128xf32>
    %78 = arith.subf %70, %77 : vector<1x128xf32>
    %79 = math.exp %78 : vector<1x128xf32>
    %c0_44 = arith.constant 0 : index
    %c0_45 = arith.constant 0 : index
    %80 = vector.load %arg16[%c0_44, %c0_45] : memref<1x1xf32, #tpu.memory_space<vmem>>, vector<1x1xf32>
    %81 = arith.mulf %76, %80 : vector<1x1xf32>
    %cst_46 = arith.constant dense<0.000000e+00> : vector<1xf32>
    %82 = vector.multi_reduction <add>, %79, %cst_46 [1] : vector<1x128xf32> to vector<1xf32>
    %83 = vector.shape_cast %82 : vector<1xf32> to vector<1x1xf32>
    %84 = arith.addf %81, %83 : vector<1x1xf32>
    %c0_47 = arith.constant 0 : index
    %c0_48 = arith.constant 0 : index
    %85 = vector.load %arg16[%c0_47, %c0_48] : memref<1x1xf32, #tpu.memory_space<vmem>>, vector<1x1xf32>
    tpu.vector_store %arg16[%c0_47, %c0_48], %84 {strides = array<i32>} : memref<1x1xf32, #tpu.memory_space<vmem>>, vector<1x1xf32>,
    %c0_49 = arith.constant 0 : index
    %c0_50 = arith.constant 0 : index
    %86 = vector.load %arg17[%c0_49, %c0_50] : memref<1x256xf32, #tpu.memory_space<vmem>>, vector<1x256xf32>
    %87 = vector.broadcast %76 : vector<1x1xf32> to vector<1x256xf32>
    %88 = arith.mulf %87, %86 : vector<1x256xf32>
    %cst_51 = arith.constant dense<0.000000e+00> : vector<1x256xf32>
    %89 = tpu.matmul %79, %49, %cst_51 {dimension_numbers = #tpu.dot_dimension_numbers<[1], [0], [0], [1], [0, 0, 1, 1], [], []>} : vector<1x128xf32>, vector<128x256xf32>, vector<1x256xf32> -> vector<1x256xf32>
    %90 = arith.addf %88, %89 : vector<1x256xf32>
    %c0_52 = arith.constant 0 : index
    %c0_53 = arith.constant 0 : index
    %91 = vector.load %arg17[%c0_52, %c0_53] : memref<1x256xf32, #tpu.memory_space<vmem>>, vector<1x256xf32>
    tpu.vector_store %arg17[%c0_52, %c0_53], %90 {strides = array<i32>} : memref<1x256xf32, #tpu.memory_space<vmem>>, vector<1x256xf32>,
    %c0_54 = arith.constant 0 : index
    %c0_55 = arith.constant 0 : index
    %92 = vector.load %arg15[%c0_54, %c0_55] : memref<1x1xf32, #tpu.memory_space<vmem>>, vector<1x1xf32>
    tpu.vector_store %arg15[%c0_54, %c0_55], %74 {strides = array<i32>} : memref<1x1xf32, #tpu.memory_space<vmem>>, vector<1x1xf32>,
    %c0_i32_56 = arith.constant 0 : i32
    %93 = arith.cmpi eq, %arg1, %c0_i32_56 : i32
    %94 = arith.extui %93 : i1 to i32
    %c0_i32_57 = arith.constant 0 : i32
    %95 = arith.cmpi ne, %94, %c0_i32_57 : i32
    scf.if %95 {
      %c0_58 = arith.constant 0 : index
      %c0_59 = arith.constant 0 : index
      %96 = vector.load %arg17[%c0_58, %c0_59] : memref<1x256xf32, #tpu.memory_space<vmem>>, vector<1x256xf32>
      %c0_60 = arith.constant 0 : index
      %c0_61 = arith.constant 0 : index
      %97 = vector.load %arg16[%c0_60, %c0_61] : memref<1x1xf32, #tpu.memory_space<vmem>>, vector<1x1xf32>
      %98 = vector.broadcast %97 : vector<1x1xf32> to vector<1x256xf32>
      %99 = arith.divf %96, %98 : vector<1x256xf32>
      %c0_62 = arith.constant 0 : index
      %c0_63 = arith.constant 0 : index
      %c0_64 = arith.constant 0 : index
      %100 = vector.load %arg14[%c0_62, %c0_63, %c0_64] : memref<1x1x256xf32, #tpu.memory_space<vmem>>, vector<1x1x256xf32>
      %101 = vector.shape_cast %100 : vector<1x1x256xf32> to vector<1x256xf32>
      %102 = vector.shape_cast %99 : vector<1x256xf32> to vector<1x1x256xf32>
      tpu.vector_store %arg14[%c0_62, %c0_63, %c0_64], %102 {strides = array<i32>} : memref<1x1x256xf32, #tpu.memory_space<vmem>>, vector<1x1x256xf32>,
    } else {
    }
    return
  }
  func.func @transform_0(%arg0: i32, %arg1: i32) -> (i32, i32) {
    %c0_i32 = arith.constant 0 : i32
    %c0_i32_0 = arith.constant 0 : i32
    return %arg1, %c0_i32 : i32, i32
  }
  func.func @transform_1(%arg0: i32, %arg1: i32) -> (i32, i32, i32) {
    %c0_i32 = arith.constant 0 : i32
    %c0_i32_0 = arith.constant 0 : i32
    %c0_i32_1 = arith.constant 0 : i32
    return %arg0, %c0_i32, %c0_i32_0 : i32, i32, i32
  }
  func.func @transform_2(%arg0: i32, %arg1: i32) -> (i32, i32, i32) {
    %c0_i32 = arith.constant 0 : i32
    %c0_i32_0 = arith.constant 0 : i32
    %c0_i32_1 = arith.constant 0 : i32
    return %arg0, %c0_i32, %c0_i32_0 : i32, i32, i32
  }
  func.func @transform_3(%arg0: i32, %arg1: i32) -> (i32, i32, i32) {
    %c0_i32 = arith.constant 0 : i32
    %c0_i32_0 = arith.constant 0 : i32
    %c0_i32_1 = arith.constant 0 : i32
    return %arg0, %c0_i32, %c0_i32_0 : i32, i32, i32
  }
  func.func @transform_4(%arg0: i32, %arg1: i32) -> (i32, i32, i32) {
    %c0_i32 = arith.constant 0 : i32
    %c0_i32_0 = arith.constant 0 : i32
    %c0_i32_1 = arith.constant 0 : i32
    return %arg0, %c0_i32, %c0_i32_0 : i32, i32, i32
  }
  func.func @transform_5(%arg0: i32, %arg1: i32) -> (i32, i32, i32) {
    %c0_i32 = arith.constant 0 : i32
    %c0_i32_0 = arith.constant 0 : i32
    %c0_i32_1 = arith.constant 0 : i32
    return %arg0, %c0_i32, %c0_i32_0 : i32, i32, i32
  }
  func.func @transform_6(%arg0: i32, %arg1: i32) -> (i32, i32, i32) {
    %c0_i32 = arith.constant 0 : i32
    %c0_i32_0 = arith.constant 0 : i32
    %c0_i32_1 = arith.constant 0 : i32
    return %arg0, %c0_i32, %c0_i32_0 : i32, i32, i32
  }
  func.func @transform_7(%arg0: i32, %arg1: i32) -> (i32, i32, i32) {
    %c0_i32 = arith.constant 0 : i32
    %c0_i32_0 = arith.constant 0 : i32
    %c0_i32_1 = arith.constant 0 : i32
    return %arg0, %c0_i32, %c0_i32_0 : i32, i32, i32
  }
  func.func @transform_8(%arg0: i32, %arg1: i32) -> (i32, i32) {
    %c0_i32 = arith.constant 0 : i32
    %c0_i32_0 = arith.constant 0 : i32
    %c0_i32_1 = arith.constant 0 : i32
    return %c0_i32, %c0_i32_0 : i32, i32
  }
  func.func @transform_9(%arg0: i32, %arg1: i32) -> (i32, i32) {
    %c0_i32 = arith.constant 0 : i32
    %c0_i32_0 = arith.constant 0 : i32
    %c0_i32_1 = arith.constant 0 : i32
    return %c0_i32, %c0_i32_0 : i32, i32
  }
  func.func @transform_10(%arg0: i32, %arg1: i32) -> (i32, i32) {
    %c0_i32 = arith.constant 0 : i32
    %c0_i32_0 = arith.constant 0 : i32
    %c0_i32_1 = arith.constant 0 : i32
    return %c0_i32, %c0_i32_0 : i32, i32
  }
  func.func @transform_11(%arg0: i32, %arg1: i32) -> i32 {
    %c0_i32 = arith.constant 0 : i32
    %c0_i32_0 = arith.constant 0 : i32
    return %c0_i32 : i32
  }
  func.func @transform_12(%arg0: i32, %arg1: i32) -> (i32, i32, i32) {
    %c0_i32 = arith.constant 0 : i32
    %c0_i32_0 = arith.constant 0 : i32
    %c0_i32_1 = arith.constant 0 : i32
    return %arg0, %c0_i32, %c0_i32_0 : i32, i32, i32
  }
}

</mosaic_0001>

<llo_original>
// kernel: msad_forward.4
$region0: #{msad_forward.4}
  #allocation0 [shape = 'u32[]', space=smem, size = 0x4, offset = 0x4, fixed_abs, tag = 'smem constant byte address 0x4 - core index']
  #allocation1 [shape = 'u32[72,128]{1,0:T(1,128)}', space=vmem, size = 0x9000, scoped, tag = 'internal scratch']
  #allocation2 [shape = 'f32[1]{0:T(128)S(6)}', space=smem, size = 0x200, scoped, tag = 'scoped memory for msad_forward.4']
  %s0 = inlined_call_operand.vmem [shape: f32[3,16,128], index: 0, kind: input, shape index: {}]
  %s1 = inlined_call_operand.vmem [shape: bf16[128,256], index: 1, kind: input, shape index: {}]
  %s2 = inlined_call_operand.vmem [shape: f32[1,256], index: 2, kind: input, shape index: {}]
  %s3 = inlined_call_operand.hbm [shape: bf16[256,512], index: 3, kind: input, shape index: {}]
  %s4 = inlined_call_operand.vmem [shape: f32[1,512], index: 4, kind: input, shape index: {}]
  %s5 = inlined_call_operand.vmem [shape: bf16[1,256], index: 5, kind: input, shape index: {}]
  %s6 = inlined_call_operand.<no memory space> [shape: f32[1], index: 6, kind: input, shape index: {}]
  %s7 = inlined_call_operand.vmem [shape: f32[3,16,256], index: 7, kind: output, shape index: {0}]
  %s8 = inlined_call_operand.vmem [shape: f32[3,1,16], index: 8, kind: output, shape index: {1}]
  %9 = xla_tuple %s7, %s8
  %s10 = sld [smem:[#allocation0]]
  $region73: #{msad_forward.4} parent=0
    _
  %s12 = ssub.s32 1, %s10
  %s13 = scalar_select 0, %s12, %s10
  %14 = sst [smem:[#allocation2]] %s6
  $region1: #{msad_forward.4} parent=0
    #allocation3 [shape = 'u8[262144]{0}', space=vmem, size = 0x40000, scoped, tag = 'input window, operand 3, single buffered']
    #allocation4 [shape = 's32[2]{0}', space=sflag, size = 0x8, scoped, tag = 'scoped memory for msad_forward.4']
    %15 = vsyncpa [#allocation4], 0
    loop: start=0, step=1, limit=5
    $region2: #{msad_forward.4} parent=1 // loop_pre_header
      _
    $region3: #{msad_forward.4} parent=1 // loop_header
      %s17 = sphi 0, %s21
      %p18 = scmp.ge.s32.totalorder %s17, 5
      %s24 = sphi 0, %s36
      %s25 = sphi 0, %s32
      %s26 = sphi 0, %s24
      %s27 = sphi 0, %s25
      %s28 = sphi 0, %s26
      %s29 = sphi 0, %s27
      %s41 = sphi 0, %s43
      %s44 = sphi 0, %s41
      %s45 = sphi 0, %s44
      %s61 = sphi 0, %s45
      %s65 = sphi 0, %s65
      %s67 = sphi 0, %s65
      %s68 = sphi 0, %s67
      %s82 = sphi 0, %s68
      %s86 = sphi 0, %s86
      %s88 = sphi 0, %s86
      %s89 = sphi 0, %s88
      %s103 = sphi 0, %s89
      %s107 = sphi 0, %s107
      %s109 = sphi 0, %s107
      %s110 = sphi 0, %s109
      %s124 = sphi 0, %s110
      %s128 = sphi 0, %s128
      %s130 = sphi 0, %s128
      %s131 = sphi 0, %s130
      %s145 = sphi 0, %s131
      %s149 = sphi 0, %s149
      %s151 = sphi 0, %s149
      %s152 = sphi 0, %s151
      %s166 = sphi 0, %s152
      %s170 = sphi 0, %s170
      %s172 = sphi 0, %s170
      %s173 = sphi 0, %s172
      %s187 = sphi 0, %s173
      %s195 = sphi 0, %s197
      %s198 = sphi 0, %s195
      %s199 = sphi 0, %s198
      %s215 = sphi 0, %s199
      %s223 = sphi 0, %s225
      %s226 = sphi 0, %s223
      %s227 = sphi 0, %s226
      %s243 = sphi 0, %s227
    $region4: #{msad_forward.4} parent=1 // loop_header_branch
      %20 = sbr.rel (%p18) target = $region8
    $region5: #{msad_forward.4} parent=1 // loop_body
      %s22 = ssub.s32 %s17, 1
      %s23 = ssub.s32 %s17, 2
      %s30 = sadd.s32 1, %s25
      %p31 = scmp.ge.s32.totalorder %s30, 1
      %s32 = scalar_select %p31, 0, %s30
      %s33 = sadd.s32 1, %s24
      %s34 = scalar_select %p31, %s33, %s24
      %p35 = scmp.ge.s32.totalorder %s34, 3
      %s36 = scalar_select %p35, 0, %s34
      %s37 = ssub.s32 %s24, %s36
      %s38 = ssub.s32 %s25, %s32
      %s39 = sor.u32 %s37, %s38
      %p40 = scmp.eq.s32.totalorder %s39, 0
      %s42 = sadd.s32 %s41, 1
      %s43 = scalar_select %p40, %s41, %s42
      %p46 = pneg %p40
      %p47 = scmp.eq.s32.totalorder %s17, 2
      %p48 = por %p46, %p47
      %p49 = scmp.ne.s32.totalorder %s41, %s44
      %p50 = scmp.eq.s32.totalorder %s17, 0
      %p51 = por %p49, %p50
      %p52 = scmp.ne.s32.totalorder %s41, %s44
      %p53 = scmp.eq.s32.totalorder %s22, 2
      %p54 = por %p52, %p53
      %p55 = scmp.ne.s32.totalorder %s44, %s45
      %p56 = scmp.eq.s32.totalorder %s22, 0
      %p57 = por %p55, %p56
      %p58 = scmp.ne.s32.totalorder %s44, %s45
      %p59 = scmp.eq.s32.totalorder %s23, 2
      %p60 = por %p58, %p59
      %p62 = scmp.ne.s32.totalorder %s45, %s61
      %p63 = scmp.eq.s32.totalorder %s23, 0
      %p64 = por %p62, %p63
      %s66 = sadd.s32 %s65, 1
      %p69 = scmp.eq.s32.totalorder %s17, 2
      %p70 = scmp.ne.s32.totalorder %s65, %s67
      %p71 = scmp.eq.s32.totalorder %s17, 0
      %p72 = por %p70, %p71
      %p73 = scmp.ne.s32.totalorder %s65, %s67
      %p74 = scmp.eq.s32.totalorder %s22, 2
      %p75 = por %p73, %p74
      %p76 = scmp.ne.s32.totalorder %s67, %s68
      %p77 = scmp.eq.s32.totalorder %s22, 0
      %p78 = por %p76, %p77
      %p79 = scmp.ne.s32.totalorder %s67, %s68
      %p80 = scmp.eq.s32.totalorder %s23, 2
      %p81 = por %p79, %p80
      %p83 = scmp.ne.s32.totalorder %s68, %s82
      %p84 = scmp.eq.s32.totalorder %s23, 0
      %p85 = por %p83, %p84
      %s87 = sadd.s32 %s86, 1
      %p90 = scmp.eq.s32.totalorder %s17, 2
      %p91 = scmp.ne.s32.totalorder %s86, %s88
      %p92 = scmp.eq.s32.totalorder %s17, 0
      %p93 = por %p91, %p92
      %p94 = scmp.ne.s32.totalorder %s86, %s88
      %p95 = scmp.eq.s32.totalorder %s22, 2
      %p96 = por %p94, %p95
      %p97 = scmp.ne.s32.totalorder %s88, %s89
      %p98 = scmp.eq.s32.totalorder %s22, 0
      %p99 = por %p97, %p98
      %p100 = scmp.ne.s32.totalorder %s88, %s89
      %p101 = scmp.eq.s32.totalorder %s23, 2
      %p102 = por %p100, %p101
      %p104 = scmp.ne.s32.totalorder %s89, %s103
      %p105 = scmp.eq.s32.totalorder %s23, 0
      %p106 = por %p104, %p105
      %s108 = sadd.s32 %s107, 1
      %p111 = scmp.eq.s32.totalorder %s17, 2
      %p112 = scmp.ne.s32.totalorder %s107, %s109
      %p113 = scmp.eq.s32.totalorder %s17, 0
      %p114 = por %p112, %p113
      %p115 = scmp.ne.s32.totalorder %s107, %s109
      %p116 = scmp.eq.s32.totalorder %s22, 2
      %p117 = por %p115, %p116
      %p118 = scmp.ne.s32.totalorder %s109, %s110
      %p119 = scmp.eq.s32.totalorder %s22, 0
      %p120 = por %p118, %p119
      %p121 = scmp.ne.s32.totalorder %s109, %s110
      %p122 = scmp.eq.s32.totalorder %s23, 2
      %p123 = por %p121, %p122
      %p125 = scmp.ne.s32.totalorder %s110, %s124
      %p126 = scmp.eq.s32.totalorder %s23, 0
      %p127 = por %p125, %p126
      %s129 = sadd.s32 %s128, 1
      %p132 = scmp.eq.s32.totalorder %s17, 2
      %p133 = scmp.ne.s32.totalorder %s128, %s130
      %p134 = scmp.eq.s32.totalorder %s17, 0
      %p135 = por %p133, %p134
      %p136 = scmp.ne.s32.totalorder %s128, %s130
      %p137 = scmp.eq.s32.totalorder %s22, 2
      %p138 = por %p136, %p137
      %p139 = scmp.ne.s32.totalorder %s130, %s131
      %p140 = scmp.eq.s32.totalorder %s22, 0
      %p141 = por %p139, %p140
      %p142 = scmp.ne.s32.totalorder %s130, %s131
      %p143 = scmp.eq.s32.totalorder %s23, 2
      %p144 = por %p142, %p143
      %p146 = scmp.ne.s32.totalorder %s131, %s145
      %p147 = scmp.eq.s32.totalorder %s23, 0
      %p148 = por %p146, %p147
      %s150 = sadd.s32 %s149, 1
      %p153 = scmp.eq.s32.totalorder %s17, 2
      %p154 = scmp.ne.s32.totalorder %s149, %s151
      %p155 = scmp.eq.s32.totalorder %s17, 0
      %p156 = por %p154, %p155
      %p157 = scmp.ne.s32.totalorder %s149, %s151
      %p158 = scmp.eq.s32.totalorder %s22, 2
      %p159 = por %p157, %p158
      %p160 = scmp.ne.s32.totalorder %s151, %s152
      %p161 = scmp.eq.s32.totalorder %s22, 0
      %p162 = por %p160, %p161
      %p163 = scmp.ne.s32.totalorder %s151, %s152
      %p164 = scmp.eq.s32.totalorder %s23, 2
      %p165 = por %p163, %p164
      %p167 = scmp.ne.s32.totalorder %s152, %s166
      %p168 = scmp.eq.s32.totalorder %s23, 0
      %p169 = por %p167, %p168
      %s171 = sadd.s32 %s170, 1
      %p174 = scmp.eq.s32.totalorder %s17, 2
      %p175 = scmp.ne.s32.totalorder %s170, %s172
      %p176 = scmp.eq.s32.totalorder %s17, 0
      %p177 = por %p175, %p176
      %p178 = scmp.ne.s32.totalorder %s170, %s172
      %p179 = scmp.eq.s32.totalorder %s22, 2
      %p180 = por %p178, %p179
      %p181 = scmp.ne.s32.totalorder %s172, %s173
      %p182 = scmp.eq.s32.totalorder %s22, 0
      %p183 = por %p181, %p182
      %p184 = scmp.ne.s32.totalorder %s172, %s173
      %p185 = scmp.eq.s32.totalorder %s23, 2
      %p186 = por %p184, %p185
      %p188 = scmp.ne.s32.totalorder %s173, %s187
      %p189 = scmp.eq.s32.totalorder %s23, 0
      %p190 = por %p188, %p189
      %s191 = ssub.s32 %s24, %s36
      %s192 = ssub.s32 %s25, %s32
      %s193 = sor.u32 %s191, %s192
      %p194 = scmp.eq.s32.totalorder %s193, 0
      %s196 = sadd.s32 %s195, 1
      %s197 = scalar_select %p194, %s195, %s196
      %p200 = pneg %p194
      %p201 = scmp.eq.s32.totalorder %s17, 2
      %p202 = por %p200, %p201
      %p203 = scmp.ne.s32.totalorder %s195, %s198
      %p204 = scmp.eq.s32.totalorder %s17, 0
      %p205 = por %p203, %p204
      %p206 = scmp.ne.s32.totalorder %s195, %s198
      %p207 = scmp.eq.s32.totalorder %s22, 2
      %p208 = por %p206, %p207
      %p209 = scmp.ne.s32.totalorder %s198, %s199
      %p210 = scmp.eq.s32.totalorder %s22, 0
      %p211 = por %p209, %p210
      %p212 = scmp.ne.s32.totalorder %s198, %s199
      %p213 = scmp.eq.s32.totalorder %s23, 2
      %p214 = por %p212, %p213
      %p216 = scmp.ne.s32.totalorder %s199, %s215
      %p217 = scmp.eq.s32.totalorder %s23, 0
      %p218 = por %p216, %p217
      %s219 = ssub.s32 %s24, %s36
      %s220 = ssub.s32 %s25, %s32
      %s221 = sor.u32 %s219, %s220
      %p222 = scmp.eq.s32.totalorder %s221, 0
      %s224 = sadd.s32 %s223, 1
      %s225 = scalar_select %p222, %s223, %s224
      %p228 = pneg %p222
      %p229 = scmp.eq.s32.totalorder %s17, 2
      %p230 = por %p228, %p229
      %p231 = scmp.ne.s32.totalorder %s223, %s226
      %p232 = scmp.eq.s32.totalorder %s17, 0
      %p233 = por %p231, %p232
      %p234 = scmp.ne.s32.totalorder %s223, %s226
      %p235 = scmp.eq.s32.totalorder %s22, 2
      %p236 = por %p234, %p235
      %p237 = scmp.ne.s32.totalorder %s226, %s227
      %p238 = scmp.eq.s32.totalorder %s22, 0
      %p239 = por %p237, %p238
      %p240 = scmp.ne.s32.totalorder %s226, %s227
      %p241 = scmp.eq.s32.totalorder %s23, 2
      %p242 = por %p240, %p241
      %p244 = scmp.ne.s32.totalorder %s227, %s243
      %p245 = scmp.eq.s32.totalorder %s23, 0
      %p246 = por %p244, %p245
      %p247 = scmp.le.s32.totalorder 1, %s17
      %p248 = scmp.lt.s32.totalorder %s17, 4
      %p249 = pnand %p247, %p248
      %p250 = pneg %p249
      // Predicated region
      $region9: #{msad_forward.4} parent=5 // pred_check
        _
      $region10: #{msad_forward.4} parent=5 // pred_check_branch
        %252 = sbr.rel (%p249) target = $region12
      $region11: #{msad_forward.4} parent=5 // pred_region
        %s253 = ssub.s32 %s17, 1
        // Predicated region
        $region13: #{msad_forward.4} parent=11 // pred_check
          %p254 = pneg %p78
        $region14: #{msad_forward.4} parent=11 // pred_check_branch
          %256 = sbr.rel (%p254) target = $region16
        $region15: #{msad_forward.4} parent=11 // pred_region
          _
        $region16: #{msad_forward.4} parent=11 // pred_fallthru
          _
        // Predicated region
        $region17: #{msad_forward.4} parent=11 // pred_check
          %p257 = pneg %p99
        $region18: #{msad_forward.4} parent=11 // pred_check_branch
          %259 = sbr.rel (%p257) target = $region20
        $region19: #{msad_forward.4} parent=11 // pred_region
          _
        $region20: #{msad_forward.4} parent=11 // pred_fallthru
          _
        // Predicated region
        $region21: #{msad_forward.4} parent=11 // pred_check
          %p260 = pneg %p120
        $region22: #{msad_forward.4} parent=11 // pred_check_branch
          %262 = sbr.rel (%p260) target = $region24
        $region23: #{msad_forward.4} parent=11 // pred_region
          %264 = vsyncadd [#allocation4], 0
          %s265 = sshll.u32 %s3, 4
          %s266 = int_to_ptr.hbm [resolvable:$true] %s265
          %s267 = sshll.u32 [#allocation3], 4
          %s268 = int_to_ptr.vmem [resolvable:$true] %s267
          %273 = dma.hbm_to_vmem [thread:$0]  %s266, 8192, %s268, [#allocation4], 256, 256, 16
        $region24: #{msad_forward.4} parent=11 // pred_fallthru
          _
        // Predicated region
        $region25: #{msad_forward.4} parent=11 // pred_check
          %p274 = pneg %p141
        $region26: #{msad_forward.4} parent=11 // pred_check_branch
          %276 = sbr.rel (%p274) target = $region28
        $region27: #{msad_forward.4} parent=11 // pred_region
          _
        $region28: #{msad_forward.4} parent=11 // pred_fallthru
          _
        // Predicated region
        $region29: #{msad_forward.4} parent=11 // pred_check
          %p277 = pneg %p162
        $region30: #{msad_forward.4} parent=11 // pred_check_branch
          %279 = sbr.rel (%p277) target = $region32
        $region31: #{msad_forward.4} parent=11 // pred_region
          _
        $region32: #{msad_forward.4} parent=11 // pred_fallthru
          _
        // Predicated region
        $region33: #{msad_forward.4} parent=11 // pred_check
          %p280 = pneg %p183
        $region34: #{msad_forward.4} parent=11 // pred_check_branch
          %282 = sbr.rel (%p280) target = $region36
        $region35: #{msad_forward.4} parent=11 // pred_region
          _
        $region36: #{msad_forward.4} parent=11 // pred_fallthru
          _
      $region12: #{msad_forward.4} parent=5 // pred_fallthru
        _
      %p283 = scmp.lt.s32.totalorder %s17, 3
      // Predicated region
      $region37: #{msad_forward.4} parent=5 // pred_check
        %p284 = pneg %p283
      $region38: #{msad_forward.4} parent=5 // pred_check_branch
        %286 = sbr.rel (%p284) target = $region40
      $region39: #{msad_forward.4} parent=5 // pred_region
        // Predicated region
        $region41: #{msad_forward.4} parent=39 // pred_check
          %p287 = pneg %p51
        $region42: #{msad_forward.4} parent=39 // pred_check_branch
          %289 = sbr.rel (%p287) target = $region44
        $region43: #{msad_forward.4} parent=39 // pred_region
          %s290 = smul.u32 2, %s25
          %p291 = scmp.lt.s32.totalorder %s24, 2
          %s292 = scalar_select %p291, %s24, 2
          %p293 = scmp.lt.s32.totalorder %s290, 1
          %s294 = scalar_select %p293, %s290, 1
          %s295 = smul.addr %s292, 2
          %s296 = sadd.s32 %s294, %s295
          %s297 = smul.addr %s296, 8
          %s298 = scalar_lea.vmem %s0, %s297
          %s299 = smul.u32 2, %s25
        $region44: #{msad_forward.4} parent=39 // pred_fallthru
          _
      $region40: #{msad_forward.4} parent=5 // pred_fallthru
        _
      %p300 = scmp.le.s32.totalorder 1, %s17
      %p301 = scmp.lt.s32.totalorder %s17, 4
      %p302 = pnand %p300, %p301
      %p303 = pneg %p302
      // Predicated region
      $region45: #{msad_forward.4} parent=5 // pred_check
        _
      $region46: #{msad_forward.4} parent=5 // pred_check_branch
        %305 = sbr.rel (%p302) target = $region48
      $region47: #{msad_forward.4} parent=5 // pred_region
        %s306 = ssub.s32 %s17, 1
        // Predicated region
        $region49: #{msad_forward.4} parent=47 // pred_check
          %p307 = pneg %p120
        $region50: #{msad_forward.4} parent=47 // pred_check_branch
          %309 = sbr.rel (%p307) target = $region52
        $region51: #{msad_forward.4} parent=47 // pred_region
          %311 = dma.done [#allocation4], 8192
        $region52: #{msad_forward.4} parent=47 // pred_fallthru
          _
        %s312 = smul.u32 2, %s27
        %p313 = scmp.lt.s32.totalorder %s26, 2
        %s314 = scalar_select %p313, %s26, 2
        %p315 = scmp.lt.s32.totalorder %s312, 1
        %s316 = scalar_select %p315, %s312, 1
        %s317 = smul.addr %s314, 2
        %s318 = sadd.s32 %s316, %s317
        %s319 = smul.addr %s318, 8
        %s320 = scalar_lea.vmem %s0, %s319
        %p321 = pneg %p57
        %p322 = pneg %p54
        %p323 = pneg %p78
        %p324 = pneg %p75
        %p325 = pneg %p99
        %p326 = pneg %p96
        %p327 = pneg %p120
        %p328 = pneg %p117
        %p329 = pneg %p141
        %p330 = pneg %p138
        %p331 = pneg %p162
        %p332 = pneg %p159
        %p333 = pneg %p183
        %p334 = pneg %p180
        %p335 = pneg %p211
        %p336 = pneg %p208
        %s337 = smul.u32 2, %s27
        %p338 = scmp.lt.s32.totalorder %s26, 2
        %s339 = scalar_select %p338, %s26, 2
        %p340 = scmp.lt.s32.totalorder %s337, 1
        %s341 = scalar_select %p340, %s337, 1
        %s342 = smul.addr %s341, 2
        %s343 = smul.addr %s339, 4
        %s344 = sadd.s32 %s342, %s343
        %s345 = smul.addr %s344, 8
        %s346 = scalar_lea.vmem %s7, %s345
        %p347 = pneg %p239
        %p348 = pneg %p236
        %p349 = scmp.lt.s32.totalorder %s26, 2
        %s350 = scalar_select %p349, %s26, 2
        %p351 = scmp.lt.s32.totalorder %s27, 0
        %s352 = scalar_select %p351, %s27, 0
        %s353 = sadd.s32 %s352, %s350
        %s354 = scalar_lea.vmem %s8, %s353
        %s355 = smul.u32 2, %s27
        %p356 = scmp.lt.s32.totalorder %s26, 2
        %s357 = scalar_select %p356, %s26, 2
        %p358 = scmp.lt.s32.totalorder %s355, 1
        %s359 = scalar_select %p358, %s355, 1
        %s360 = smul.addr %s357, 2
        %s361 = sadd.s32 %s359, %s360
        %s362 = smul.addr %s361, 8
        %s363 = scalar_lea.vmem %s0, %s362
        %s364 = smul.u32 2, %s27
        %s365 = smul.u32 2, %s27
        %p366 = scmp.lt.s32.totalorder %s26, 2
        %s367 = scalar_select %p366, %s26, 2
        %p368 = scmp.lt.s32.totalorder %s365, 1
        %s369 = scalar_select %p368, %s365, 1
        %s370 = smul.addr %s369, 2
        %s371 = smul.addr %s367, 4
        %s372 = sadd.s32 %s370, %s371
        %s373 = smul.addr %s372, 8
        %s374 = scalar_lea.vmem %s7, %s373
        %s375 = smul.u32 2, %s27
        %p376 = scmp.lt.s32.totalorder %s26, 2
        %s377 = scalar_select %p376, %s26, 2
        %p378 = scmp.lt.s32.totalorder %s27, 0
        %s379 = scalar_select %p378, %s27, 0
        %s380 = sadd.s32 %s379, %s377
        %s381 = scalar_lea.vmem %s8, %s380
        %v383 = vld [vmem:[%s363] sm:$0xff]
        %v384 = vld [vmem:[%s363 + $0x8] sm:$0xff]
        %v385 = vpack.c.bf16 %v384, %v383
        %v386 = vld [vmem:[%s1] sm:$0xff]
        %v387 = vld [vmem:[%s1 + $0x8] sm:$0xff]
        %v388 = vld [vmem:[%s1 + $0x10] sm:$0xff]
        %v389 = vld [vmem:[%s1 + $0x18] sm:$0xff]
        %v390 = vld [vmem:[%s1 + $0x20] sm:$0xff]
        %v391 = vld [vmem:[%s1 + $0x28] sm:$0xff]
        %v392 = vld [vmem:[%s1 + $0x30] sm:$0xff]
        %v393 = vld [vmem:[%s1 + $0x38] sm:$0xff]
        %v394 = vld [vmem:[%s1 + $0x40] sm:$0xff]
        %v395 = vld [vmem:[%s1 + $0x48] sm:$0xff]
        %v396 = vld [vmem:[%s1 + $0x50] sm:$0xff]
        %v397 = vld [vmem:[%s1 + $0x58] sm:$0xff]
        %v398 = vld [vmem:[%s1 + $0x60] sm:$0xff]
        %v399 = vld [vmem:[%s1 + $0x68] sm:$0xff]
        %v400 = vld [vmem:[%s1 + $0x70] sm:$0xff]
        %v401 = vld [vmem:[%s1 + $0x78] sm:$0xff]
        %v402 = vld [vmem:[%s2] sm:$0x3]
        %v404 = vperm.slane %v402, 0
        %v405 = vperm.slane %v402, 1
        %v424 = vunpack.c.l.b16 %v386
        %v425 = vunpack.c.h.b16 %v386
        %v426 = vunpack.c.l.b16 %v387
        %v427 = vunpack.c.h.b16 %v387
        %v428 = vunpack.c.l.b16 %v388
        %v429 = vunpack.c.h.b16 %v388
        %v430 = vunpack.c.l.b16 %v389
        %v431 = vunpack.c.h.b16 %v389
        %v432 = vunpack.c.l.b16 %v390
        %v433 = vunpack.c.h.b16 %v390
        %v434 = vunpack.c.l.b16 %v391
        %v435 = vunpack.c.h.b16 %v391
        %v436 = vunpack.c.l.b16 %v392
        %v437 = vunpack.c.h.b16 %v392
        %v438 = vunpack.c.l.b16 %v393
        %v439 = vunpack.c.h.b16 %v393
        %v440 = vunpack.c.l.b16 %v394
        %v441 = vunpack.c.h.b16 %v394
        %v442 = vunpack.c.l.b16 %v395
        %v443 = vunpack.c.h.b16 %v395
        %v444 = vunpack.c.l.b16 %v396
        %v445 = vunpack.c.h.b16 %v396
        %v446 = vunpack.c.l.b16 %v397
        %v447 = vunpack.c.h.b16 %v397
        %v448 = vunpack.c.l.b16 %v398
        %v449 = vunpack.c.h.b16 %v398
        %v450 = vunpack.c.l.b16 %v399
        %v451 = vunpack.c.h.b16 %v399
        %v452 = vunpack.c.l.b16 %v400
        %v453 = vunpack.c.h.b16 %v400
        %v454 = vunpack.c.l.b16 %v401
        %v455 = vunpack.c.h.b16 %v401
        %v456 = vpack.c.b16 %v426, %v424
        %v457 = vpack.c.b16 %v427, %v425
        %v458 = vpack.c.b16 %v430, %v428
        %v459 = vpack.c.b16 %v431, %v429
        %v460 = vpack.c.b16 %v434, %v432
        %v461 = vpack.c.b16 %v435, %v433
        %v462 = vpack.c.b16 %v438, %v436
        %v463 = vpack.c.b16 %v439, %v437
        %v464 = vpack.c.b16 %v442, %v440
        %v465 = vpack.c.b16 %v443, %v441
        %v466 = vpack.c.b16 %v446, %v444
        %v467 = vpack.c.b16 %v447, %v445
        %v468 = vpack.c.b16 %v450, %v448
        %v469 = vpack.c.b16 %v451, %v449
        %v470 = vpack.c.b16 %v454, %v452
        %v471 = vpack.c.b16 %v455, %v453
        %488 = vmatpush.bf16.msra.mxu0 %v470
        %489 = vmatpush.bf16.msra.mxu0 %v468
        %490 = vmatpush.bf16.msra.mxu0 %v466
        %491 = vmatpush.bf16.msra.mxu0 %v464
        %492 = vmatpush.bf16.msra.mxu0 %v462
        %493 = vmatpush.bf16.msra.mxu0 %v460
        %494 = vmatpush.bf16.msra.mxu0 %v458
        %495 = vmatpush.bf16.msra.mxu0 %v456
        %496 = vmatmul.bf16.gmra.mxu0 %v385
        %v497 = vpop.f32.mrf.mxu0
        %v498 = vadd.f32 %v404, %v497
        %v499 = vpop.f32.mrf.mxu0
        %v500 = vadd.f32 %v404, %v499
        %501 = vdwg.mxu0
        %502 = vmatpush.bf16.msra.mxu0 %v471
        %503 = vmatpush.bf16.msra.mxu0 %v469
        %504 = vmatpush.bf16.msra.mxu0 %v467
        %505 = vmatpush.bf16.msra.mxu0 %v465
        %506 = vmatpush.bf16.msra.mxu0 %v463
        %507 = vmatpush.bf16.msra.mxu0 %v461
        %508 = vmatpush.bf16.msra.mxu0 %v459
        %509 = vmatpush.bf16.msra.mxu0 %v457
        %510 = vmatmul.bf16.gmra.mxu0 %v385
        %v511 = vpop.f32.mrf.mxu0
        %v512 = vadd.f32 %v405, %v511
        %v513 = vpop.f32.mrf.mxu0
        %v514 = vadd.f32 %v405, %v513
        %515 = vdwg.mxu0
        %v516 = vmax.f32 %v498, 0.0
        %v517 = vmax.f32 %v512, 0.0
        %v518 = vmax.f32 %v500, 0.0
        %v519 = vmax.f32 %v514, 0.0
        %v520 = vpack.c.bf16 %v518, %v516
        %v521 = vpack.c.bf16 %v519, %v517
        %v522 = vld [vmem:[#allocation3] sm:$0xff]
        %v523 = vld [vmem:[#allocation3 + $0x8] sm:$0xff]
        %v524 = vld [vmem:[#allocation3 + $0x10] sm:$0xff]
        %v525 = vld [vmem:[#allocation3 + $0x18] sm:$0xff]
        %v526 = vld [vmem:[#allocation3 + $0x20] sm:$0xff]
        %v527 = vld [vmem:[#allocation3 + $0x28] sm:$0xff]
        %v528 = vld [vmem:[#allocation3 + $0x30] sm:$0xff]
        %v529 = vld [vmem:[#allocation3 + $0x38] sm:$0xff]
        %v530 = vld [vmem:[#allocation3 + $0x40] sm:$0xff]
        %v531 = vld [vmem:[#allocation3 + $0x48] sm:$0xff]
        %v532 = vld [vmem:[#allocation3 + $0x50] sm:$0xff]
        %v533 = vld [vmem:[#allocation3 + $0x58] sm:$0xff]
        %v534 = vld [vmem:[#allocation3 + $0x60] sm:$0xff]
        %v535 = vld [vmem:[#allocation3 + $0x68] sm:$0xff]
        %v536 = vld [vmem:[#allocation3 + $0x70] sm:$0xff]
        %v537 = vld [vmem:[#allocation3 + $0x78] sm:$0xff]
        %v538 = vld [vmem:[#allocation3 + $0x80] sm:$0xff]
        %v539 = vld [vmem:[#allocation3 + $0x88] sm:$0xff]
        %v540 = vld [vmem:[#allocation3 + $0x90] sm:$0xff]
        %v541 = vld [vmem:[#allocation3 + $0x98] sm:$0xff]
        %v542 = vld [vmem:[#allocation3 + $0xa0] sm:$0xff]
        %v543 = vld [vmem:[#allocation3 + $0xa8] sm:$0xff]
        %v544 = vld [vmem:[#allocation3 + $0xb0] sm:$0xff]
        %v545 = vld [vmem:[#allocation3 + $0xb8] sm:$0xff]
        %v546 = vld [vmem:[#allocation3 + $0xc0] sm:$0xff]
        %v547 = vld [vmem:[#allocation3 + $0xc8] sm:$0xff]
        %v548 = vld [vmem:[#allocation3 + $0xd0] sm:$0xff]
        %v549 = vld [vmem:[#allocation3 + $0xd8] sm:$0xff]
        %v550 = vld [vmem:[#allocation3 + $0xe0] sm:$0xff]
        %v551 = vld [vmem:[#allocation3 + $0xe8] sm:$0xff]
        %v552 = vld [vmem:[#allocation3 + $0xf0] sm:$0xff]
        %v553 = vld [vmem:[#allocation3 + $0xf8] sm:$0xff]
        %v554 = vld [vmem:[#allocation3 + $0x100] sm:$0xff]
        %v555 = vld [vmem:[#allocation3 + $0x108] sm:$0xff]
        %v556 = vld [vmem:[#allocation3 + $0x110] sm:$0xff]
        %v557 = vld [vmem:[#allocation3 + $0x118] sm:$0xff]
        %v558 = vld [vmem:[#allocation3 + $0x120] sm:$0xff]
        %v559 = vld [vmem:[#allocation3 + $0x128] sm:$0xff]
        %v560 = vld [vmem:[#allocation3 + $0x130] sm:$0xff]
        %v561 = vld [vmem:[#allocation3 + $0x138] sm:$0xff]
        %v562 = vld [vmem:[#allocation3 + $0x140] sm:$0xff]
        %v563 = vld [vmem:[#allocation3 + $0x148] sm:$0xff]
        %v564 = vld [vmem:[#allocation3 + $0x150] sm:$0xff]
        %v565 = vld [vmem:[#allocation3 + $0x158] sm:$0xff]
        %v566 = vld [vmem:[#allocation3 + $0x160] sm:$0xff]
        %v567 = vld [vmem:[#allocation3 + $0x168] sm:$0xff]
        %v568 = vld [vmem:[#allocation3 + $0x170] sm:$0xff]
        %v569 = vld [vmem:[#allocation3 + $0x178] sm:$0xff]
        %v570 = vld [vmem:[#allocation3 + $0x180] sm:$0xff]
        %v571 = vld [vmem:[#allocation3 + $0x188] sm:$0xff]
        %v572 = vld [vmem:[#allocation3 + $0x190] sm:$0xff]
        %v573 = vld [vmem:[#allocation3 + $0x198] sm:$0xff]
        %v574 = vld [vmem:[#allocation3 + $0x1a0] sm:$0xff]
        %v575 = vld [vmem:[#allocation3 + $0x1a8] sm:$0xff]
        %v576 = vld [vmem:[#allocation3 + $0x1b0] sm:$0xff]
        %v577 = vld [vmem:[#allocation3 + $0x1b8] sm:$0xff]
        %v578 = vld [vmem:[#allocation3 + $0x1c0] sm:$0xff]
        %v579 = vld [vmem:[#allocation3 + $0x1c8] sm:$0xff]
        %v580 = vld [vmem:[#allocation3 + $0x1d0] sm:$0xff]
        %v581 = vld [vmem:[#allocation3 + $0x1d8] sm:$0xff]
        %v582 = vld [vmem:[#allocation3 + $0x1e0] sm:$0xff]
        %v583 = vld [vmem:[#allocation3 + $0x1e8] sm:$0xff]
        %v584 = vld [vmem:[#allocation3 + $0x1f0] sm:$0xff]
        %v585 = vld [vmem:[#allocation3 + $0x1f8] sm:$0xff]
        %v586 = vld [vmem:[%s4] sm:$0xf]
        %v588 = vperm.slane %v586, 0
        %v589 = vperm.slane %v586, 1
        %v590 = vperm.slane %v586, 2
        %v591 = vperm.slane %v586, 3
        %v660 = vunpack.c.l.b16 %v522
        %v661 = vunpack.c.h.b16 %v522
        %v662 = vunpack.c.l.b16 %v523
        %v663 = vunpack.c.h.b16 %v523
        %v664 = vunpack.c.l.b16 %v524
        %v665 = vunpack.c.h.b16 %v524
        %v666 = vunpack.c.l.b16 %v525
        %v667 = vunpack.c.h.b16 %v525
        %v668 = vunpack.c.l.b16 %v526
        %v669 = vunpack.c.h.b16 %v526
        %v670 = vunpack.c.l.b16 %v527
        %v671 = vunpack.c.h.b16 %v527
        %v672 = vunpack.c.l.b16 %v528
        %v673 = vunpack.c.h.b16 %v528
        %v674 = vunpack.c.l.b16 %v529
        %v675 = vunpack.c.h.b16 %v529
        %v676 = vunpack.c.l.b16 %v530
        %v677 = vunpack.c.h.b16 %v530
        %v678 = vunpack.c.l.b16 %v531
        %v679 = vunpack.c.h.b16 %v531
        %v680 = vunpack.c.l.b16 %v532
        %v681 = vunpack.c.h.b16 %v532
        %v682 = vunpack.c.l.b16 %v533
        %v683 = vunpack.c.h.b16 %v533
        %v684 = vunpack.c.l.b16 %v534
        %v685 = vunpack.c.h.b16 %v534
        %v686 = vunpack.c.l.b16 %v535
        %v687 = vunpack.c.h.b16 %v535
        %v688 = vunpack.c.l.b16 %v536
        %v689 = vunpack.c.h.b16 %v536
        %v690 = vunpack.c.l.b16 %v537
        %v691 = vunpack.c.h.b16 %v537
        %v692 = vunpack.c.l.b16 %v538
        %v693 = vunpack.c.h.b16 %v538
        %v694 = vunpack.c.l.b16 %v539
        %v695 = vunpack.c.h.b16 %v539
        %v696 = vunpack.c.l.b16 %v540
        %v697 = vunpack.c.h.b16 %v540
        %v698 = vunpack.c.l.b16 %v541
        %v699 = vunpack.c.h.b16 %v541
        %v700 = vunpack.c.l.b16 %v542
        %v701 = vunpack.c.h.b16 %v542
        %v702 = vunpack.c.l.b16 %v543
        %v703 = vunpack.c.h.b16 %v543
        %v704 = vunpack.c.l.b16 %v544
        %v705 = vunpack.c.h.b16 %v544
        %v706 = vunpack.c.l.b16 %v545
        %v707 = vunpack.c.h.b16 %v545
        %v708 = vunpack.c.l.b16 %v546
        %v709 = vunpack.c.h.b16 %v546
        %v710 = vunpack.c.l.b16 %v547
        %v711 = vunpack.c.h.b16 %v547
        %v712 = vunpack.c.l.b16 %v548
        %v713 = vunpack.c.h.b16 %v548
        %v714 = vunpack.c.l.b16 %v549
        %v715 = vunpack.c.h.b16 %v549
        %v716 = vunpack.c.l.b16 %v550
        %v717 = vunpack.c.h.b16 %v550
        %v718 = vunpack.c.l.b16 %v551
        %v719 = vunpack.c.h.b16 %v551
        %v720 = vunpack.c.l.b16 %v552
        %v721 = vunpack.c.h.b16 %v552
        %v722 = vunpack.c.l.b16 %v553
        %v723 = vunpack.c.h.b16 %v553
        %v724 = vunpack.c.l.b16 %v554
        %v725 = vunpack.c.h.b16 %v554
        %v726 = vunpack.c.l.b16 %v555
        %v727 = vunpack.c.h.b16 %v555
        %v728 = vunpack.c.l.b16 %v556
        %v729 = vunpack.c.h.b16 %v556
        %v730 = vunpack.c.l.b16 %v557
        %v731 = vunpack.c.h.b16 %v557
        %v732 = vunpack.c.l.b16 %v558
        %v733 = vunpack.c.h.b16 %v558
        %v734 = vunpack.c.l.b16 %v559
        %v735 = vunpack.c.h.b16 %v559
        %v736 = vunpack.c.l.b16 %v560
        %v737 = vunpack.c.h.b16 %v560
        %v738 = vunpack.c.l.b16 %v561
        %v739 = vunpack.c.h.b16 %v561
        %v740 = vunpack.c.l.b16 %v562
        %v741 = vunpack.c.h.b16 %v562
        %v742 = vunpack.c.l.b16 %v563
        %v743 = vunpack.c.h.b16 %v563
        %v744 = vunpack.c.l.b16 %v564
        %v745 = vunpack.c.h.b16 %v564
        %v746 = vunpack.c.l.b16 %v565
        %v747 = vunpack.c.h.b16 %v565
        %v748 = vunpack.c.l.b16 %v566
        %v749 = vunpack.c.h.b16 %v566
        %v750 = vunpack.c.l.b16 %v567
        %v751 = vunpack.c.h.b16 %v567
        %v752 = vunpack.c.l.b16 %v568
        %v753 = vunpack.c.h.b16 %v568
        %v754 = vunpack.c.l.b16 %v569
        %v755 = vunpack.c.h.b16 %v569
        %v756 = vunpack.c.l.b16 %v570
        %v757 = vunpack.c.h.b16 %v570
        %v758 = vunpack.c.l.b16 %v571
        %v759 = vunpack.c.h.b16 %v571
        %v760 = vunpack.c.l.b16 %v572
        %v761 = vunpack.c.h.b16 %v572
        %v762 = vunpack.c.l.b16 %v573
        %v763 = vunpack.c.h.b16 %v573
        %v764 = vunpack.c.l.b16 %v574
        %v765 = vunpack.c.h.b16 %v574
        %v766 = vunpack.c.l.b16 %v575
        %v767 = vunpack.c.h.b16 %v575
        %v768 = vunpack.c.l.b16 %v576
        %v769 = vunpack.c.h.b16 %v576
        %v770 = vunpack.c.l.b16 %v577
        %v771 = vunpack.c.h.b16 %v577
        %v772 = vunpack.c.l.b16 %v578
        %v773 = vunpack.c.h.b16 %v578
        %v774 = vunpack.c.l.b16 %v579
        %v775 = vunpack.c.h.b16 %v579
        %v776 = vunpack.c.l.b16 %v580
        %v777 = vunpack.c.h.b16 %v580
        %v778 = vunpack.c.l.b16 %v581
        %v779 = vunpack.c.h.b16 %v581
        %v780 = vunpack.c.l.b16 %v582
        %v781 = vunpack.c.h.b16 %v582
        %v782 = vunpack.c.l.b16 %v583
        %v783 = vunpack.c.h.b16 %v583
        %v784 = vunpack.c.l.b16 %v584
        %v785 = vunpack.c.h.b16 %v584
        %v786 = vunpack.c.l.b16 %v585
        %v787 = vunpack.c.h.b16 %v585
        %v788 = vpack.c.b16 %v664, %v660
        %v789 = vpack.c.b16 %v665, %v661
        %v790 = vpack.c.b16 %v666, %v662
        %v791 = vpack.c.b16 %v667, %v663
        %v792 = vpack.c.b16 %v672, %v668
        %v793 = vpack.c.b16 %v673, %v669
        %v794 = vpack.c.b16 %v674, %v670
        %v795 = vpack.c.b16 %v675, %v671
        %v796 = vpack.c.b16 %v680, %v676
        %v797 = vpack.c.b16 %v681, %v677
        %v798 = vpack.c.b16 %v682, %v678
        %v799 = vpack.c.b16 %v683, %v679
        %v800 = vpack.c.b16 %v688, %v684
        %v801 = vpack.c.b16 %v689, %v685
        %v802 = vpack.c.b16 %v690, %v686
        %v803 = vpack.c.b16 %v691, %v687
        %v804 = vpack.c.b16 %v696, %v692
        %v805 = vpack.c.b16 %v697, %v693
        %v806 = vpack.c.b16 %v698, %v694
        %v807 = vpack.c.b16 %v699, %v695
        %v808 = vpack.c.b16 %v704, %v700
        %v809 = vpack.c.b16 %v705, %v701
        %v810 = vpack.c.b16 %v706, %v702
        %v811 = vpack.c.b16 %v707, %v703
        %v812 = vpack.c.b16 %v712, %v708
        %v813 = vpack.c.b16 %v713, %v709
        %v814 = vpack.c.b16 %v714, %v710
        %v815 = vpack.c.b16 %v715, %v711
        %v816 = vpack.c.b16 %v720, %v716
        %v817 = vpack.c.b16 %v721, %v717
        %v818 = vpack.c.b16 %v722, %v718
        %v819 = vpack.c.b16 %v723, %v719
        %v820 = vpack.c.b16 %v728, %v724
        %v821 = vpack.c.b16 %v729, %v725
        %v822 = vpack.c.b16 %v730, %v726
        %v823 = vpack.c.b16 %v731, %v727
        %v824 = vpack.c.b16 %v736, %v732
        %v825 = vpack.c.b16 %v737, %v733
        %v826 = vpack.c.b16 %v738, %v734
        %v827 = vpack.c.b16 %v739, %v735
        %v828 = vpack.c.b16 %v744, %v740
        %v829 = vpack.c.b16 %v745, %v741
        %v830 = vpack.c.b16 %v746, %v742
        %v831 = vpack.c.b16 %v747, %v743
        %v832 = vpack.c.b16 %v752, %v748
        %v833 = vpack.c.b16 %v753, %v749
        %v834 = vpack.c.b16 %v754, %v750
        %v835 = vpack.c.b16 %v755, %v751
        %v836 = vpack.c.b16 %v760, %v756
        %v837 = vpack.c.b16 %v761, %v757
        %v838 = vpack.c.b16 %v762, %v758
        %v839 = vpack.c.b16 %v763, %v759
        %v840 = vpack.c.b16 %v768, %v764
        %v841 = vpack.c.b16 %v769, %v765
        %v842 = vpack.c.b16 %v770, %v766
        %v843 = vpack.c.b16 %v771, %v767
        %v844 = vpack.c.b16 %v776, %v772
        %v845 = vpack.c.b16 %v777, %v773
        %v846 = vpack.c.b16 %v778, %v774
        %v847 = vpack.c.b16 %v779, %v775
        %v848 = vpack.c.b16 %v784, %v780
        %v849 = vpack.c.b16 %v785, %v781
        %v850 = vpack.c.b16 %v786, %v782
        %v851 = vpack.c.b16 %v787, %v783
        %916 = vmatpush.bf16.msra.mxu0 %v816
        %917 = vmatpush.bf16.msra.mxu0 %v812
        %918 = vmatpush.bf16.msra.mxu0 %v808
        %919 = vmatpush.bf16.msra.mxu0 %v804
        %920 = vmatpush.bf16.msra.mxu0 %v800
        %921 = vmatpush.bf16.msra.mxu0 %v796
        %922 = vmatpush.bf16.msra.mxu0 %v792
        %923 = vmatpush.bf16.msra.mxu0 %v788
        %924 = vmatmul.bf16.gmra.mxu0 %v520
        %v925 = vpop.f32.mrf.mxu0
        %v926 = vadd.f32 %v588, %v925
        %v927 = vpop.f32.mrf.mxu0
        %v928 = vadd.f32 %v588, %v927
        %929 = vdwg.mxu0
        %930 = vmatpush.bf16.msra.mxu0 %v848
        %931 = vmatpush.bf16.msra.mxu0 %v844
        %932 = vmatpush.bf16.msra.mxu0 %v840
        %933 = vmatpush.bf16.msra.mxu0 %v836
        %934 = vmatpush.bf16.msra.mxu0 %v832
        %935 = vmatpush.bf16.msra.mxu0 %v828
        %936 = vmatpush.bf16.msra.mxu0 %v824
        %937 = vmatpush.bf16.msra.mxu0 %v820
        %938 = vmatmul.bf16.gmra.mxu0 %v521
        %v939 = vpop.f32.mrf.mxu0
        %v940 = vadd.f32 %v926, %v939
        %v941 = vpop.f32.mrf.mxu0
        %v942 = vadd.f32 %v928, %v941
        %943 = vdwg.mxu0
        %944 = vmatpush.bf16.msra.mxu0 %v817
        %945 = vmatpush.bf16.msra.mxu0 %v813
        %946 = vmatpush.bf16.msra.mxu0 %v809
        %947 = vmatpush.bf16.msra.mxu0 %v805
        %948 = vmatpush.bf16.msra.mxu0 %v801
        %949 = vmatpush.bf16.msra.mxu0 %v797
        %950 = vmatpush.bf16.msra.mxu0 %v793
        %951 = vmatpush.bf16.msra.mxu0 %v789
        %952 = vmatmul.bf16.gmra.mxu0 %v520
        %v953 = vpop.f32.mrf.mxu0
        %v954 = vadd.f32 %v589, %v953
        %v955 = vpop.f32.mrf.mxu0
        %v956 = vadd.f32 %v589, %v955
        %957 = vdwg.mxu0
        %958 = vmatpush.bf16.msra.mxu0 %v849
        %959 = vmatpush.bf16.msra.mxu0 %v845
        %960 = vmatpush.bf16.msra.mxu0 %v841
        %961 = vmatpush.bf16.msra.mxu0 %v837
        %962 = vmatpush.bf16.msra.mxu0 %v833
        %963 = vmatpush.bf16.msra.mxu0 %v829
        %964 = vmatpush.bf16.msra.mxu0 %v825
        %965 = vmatpush.bf16.msra.mxu0 %v821
        %966 = vmatmul.bf16.gmra.mxu0 %v521
        %v967 = vpop.f32.mrf.mxu0
        %v968 = vadd.f32 %v954, %v967
        %v969 = vpop.f32.mrf.mxu0
        %v970 = vadd.f32 %v956, %v969
        %971 = vdwg.mxu0
        %972 = vmatpush.bf16.msra.mxu0 %v818
        %973 = vmatpush.bf16.msra.mxu0 %v814
        %974 = vmatpush.bf16.msra.mxu0 %v810
        %975 = vmatpush.bf16.msra.mxu0 %v806
        %976 = vmatpush.bf16.msra.mxu0 %v802
        %977 = vmatpush.bf16.msra.mxu0 %v798
        %978 = vmatpush.bf16.msra.mxu0 %v794
        %979 = vmatpush.bf16.msra.mxu0 %v790
        %980 = vmatmul.bf16.gmra.mxu0 %v520
        %v981 = vpop.f32.mrf.mxu0
        %v982 = vadd.f32 %v590, %v981
        %v983 = vpop.f32.mrf.mxu0
        %v984 = vadd.f32 %v590, %v983
        %985 = vdwg.mxu0
        %986 = vmatpush.bf16.msra.mxu0 %v850
        %987 = vmatpush.bf16.msra.mxu0 %v846
        %988 = vmatpush.bf16.msra.mxu0 %v842
        %989 = vmatpush.bf16.msra.mxu0 %v838
        %990 = vmatpush.bf16.msra.mxu0 %v834
        %991 = vmatpush.bf16.msra.mxu0 %v830
        %992 = vmatpush.bf16.msra.mxu0 %v826
        %993 = vmatpush.bf16.msra.mxu0 %v822
        %994 = vmatmul.bf16.gmra.mxu0 %v521
        %v995 = vpop.f32.mrf.mxu0
        %v996 = vadd.f32 %v982, %v995
        %v997 = vpop.f32.mrf.mxu0
        %v998 = vadd.f32 %v984, %v997
        %999 = vdwg.mxu0
        %1000 = vmatpush.bf16.msra.mxu0 %v819
        %1001 = vmatpush.bf16.msra.mxu0 %v815
        %1002 = vmatpush.bf16.msra.mxu0 %v811
        %1003 = vmatpush.bf16.msra.mxu0 %v807
        %1004 = vmatpush.bf16.msra.mxu0 %v803
        %1005 = vmatpush.bf16.msra.mxu0 %v799
        %1006 = vmatpush.bf16.msra.mxu0 %v795
        %1007 = vmatpush.bf16.msra.mxu0 %v791
        %1008 = vmatmul.bf16.gmra.mxu0 %v520
        %v1009 = vpop.f32.mrf.mxu0
        %v1010 = vadd.f32 %v591, %v1009
        %v1011 = vpop.f32.mrf.mxu0
        %v1012 = vadd.f32 %v591, %v1011
        %1013 = vdwg.mxu0
        %1014 = vmatpush.bf16.msra.mxu0 %v851
        %1015 = vmatpush.bf16.msra.mxu0 %v847
        %1016 = vmatpush.bf16.msra.mxu0 %v843
        %1017 = vmatpush.bf16.msra.mxu0 %v839
        %1018 = vmatpush.bf16.msra.mxu0 %v835
        %1019 = vmatpush.bf16.msra.mxu0 %v831
        %1020 = vmatpush.bf16.msra.mxu0 %v827
        %1021 = vmatpush.bf16.msra.mxu0 %v823
        %1022 = vmatmul.bf16.gmra.mxu0 %v521
        %v1023 = vpop.f32.mrf.mxu0
        %v1024 = vadd.f32 %v1010, %v1023
        %v1025 = vpop.f32.mrf.mxu0
        %v1026 = vadd.f32 %v1012, %v1025
        %1027 = vdwg.mxu0
        %v1028 = vtanh.pop %v940
        %v1029 = vtanh.pop %v968
        %v1030 = vtanh.pop %v942
        %v1031 = vtanh.pop %v970
        %v1032 = vxor.u32 %v996, 2147483648
        %v1033 = vxor.u32 %v1024, 2147483648
        %v1034 = vxor.u32 %v998, 2147483648
        %v1035 = vxor.u32 %v1026, 2147483648
        %v1036 = vmul.f32 %v1032, 1.442695
        %v1037 = vpow.pop %v1036
        %v1038 = vmul.f32 %v1033, 1.442695
        %v1039 = vpow.pop %v1038
        %v1040 = vmul.f32 %v1034, 1.442695
        %v1041 = vpow.pop %v1040
        %v1042 = vmul.f32 %v1035, 1.442695
        %v1043 = vpow.pop %v1042
        %v1044 = vadd.f32 %v1037, 1.0
        %v1045 = vadd.f32 %v1039, 1.0
        %v1046 = vadd.f32 %v1041, 1.0
        %v1047 = vadd.f32 %v1043, 1.0
        %v1048 = vrcp.pop %v1044
        %v1049 = vmul.f32 %v1044, %v1048
        %v1050 = vsub.f32 1.0, %v1049
        %v1051 = vmul.f32 %v1048, %v1050
        %v1052 = vadd.f32 %v1048, %v1051
        %vm1053 = vweird.f32 %v1044
        %vm1054 = vweird.f32 %v1048
        %vm1055 = vmor %vm1053, %vm1054
        %v1056 = vsel %vm1055, %v1048, %v1052
        %v1057 = vand.u32 2147483647, %v1044
        %vm1058 = vcmp.eq.f32.partialorder %v1057, 8.507059e+37
        %v1059 = vand.u32 %v1044, 2147483648
        %v1060 = vor.u32 1.1754944e-38, %v1059
        %v1061 = vsel %vm1058, %v1060, %v1056
        %v1062 = vmul.f32 1.0, %v1061
        %v1063 = vrcp.pop %v1045
        %v1064 = vmul.f32 %v1045, %v1063
        %v1065 = vsub.f32 1.0, %v1064
        %v1066 = vmul.f32 %v1063, %v1065
        %v1067 = vadd.f32 %v1063, %v1066
        %vm1068 = vweird.f32 %v1045
        %vm1069 = vweird.f32 %v1063
        %vm1070 = vmor %vm1068, %vm1069
        %v1071 = vsel %vm1070, %v1063, %v1067
        %v1072 = vand.u32 2147483647, %v1045
        %vm1073 = vcmp.eq.f32.partialorder %v1072, 8.507059e+37
        %v1074 = vand.u32 %v1045, 2147483648
        %v1075 = vor.u32 1.1754944e-38, %v1074
        %v1076 = vsel %vm1073, %v1075, %v1071
        %v1077 = vmul.f32 1.0, %v1076
        %v1078 = vrcp.pop %v1046
        %v1079 = vmul.f32 %v1046, %v1078
        %v1080 = vsub.f32 1.0, %v1079
        %v1081 = vmul.f32 %v1078, %v1080
        %v1082 = vadd.f32 %v1078, %v1081
        %vm1083 = vweird.f32 %v1046
        %vm1084 = vweird.f32 %v1078
        %vm1085 = vmor %vm1083, %vm1084
        %v1086 = vsel %vm1085, %v1078, %v1082
        %v1087 = vand.u32 2147483647, %v1046
        %vm1088 = vcmp.eq.f32.partialorder %v1087, 8.507059e+37
        %v1089 = vand.u32 %v1046, 2147483648
        %v1090 = vor.u32 1.1754944e-38, %v1089
        %v1091 = vsel %vm1088, %v1090, %v1086
        %v1092 = vmul.f32 1.0, %v1091
        %v1093 = vrcp.pop %v1047
        %v1094 = vmul.f32 %v1047, %v1093
        %v1095 = vsub.f32 1.0, %v1094
        %v1096 = vmul.f32 %v1093, %v1095
        %v1097 = vadd.f32 %v1093, %v1096
        %vm1098 = vweird.f32 %v1047
        %vm1099 = vweird.f32 %v1093
        %vm1100 = vmor %vm1098, %vm1099
        %v1101 = vsel %vm1100, %v1093, %v1097
        %v1102 = vand.u32 2147483647, %v1047
        %vm1103 = vcmp.eq.f32.partialorder %v1102, 8.507059e+37
        %v1104 = vand.u32 %v1047, 2147483648
        %v1105 = vor.u32 1.1754944e-38, %v1104
        %v1106 = vsel %vm1103, %v1105, %v1101
        %v1107 = vmul.f32 1.0, %v1106
        %v1108 = vmul.f32 %v1028, %v1062
        %v1109 = vmul.f32 %v1029, %v1077
        %v1110 = vmul.f32 %v1030, %v1092
        %v1111 = vmul.f32 %v1031, %v1107
        %v1112 = vld [vmem:[%s5] sm:$0x3]
        %v1113 = vpack.c.bf16 %v1110, %v1108
        %v1114 = vpack.c.bf16 %v1111, %v1109
        %s1115 = sld [smem:[#allocation2]]
        %v1116 = vstv %s1115
        %1118 = vst [vmem:[#allocation1] ss:$9 sm:$0xff] %v1112
        %v1119 = vld [vmem:[#allocation1] sm:$0xff]
        %v1120 = vld [vmem:[#allocation1 + $0x9] sm:$0xff]
        %1123 = vmatpush.bf16.xpose.msra.mxu0 0
        %1124 = vmatpush.bf16.xpose.msra.mxu0 0
        %1125 = vmatpush.bf16.xpose.msra.mxu0 0
        %1126 = vmatpush.bf16.xpose.msra.mxu0 0
        %1127 = vmatpush.bf16.xpose.msra.mxu0 0
        %1128 = vmatpush.bf16.xpose.msra.mxu0 0
        %1129 = vmatpush.bf16.xpose.msra.mxu0 0
        %1130 = vmatpush.bf16.xpose.msra.mxu0 %v1113
        %1131 = vmatmul.bf16.gmra.mxu0 %v1119
        %v1132 = vpop.f32.mrf.mxu0
        %v1133 = vadd.f32 %v1116, %v1132
        %v1134 = vpop.f32.mrf.mxu0
        %1135 = vdwg.mxu0
        %1136 = vmatpush.bf16.xpose.msra.mxu0 0
        %1137 = vmatpush.bf16.xpose.msra.mxu0 0
        %1138 = vmatpush.bf16.xpose.msra.mxu0 0
        %1139 = vmatpush.bf16.xpose.msra.mxu0 0
        %1140 = vmatpush.bf16.xpose.msra.mxu0 0
        %1141 = vmatpush.bf16.xpose.msra.mxu0 0
        %1142 = vmatpush.bf16.xpose.msra.mxu0 0
        %1143 = vmatpush.bf16.xpose.msra.mxu0 %v1114
        %1144 = vmatmul.bf16.gmra.mxu0 %v1120
        %v1145 = vpop.f32.mrf.mxu0
        %v1146 = vadd.f32 %v1133, %v1145
        %v1147 = vpop.f32.mrf.mxu0
        %1148 = vdwg.mxu0
        %1149 = vst [vmem:[%s374] sm:$0xff] %v516
        %1150 = vst [vmem:[%s374 + $0x8] sm:$0xff] %v517
        %1151 = vst [vmem:[%s374 + $0x10] sm:$0xff] %v518
        %1152 = vst [vmem:[%s374 + $0x18] sm:$0xff] %v519
        %vm1153 = vcmask 122880
        %1154 = vst.msk [vmem:[%s381] sm:$0x1] %vm1153, %v1146
        %s1155 = smul.u32 2, %s27
        %p1156 = scmp.lt.s32.totalorder %s26, 2
        %s1157 = scalar_select %p1156, %s26, 2
        %p1158 = scmp.lt.s32.totalorder %s1155, 1
        %s1159 = scalar_select %p1158, %s1155, 1
        %s1160 = smul.addr %s1159, 2
        %s1161 = smul.addr %s1157, 4
        %s1162 = sadd.s32 %s1160, %s1161
        %s1163 = smul.addr %s1162, 8
        %s1164 = scalar_lea.vmem %s7, %s1163
        %p1165 = scmp.lt.s32.totalorder %s26, 2
        %s1166 = scalar_select %p1165, %s26, 2
        %p1167 = scmp.lt.s32.totalorder %s27, 0
        %s1168 = scalar_select %p1167, %s27, 0
        %s1169 = sadd.s32 %s1168, %s1166
        %s1170 = scalar_lea.vmem %s8, %s1169
        // Predicated region
        $region53: #{msad_forward.4} parent=47 // pred_check
          %p1171 = pneg %p208
        $region54: #{msad_forward.4} parent=47 // pred_check_branch
          %1173 = sbr.rel (%p1171) target = $region56
        $region55: #{msad_forward.4} parent=47 // pred_region
          %s1174 = smul.u32 2, %s27
        $region56: #{msad_forward.4} parent=47 // pred_fallthru
          _
        // Predicated region
        $region57: #{msad_forward.4} parent=47 // pred_check
          %p1175 = pneg %p236
        $region58: #{msad_forward.4} parent=47 // pred_check_branch
          %1177 = sbr.rel (%p1175) target = $region60
        $region59: #{msad_forward.4} parent=47 // pred_region
          _
        $region60: #{msad_forward.4} parent=47 // pred_fallthru
          _
      $region48: #{msad_forward.4} parent=5 // pred_fallthru
        _
      %p1178 = scmp.le.s32.totalorder 2, %s17
      // Predicated region
      $region61: #{msad_forward.4} parent=5 // pred_check
        %p1179 = pneg %p1178
      $region62: #{msad_forward.4} parent=5 // pred_check_branch
        %1181 = sbr.rel (%p1179) target = $region64
      $region63: #{msad_forward.4} parent=5 // pred_region
        %s1182 = ssub.s32 %s17, 2
        // Predicated region
        $region65: #{msad_forward.4} parent=63 // pred_check
          %p1183 = pneg %p214
        $region66: #{msad_forward.4} parent=63 // pred_check_branch
          %1185 = sbr.rel (%p1183) target = $region68
        $region67: #{msad_forward.4} parent=63 // pred_region
          %s1186 = smul.u32 2, %s29
          %p1187 = scmp.lt.s32.totalorder %s28, 2
          %s1188 = scalar_select %p1187, %s28, 2
          %p1189 = scmp.lt.s32.totalorder %s1186, 1
          %s1190 = scalar_select %p1189, %s1186, 1
          %s1191 = smul.addr %s1190, 2
          %s1192 = smul.addr %s1188, 4
          %s1193 = sadd.s32 %s1191, %s1192
          %s1194 = smul.addr %s1193, 8
          %s1195 = scalar_lea.vmem %s7, %s1194
        $region68: #{msad_forward.4} parent=63 // pred_fallthru
          _
        // Predicated region
        $region69: #{msad_forward.4} parent=63 // pred_check
          %p1196 = pneg %p242
        $region70: #{msad_forward.4} parent=63 // pred_check_branch
          %1198 = sbr.rel (%p1196) target = $region72
        $region71: #{msad_forward.4} parent=63 // pred_region
          %p1199 = scmp.lt.s32.totalorder %s28, 2
          %s1200 = scalar_select %p1199, %s28, 2
          %p1201 = scmp.lt.s32.totalorder %s29, 0
          %s1202 = scalar_select %p1201, %s29, 0
          %s1203 = sadd.s32 %s1202, %s1200
          %s1204 = scalar_lea.vmem %s8, %s1203
        $region72: #{msad_forward.4} parent=63 // pred_fallthru
          _
      $region64: #{msad_forward.4} parent=5 // pred_fallthru
        _
    $region6: #{msad_forward.4} parent=1 // loop_footer
      %s21 = sadd.s32 1, %s17
    $region7: #{msad_forward.4} parent=1 // loop_footer_branch
      %16 = sbr.rel target = $region3
    $region8: #{msad_forward.4} parent=1 // loop_exit
      _
    %1205 = vsyncpa [#allocation4], 1
    %s1206 = scalar_lea.sflag [#allocation4], 1
    %1207 = vsyncpa %s1206, 1

// kernel: msad_forward.3
$region0: #{msad_forward.3}
  #allocation0 [shape = 'u32[]', space=smem, size = 0x4, offset = 0x4, fixed_abs, tag = 'smem constant byte address 0x4 - core index']
  #allocation1 [shape = 'u32[72,128]{1,0:T(1,128)}', space=vmem, size = 0x9000, scoped, tag = 'internal scratch']
  %s0 = inlined_call_operand.vmem [shape: f32[128,256], index: 0, kind: input, shape index: {}]
  %s1 = inlined_call_operand.hbm [shape: bf16[256,256], index: 1, kind: input, shape index: {}]
  %s2 = inlined_call_operand.vmem [shape: f32[1,256], index: 2, kind: input, shape index: {}]
  %s3 = inlined_call_operand.hbm [shape: bf16[256,256], index: 3, kind: input, shape index: {}]
  %s4 = inlined_call_operand.vmem [shape: f32[1,256], index: 4, kind: input, shape index: {}]
  %s5 = inlined_call_operand.vmem [shape: f32[128,256], index: 5, kind: output, shape index: {}]
  %s6 = sld [smem:[#allocation0]]
  $region38: #{msad_forward.3} parent=0
    _
  %s8 = ssub.s32 1, %s6
  %s9 = scalar_select 0, %s8, %s6
  $region1: #{msad_forward.3} parent=0
    #allocation2 [shape = 'u8[131072]{0}', space=vmem, size = 0x20000, scoped, tag = 'input window, operand 1, single buffered']
    #allocation3 [shape = 's32[1]{0}', space=sflag, size = 0x4, scoped, tag = 'scoped memory for msad_forward.3']
    #allocation4 [shape = 'u8[131072]{0}', space=vmem, size = 0x20000, scoped, tag = 'input window, operand 3, single buffered']
    #allocation5 [shape = 's32[1]{0}', space=sflag, size = 0x4, scoped, tag = 'scoped memory for msad_forward.3']
    %10 = vsyncpa [#allocation3], 0
    %11 = vsyncpa [#allocation5], 0
    // Predicated region
    $region2: #{msad_forward.3} parent=1 // pred_check
      _
    $region3: #{msad_forward.3} parent=1 // pred_check_branch
      %13 = sbr.rel (0) target = $region5
    $region4: #{msad_forward.3} parent=1 // pred_region
      _
    $region5: #{msad_forward.3} parent=1 // pred_fallthru
      _
    // Predicated region
    $region6: #{msad_forward.3} parent=1 // pred_check
      _
    $region7: #{msad_forward.3} parent=1 // pred_check_branch
      %15 = sbr.rel (0) target = $region9
    $region8: #{msad_forward.3} parent=1 // pred_region
      %17 = vsyncadd [#allocation3], 0
      %s18 = sshll.u32 %s1, 4
      %s19 = int_to_ptr.hbm [resolvable:$true] %s18
      %s20 = sshll.u32 [#allocation2], 4
      %s21 = int_to_ptr.vmem [resolvable:$true] %s20
      %26 = dma.hbm_to_vmem [thread:$0]  %s19, 4096, %s21, [#allocation3], 128, 128, 8
    $region9: #{msad_forward.3} parent=1 // pred_fallthru
      _
    // Predicated region
    $region10: #{msad_forward.3} parent=1 // pred_check
      _
    $region11: #{msad_forward.3} parent=1 // pred_check_branch
      %28 = sbr.rel (0) target = $region13
    $region12: #{msad_forward.3} parent=1 // pred_region
      _
    $region13: #{msad_forward.3} parent=1 // pred_fallthru
      _
    // Predicated region
    $region14: #{msad_forward.3} parent=1 // pred_check
      _
    $region15: #{msad_forward.3} parent=1 // pred_check_branch
      %30 = sbr.rel (0) target = $region17
    $region16: #{msad_forward.3} parent=1 // pred_region
      %32 = vsyncadd [#allocation5], 0
      %s33 = sshll.u32 %s3, 4
      %s34 = int_to_ptr.hbm [resolvable:$true] %s33
      %s35 = sshll.u32 [#allocation4], 4
      %s36 = int_to_ptr.vmem [resolvable:$true] %s35
      %41 = dma.hbm_to_vmem [thread:$0]  %s34, 4096, %s36, [#allocation5], 128, 128, 8
    $region17: #{msad_forward.3} parent=1 // pred_fallthru
      _
    // Predicated region
    $region18: #{msad_forward.3} parent=1 // pred_check
      _
    $region19: #{msad_forward.3} parent=1 // pred_check_branch
      %43 = sbr.rel (0) target = $region21
    $region20: #{msad_forward.3} parent=1 // pred_region
      _
    $region21: #{msad_forward.3} parent=1 // pred_fallthru
      _
    // Predicated region
    $region22: #{msad_forward.3} parent=1 // pred_check
      _
    $region23: #{msad_forward.3} parent=1 // pred_check_branch
      %45 = sbr.rel (0) target = $region25
    $region24: #{msad_forward.3} parent=1 // pred_region
      %47 = dma.done [#allocation3], 4096
    $region25: #{msad_forward.3} parent=1 // pred_fallthru
      _
    // Predicated region
    $region26: #{msad_forward.3} parent=1 // pred_check
      _
    $region27: #{msad_forward.3} parent=1 // pred_check_branch
      %49 = sbr.rel (0) target = $region29
    $region28: #{msad_forward.3} parent=1 // pred_region
      %51 = dma.done [#allocation5], 4096
    $region29: #{msad_forward.3} parent=1 // pred_fallthru
      _
    %v52 = vld [vmem:[%s0] sm:$0xff]
    %v53 = vld [vmem:[%s0 + $0x8] sm:$0xff]
    %v54 = vld [vmem:[%s0 + $0x10] sm:$0xff]
    %v55 = vld [vmem:[%s0 + $0x18] sm:$0xff]
    %v56 = vld [vmem:[%s0 + $0x20] sm:$0xff]
    %v57 = vld [vmem:[%s0 + $0x28] sm:$0xff]
    %v58 = vld [vmem:[%s0 + $0x30] sm:$0xff]
    %v59 = vld [vmem:[%s0 + $0x38] sm:$0xff]
    %v60 = vld [vmem:[%s0 + $0x40] sm:$0xff]
    %v61 = vld [vmem:[%s0 + $0x48] sm:$0xff]
    %v62 = vld [vmem:[%s0 + $0x50] sm:$0xff]
    %v63 = vld [vmem:[%s0 + $0x58] sm:$0xff]
    %v64 = vld [vmem:[%s0 + $0x60] sm:$0xff]
    %v65 = vld [vmem:[%s0 + $0x68] sm:$0xff]
    %v66 = vld [vmem:[%s0 + $0x70] sm:$0xff]
    %v67 = vld [vmem:[%s0 + $0x78] sm:$0xff]
    %v68 = vld [vmem:[%s0 + $0x80] sm:$0xff]
    %v69 = vld [vmem:[%s0 + $0x88] sm:$0xff]
    %v70 = vld [vmem:[%s0 + $0x90] sm:$0xff]
    %v71 = vld [vmem:[%s0 + $0x98] sm:$0xff]
    %v72 = vld [vmem:[%s0 + $0xa0] sm:$0xff]
    %v73 = vld [vmem:[%s0 + $0xa8] sm:$0xff]
    %v74 = vld [vmem:[%s0 + $0xb0] sm:$0xff]
    %v75 = vld [vmem:[%s0 + $0xb8] sm:$0xff]
    %v76 = vld [vmem:[%s0 + $0xc0] sm:$0xff]
    %v77 = vld [vmem:[%s0 + $0xc8] sm:$0xff]
    %v78 = vld [vmem:[%s0 + $0xd0] sm:$0xff]
    %v79 = vld [vmem:[%s0 + $0xd8] sm:$0xff]
    %v80 = vld [vmem:[%s0 + $0xe0] sm:$0xff]
    %v81 = vld [vmem:[%s0 + $0xe8] sm:$0xff]
    %v82 = vld [vmem:[%s0 + $0xf0] sm:$0xff]
    %v83 = vld [vmem:[%s0 + $0xf8] sm:$0xff]
    %v84 = vpack.c.bf16 %v54, %v52
    %v85 = vpack.c.bf16 %v55, %v53
    %v86 = vpack.c.bf16 %v58, %v56
    %v87 = vpack.c.bf16 %v59, %v57
    %v88 = vpack.c.bf16 %v62, %v60
    %v89 = vpack.c.bf16 %v63, %v61
    %v90 = vpack.c.bf16 %v66, %v64
    %v91 = vpack.c.bf16 %v67, %v65
    %v92 = vpack.c.bf16 %v70, %v68
    %v93 = vpack.c.bf16 %v71, %v69
    %v94 = vpack.c.bf16 %v74, %v72
    %v95 = vpack.c.bf16 %v75, %v73
    %v96 = vpack.c.bf16 %v78, %v76
    %v97 = vpack.c.bf16 %v79, %v77
    %v98 = vpack.c.bf16 %v82, %v80
    %v99 = vpack.c.bf16 %v83, %v81
    %v100 = vld [vmem:[#allocation2] sm:$0xff]
    %v101 = vld [vmem:[#allocation2 + $0x8] sm:$0xff]
    %v102 = vld [vmem:[#allocation2 + $0x10] sm:$0xff]
    %v103 = vld [vmem:[#allocation2 + $0x18] sm:$0xff]
    %v104 = vld [vmem:[#allocation2 + $0x20] sm:$0xff]
    %v105 = vld [vmem:[#allocation2 + $0x28] sm:$0xff]
    %v106 = vld [vmem:[#allocation2 + $0x30] sm:$0xff]
    %v107 = vld [vmem:[#allocation2 + $0x38] sm:$0xff]
    %v108 = vld [vmem:[#allocation2 + $0x40] sm:$0xff]
    %v109 = vld [vmem:[#allocation2 + $0x48] sm:$0xff]
    %v110 = vld [vmem:[#allocation2 + $0x50] sm:$0xff]
    %v111 = vld [vmem:[#allocation2 + $0x58] sm:$0xff]
    %v112 = vld [vmem:[#allocation2 + $0x60] sm:$0xff]
    %v113 = vld [vmem:[#allocation2 + $0x68] sm:$0xff]
    %v114 = vld [vmem:[#allocation2 + $0x70] sm:$0xff]
    %v115 = vld [vmem:[#allocation2 + $0x78] sm:$0xff]
    %v116 = vld [vmem:[#allocation2 + $0x80] sm:$0xff]
    %v117 = vld [vmem:[#allocation2 + $0x88] sm:$0xff]
    %v118 = vld [vmem:[#allocation2 + $0x90] sm:$0xff]
    %v119 = vld [vmem:[#allocation2 + $0x98] sm:$0xff]
    %v120 = vld [vmem:[#allocation2 + $0xa0] sm:$0xff]
    %v121 = vld [vmem:[#allocation2 + $0xa8] sm:$0xff]
    %v122 = vld [vmem:[#allocation2 + $0xb0] sm:$0xff]
    %v123 = vld [vmem:[#allocation2 + $0xb8] sm:$0xff]
    %v124 = vld [vmem:[#allocation2 + $0xc0] sm:$0xff]
    %v125 = vld [vmem:[#allocation2 + $0xc8] sm:$0xff]
    %v126 = vld [vmem:[#allocation2 + $0xd0] sm:$0xff]
    %v127 = vld [vmem:[#allocation2 + $0xd8] sm:$0xff]
    %v128 = vld [vmem:[#allocation2 + $0xe0] sm:$0xff]
    %v129 = vld [vmem:[#allocation2 + $0xe8] sm:$0xff]
    %v130 = vld [vmem:[#allocation2 + $0xf0] sm:$0xff]
    %v131 = vld [vmem:[#allocation2 + $0xf8] sm:$0xff]
    %v132 = vld [vmem:[%s2] sm:$0x3]
    %v134 = vperm.slane %v132, 0
    %v135 = vperm.slane %v132, 1
    %v170 = vunpack.c.l.b16 %v100
    %v171 = vunpack.c.h.b16 %v100
    %v172 = vunpack.c.l.b16 %v101
    %v173 = vunpack.c.h.b16 %v101
    %v174 = vunpack.c.l.b16 %v102
    %v175 = vunpack.c.h.b16 %v102
    %v176 = vunpack.c.l.b16 %v103
    %v177 = vunpack.c.h.b16 %v103
    %v178 = vunpack.c.l.b16 %v104
    %v179 = vunpack.c.h.b16 %v104
    %v180 = vunpack.c.l.b16 %v105
    %v181 = vunpack.c.h.b16 %v105
    %v182 = vunpack.c.l.b16 %v106
    %v183 = vunpack.c.h.b16 %v106
    %v184 = vunpack.c.l.b16 %v107
    %v185 = vunpack.c.h.b16 %v107
    %v186 = vunpack.c.l.b16 %v108
    %v187 = vunpack.c.h.b16 %v108
    %v188 = vunpack.c.l.b16 %v109
    %v189 = vunpack.c.h.b16 %v109
    %v190 = vunpack.c.l.b16 %v110
    %v191 = vunpack.c.h.b16 %v110
    %v192 = vunpack.c.l.b16 %v111
    %v193 = vunpack.c.h.b16 %v111
    %v194 = vunpack.c.l.b16 %v112
    %v195 = vunpack.c.h.b16 %v112
    %v196 = vunpack.c.l.b16 %v113
    %v197 = vunpack.c.h.b16 %v113
    %v198 = vunpack.c.l.b16 %v114
    %v199 = vunpack.c.h.b16 %v114
    %v200 = vunpack.c.l.b16 %v115
    %v201 = vunpack.c.h.b16 %v115
    %v202 = vunpack.c.l.b16 %v116
    %v203 = vunpack.c.h.b16 %v116
    %v204 = vunpack.c.l.b16 %v117
    %v205 = vunpack.c.h.b16 %v117
    %v206 = vunpack.c.l.b16 %v118
    %v207 = vunpack.c.h.b16 %v118
    %v208 = vunpack.c.l.b16 %v119
    %v209 = vunpack.c.h.b16 %v119
    %v210 = vunpack.c.l.b16 %v120
    %v211 = vunpack.c.h.b16 %v120
    %v212 = vunpack.c.l.b16 %v121
    %v213 = vunpack.c.h.b16 %v121
    %v214 = vunpack.c.l.b16 %v122
    %v215 = vunpack.c.h.b16 %v122
    %v216 = vunpack.c.l.b16 %v123
    %v217 = vunpack.c.h.b16 %v123
    %v218 = vunpack.c.l.b16 %v124
    %v219 = vunpack.c.h.b16 %v124
    %v220 = vunpack.c.l.b16 %v125
    %v221 = vunpack.c.h.b16 %v125
    %v222 = vunpack.c.l.b16 %v126
    %v223 = vunpack.c.h.b16 %v126
    %v224 = vunpack.c.l.b16 %v127
    %v225 = vunpack.c.h.b16 %v127
    %v226 = vunpack.c.l.b16 %v128
    %v227 = vunpack.c.h.b16 %v128
    %v228 = vunpack.c.l.b16 %v129
    %v229 = vunpack.c.h.b16 %v129
    %v230 = vunpack.c.l.b16 %v130
    %v231 = vunpack.c.h.b16 %v130
    %v232 = vunpack.c.l.b16 %v131
    %v233 = vunpack.c.h.b16 %v131
    %v234 = vpack.c.b16 %v172, %v170
    %v235 = vpack.c.b16 %v173, %v171
    %v236 = vpack.c.b16 %v176, %v174
    %v237 = vpack.c.b16 %v177, %v175
    %v238 = vpack.c.b16 %v180, %v178
    %v239 = vpack.c.b16 %v181, %v179
    %v240 = vpack.c.b16 %v184, %v182
    %v241 = vpack.c.b16 %v185, %v183
    %v242 = vpack.c.b16 %v188, %v186
    %v243 = vpack.c.b16 %v189, %v187
    %v244 = vpack.c.b16 %v192, %v190
    %v245 = vpack.c.b16 %v193, %v191
    %v246 = vpack.c.b16 %v196, %v194
    %v247 = vpack.c.b16 %v197, %v195
    %v248 = vpack.c.b16 %v200, %v198
    %v249 = vpack.c.b16 %v201, %v199
    %v250 = vpack.c.b16 %v204, %v202
    %v251 = vpack.c.b16 %v205, %v203
    %v252 = vpack.c.b16 %v208, %v206
    %v253 = vpack.c.b16 %v209, %v207
    %v254 = vpack.c.b16 %v212, %v210
    %v255 = vpack.c.b16 %v213, %v211
    %v256 = vpack.c.b16 %v216, %v214
    %v257 = vpack.c.b16 %v217, %v215
    %v258 = vpack.c.b16 %v220, %v218
    %v259 = vpack.c.b16 %v221, %v219
    %v260 = vpack.c.b16 %v224, %v222
    %v261 = vpack.c.b16 %v225, %v223
    %v262 = vpack.c.b16 %v228, %v226
    %v263 = vpack.c.b16 %v229, %v227
    %v264 = vpack.c.b16 %v232, %v230
    %v265 = vpack.c.b16 %v233, %v231
    %298 = vmatpush.bf16.msra.mxu0 %v248
    %299 = vmatpush.bf16.msra.mxu0 %v246
    %300 = vmatpush.bf16.msra.mxu0 %v244
    %301 = vmatpush.bf16.msra.mxu0 %v242
    %302 = vmatpush.bf16.msra.mxu0 %v240
    %303 = vmatpush.bf16.msra.mxu0 %v238
    %304 = vmatpush.bf16.msra.mxu0 %v236
    %305 = vmatpush.bf16.msra.mxu0 %v234
    %306 = vmatmul.bf16.gmra.mxu0 %v84
    %v307 = vpop.f32.mrf.mxu0
    %v308 = vadd.f32 %v134, %v307
    %v309 = vpop.f32.mrf.mxu0
    %v310 = vadd.f32 %v134, %v309
    %311 = vmatmul.bf16.gmra.mxu0 %v86
    %v312 = vpop.f32.mrf.mxu0
    %v313 = vadd.f32 %v134, %v312
    %v314 = vpop.f32.mrf.mxu0
    %v315 = vadd.f32 %v134, %v314
    %316 = vmatmul.bf16.gmra.mxu0 %v88
    %v317 = vpop.f32.mrf.mxu0
    %v318 = vadd.f32 %v134, %v317
    %v319 = vpop.f32.mrf.mxu0
    %v320 = vadd.f32 %v134, %v319
    %321 = vmatmul.bf16.gmra.mxu0 %v90
    %v322 = vpop.f32.mrf.mxu0
    %v323 = vadd.f32 %v134, %v322
    %v324 = vpop.f32.mrf.mxu0
    %v325 = vadd.f32 %v134, %v324
    %326 = vmatmul.bf16.gmra.mxu0 %v92
    %v327 = vpop.f32.mrf.mxu0
    %v328 = vadd.f32 %v134, %v327
    %v329 = vpop.f32.mrf.mxu0
    %v330 = vadd.f32 %v134, %v329
    %331 = vmatmul.bf16.gmra.mxu0 %v94
    %v332 = vpop.f32.mrf.mxu0
    %v333 = vadd.f32 %v134, %v332
    %v334 = vpop.f32.mrf.mxu0
    %v335 = vadd.f32 %v134, %v334
    %336 = vmatmul.bf16.gmra.mxu0 %v96
    %v337 = vpop.f32.mrf.mxu0
    %v338 = vadd.f32 %v134, %v337
    %v339 = vpop.f32.mrf.mxu0
    %v340 = vadd.f32 %v134, %v339
    %341 = vmatmul.bf16.gmra.mxu0 %v98
    %v342 = vpop.f32.mrf.mxu0
    %v343 = vadd.f32 %v134, %v342
    %v344 = vpop.f32.mrf.mxu0
    %v345 = vadd.f32 %v134, %v344
    %346 = vdwg.mxu0
    %347 = vmatpush.bf16.msra.mxu0 %v264
    %348 = vmatpush.bf16.msra.mxu0 %v262
    %349 = vmatpush.bf16.msra.mxu0 %v260
    %350 = vmatpush.bf16.msra.mxu0 %v258
    %351 = vmatpush.bf16.msra.mxu0 %v256
    %352 = vmatpush.bf16.msra.mxu0 %v254
    %353 = vmatpush.bf16.msra.mxu0 %v252
    %354 = vmatpush.bf16.msra.mxu0 %v250
    %355 = vmatmul.bf16.gmra.mxu0 %v85
    %v356 = vpop.f32.mrf.mxu0
    %v357 = vadd.f32 %v308, %v356
    %v358 = vpop.f32.mrf.mxu0
    %v359 = vadd.f32 %v310, %v358
    %360 = vmatmul.bf16.gmra.mxu0 %v87
    %v361 = vpop.f32.mrf.mxu0
    %v362 = vadd.f32 %v313, %v361
    %v363 = vpop.f32.mrf.mxu0
    %v364 = vadd.f32 %v315, %v363
    %365 = vmatmul.bf16.gmra.mxu0 %v89
    %v366 = vpop.f32.mrf.mxu0
    %v367 = vadd.f32 %v318, %v366
    %v368 = vpop.f32.mrf.mxu0
    %v369 = vadd.f32 %v320, %v368
    %370 = vmatmul.bf16.gmra.mxu0 %v91
    %v371 = vpop.f32.mrf.mxu0
    %v372 = vadd.f32 %v323, %v371
    %v373 = vpop.f32.mrf.mxu0
    %v374 = vadd.f32 %v325, %v373
    %375 = vmatmul.bf16.gmra.mxu0 %v93
    %v376 = vpop.f32.mrf.mxu0
    %v377 = vadd.f32 %v328, %v376
    %v378 = vpop.f32.mrf.mxu0
    %v379 = vadd.f32 %v330, %v378
    %380 = vmatmul.bf16.gmra.mxu0 %v95
    %v381 = vpop.f32.mrf.mxu0
    %v382 = vadd.f32 %v333, %v381
    %v383 = vpop.f32.mrf.mxu0
    %v384 = vadd.f32 %v335, %v383
    %385 = vmatmul.bf16.gmra.mxu0 %v97
    %v386 = vpop.f32.mrf.mxu0
    %v387 = vadd.f32 %v338, %v386
    %v388 = vpop.f32.mrf.mxu0
    %v389 = vadd.f32 %v340, %v388
    %390 = vmatmul.bf16.gmra.mxu0 %v99
    %v391 = vpop.f32.mrf.mxu0
    %v392 = vadd.f32 %v343, %v391
    %v393 = vpop.f32.mrf.mxu0
    %v394 = vadd.f32 %v345, %v393
    %395 = vdwg.mxu0
    %396 = vmatpush.bf16.msra.mxu0 %v249
    %397 = vmatpush.bf16.msra.mxu0 %v247
    %398 = vmatpush.bf16.msra.mxu0 %v245
    %399 = vmatpush.bf16.msra.mxu0 %v243
    %400 = vmatpush.bf16.msra.mxu0 %v241
    %401 = vmatpush.bf16.msra.mxu0 %v239
    %402 = vmatpush.bf16.msra.mxu0 %v237
    %403 = vmatpush.bf16.msra.mxu0 %v235
    %404 = vmatmul.bf16.gmra.mxu0 %v84
    %v405 = vpop.f32.mrf.mxu0
    %v406 = vadd.f32 %v135, %v405
    %v407 = vpop.f32.mrf.mxu0
    %v408 = vadd.f32 %v135, %v407
    %409 = vmatmul.bf16.gmra.mxu0 %v86
    %v410 = vpop.f32.mrf.mxu0
    %v411 = vadd.f32 %v135, %v410
    %v412 = vpop.f32.mrf.mxu0
    %v413 = vadd.f32 %v135, %v412
    %414 = vmatmul.bf16.gmra.mxu0 %v88
    %v415 = vpop.f32.mrf.mxu0
    %v416 = vadd.f32 %v135, %v415
    %v417 = vpop.f32.mrf.mxu0
    %v418 = vadd.f32 %v135, %v417
    %419 = vmatmul.bf16.gmra.mxu0 %v90
    %v420 = vpop.f32.mrf.mxu0
    %v421 = vadd.f32 %v135, %v420
    %v422 = vpop.f32.mrf.mxu0
    %v423 = vadd.f32 %v135, %v422
    %424 = vmatmul.bf16.gmra.mxu0 %v92
    %v425 = vpop.f32.mrf.mxu0
    %v426 = vadd.f32 %v135, %v425
    %v427 = vpop.f32.mrf.mxu0
    %v428 = vadd.f32 %v135, %v427
    %429 = vmatmul.bf16.gmra.mxu0 %v94
    %v430 = vpop.f32.mrf.mxu0
    %v431 = vadd.f32 %v135, %v430
    %v432 = vpop.f32.mrf.mxu0
    %v433 = vadd.f32 %v135, %v432
    %434 = vmatmul.bf16.gmra.mxu0 %v96
    %v435 = vpop.f32.mrf.mxu0
    %v436 = vadd.f32 %v135, %v435
    %v437 = vpop.f32.mrf.mxu0
    %v438 = vadd.f32 %v135, %v437
    %439 = vmatmul.bf16.gmra.mxu0 %v98
    %v440 = vpop.f32.mrf.mxu0
    %v441 = vadd.f32 %v135, %v440
    %v442 = vpop.f32.mrf.mxu0
    %v443 = vadd.f32 %v135, %v442
    %444 = vdwg.mxu0
    %445 = vmatpush.bf16.msra.mxu0 %v265
    %446 = vmatpush.bf16.msra.mxu0 %v263
    %447 = vmatpush.bf16.msra.mxu0 %v261
    %448 = vmatpush.bf16.msra.mxu0 %v259
    %449 = vmatpush.bf16.msra.mxu0 %v257
    %450 = vmatpush.bf16.msra.mxu0 %v255
    %451 = vmatpush.bf16.msra.mxu0 %v253
    %452 = vmatpush.bf16.msra.mxu0 %v251
    %453 = vmatmul.bf16.gmra.mxu0 %v85
    %v454 = vpop.f32.mrf.mxu0
    %v455 = vadd.f32 %v406, %v454
    %v456 = vpop.f32.mrf.mxu0
    %v457 = vadd.f32 %v408, %v456
    %458 = vmatmul.bf16.gmra.mxu0 %v87
    %v459 = vpop.f32.mrf.mxu0
    %v460 = vadd.f32 %v411, %v459
    %v461 = vpop.f32.mrf.mxu0
    %v462 = vadd.f32 %v413, %v461
    %463 = vmatmul.bf16.gmra.mxu0 %v89
    %v464 = vpop.f32.mrf.mxu0
    %v465 = vadd.f32 %v416, %v464
    %v466 = vpop.f32.mrf.mxu0
    %v467 = vadd.f32 %v418, %v466
    %468 = vmatmul.bf16.gmra.mxu0 %v91
    %v469 = vpop.f32.mrf.mxu0
    %v470 = vadd.f32 %v421, %v469
    %v471 = vpop.f32.mrf.mxu0
    %v472 = vadd.f32 %v423, %v471
    %473 = vmatmul.bf16.gmra.mxu0 %v93
    %v474 = vpop.f32.mrf.mxu0
    %v475 = vadd.f32 %v426, %v474
    %v476 = vpop.f32.mrf.mxu0
    %v477 = vadd.f32 %v428, %v476
    %478 = vmatmul.bf16.gmra.mxu0 %v95
    %v479 = vpop.f32.mrf.mxu0
    %v480 = vadd.f32 %v431, %v479
    %v481 = vpop.f32.mrf.mxu0
    %v482 = vadd.f32 %v433, %v481
    %483 = vmatmul.bf16.gmra.mxu0 %v97
    %v484 = vpop.f32.mrf.mxu0
    %v485 = vadd.f32 %v436, %v484
    %v486 = vpop.f32.mrf.mxu0
    %v487 = vadd.f32 %v438, %v486
    %488 = vmatmul.bf16.gmra.mxu0 %v99
    %v489 = vpop.f32.mrf.mxu0
    %v490 = vadd.f32 %v441, %v489
    %v491 = vpop.f32.mrf.mxu0
    %v492 = vadd.f32 %v443, %v491
    %493 = vdwg.mxu0
    %v494 = vpack.c.bf16 %v359, %v357
    %v495 = vpack.c.bf16 %v457, %v455
    %v496 = vpack.c.bf16 %v364, %v362
    %v497 = vpack.c.bf16 %v462, %v460
    %v498 = vpack.c.bf16 %v369, %v367
    %v499 = vpack.c.bf16 %v467, %v465
    %v500 = vpack.c.bf16 %v374, %v372
    %v501 = vpack.c.bf16 %v472, %v470
    %v502 = vpack.c.bf16 %v379, %v377
    %v503 = vpack.c.bf16 %v477, %v475
    %v504 = vpack.c.bf16 %v384, %v382
    %v505 = vpack.c.bf16 %v482, %v480
    %v506 = vpack.c.bf16 %v389, %v387
    %v507 = vpack.c.bf16 %v487, %v485
    %v508 = vpack.c.bf16 %v394, %v392
    %v509 = vpack.c.bf16 %v492, %v490
    %v510 = vld [vmem:[#allocation4] sm:$0xff]
    %v511 = vld [vmem:[#allocation4 + $0x8] sm:$0xff]
    %v512 = vld [vmem:[#allocation4 + $0x10] sm:$0xff]
    %v513 = vld [vmem:[#allocation4 + $0x18] sm:$0xff]
    %v514 = vld [vmem:[#allocation4 + $0x20] sm:$0xff]
    %v515 = vld [vmem:[#allocation4 + $0x28] sm:$0xff]
    %v516 = vld [vmem:[#allocation4 + $0x30] sm:$0xff]
    %v517 = vld [vmem:[#allocation4 + $0x38] sm:$0xff]
    %v518 = vld [vmem:[#allocation4 + $0x40] sm:$0xff]
    %v519 = vld [vmem:[#allocation4 + $0x48] sm:$0xff]
    %v520 = vld [vmem:[#allocation4 + $0x50] sm:$0xff]
    %v521 = vld [vmem:[#allocation4 + $0x58] sm:$0xff]
    %v522 = vld [vmem:[#allocation4 + $0x60] sm:$0xff]
    %v523 = vld [vmem:[#allocation4 + $0x68] sm:$0xff]
    %v524 = vld [vmem:[#allocation4 + $0x70] sm:$0xff]
    %v525 = vld [vmem:[#allocation4 + $0x78] sm:$0xff]
    %v526 = vld [vmem:[#allocation4 + $0x80] sm:$0xff]
    %v527 = vld [vmem:[#allocation4 + $0x88] sm:$0xff]
    %v528 = vld [vmem:[#allocation4 + $0x90] sm:$0xff]
    %v529 = vld [vmem:[#allocation4 + $0x98] sm:$0xff]
    %v530 = vld [vmem:[#allocation4 + $0xa0] sm:$0xff]
    %v531 = vld [vmem:[#allocation4 + $0xa8] sm:$0xff]
    %v532 = vld [vmem:[#allocation4 + $0xb0] sm:$0xff]
    %v533 = vld [vmem:[#allocation4 + $0xb8] sm:$0xff]
    %v534 = vld [vmem:[#allocation4 + $0xc0] sm:$0xff]
    %v535 = vld [vmem:[#allocation4 + $0xc8] sm:$0xff]
    %v536 = vld [vmem:[#allocation4 + $0xd0] sm:$0xff]
    %v537 = vld [vmem:[#allocation4 + $0xd8] sm:$0xff]
    %v538 = vld [vmem:[#allocation4 + $0xe0] sm:$0xff]
    %v539 = vld [vmem:[#allocation4 + $0xe8] sm:$0xff]
    %v540 = vld [vmem:[#allocation4 + $0xf0] sm:$0xff]
    %v541 = vld [vmem:[#allocation4 + $0xf8] sm:$0xff]
    %v542 = vld [vmem:[%s4] sm:$0x3]
    %v544 = vperm.slane %v542, 0
    %v545 = vperm.slane %v542, 1
    %v580 = vunpack.c.l.b16 %v510
    %v581 = vunpack.c.h.b16 %v510
    %v582 = vunpack.c.l.b16 %v511
    %v583 = vunpack.c.h.b16 %v511
    %v584 = vunpack.c.l.b16 %v512
    %v585 = vunpack.c.h.b16 %v512
    %v586 = vunpack.c.l.b16 %v513
    %v587 = vunpack.c.h.b16 %v513
    %v588 = vunpack.c.l.b16 %v514
    %v589 = vunpack.c.h.b16 %v514
    %v590 = vunpack.c.l.b16 %v515
    %v591 = vunpack.c.h.b16 %v515
    %v592 = vunpack.c.l.b16 %v516
    %v593 = vunpack.c.h.b16 %v516
    %v594 = vunpack.c.l.b16 %v517
    %v595 = vunpack.c.h.b16 %v517
    %v596 = vunpack.c.l.b16 %v518
    %v597 = vunpack.c.h.b16 %v518
    %v598 = vunpack.c.l.b16 %v519
    %v599 = vunpack.c.h.b16 %v519
    %v600 = vunpack.c.l.b16 %v520
    %v601 = vunpack.c.h.b16 %v520
    %v602 = vunpack.c.l.b16 %v521
    %v603 = vunpack.c.h.b16 %v521
    %v604 = vunpack.c.l.b16 %v522
    %v605 = vunpack.c.h.b16 %v522
    %v606 = vunpack.c.l.b16 %v523
    %v607 = vunpack.c.h.b16 %v523
    %v608 = vunpack.c.l.b16 %v524
    %v609 = vunpack.c.h.b16 %v524
    %v610 = vunpack.c.l.b16 %v525
    %v611 = vunpack.c.h.b16 %v525
    %v612 = vunpack.c.l.b16 %v526
    %v613 = vunpack.c.h.b16 %v526
    %v614 = vunpack.c.l.b16 %v527
    %v615 = vunpack.c.h.b16 %v527
    %v616 = vunpack.c.l.b16 %v528
    %v617 = vunpack.c.h.b16 %v528
    %v618 = vunpack.c.l.b16 %v529
    %v619 = vunpack.c.h.b16 %v529
    %v620 = vunpack.c.l.b16 %v530
    %v621 = vunpack.c.h.b16 %v530
    %v622 = vunpack.c.l.b16 %v531
    %v623 = vunpack.c.h.b16 %v531
    %v624 = vunpack.c.l.b16 %v532
    %v625 = vunpack.c.h.b16 %v532
    %v626 = vunpack.c.l.b16 %v533
    %v627 = vunpack.c.h.b16 %v533
    %v628 = vunpack.c.l.b16 %v534
    %v629 = vunpack.c.h.b16 %v534
    %v630 = vunpack.c.l.b16 %v535
    %v631 = vunpack.c.h.b16 %v535
    %v632 = vunpack.c.l.b16 %v536
    %v633 = vunpack.c.h.b16 %v536
    %v634 = vunpack.c.l.b16 %v537
    %v635 = vunpack.c.h.b16 %v537
    %v636 = vunpack.c.l.b16 %v538
    %v637 = vunpack.c.h.b16 %v538
    %v638 = vunpack.c.l.b16 %v539
    %v639 = vunpack.c.h.b16 %v539
    %v640 = vunpack.c.l.b16 %v540
    %v641 = vunpack.c.h.b16 %v540
    %v642 = vunpack.c.l.b16 %v541
    %v643 = vunpack.c.h.b16 %v541
    %v644 = vpack.c.b16 %v582, %v580
    %v645 = vpack.c.b16 %v583, %v581
    %v646 = vpack.c.b16 %v586, %v584
    %v647 = vpack.c.b16 %v587, %v585
    %v648 = vpack.c.b16 %v590, %v588
    %v649 = vpack.c.b16 %v591, %v589
    %v650 = vpack.c.b16 %v594, %v592
    %v651 = vpack.c.b16 %v595, %v593
    %v652 = vpack.c.b16 %v598, %v596
    %v653 = vpack.c.b16 %v599, %v597
    %v654 = vpack.c.b16 %v602, %v600
    %v655 = vpack.c.b16 %v603, %v601
    %v656 = vpack.c.b16 %v606, %v604
    %v657 = vpack.c.b16 %v607, %v605
    %v658 = vpack.c.b16 %v610, %v608
    %v659 = vpack.c.b16 %v611, %v609
    %v660 = vpack.c.b16 %v614, %v612
    %v661 = vpack.c.b16 %v615, %v613
    %v662 = vpack.c.b16 %v618, %v616
    %v663 = vpack.c.b16 %v619, %v617
    %v664 = vpack.c.b16 %v622, %v620
    %v665 = vpack.c.b16 %v623, %v621
    %v666 = vpack.c.b16 %v626, %v624
    %v667 = vpack.c.b16 %v627, %v625
    %v668 = vpack.c.b16 %v630, %v628
    %v669 = vpack.c.b16 %v631, %v629
    %v670 = vpack.c.b16 %v634, %v632
    %v671 = vpack.c.b16 %v635, %v633
    %v672 = vpack.c.b16 %v638, %v636
    %v673 = vpack.c.b16 %v639, %v637
    %v674 = vpack.c.b16 %v642, %v640
    %v675 = vpack.c.b16 %v643, %v641
    %708 = vmatpush.bf16.msra.mxu0 %v658
    %709 = vmatpush.bf16.msra.mxu0 %v656
    %710 = vmatpush.bf16.msra.mxu0 %v654
    %711 = vmatpush.bf16.msra.mxu0 %v652
    %712 = vmatpush.bf16.msra.mxu0 %v650
    %713 = vmatpush.bf16.msra.mxu0 %v648
    %714 = vmatpush.bf16.msra.mxu0 %v646
    %715 = vmatpush.bf16.msra.mxu0 %v644
    %716 = vmatmul.bf16.gmra.mxu0 %v494
    %v717 = vpop.f32.mrf.mxu0
    %v718 = vadd.f32 %v544, %v717
    %v719 = vpop.f32.mrf.mxu0
    %v720 = vadd.f32 %v544, %v719
    %721 = vmatmul.bf16.gmra.mxu0 %v496
    %v722 = vpop.f32.mrf.mxu0
    %v723 = vadd.f32 %v544, %v722
    %v724 = vpop.f32.mrf.mxu0
    %v725 = vadd.f32 %v544, %v724
    %726 = vmatmul.bf16.gmra.mxu0 %v498
    %v727 = vpop.f32.mrf.mxu0
    %v728 = vadd.f32 %v544, %v727
    %v729 = vpop.f32.mrf.mxu0
    %v730 = vadd.f32 %v544, %v729
    %731 = vmatmul.bf16.gmra.mxu0 %v500
    %v732 = vpop.f32.mrf.mxu0
    %v733 = vadd.f32 %v544, %v732
    %v734 = vpop.f32.mrf.mxu0
    %v735 = vadd.f32 %v544, %v734
    %736 = vmatmul.bf16.gmra.mxu0 %v502
    %v737 = vpop.f32.mrf.mxu0
    %v738 = vadd.f32 %v544, %v737
    %v739 = vpop.f32.mrf.mxu0
    %v740 = vadd.f32 %v544, %v739
    %741 = vmatmul.bf16.gmra.mxu0 %v504
    %v742 = vpop.f32.mrf.mxu0
    %v743 = vadd.f32 %v544, %v742
    %v744 = vpop.f32.mrf.mxu0
    %v745 = vadd.f32 %v544, %v744
    %746 = vmatmul.bf16.gmra.mxu0 %v506
    %v747 = vpop.f32.mrf.mxu0
    %v748 = vadd.f32 %v544, %v747
    %v749 = vpop.f32.mrf.mxu0
    %v750 = vadd.f32 %v544, %v749
    %751 = vmatmul.bf16.gmra.mxu0 %v508
    %v752 = vpop.f32.mrf.mxu0
    %v753 = vadd.f32 %v544, %v752
    %v754 = vpop.f32.mrf.mxu0
    %v755 = vadd.f32 %v544, %v754
    %756 = vdwg.mxu0
    %757 = vmatpush.bf16.msra.mxu0 %v674
    %758 = vmatpush.bf16.msra.mxu0 %v672
    %759 = vmatpush.bf16.msra.mxu0 %v670
    %760 = vmatpush.bf16.msra.mxu0 %v668
    %761 = vmatpush.bf16.msra.mxu0 %v666
    %762 = vmatpush.bf16.msra.mxu0 %v664
    %763 = vmatpush.bf16.msra.mxu0 %v662
    %764 = vmatpush.bf16.msra.mxu0 %v660
    %765 = vmatmul.bf16.gmra.mxu0 %v495
    %v766 = vpop.f32.mrf.mxu0
    %v767 = vadd.f32 %v718, %v766
    %v768 = vpop.f32.mrf.mxu0
    %v769 = vadd.f32 %v720, %v768
    %770 = vmatmul.bf16.gmra.mxu0 %v497
    %v771 = vpop.f32.mrf.mxu0
    %v772 = vadd.f32 %v723, %v771
    %v773 = vpop.f32.mrf.mxu0
    %v774 = vadd.f32 %v725, %v773
    %775 = vmatmul.bf16.gmra.mxu0 %v499
    %v776 = vpop.f32.mrf.mxu0
    %v777 = vadd.f32 %v728, %v776
    %v778 = vpop.f32.mrf.mxu0
    %v779 = vadd.f32 %v730, %v778
    %780 = vmatmul.bf16.gmra.mxu0 %v501
    %v781 = vpop.f32.mrf.mxu0
    %v782 = vadd.f32 %v733, %v781
    %v783 = vpop.f32.mrf.mxu0
    %v784 = vadd.f32 %v735, %v783
    %785 = vmatmul.bf16.gmra.mxu0 %v503
    %v786 = vpop.f32.mrf.mxu0
    %v787 = vadd.f32 %v738, %v786
    %v788 = vpop.f32.mrf.mxu0
    %v789 = vadd.f32 %v740, %v788
    %790 = vmatmul.bf16.gmra.mxu0 %v505
    %v791 = vpop.f32.mrf.mxu0
    %v792 = vadd.f32 %v743, %v791
    %v793 = vpop.f32.mrf.mxu0
    %v794 = vadd.f32 %v745, %v793
    %795 = vmatmul.bf16.gmra.mxu0 %v507
    %v796 = vpop.f32.mrf.mxu0
    %v797 = vadd.f32 %v748, %v796
    %v798 = vpop.f32.mrf.mxu0
    %v799 = vadd.f32 %v750, %v798
    %800 = vmatmul.bf16.gmra.mxu0 %v509
    %v801 = vpop.f32.mrf.mxu0
    %v802 = vadd.f32 %v753, %v801
    %v803 = vpop.f32.mrf.mxu0
    %v804 = vadd.f32 %v755, %v803
    %805 = vdwg.mxu0
    %806 = vmatpush.bf16.msra.mxu0 %v659
    %807 = vmatpush.bf16.msra.mxu0 %v657
    %808 = vmatpush.bf16.msra.mxu0 %v655
    %809 = vmatpush.bf16.msra.mxu0 %v653
    %810 = vmatpush.bf16.msra.mxu0 %v651
    %811 = vmatpush.bf16.msra.mxu0 %v649
    %812 = vmatpush.bf16.msra.mxu0 %v647
    %813 = vmatpush.bf16.msra.mxu0 %v645
    %814 = vmatmul.bf16.gmra.mxu0 %v494
    %v815 = vpop.f32.mrf.mxu0
    %v816 = vadd.f32 %v545, %v815
    %v817 = vpop.f32.mrf.mxu0
    %v818 = vadd.f32 %v545, %v817
    %819 = vmatmul.bf16.gmra.mxu0 %v496
    %v820 = vpop.f32.mrf.mxu0
    %v821 = vadd.f32 %v545, %v820
    %v822 = vpop.f32.mrf.mxu0
    %v823 = vadd.f32 %v545, %v822
    %824 = vmatmul.bf16.gmra.mxu0 %v498
    %v825 = vpop.f32.mrf.mxu0
    %v826 = vadd.f32 %v545, %v825
    %v827 = vpop.f32.mrf.mxu0
    %v828 = vadd.f32 %v545, %v827
    %829 = vmatmul.bf16.gmra.mxu0 %v500
    %v830 = vpop.f32.mrf.mxu0
    %v831 = vadd.f32 %v545, %v830
    %v832 = vpop.f32.mrf.mxu0
    %v833 = vadd.f32 %v545, %v832
    %834 = vmatmul.bf16.gmra.mxu0 %v502
    %v835 = vpop.f32.mrf.mxu0
    %v836 = vadd.f32 %v545, %v835
    %v837 = vpop.f32.mrf.mxu0
    %v838 = vadd.f32 %v545, %v837
    %839 = vmatmul.bf16.gmra.mxu0 %v504
    %v840 = vpop.f32.mrf.mxu0
    %v841 = vadd.f32 %v545, %v840
    %v842 = vpop.f32.mrf.mxu0
    %v843 = vadd.f32 %v545, %v842
    %844 = vmatmul.bf16.gmra.mxu0 %v506
    %v845 = vpop.f32.mrf.mxu0
    %v846 = vadd.f32 %v545, %v845
    %v847 = vpop.f32.mrf.mxu0
    %v848 = vadd.f32 %v545, %v847
    %849 = vmatmul.bf16.gmra.mxu0 %v508
    %v850 = vpop.f32.mrf.mxu0
    %v851 = vadd.f32 %v545, %v850
    %v852 = vpop.f32.mrf.mxu0
    %v853 = vadd.f32 %v545, %v852
    %854 = vdwg.mxu0
    %855 = vmatpush.bf16.msra.mxu0 %v675
    %856 = vmatpush.bf16.msra.mxu0 %v673
    %857 = vmatpush.bf16.msra.mxu0 %v671
    %858 = vmatpush.bf16.msra.mxu0 %v669
    %859 = vmatpush.bf16.msra.mxu0 %v667
    %860 = vmatpush.bf16.msra.mxu0 %v665
    %861 = vmatpush.bf16.msra.mxu0 %v663
    %862 = vmatpush.bf16.msra.mxu0 %v661
    %863 = vmatmul.bf16.gmra.mxu0 %v495
    %v864 = vpop.f32.mrf.mxu0
    %v865 = vadd.f32 %v816, %v864
    %v866 = vpop.f32.mrf.mxu0
    %v867 = vadd.f32 %v818, %v866
    %868 = vmatmul.bf16.gmra.mxu0 %v497
    %v869 = vpop.f32.mrf.mxu0
    %v870 = vadd.f32 %v821, %v869
    %v871 = vpop.f32.mrf.mxu0
    %v872 = vadd.f32 %v823, %v871
    %873 = vmatmul.bf16.gmra.mxu0 %v499
    %v874 = vpop.f32.mrf.mxu0
    %v875 = vadd.f32 %v826, %v874
    %v876 = vpop.f32.mrf.mxu0
    %v877 = vadd.f32 %v828, %v876
    %878 = vmatmul.bf16.gmra.mxu0 %v501
    %v879 = vpop.f32.mrf.mxu0
    %v880 = vadd.f32 %v831, %v879
    %v881 = vpop.f32.mrf.mxu0
    %v882 = vadd.f32 %v833, %v881
    %883 = vmatmul.bf16.gmra.mxu0 %v503
    %v884 = vpop.f32.mrf.mxu0
    %v885 = vadd.f32 %v836, %v884
    %v886 = vpop.f32.mrf.mxu0
    %v887 = vadd.f32 %v838, %v886
    %888 = vmatmul.bf16.gmra.mxu0 %v505
    %v889 = vpop.f32.mrf.mxu0
    %v890 = vadd.f32 %v841, %v889
    %v891 = vpop.f32.mrf.mxu0
    %v892 = vadd.f32 %v843, %v891
    %893 = vmatmul.bf16.gmra.mxu0 %v507
    %v894 = vpop.f32.mrf.mxu0
    %v895 = vadd.f32 %v846, %v894
    %v896 = vpop.f32.mrf.mxu0
    %v897 = vadd.f32 %v848, %v896
    %898 = vmatmul.bf16.gmra.mxu0 %v509
    %v899 = vpop.f32.mrf.mxu0
    %v900 = vadd.f32 %v851, %v899
    %v901 = vpop.f32.mrf.mxu0
    %v902 = vadd.f32 %v853, %v901
    %903 = vdwg.mxu0
    %vm904 = vcmp.gt.f32.partialorder %v767, 0.0
    %vm905 = vcmp.gt.f32.partialorder %v865, 0.0
    %vm906 = vcmp.gt.f32.partialorder %v769, 0.0
    %vm907 = vcmp.gt.f32.partialorder %v867, 0.0
    %vm908 = vcmp.gt.f32.partialorder %v772, 0.0
    %vm909 = vcmp.gt.f32.partialorder %v870, 0.0
    %vm910 = vcmp.gt.f32.partialorder %v774, 0.0
    %vm911 = vcmp.gt.f32.partialorder %v872, 0.0
    %vm912 = vcmp.gt.f32.partialorder %v777, 0.0
    %vm913 = vcmp.gt.f32.partialorder %v875, 0.0
    %vm914 = vcmp.gt.f32.partialorder %v779, 0.0
    %vm915 = vcmp.gt.f32.partialorder %v877, 0.0
    %vm916 = vcmp.gt.f32.partialorder %v782, 0.0
    %vm917 = vcmp.gt.f32.partialorder %v880, 0.0
    %vm918 = vcmp.gt.f32.partialorder %v784, 0.0
    %vm919 = vcmp.gt.f32.partialorder %v882, 0.0
    %vm920 = vcmp.gt.f32.partialorder %v787, 0.0
    %vm921 = vcmp.gt.f32.partialorder %v885, 0.0
    %vm922 = vcmp.gt.f32.partialorder %v789, 0.0
    %vm923 = vcmp.gt.f32.partialorder %v887, 0.0
    %vm924 = vcmp.gt.f32.partialorder %v792, 0.0
    %vm925 = vcmp.gt.f32.partialorder %v890, 0.0
    %vm926 = vcmp.gt.f32.partialorder %v794, 0.0
    %vm927 = vcmp.gt.f32.partialorder %v892, 0.0
    %vm928 = vcmp.gt.f32.partialorder %v797, 0.0
    %vm929 = vcmp.gt.f32.partialorder %v895, 0.0
    %vm930 = vcmp.gt.f32.partialorder %v799, 0.0
    %vm931 = vcmp.gt.f32.partialorder %v897, 0.0
    %vm932 = vcmp.gt.f32.partialorder %v802, 0.0
    %vm933 = vcmp.gt.f32.partialorder %v900, 0.0
    %vm934 = vcmp.gt.f32.partialorder %v804, 0.0
    %vm935 = vcmp.gt.f32.partialorder %v902, 0.0
    %v936 = vmul.f32 %v767, 0.01
    %v937 = vmul.f32 %v865, 0.01
    %v938 = vmul.f32 %v769, 0.01
    %v939 = vmul.f32 %v867, 0.01
    %v940 = vmul.f32 %v772, 0.01
    %v941 = vmul.f32 %v870, 0.01
    %v942 = vmul.f32 %v774, 0.01
    %v943 = vmul.f32 %v872, 0.01
    %v944 = vmul.f32 %v777, 0.01
    %v945 = vmul.f32 %v875, 0.01
    %v946 = vmul.f32 %v779, 0.01
    %v947 = vmul.f32 %v877, 0.01
    %v948 = vmul.f32 %v782, 0.01
    %v949 = vmul.f32 %v880, 0.01
    %v950 = vmul.f32 %v784, 0.01
    %v951 = vmul.f32 %v882, 0.01
    %v952 = vmul.f32 %v787, 0.01
    %v953 = vmul.f32 %v885, 0.01
    %v954 = vmul.f32 %v789, 0.01
    %v955 = vmul.f32 %v887, 0.01
    %v956 = vmul.f32 %v792, 0.01
    %v957 = vmul.f32 %v890, 0.01
    %v958 = vmul.f32 %v794, 0.01
    %v959 = vmul.f32 %v892, 0.01
    %v960 = vmul.f32 %v797, 0.01
    %v961 = vmul.f32 %v895, 0.01
    %v962 = vmul.f32 %v799, 0.01
    %v963 = vmul.f32 %v897, 0.01
    %v964 = vmul.f32 %v802, 0.01
    %v965 = vmul.f32 %v900, 0.01
    %v966 = vmul.f32 %v804, 0.01
    %v967 = vmul.f32 %v902, 0.01
    %v968 = vsel %vm904, %v767, %v936
    %v969 = vsel %vm905, %v865, %v937
    %v970 = vsel %vm906, %v769, %v938
    %v971 = vsel %vm907, %v867, %v939
    %v972 = vsel %vm908, %v772, %v940
    %v973 = vsel %vm909, %v870, %v941
    %v974 = vsel %vm910, %v774, %v942
    %v975 = vsel %vm911, %v872, %v943
    %v976 = vsel %vm912, %v777, %v944
    %v977 = vsel %vm913, %v875, %v945
    %v978 = vsel %vm914, %v779, %v946
    %v979 = vsel %vm915, %v877, %v947
    %v980 = vsel %vm916, %v782, %v948
    %v981 = vsel %vm917, %v880, %v949
    %v982 = vsel %vm918, %v784, %v950
    %v983 = vsel %vm919, %v882, %v951
    %v984 = vsel %vm920, %v787, %v952
    %v985 = vsel %vm921, %v885, %v953
    %v986 = vsel %vm922, %v789, %v954
    %v987 = vsel %vm923, %v887, %v955
    %v988 = vsel %vm924, %v792, %v956
    %v989 = vsel %vm925, %v890, %v957
    %v990 = vsel %vm926, %v794, %v958
    %v991 = vsel %vm927, %v892, %v959
    %v992 = vsel %vm928, %v797, %v960
    %v993 = vsel %vm929, %v895, %v961
    %v994 = vsel %vm930, %v799, %v962
    %v995 = vsel %vm931, %v897, %v963
    %v996 = vsel %vm932, %v802, %v964
    %v997 = vsel %vm933, %v900, %v965
    %v998 = vsel %vm934, %v804, %v966
    %v999 = vsel %vm935, %v902, %v967
    %1000 = vst [vmem:[%s5] sm:$0xff] %v968
    %1001 = vst [vmem:[%s5 + $0x8] sm:$0xff] %v969
    %1002 = vst [vmem:[%s5 + $0x10] sm:$0xff] %v970
    %1003 = vst [vmem:[%s5 + $0x18] sm:$0xff] %v971
    %1004 = vst [vmem:[%s5 + $0x20] sm:$0xff] %v972
    %1005 = vst [vmem:[%s5 + $0x28] sm:$0xff] %v973
    %1006 = vst [vmem:[%s5 + $0x30] sm:$0xff] %v974
    %1007 = vst [vmem:[%s5 + $0x38] sm:$0xff] %v975
    %1008 = vst [vmem:[%s5 + $0x40] sm:$0xff] %v976
    %1009 = vst [vmem:[%s5 + $0x48] sm:$0xff] %v977
    %1010 = vst [vmem:[%s5 + $0x50] sm:$0xff] %v978
    %1011 = vst [vmem:[%s5 + $0x58] sm:$0xff] %v979
    %1012 = vst [vmem:[%s5 + $0x60] sm:$0xff] %v980
    %1013 = vst [vmem:[%s5 + $0x68] sm:$0xff] %v981
    %1014 = vst [vmem:[%s5 + $0x70] sm:$0xff] %v982
    %1015 = vst [vmem:[%s5 + $0x78] sm:$0xff] %v983
    %1016 = vst [vmem:[%s5 + $0x80] sm:$0xff] %v984
    %1017 = vst [vmem:[%s5 + $0x88] sm:$0xff] %v985
    %1018 = vst [vmem:[%s5 + $0x90] sm:$0xff] %v986
    %1019 = vst [vmem:[%s5 + $0x98] sm:$0xff] %v987
    %1020 = vst [vmem:[%s5 + $0xa0] sm:$0xff] %v988
    %1021 = vst [vmem:[%s5 + $0xa8] sm:$0xff] %v989
    %1022 = vst [vmem:[%s5 + $0xb0] sm:$0xff] %v990
    %1023 = vst [vmem:[%s5 + $0xb8] sm:$0xff] %v991
    %1024 = vst [vmem:[%s5 + $0xc0] sm:$0xff] %v992
    %1025 = vst [vmem:[%s5 + $0xc8] sm:$0xff] %v993
    %1026 = vst [vmem:[%s5 + $0xd0] sm:$0xff] %v994
    %1027 = vst [vmem:[%s5 + $0xd8] sm:$0xff] %v995
    %1028 = vst [vmem:[%s5 + $0xe0] sm:$0xff] %v996
    %1029 = vst [vmem:[%s5 + $0xe8] sm:$0xff] %v997
    %1030 = vst [vmem:[%s5 + $0xf0] sm:$0xff] %v998
    %1031 = vst [vmem:[%s5 + $0xf8] sm:$0xff] %v999
    // Predicated region
    $region30: #{msad_forward.3} parent=1 // pred_check
      _
    $region31: #{msad_forward.3} parent=1 // pred_check_branch
      %1033 = sbr.rel (0) target = $region33
    $region32: #{msad_forward.3} parent=1 // pred_region
      _
    $region33: #{msad_forward.3} parent=1 // pred_fallthru
      _
    // Predicated region
    $region34: #{msad_forward.3} parent=1 // pred_check
      _
    $region35: #{msad_forward.3} parent=1 // pred_check_branch
      %1035 = sbr.rel (0) target = $region37
    $region36: #{msad_forward.3} parent=1 // pred_region
      _
    $region37: #{msad_forward.3} parent=1 // pred_fallthru
      _
    %1036 = vsyncpa [#allocation3], 1
    %1037 = vsyncpa [#allocation5], 1

// kernel: msad_forward.5
$region0: #{msad_forward.5}
  #allocation0 [shape = 'u32[]', space=smem, size = 0x4, offset = 0x4, fixed_abs, tag = 'smem constant byte address 0x4 - core index']
  #allocation1 [shape = 'u32[72,128]{1,0:T(1,128)}', space=vmem, size = 0x9000, scoped, tag = 'internal scratch']
  #allocation2 [shape = 'f32[1,1]{1,0:T(1,128)}', space=vmem, size = 0x200, scoped, tag = 'scratch operand']
  #allocation3 [shape = 'f32[1,1]{1,0:T(1,128)}', space=vmem, size = 0x200, scoped, tag = 'scratch operand']
  #allocation4 [shape = 'f32[1,256]{1,0:T(1,128)}', space=vmem, size = 0x400, scoped, tag = 'scratch operand']
  #allocation5 [shape = 'f32[1]{0:T(128)S(6)}', space=smem, size = 0x200, scoped, tag = 'scoped memory for msad_forward.5']
  %s0 = inlined_call_operand.vmem [shape: f32[128,256], index: 0, kind: input, shape index: {}]
  %s1 = inlined_call_operand.vmem [shape: f32[3,16,256], index: 1, kind: input, shape index: {}]
  %s2 = inlined_call_operand.vmem [shape: bf16[3,256,256], index: 2, kind: input, shape index: {}]
  %s3 = inlined_call_operand.vmem [shape: f32[3,1,256], index: 3, kind: input, shape index: {}]
  %s4 = inlined_call_operand.vmem [shape: bf16[3,256,512], index: 4, kind: input, shape index: {}]
  %s5 = inlined_call_operand.vmem [shape: f32[3,1,512], index: 5, kind: input, shape index: {}]
  %s6 = inlined_call_operand.hbm [shape: bf16[3,256,256], index: 6, kind: input, shape index: {}]
  %s7 = inlined_call_operand.vmem [shape: f32[3,1,256], index: 7, kind: input, shape index: {}]
  %s8 = inlined_call_operand.vmem [shape: bf16[256,512], index: 8, kind: input, shape index: {}]
  %s9 = inlined_call_operand.vmem [shape: f32[1,512], index: 9, kind: input, shape index: {}]
  %s10 = inlined_call_operand.vmem [shape: bf16[1,256], index: 10, kind: input, shape index: {}]
  %s11 = inlined_call_operand.<no memory space> [shape: f32[1], index: 11, kind: input, shape index: {}]
  %s12 = inlined_call_operand.vmem [shape: f32[3,1,256], index: 12, kind: output, shape index: {}]
  %s13 = sld [smem:[#allocation0]]
  $region93: #{msad_forward.5} parent=0
    _
  %s15 = ssub.s32 1, %s13
  %s16 = scalar_select 0, %s15, %s13
  %17 = sst [smem:[#allocation5]] %s11
  $region1: #{msad_forward.5} parent=0
    #allocation6 [shape = 'u8[262144]{0}', space=vmem, size = 0x40000, scoped, tag = 'input window, operand 6']
    #allocation7 [shape = 's32[2]{0}', space=sflag, size = 0x8, scoped, tag = 'scoped memory for msad_forward.5']
    %18 = vsyncpa [#allocation7], 0
    %s19 = scalar_lea.sflag [#allocation7], 1
    %20 = vsyncpa %s19, 0
    loop: start=0, step=1, limit=5
    $region2: #{msad_forward.5} parent=1 // loop_pre_header
      _
    $region3: #{msad_forward.5} parent=1 // loop_header
      %s22 = sphi 0, %s26
      %p23 = scmp.ge.s32.totalorder %s22, 5
      %s29 = sphi 0, %s41
      %s30 = sphi 0, %s37
      %s31 = sphi 0, %s29
      %s32 = sphi 0, %s30
      %s33 = sphi 0, %s31
      %s34 = sphi 0, %s32
      %s44 = sphi 0, %s46
      %s47 = sphi 0, %s44
      %s48 = sphi 0, %s47
      %s64 = sphi 0, %s48
      %s70 = sphi 0, %s72
      %s73 = sphi 0, %s70
      %s74 = sphi 0, %s73
      %s90 = sphi 0, %s74
      %s96 = sphi 0, %s98
      %s99 = sphi 0, %s96
      %s100 = sphi 0, %s99
      %s116 = sphi 0, %s100
      %s122 = sphi 0, %s124
      %s125 = sphi 0, %s122
      %s126 = sphi 0, %s125
      %s142 = sphi 0, %s126
      %s148 = sphi 0, %s150
      %s151 = sphi 0, %s148
      %s152 = sphi 0, %s151
      %s168 = sphi 0, %s152
      %s174 = sphi 0, %s176
      %s177 = sphi 0, %s174
      %s178 = sphi 0, %s177
      %s194 = sphi 0, %s178
      %s200 = sphi 0, %s202
      %s203 = sphi 0, %s200
      %s204 = sphi 0, %s203
      %s220 = sphi 0, %s204
      %s226 = sphi 0, %s228
      %s229 = sphi 0, %s226
      %s230 = sphi 0, %s229
      %s246 = sphi 0, %s230
      %s250 = sphi 0, %s250
      %s252 = sphi 0, %s250
      %s253 = sphi 0, %s252
      %s267 = sphi 0, %s253
      %s271 = sphi 0, %s271
      %s273 = sphi 0, %s271
      %s274 = sphi 0, %s273
      %s288 = sphi 0, %s274
      %s292 = sphi 0, %s292
      %s294 = sphi 0, %s292
      %s295 = sphi 0, %s294
      %s309 = sphi 0, %s295
      %s313 = sphi 0, %s313
      %s315 = sphi 0, %s313
      %s316 = sphi 0, %s315
      %s330 = sphi 0, %s316
      %s336 = sphi 0, %s338
      %s339 = sphi 0, %s336
      %s340 = sphi 0, %s339
      %s356 = sphi 0, %s340
    $region4: #{msad_forward.5} parent=1 // loop_header_branch
      %25 = sbr.rel (%p23) target = $region8
    $region5: #{msad_forward.5} parent=1 // loop_body
      %s27 = ssub.s32 %s22, 1
      %s28 = ssub.s32 %s22, 2
      %s35 = sadd.s32 1, %s30
      %p36 = scmp.ge.s32.totalorder %s35, 1
      %s37 = scalar_select %p36, 0, %s35
      %s38 = sadd.s32 1, %s29
      %s39 = scalar_select %p36, %s38, %s29
      %p40 = scmp.ge.s32.totalorder %s39, 3
      %s41 = scalar_select %p40, 0, %s39
      %s42 = ssub.s32 %s30, %s37
      %p43 = scmp.eq.s32.totalorder %s42, 0
      %s45 = sadd.s32 %s44, 1
      %s46 = scalar_select %p43, %s44, %s45
      %p49 = pneg %p43
      %p50 = scmp.eq.s32.totalorder %s22, 2
      %p51 = por %p49, %p50
      %p52 = scmp.ne.s32.totalorder %s44, %s47
      %p53 = scmp.eq.s32.totalorder %s22, 0
      %p54 = por %p52, %p53
      %p55 = scmp.ne.s32.totalorder %s44, %s47
      %p56 = scmp.eq.s32.totalorder %s27, 2
      %p57 = por %p55, %p56
      %p58 = scmp.ne.s32.totalorder %s47, %s48
      %p59 = scmp.eq.s32.totalorder %s27, 0
      %p60 = por %p58, %p59
      %p61 = scmp.ne.s32.totalorder %s47, %s48
      %p62 = scmp.eq.s32.totalorder %s28, 2
      %p63 = por %p61, %p62
      %p65 = scmp.ne.s32.totalorder %s48, %s64
      %p66 = scmp.eq.s32.totalorder %s28, 0
      %p67 = por %p65, %p66
      %s68 = ssub.s32 %s29, %s41
      %p69 = scmp.eq.s32.totalorder %s68, 0
      %s71 = sadd.s32 %s70, 1
      %s72 = scalar_select %p69, %s70, %s71
      %p75 = pneg %p69
      %p76 = scmp.eq.s32.totalorder %s22, 2
      %p77 = por %p75, %p76
      %p78 = scmp.ne.s32.totalorder %s70, %s73
      %p79 = scmp.eq.s32.totalorder %s22, 0
      %p80 = por %p78, %p79
      %p81 = scmp.ne.s32.totalorder %s70, %s73
      %p82 = scmp.eq.s32.totalorder %s27, 2
      %p83 = por %p81, %p82
      %p84 = scmp.ne.s32.totalorder %s73, %s74
      %p85 = scmp.eq.s32.totalorder %s27, 0
      %p86 = por %p84, %p85
      %p87 = scmp.ne.s32.totalorder %s73, %s74
      %p88 = scmp.eq.s32.totalorder %s28, 2
      %p89 = por %p87, %p88
      %p91 = scmp.ne.s32.totalorder %s74, %s90
      %p92 = scmp.eq.s32.totalorder %s28, 0
      %p93 = por %p91, %p92
      %s94 = ssub.s32 %s29, %s41
      %p95 = scmp.eq.s32.totalorder %s94, 0
      %s97 = sadd.s32 %s96, 1
      %s98 = scalar_select %p95, %s96, %s97
      %p101 = pneg %p95
      %p102 = scmp.eq.s32.totalorder %s22, 2
      %p103 = por %p101, %p102
      %p104 = scmp.ne.s32.totalorder %s96, %s99
      %p105 = scmp.eq.s32.totalorder %s22, 0
      %p106 = por %p104, %p105
      %p107 = scmp.ne.s32.totalorder %s96, %s99
      %p108 = scmp.eq.s32.totalorder %s27, 2
      %p109 = por %p107, %p108
      %p110 = scmp.ne.s32.totalorder %s99, %s100
      %p111 = scmp.eq.s32.totalorder %s27, 0
      %p112 = por %p110, %p111
      %p113 = scmp.ne.s32.totalorder %s99, %s100
      %p114 = scmp.eq.s32.totalorder %s28, 2
      %p115 = por %p113, %p114
      %p117 = scmp.ne.s32.totalorder %s100, %s116
      %p118 = scmp.eq.s32.totalorder %s28, 0
      %p119 = por %p117, %p118
      %s120 = ssub.s32 %s29, %s41
      %p121 = scmp.eq.s32.totalorder %s120, 0
      %s123 = sadd.s32 %s122, 1
      %s124 = scalar_select %p121, %s122, %s123
      %p127 = pneg %p121
      %p128 = scmp.eq.s32.totalorder %s22, 2
      %p129 = por %p127, %p128
      %p130 = scmp.ne.s32.totalorder %s122, %s125
      %p131 = scmp.eq.s32.totalorder %s22, 0
      %p132 = por %p130, %p131
      %p133 = scmp.ne.s32.totalorder %s122, %s125
      %p134 = scmp.eq.s32.totalorder %s27, 2
      %p135 = por %p133, %p134
      %p136 = scmp.ne.s32.totalorder %s125, %s126
      %p137 = scmp.eq.s32.totalorder %s27, 0
      %p138 = por %p136, %p137
      %p139 = scmp.ne.s32.totalorder %s125, %s126
      %p140 = scmp.eq.s32.totalorder %s28, 2
      %p141 = por %p139, %p140
      %p143 = scmp.ne.s32.totalorder %s126, %s142
      %p144 = scmp.eq.s32.totalorder %s28, 0
      %p145 = por %p143, %p144
      %s146 = ssub.s32 %s29, %s41
      %p147 = scmp.eq.s32.totalorder %s146, 0
      %s149 = sadd.s32 %s148, 1
      %s150 = scalar_select %p147, %s148, %s149
      %p153 = pneg %p147
      %p154 = scmp.eq.s32.totalorder %s22, 2
      %p155 = por %p153, %p154
      %p156 = scmp.ne.s32.totalorder %s148, %s151
      %p157 = scmp.eq.s32.totalorder %s22, 0
      %p158 = por %p156, %p157
      %p159 = scmp.ne.s32.totalorder %s148, %s151
      %p160 = scmp.eq.s32.totalorder %s27, 2
      %p161 = por %p159, %p160
      %p162 = scmp.ne.s32.totalorder %s151, %s152
      %p163 = scmp.eq.s32.totalorder %s27, 0
      %p164 = por %p162, %p163
      %p165 = scmp.ne.s32.totalorder %s151, %s152
      %p166 = scmp.eq.s32.totalorder %s28, 2
      %p167 = por %p165, %p166
      %p169 = scmp.ne.s32.totalorder %s152, %s168
      %p170 = scmp.eq.s32.totalorder %s28, 0
      %p171 = por %p169, %p170
      %s172 = ssub.s32 %s29, %s41
      %p173 = scmp.eq.s32.totalorder %s172, 0
      %s175 = sadd.s32 %s174, 1
      %s176 = scalar_select %p173, %s174, %s175
      %p179 = pneg %p173
      %p180 = scmp.eq.s32.totalorder %s22, 2
      %p181 = por %p179, %p180
      %p182 = scmp.ne.s32.totalorder %s174, %s177
      %p183 = scmp.eq.s32.totalorder %s22, 0
      %p184 = por %p182, %p183
      %p185 = scmp.ne.s32.totalorder %s174, %s177
      %p186 = scmp.eq.s32.totalorder %s27, 2
      %p187 = por %p185, %p186
      %p188 = scmp.ne.s32.totalorder %s177, %s178
      %p189 = scmp.eq.s32.totalorder %s27, 0
      %p190 = por %p188, %p189
      %p191 = scmp.ne.s32.totalorder %s177, %s178
      %p192 = scmp.eq.s32.totalorder %s28, 2
      %p193 = por %p191, %p192
      %p195 = scmp.ne.s32.totalorder %s178, %s194
      %p196 = scmp.eq.s32.totalorder %s28, 0
      %p197 = por %p195, %p196
      %s198 = ssub.s32 %s29, %s41
      %p199 = scmp.eq.s32.totalorder %s198, 0
      %s201 = sadd.s32 %s200, 1
      %s202 = scalar_select %p199, %s200, %s201
      %p205 = pneg %p199
      %p206 = scmp.eq.s32.totalorder %s22, 2
      %p207 = por %p205, %p206
      %p208 = scmp.ne.s32.totalorder %s200, %s203
      %p209 = scmp.eq.s32.totalorder %s22, 0
      %p210 = por %p208, %p209
      %p211 = scmp.ne.s32.totalorder %s200, %s203
      %p212 = scmp.eq.s32.totalorder %s27, 2
      %p213 = por %p211, %p212
      %p214 = scmp.ne.s32.totalorder %s203, %s204
      %p215 = scmp.eq.s32.totalorder %s27, 0
      %p216 = por %p214, %p215
      %p217 = scmp.ne.s32.totalorder %s203, %s204
      %p218 = scmp.eq.s32.totalorder %s28, 2
      %p219 = por %p217, %p218
      %p221 = scmp.ne.s32.totalorder %s204, %s220
      %p222 = scmp.eq.s32.totalorder %s28, 0
      %p223 = por %p221, %p222
      %s224 = ssub.s32 %s29, %s41
      %p225 = scmp.eq.s32.totalorder %s224, 0
      %s227 = sadd.s32 %s226, 1
      %s228 = scalar_select %p225, %s226, %s227
      %p231 = pneg %p225
      %p232 = scmp.eq.s32.totalorder %s22, 2
      %p233 = por %p231, %p232
      %p234 = scmp.ne.s32.totalorder %s226, %s229
      %p235 = scmp.eq.s32.totalorder %s22, 0
      %p236 = por %p234, %p235
      %p237 = scmp.ne.s32.totalorder %s226, %s229
      %p238 = scmp.eq.s32.totalorder %s27, 2
      %p239 = por %p237, %p238
      %p240 = scmp.ne.s32.totalorder %s229, %s230
      %p241 = scmp.eq.s32.totalorder %s27, 0
      %p242 = por %p240, %p241
      %p243 = scmp.ne.s32.totalorder %s229, %s230
      %p244 = scmp.eq.s32.totalorder %s28, 2
      %p245 = por %p243, %p244
      %p247 = scmp.ne.s32.totalorder %s230, %s246
      %p248 = scmp.eq.s32.totalorder %s28, 0
      %p249 = por %p247, %p248
      %s251 = sadd.s32 %s250, 1
      %p254 = scmp.eq.s32.totalorder %s22, 2
      %p255 = scmp.ne.s32.totalorder %s250, %s252
      %p256 = scmp.eq.s32.totalorder %s22, 0
      %p257 = por %p255, %p256
      %p258 = scmp.ne.s32.totalorder %s250, %s252
      %p259 = scmp.eq.s32.totalorder %s27, 2
      %p260 = por %p258, %p259
      %p261 = scmp.ne.s32.totalorder %s252, %s253
      %p262 = scmp.eq.s32.totalorder %s27, 0
      %p263 = por %p261, %p262
      %p264 = scmp.ne.s32.totalorder %s252, %s253
      %p265 = scmp.eq.s32.totalorder %s28, 2
      %p266 = por %p264, %p265
      %p268 = scmp.ne.s32.totalorder %s253, %s267
      %p269 = scmp.eq.s32.totalorder %s28, 0
      %p270 = por %p268, %p269
      %s272 = sadd.s32 %s271, 1
      %p275 = scmp.eq.s32.totalorder %s22, 2
      %p276 = scmp.ne.s32.totalorder %s271, %s273
      %p277 = scmp.eq.s32.totalorder %s22, 0
      %p278 = por %p276, %p277
      %p279 = scmp.ne.s32.totalorder %s271, %s273
      %p280 = scmp.eq.s32.totalorder %s27, 2
      %p281 = por %p279, %p280
      %p282 = scmp.ne.s32.totalorder %s273, %s274
      %p283 = scmp.eq.s32.totalorder %s27, 0
      %p284 = por %p282, %p283
      %p285 = scmp.ne.s32.totalorder %s273, %s274
      %p286 = scmp.eq.s32.totalorder %s28, 2
      %p287 = por %p285, %p286
      %p289 = scmp.ne.s32.totalorder %s274, %s288
      %p290 = scmp.eq.s32.totalorder %s28, 0
      %p291 = por %p289, %p290
      %s293 = sadd.s32 %s292, 1
      %p296 = scmp.eq.s32.totalorder %s22, 2
      %p297 = scmp.ne.s32.totalorder %s292, %s294
      %p298 = scmp.eq.s32.totalorder %s22, 0
      %p299 = por %p297, %p298
      %p300 = scmp.ne.s32.totalorder %s292, %s294
      %p301 = scmp.eq.s32.totalorder %s27, 2
      %p302 = por %p300, %p301
      %p303 = scmp.ne.s32.totalorder %s294, %s295
      %p304 = scmp.eq.s32.totalorder %s27, 0
      %p305 = por %p303, %p304
      %p306 = scmp.ne.s32.totalorder %s294, %s295
      %p307 = scmp.eq.s32.totalorder %s28, 2
      %p308 = por %p306, %p307
      %p310 = scmp.ne.s32.totalorder %s295, %s309
      %p311 = scmp.eq.s32.totalorder %s28, 0
      %p312 = por %p310, %p311
      %s314 = sadd.s32 %s313, 1
      %p317 = scmp.eq.s32.totalorder %s22, 2
      %p318 = scmp.ne.s32.totalorder %s313, %s315
      %p319 = scmp.eq.s32.totalorder %s22, 0
      %p320 = por %p318, %p319
      %p321 = scmp.ne.s32.totalorder %s313, %s315
      %p322 = scmp.eq.s32.totalorder %s27, 2
      %p323 = por %p321, %p322
      %p324 = scmp.ne.s32.totalorder %s315, %s316
      %p325 = scmp.eq.s32.totalorder %s27, 0
      %p326 = por %p324, %p325
      %p327 = scmp.ne.s32.totalorder %s315, %s316
      %p328 = scmp.eq.s32.totalorder %s28, 2
      %p329 = por %p327, %p328
      %p331 = scmp.ne.s32.totalorder %s316, %s330
      %p332 = scmp.eq.s32.totalorder %s28, 0
      %p333 = por %p331, %p332
      %s334 = ssub.s32 %s29, %s41
      %p335 = scmp.eq.s32.totalorder %s334, 0
      %s337 = sadd.s32 %s336, 1
      %s338 = scalar_select %p335, %s336, %s337
      %p341 = pneg %p335
      %p342 = scmp.eq.s32.totalorder %s22, 2
      %p343 = por %p341, %p342
      %p344 = scmp.ne.s32.totalorder %s336, %s339
      %p345 = scmp.eq.s32.totalorder %s22, 0
      %p346 = por %p344, %p345
      %p347 = scmp.ne.s32.totalorder %s336, %s339
      %p348 = scmp.eq.s32.totalorder %s27, 2
      %p349 = por %p347, %p348
      %p350 = scmp.ne.s32.totalorder %s339, %s340
      %p351 = scmp.eq.s32.totalorder %s27, 0
      %p352 = por %p350, %p351
      %p353 = scmp.ne.s32.totalorder %s339, %s340
      %p354 = scmp.eq.s32.totalorder %s28, 2
      %p355 = por %p353, %p354
      %p357 = scmp.ne.s32.totalorder %s340, %s356
      %p358 = scmp.eq.s32.totalorder %s28, 0
      %p359 = por %p357, %p358
      %p360 = scmp.le.s32.totalorder 1, %s22
      %p361 = scmp.lt.s32.totalorder %s22, 4
      %p362 = pnand %p360, %p361
      %p363 = pneg %p362
      // Predicated region
      $region9: #{msad_forward.5} parent=5 // pred_check
        _
      $region10: #{msad_forward.5} parent=5 // pred_check_branch
        %365 = sbr.rel (%p362) target = $region12
      $region11: #{msad_forward.5} parent=5 // pred_region
        %s366 = ssub.s32 %s22, 1
        // Predicated region
        $region13: #{msad_forward.5} parent=11 // pred_check
          %p367 = pneg %p60
        $region14: #{msad_forward.5} parent=11 // pred_check_branch
          %369 = sbr.rel (%p367) target = $region16
        $region15: #{msad_forward.5} parent=11 // pred_region
          %s370 = smul.u32 16, %s32
          %p371 = scmp.lt.s32.totalorder %s370, 15
          %s372 = scalar_select %p371, %s370, 15
          %s373 = smul.addr %s372, 2
          %s374 = smul.addr %s373, 8
          %s375 = scalar_lea.vmem %s0, %s374
          %s376 = smul.u32 16, %s32
        $region16: #{msad_forward.5} parent=11 // pred_fallthru
          _
        // Predicated region
        $region17: #{msad_forward.5} parent=11 // pred_check
          %p377 = pneg %p263
        $region18: #{msad_forward.5} parent=11 // pred_check_branch
          %379 = sbr.rel (%p377) target = $region20
        $region19: #{msad_forward.5} parent=11 // pred_region
          _
        $region20: #{msad_forward.5} parent=11 // pred_fallthru
          _
        // Predicated region
        $region21: #{msad_forward.5} parent=11 // pred_check
          %p380 = pneg %p284
        $region22: #{msad_forward.5} parent=11 // pred_check_branch
          %382 = sbr.rel (%p380) target = $region24
        $region23: #{msad_forward.5} parent=11 // pred_region
          _
        $region24: #{msad_forward.5} parent=11 // pred_fallthru
          _
        // Predicated region
        $region25: #{msad_forward.5} parent=11 // pred_check
          %p383 = pneg %p305
        $region26: #{msad_forward.5} parent=11 // pred_check_branch
          %385 = sbr.rel (%p383) target = $region28
        $region27: #{msad_forward.5} parent=11 // pred_region
          _
        $region28: #{msad_forward.5} parent=11 // pred_fallthru
          _
        // Predicated region
        $region29: #{msad_forward.5} parent=11 // pred_check
          %p386 = pneg %p326
        $region30: #{msad_forward.5} parent=11 // pred_check_branch
          %388 = sbr.rel (%p386) target = $region32
        $region31: #{msad_forward.5} parent=11 // pred_region
          _
        $region32: #{msad_forward.5} parent=11 // pred_fallthru
          _
      $region12: #{msad_forward.5} parent=5 // pred_fallthru
        _
      %p389 = scmp.lt.s32.totalorder %s22, 3
      // Predicated region
      $region33: #{msad_forward.5} parent=5 // pred_check
        %p390 = pneg %p389
      $region34: #{msad_forward.5} parent=5 // pred_check_branch
        %392 = sbr.rel (%p390) target = $region36
      $region35: #{msad_forward.5} parent=5 // pred_region
        // Predicated region
        $region37: #{msad_forward.5} parent=35 // pred_check
          %p393 = pneg %p80
        $region38: #{msad_forward.5} parent=35 // pred_check_branch
          %395 = sbr.rel (%p393) target = $region40
        $region39: #{msad_forward.5} parent=35 // pred_region
          %p396 = scmp.lt.s32.totalorder %s29, 2
          %s397 = scalar_select %p396, %s29, 2
          %s398 = smul.addr %s397, 4
          %s399 = smul.addr %s398, 8
          %s400 = scalar_lea.vmem %s1, %s399
        $region40: #{msad_forward.5} parent=35 // pred_fallthru
          _
        // Predicated region
        $region41: #{msad_forward.5} parent=35 // pred_check
          %p401 = pneg %p106
        $region42: #{msad_forward.5} parent=35 // pred_check_branch
          %403 = sbr.rel (%p401) target = $region44
        $region43: #{msad_forward.5} parent=35 // pred_region
          %p404 = scmp.lt.s32.totalorder %s29, 2
          %s405 = scalar_select %p404, %s29, 2
          %s406 = smul.addr %s405, 64
          %s407 = smul.addr %s406, 4
          %s408 = scalar_lea.vmem %s2, %s407
        $region44: #{msad_forward.5} parent=35 // pred_fallthru
          _
        // Predicated region
        $region45: #{msad_forward.5} parent=35 // pred_check
          %p409 = pneg %p132
        $region46: #{msad_forward.5} parent=35 // pred_check_branch
          %411 = sbr.rel (%p409) target = $region48
        $region47: #{msad_forward.5} parent=35 // pred_region
          %p412 = scmp.lt.s32.totalorder %s29, 2
          %s413 = scalar_select %p412, %s29, 2
          %s414 = smul.addr %s413, 2
          %s415 = scalar_lea.vmem %s3, %s414
        $region48: #{msad_forward.5} parent=35 // pred_fallthru
          _
        // Predicated region
        $region49: #{msad_forward.5} parent=35 // pred_check
          %p416 = pneg %p158
        $region50: #{msad_forward.5} parent=35 // pred_check_branch
          %418 = sbr.rel (%p416) target = $region52
        $region51: #{msad_forward.5} parent=35 // pred_region
          %p419 = scmp.lt.s32.totalorder %s29, 2
          %s420 = scalar_select %p419, %s29, 2
          %s421 = smul.addr %s420, 128
          %s422 = smul.addr %s421, 4
          %s423 = scalar_lea.vmem %s4, %s422
        $region52: #{msad_forward.5} parent=35 // pred_fallthru
          _
        // Predicated region
        $region53: #{msad_forward.5} parent=35 // pred_check
          %p424 = pneg %p184
        $region54: #{msad_forward.5} parent=35 // pred_check_branch
          %426 = sbr.rel (%p424) target = $region56
        $region55: #{msad_forward.5} parent=35 // pred_region
          %p427 = scmp.lt.s32.totalorder %s29, 2
          %s428 = scalar_select %p427, %s29, 2
          %s429 = smul.addr %s428, 4
          %s430 = scalar_lea.vmem %s5, %s429
        $region56: #{msad_forward.5} parent=35 // pred_fallthru
          _
        // Predicated region
        $region57: #{msad_forward.5} parent=35 // pred_check
          %p431 = pneg %p210
        $region58: #{msad_forward.5} parent=35 // pred_check_branch
          %433 = sbr.rel (%p431) target = $region60
        $region59: #{msad_forward.5} parent=35 // pred_region
          %s434 = sand.u32 %s200, 1
          %s435 = scalar_lea.sflag [#allocation7], %s434
          %s436 = sand.u32 %s200, 1
          %s437 = smul.addr %s436, 256
          %s438 = scalar_lea.vmem [#allocation6], %s437
          %440 = vsyncadd %s435, 0
          %s441 = smul.addr %s29, 64
          %s442 = smul.addr %s441, 4
          %s443 = scalar_lea.hbm %s6, %s442
          %s444 = sshll.u32 %s443, 4
          %s445 = int_to_ptr.hbm [resolvable:$true] %s444
          %s446 = sshll.u32 %s438, 4
          %s447 = int_to_ptr.vmem [resolvable:$true] %s446
          %452 = dma.hbm_to_vmem [thread:$0]  %s445, 4096, %s447, %s435, 128, 128, 8
        $region60: #{msad_forward.5} parent=35 // pred_fallthru
          _
        // Predicated region
        $region61: #{msad_forward.5} parent=35 // pred_check
          %p453 = pneg %p236
        $region62: #{msad_forward.5} parent=35 // pred_check_branch
          %455 = sbr.rel (%p453) target = $region64
        $region63: #{msad_forward.5} parent=35 // pred_region
          %p456 = scmp.lt.s32.totalorder %s29, 2
          %s457 = scalar_select %p456, %s29, 2
          %s458 = smul.addr %s457, 2
          %s459 = scalar_lea.vmem %s7, %s458
        $region64: #{msad_forward.5} parent=35 // pred_fallthru
          _
      $region36: #{msad_forward.5} parent=5 // pred_fallthru
        _
      %p460 = scmp.le.s32.totalorder 1, %s22
      %p461 = scmp.lt.s32.totalorder %s22, 4
      %p462 = pnand %p460, %p461
      %p463 = pneg %p462
      // Predicated region
      $region65: #{msad_forward.5} parent=5 // pred_check
        _
      $region66: #{msad_forward.5} parent=5 // pred_check_branch
        %465 = sbr.rel (%p462) target = $region68
      $region67: #{msad_forward.5} parent=5 // pred_region
        %s466 = ssub.s32 %s22, 1
        %s467 = sand.u32 %s203, 1
        %s468 = scalar_lea.sflag [#allocation7], %s467
        %s469 = sand.u32 %s203, 1
        %s470 = smul.addr %s469, 256
        %s471 = scalar_lea.vmem [#allocation6], %s470
        // Predicated region
        $region69: #{msad_forward.5} parent=67 // pred_check
          %p472 = pneg %p216
        $region70: #{msad_forward.5} parent=67 // pred_check_branch
          %474 = sbr.rel (%p472) target = $region72
        $region71: #{msad_forward.5} parent=67 // pred_region
          %476 = dma.done %s468, 4096
        $region72: #{msad_forward.5} parent=67 // pred_fallthru
          _
        %s477 = smul.u32 16, %s32
        %p478 = scmp.lt.s32.totalorder %s477, 15
        %s479 = scalar_select %p478, %s477, 15
        %s480 = smul.addr %s479, 2
        %s481 = smul.addr %s480, 8
        %s482 = scalar_lea.vmem %s0, %s481
        %p483 = pneg %p60
        %p484 = pneg %p57
        %p485 = scmp.lt.s32.totalorder %s31, 2
        %s486 = scalar_select %p485, %s31, 2
        %s487 = smul.addr %s486, 4
        %s488 = smul.addr %s487, 8
        %s489 = scalar_lea.vmem %s1, %s488
        %p490 = pneg %p86
        %p491 = pneg %p83
        %p492 = scmp.lt.s32.totalorder %s31, 2
        %s493 = scalar_select %p492, %s31, 2
        %s494 = smul.addr %s493, 64
        %s495 = smul.addr %s494, 4
        %s496 = scalar_lea.vmem %s2, %s495
        %p497 = pneg %p112
        %p498 = pneg %p109
        %p499 = scmp.lt.s32.totalorder %s31, 2
        %s500 = scalar_select %p499, %s31, 2
        %s501 = smul.addr %s500, 2
        %s502 = scalar_lea.vmem %s3, %s501
        %p503 = pneg %p138
        %p504 = pneg %p135
        %p505 = scmp.lt.s32.totalorder %s31, 2
        %s506 = scalar_select %p505, %s31, 2
        %s507 = smul.addr %s506, 128
        %s508 = smul.addr %s507, 4
        %s509 = scalar_lea.vmem %s4, %s508
        %p510 = pneg %p164
        %p511 = pneg %p161
        %p512 = scmp.lt.s32.totalorder %s31, 2
        %s513 = scalar_select %p512, %s31, 2
        %s514 = smul.addr %s513, 4
        %s515 = scalar_lea.vmem %s5, %s514
        %p516 = pneg %p190
        %p517 = pneg %p187
        %s518 = sand.u32 %s203, 1
        %s519 = scalar_lea.sflag [#allocation7], %s518
        %s520 = sand.u32 %s203, 1
        %s521 = smul.addr %s520, 256
        %s522 = scalar_lea.vmem [#allocation6], %s521
        %p523 = pneg %p216
        %p524 = pneg %p213
        %p525 = scmp.lt.s32.totalorder %s31, 2
        %s526 = scalar_select %p525, %s31, 2
        %s527 = smul.addr %s526, 2
        %s528 = scalar_lea.vmem %s7, %s527
        %p529 = pneg %p242
        %p530 = pneg %p239
        %p531 = pneg %p263
        %p532 = pneg %p260
        %p533 = pneg %p284
        %p534 = pneg %p281
        %p535 = pneg %p305
        %p536 = pneg %p302
        %p537 = pneg %p326
        %p538 = pneg %p323
        %p539 = pneg %p352
        %p540 = pneg %p349
        %p541 = scmp.lt.s32.totalorder %s31, 2
        %s542 = scalar_select %p541, %s31, 2
        %s543 = smul.addr %s542, 2
        %s544 = scalar_lea.vmem %s12, %s543
        %s545 = smul.u32 16, %s32
        %p546 = scmp.lt.s32.totalorder %s545, 15
        %s547 = scalar_select %p546, %s545, 15
        %s548 = smul.addr %s547, 2
        %s549 = smul.addr %s548, 8
        %s550 = scalar_lea.vmem %s0, %s549
        %s551 = smul.u32 16, %s32
        %p552 = scmp.lt.s32.totalorder %s31, 2
        %s553 = scalar_select %p552, %s31, 2
        %s554 = smul.addr %s553, 4
        %s555 = smul.addr %s554, 8
        %s556 = scalar_lea.vmem %s1, %s555
        %p557 = scmp.lt.s32.totalorder %s31, 2
        %s558 = scalar_select %p557, %s31, 2
        %s559 = smul.addr %s558, 64
        %s560 = smul.addr %s559, 4
        %s561 = scalar_lea.vmem %s2, %s560
        %p562 = scmp.lt.s32.totalorder %s31, 2
        %s563 = scalar_select %p562, %s31, 2
        %s564 = smul.addr %s563, 2
        %s565 = scalar_lea.vmem %s3, %s564
        %p566 = scmp.lt.s32.totalorder %s31, 2
        %s567 = scalar_select %p566, %s31, 2
        %s568 = smul.addr %s567, 128
        %s569 = smul.addr %s568, 4
        %s570 = scalar_lea.vmem %s4, %s569
        %p571 = scmp.lt.s32.totalorder %s31, 2
        %s572 = scalar_select %p571, %s31, 2
        %s573 = smul.addr %s572, 4
        %s574 = scalar_lea.vmem %s5, %s573
        %p575 = scmp.lt.s32.totalorder %s31, 2
        %s576 = scalar_select %p575, %s31, 2
        %s577 = smul.addr %s576, 2
        %s578 = scalar_lea.vmem %s7, %s577
        %p579 = scmp.lt.s32.totalorder %s31, 2
        %s580 = scalar_select %p579, %s31, 2
        %s581 = smul.addr %s580, 2
        %s582 = scalar_lea.vmem %s12, %s581
        %p583 = scmp.eq.s32.totalorder %s32, 0
        // Predicated region
        $region73: #{msad_forward.5} parent=67 // pred_check
          %p584 = pneg %p583
        $region74: #{msad_forward.5} parent=67 // pred_check_branch
          %586 = sbr.rel (%p584) target = $region76
        $region75: #{msad_forward.5} parent=67 // pred_region
          %vm587 = vcmask 0
          %588 = vst.msk [vmem:[#allocation2] sm:$0x1] %vm587, -inf
          %589 = vst.msk [vmem:[#allocation3] sm:$0x1] %vm587, 0.0
          %v590 = vlaneseq
          %vm591 = vcmp.ge.s32.totalorder %v590, 0
          %vm592 = vcmp.lt.s32.totalorder %v590, 256
          %vm593 = vmand %vm591, %vm592
          %594 = vst.msk [vmem:[#allocation4] sm:$0x3] %vm593, 0.0
        $region76: #{msad_forward.5} parent=67 // pred_fallthru
          _
        %v595 = vld [vmem:[%s550] sm:$0xff]
        %v596 = vld [vmem:[%s550 + $0x8] sm:$0xff]
        %v597 = vld [vmem:[%s550 + $0x10] sm:$0xff]
        %v598 = vld [vmem:[%s550 + $0x18] sm:$0xff]
        %v599 = vld [vmem:[%s550 + $0x20] sm:$0xff]
        %v600 = vld [vmem:[%s550 + $0x28] sm:$0xff]
        %v601 = vld [vmem:[%s550 + $0x30] sm:$0xff]
        %v602 = vld [vmem:[%s550 + $0x38] sm:$0xff]
        %v603 = vld [vmem:[%s550 + $0x40] sm:$0xff]
        %v604 = vld [vmem:[%s550 + $0x48] sm:$0xff]
        %v605 = vld [vmem:[%s550 + $0x50] sm:$0xff]
        %v606 = vld [vmem:[%s550 + $0x58] sm:$0xff]
        %v607 = vld [vmem:[%s550 + $0x60] sm:$0xff]
        %v608 = vld [vmem:[%s550 + $0x68] sm:$0xff]
        %v609 = vld [vmem:[%s550 + $0x70] sm:$0xff]
        %v610 = vld [vmem:[%s550 + $0x78] sm:$0xff]
        %v611 = vld [vmem:[%s550 + $0x80] sm:$0xff]
        %v612 = vld [vmem:[%s550 + $0x88] sm:$0xff]
        %v613 = vld [vmem:[%s550 + $0x90] sm:$0xff]
        %v614 = vld [vmem:[%s550 + $0x98] sm:$0xff]
        %v615 = vld [vmem:[%s550 + $0xa0] sm:$0xff]
        %v616 = vld [vmem:[%s550 + $0xa8] sm:$0xff]
        %v617 = vld [vmem:[%s550 + $0xb0] sm:$0xff]
        %v618 = vld [vmem:[%s550 + $0xb8] sm:$0xff]
        %v619 = vld [vmem:[%s550 + $0xc0] sm:$0xff]
        %v620 = vld [vmem:[%s550 + $0xc8] sm:$0xff]
        %v621 = vld [vmem:[%s550 + $0xd0] sm:$0xff]
        %v622 = vld [vmem:[%s550 + $0xd8] sm:$0xff]
        %v623 = vld [vmem:[%s550 + $0xe0] sm:$0xff]
        %v624 = vld [vmem:[%s550 + $0xe8] sm:$0xff]
        %v625 = vld [vmem:[%s550 + $0xf0] sm:$0xff]
        %v626 = vld [vmem:[%s550 + $0xf8] sm:$0xff]
        %v627 = vld [vmem:[%s556] sm:$0xff]
        %v628 = vld [vmem:[%s556 + $0x8] sm:$0xff]
        %v629 = vld [vmem:[%s556 + $0x10] sm:$0xff]
        %v630 = vld [vmem:[%s556 + $0x18] sm:$0xff]
        %v631 = vld [vmem:[%s561] sm:$0xff]
        %v632 = vld [vmem:[%s561 + $0x8] sm:$0xff]
        %v633 = vld [vmem:[%s561 + $0x10] sm:$0xff]
        %v634 = vld [vmem:[%s561 + $0x18] sm:$0xff]
        %v635 = vld [vmem:[%s561 + $0x20] sm:$0xff]
        %v636 = vld [vmem:[%s561 + $0x28] sm:$0xff]
        %v637 = vld [vmem:[%s561 + $0x30] sm:$0xff]
        %v638 = vld [vmem:[%s561 + $0x38] sm:$0xff]
        %v639 = vld [vmem:[%s561 + $0x40] sm:$0xff]
        %v640 = vld [vmem:[%s561 + $0x48] sm:$0xff]
        %v641 = vld [vmem:[%s561 + $0x50] sm:$0xff]
        %v642 = vld [vmem:[%s561 + $0x58] sm:$0xff]
        %v643 = vld [vmem:[%s561 + $0x60] sm:$0xff]
        %v644 = vld [vmem:[%s561 + $0x68] sm:$0xff]
        %v645 = vld [vmem:[%s561 + $0x70] sm:$0xff]
        %v646 = vld [vmem:[%s561 + $0x78] sm:$0xff]
        %v647 = vld [vmem:[%s561 + $0x80] sm:$0xff]
        %v648 = vld [vmem:[%s561 + $0x88] sm:$0xff]
        %v649 = vld [vmem:[%s561 + $0x90] sm:$0xff]
        %v650 = vld [vmem:[%s561 + $0x98] sm:$0xff]
        %v651 = vld [vmem:[%s561 + $0xa0] sm:$0xff]
        %v652 = vld [vmem:[%s561 + $0xa8] sm:$0xff]
        %v653 = vld [vmem:[%s561 + $0xb0] sm:$0xff]
        %v654 = vld [vmem:[%s561 + $0xb8] sm:$0xff]
        %v655 = vld [vmem:[%s561 + $0xc0] sm:$0xff]
        %v656 = vld [vmem:[%s561 + $0xc8] sm:$0xff]
        %v657 = vld [vmem:[%s561 + $0xd0] sm:$0xff]
        %v658 = vld [vmem:[%s561 + $0xd8] sm:$0xff]
        %v659 = vld [vmem:[%s561 + $0xe0] sm:$0xff]
        %v660 = vld [vmem:[%s561 + $0xe8] sm:$0xff]
        %v661 = vld [vmem:[%s561 + $0xf0] sm:$0xff]
        %v662 = vld [vmem:[%s561 + $0xf8] sm:$0xff]
        %v663 = vld [vmem:[%s570] sm:$0xff]
        %v664 = vld [vmem:[%s570 + $0x8] sm:$0xff]
        %v665 = vld [vmem:[%s570 + $0x10] sm:$0xff]
        %v666 = vld [vmem:[%s570 + $0x18] sm:$0xff]
        %v667 = vld [vmem:[%s570 + $0x20] sm:$0xff]
        %v668 = vld [vmem:[%s570 + $0x28] sm:$0xff]
        %v669 = vld [vmem:[%s570 + $0x30] sm:$0xff]
        %v670 = vld [vmem:[%s570 + $0x38] sm:$0xff]
        %v671 = vld [vmem:[%s570 + $0x40] sm:$0xff]
        %v672 = vld [vmem:[%s570 + $0x48] sm:$0xff]
        %v673 = vld [vmem:[%s570 + $0x50] sm:$0xff]
        %v674 = vld [vmem:[%s570 + $0x58] sm:$0xff]
        %v675 = vld [vmem:[%s570 + $0x60] sm:$0xff]
        %v676 = vld [vmem:[%s570 + $0x68] sm:$0xff]
        %v677 = vld [vmem:[%s570 + $0x70] sm:$0xff]
        %v678 = vld [vmem:[%s570 + $0x78] sm:$0xff]
        %v679 = vld [vmem:[%s570 + $0x80] sm:$0xff]
        %v680 = vld [vmem:[%s570 + $0x88] sm:$0xff]
        %v681 = vld [vmem:[%s570 + $0x90] sm:$0xff]
        %v682 = vld [vmem:[%s570 + $0x98] sm:$0xff]
        %v683 = vld [vmem:[%s570 + $0xa0] sm:$0xff]
        %v684 = vld [vmem:[%s570 + $0xa8] sm:$0xff]
        %v685 = vld [vmem:[%s570 + $0xb0] sm:$0xff]
        %v686 = vld [vmem:[%s570 + $0xb8] sm:$0xff]
        %v687 = vld [vmem:[%s570 + $0xc0] sm:$0xff]
        %v688 = vld [vmem:[%s570 + $0xc8] sm:$0xff]
        %v689 = vld [vmem:[%s570 + $0xd0] sm:$0xff]
        %v690 = vld [vmem:[%s570 + $0xd8] sm:$0xff]
        %v691 = vld [vmem:[%s570 + $0xe0] sm:$0xff]
        %v692 = vld [vmem:[%s570 + $0xe8] sm:$0xff]
        %v693 = vld [vmem:[%s570 + $0xf0] sm:$0xff]
        %v694 = vld [vmem:[%s570 + $0xf8] sm:$0xff]
        %v695 = vld [vmem:[%s570 + $0x100] sm:$0xff]
        %v696 = vld [vmem:[%s570 + $0x108] sm:$0xff]
        %v697 = vld [vmem:[%s570 + $0x110] sm:$0xff]
        %v698 = vld [vmem:[%s570 + $0x118] sm:$0xff]
        %v699 = vld [vmem:[%s570 + $0x120] sm:$0xff]
        %v700 = vld [vmem:[%s570 + $0x128] sm:$0xff]
        %v701 = vld [vmem:[%s570 + $0x130] sm:$0xff]
        %v702 = vld [vmem:[%s570 + $0x138] sm:$0xff]
        %v703 = vld [vmem:[%s570 + $0x140] sm:$0xff]
        %v704 = vld [vmem:[%s570 + $0x148] sm:$0xff]
        %v705 = vld [vmem:[%s570 + $0x150] sm:$0xff]
        %v706 = vld [vmem:[%s570 + $0x158] sm:$0xff]
        %v707 = vld [vmem:[%s570 + $0x160] sm:$0xff]
        %v708 = vld [vmem:[%s570 + $0x168] sm:$0xff]
        %v709 = vld [vmem:[%s570 + $0x170] sm:$0xff]
        %v710 = vld [vmem:[%s570 + $0x178] sm:$0xff]
        %v711 = vld [vmem:[%s570 + $0x180] sm:$0xff]
        %v712 = vld [vmem:[%s570 + $0x188] sm:$0xff]
        %v713 = vld [vmem:[%s570 + $0x190] sm:$0xff]
        %v714 = vld [vmem:[%s570 + $0x198] sm:$0xff]
        %v715 = vld [vmem:[%s570 + $0x1a0] sm:$0xff]
        %v716 = vld [vmem:[%s570 + $0x1a8] sm:$0xff]
        %v717 = vld [vmem:[%s570 + $0x1b0] sm:$0xff]
        %v718 = vld [vmem:[%s570 + $0x1b8] sm:$0xff]
        %v719 = vld [vmem:[%s570 + $0x1c0] sm:$0xff]
        %v720 = vld [vmem:[%s570 + $0x1c8] sm:$0xff]
        %v721 = vld [vmem:[%s570 + $0x1d0] sm:$0xff]
        %v722 = vld [vmem:[%s570 + $0x1d8] sm:$0xff]
        %v723 = vld [vmem:[%s570 + $0x1e0] sm:$0xff]
        %v724 = vld [vmem:[%s570 + $0x1e8] sm:$0xff]
        %v725 = vld [vmem:[%s570 + $0x1f0] sm:$0xff]
        %v726 = vld [vmem:[%s570 + $0x1f8] sm:$0xff]
        %v727 = vld [vmem:[%s471] sm:$0xff]
        %v728 = vld [vmem:[%s471 + $0x8] sm:$0xff]
        %v729 = vld [vmem:[%s471 + $0x10] sm:$0xff]
        %v730 = vld [vmem:[%s471 + $0x18] sm:$0xff]
        %v731 = vld [vmem:[%s471 + $0x20] sm:$0xff]
        %v732 = vld [vmem:[%s471 + $0x28] sm:$0xff]
        %v733 = vld [vmem:[%s471 + $0x30] sm:$0xff]
        %v734 = vld [vmem:[%s471 + $0x38] sm:$0xff]
        %v735 = vld [vmem:[%s471 + $0x40] sm:$0xff]
        %v736 = vld [vmem:[%s471 + $0x48] sm:$0xff]
        %v737 = vld [vmem:[%s471 + $0x50] sm:$0xff]
        %v738 = vld [vmem:[%s471 + $0x58] sm:$0xff]
        %v739 = vld [vmem:[%s471 + $0x60] sm:$0xff]
        %v740 = vld [vmem:[%s471 + $0x68] sm:$0xff]
        %v741 = vld [vmem:[%s471 + $0x70] sm:$0xff]
        %v742 = vld [vmem:[%s471 + $0x78] sm:$0xff]
        %v743 = vld [vmem:[%s471 + $0x80] sm:$0xff]
        %v744 = vld [vmem:[%s471 + $0x88] sm:$0xff]
        %v745 = vld [vmem:[%s471 + $0x90] sm:$0xff]
        %v746 = vld [vmem:[%s471 + $0x98] sm:$0xff]
        %v747 = vld [vmem:[%s471 + $0xa0] sm:$0xff]
        %v748 = vld [vmem:[%s471 + $0xa8] sm:$0xff]
        %v749 = vld [vmem:[%s471 + $0xb0] sm:$0xff]
        %v750 = vld [vmem:[%s471 + $0xb8] sm:$0xff]
        %v751 = vld [vmem:[%s471 + $0xc0] sm:$0xff]
        %v752 = vld [vmem:[%s471 + $0xc8] sm:$0xff]
        %v753 = vld [vmem:[%s471 + $0xd0] sm:$0xff]
        %v754 = vld [vmem:[%s471 + $0xd8] sm:$0xff]
        %v755 = vld [vmem:[%s471 + $0xe0] sm:$0xff]
        %v756 = vld [vmem:[%s471 + $0xe8] sm:$0xff]
        %v757 = vld [vmem:[%s471 + $0xf0] sm:$0xff]
        %v758 = vld [vmem:[%s471 + $0xf8] sm:$0xff]
        %v759 = vpack.c.bf16 %v597, %v595
        %v760 = vpack.c.bf16 %v598, %v596
        %v761 = vpack.c.bf16 %v601, %v599
        %v762 = vpack.c.bf16 %v602, %v600
        %v763 = vpack.c.bf16 %v605, %v603
        %v764 = vpack.c.bf16 %v606, %v604
        %v765 = vpack.c.bf16 %v609, %v607
        %v766 = vpack.c.bf16 %v610, %v608
        %v767 = vpack.c.bf16 %v613, %v611
        %v768 = vpack.c.bf16 %v614, %v612
        %v769 = vpack.c.bf16 %v617, %v615
        %v770 = vpack.c.bf16 %v618, %v616
        %v771 = vpack.c.bf16 %v621, %v619
        %v772 = vpack.c.bf16 %v622, %v620
        %v773 = vpack.c.bf16 %v625, %v623
        %v774 = vpack.c.bf16 %v626, %v624
        %v775 = vld [vmem:[%s565] sm:$0x3]
        %v777 = vperm.slane %v775, 0
        %v778 = vperm.slane %v775, 1
        %v813 = vunpack.c.l.b16 %v631
        %v814 = vunpack.c.h.b16 %v631
        %v815 = vunpack.c.l.b16 %v632
        %v816 = vunpack.c.h.b16 %v632
        %v817 = vunpack.c.l.b16 %v633
        %v818 = vunpack.c.h.b16 %v633
        %v819 = vunpack.c.l.b16 %v634
        %v820 = vunpack.c.h.b16 %v634
        %v821 = vunpack.c.l.b16 %v635
        %v822 = vunpack.c.h.b16 %v635
        %v823 = vunpack.c.l.b16 %v636
        %v824 = vunpack.c.h.b16 %v636
        %v825 = vunpack.c.l.b16 %v637
        %v826 = vunpack.c.h.b16 %v637
        %v827 = vunpack.c.l.b16 %v638
        %v828 = vunpack.c.h.b16 %v638
        %v829 = vunpack.c.l.b16 %v639
        %v830 = vunpack.c.h.b16 %v639
        %v831 = vunpack.c.l.b16 %v640
        %v832 = vunpack.c.h.b16 %v640
        %v833 = vunpack.c.l.b16 %v641
        %v834 = vunpack.c.h.b16 %v641
        %v835 = vunpack.c.l.b16 %v642
        %v836 = vunpack.c.h.b16 %v642
        %v837 = vunpack.c.l.b16 %v643
        %v838 = vunpack.c.h.b16 %v643
        %v839 = vunpack.c.l.b16 %v644
        %v840 = vunpack.c.h.b16 %v644
        %v841 = vunpack.c.l.b16 %v645
        %v842 = vunpack.c.h.b16 %v645
        %v843 = vunpack.c.l.b16 %v646
        %v844 = vunpack.c.h.b16 %v646
        %v845 = vunpack.c.l.b16 %v647
        %v846 = vunpack.c.h.b16 %v647
        %v847 = vunpack.c.l.b16 %v648
        %v848 = vunpack.c.h.b16 %v648
        %v849 = vunpack.c.l.b16 %v649
        %v850 = vunpack.c.h.b16 %v649
        %v851 = vunpack.c.l.b16 %v650
        %v852 = vunpack.c.h.b16 %v650
        %v853 = vunpack.c.l.b16 %v651
        %v854 = vunpack.c.h.b16 %v651
        %v855 = vunpack.c.l.b16 %v652
        %v856 = vunpack.c.h.b16 %v652
        %v857 = vunpack.c.l.b16 %v653
        %v858 = vunpack.c.h.b16 %v653
        %v859 = vunpack.c.l.b16 %v654
        %v860 = vunpack.c.h.b16 %v654
        %v861 = vunpack.c.l.b16 %v655
        %v862 = vunpack.c.h.b16 %v655
        %v863 = vunpack.c.l.b16 %v656
        %v864 = vunpack.c.h.b16 %v656
        %v865 = vunpack.c.l.b16 %v657
        %v866 = vunpack.c.h.b16 %v657
        %v867 = vunpack.c.l.b16 %v658
        %v868 = vunpack.c.h.b16 %v658
        %v869 = vunpack.c.l.b16 %v659
        %v870 = vunpack.c.h.b16 %v659
        %v871 = vunpack.c.l.b16 %v660
        %v872 = vunpack.c.h.b16 %v660
        %v873 = vunpack.c.l.b16 %v661
        %v874 = vunpack.c.h.b16 %v661
        %v875 = vunpack.c.l.b16 %v662
        %v876 = vunpack.c.h.b16 %v662
        %v877 = vpack.c.b16 %v815, %v813
        %v878 = vpack.c.b16 %v816, %v814
        %v879 = vpack.c.b16 %v819, %v817
        %v880 = vpack.c.b16 %v820, %v818
        %v881 = vpack.c.b16 %v823, %v821
        %v882 = vpack.c.b16 %v824, %v822
        %v883 = vpack.c.b16 %v827, %v825
        %v884 = vpack.c.b16 %v828, %v826
        %v885 = vpack.c.b16 %v831, %v829
        %v886 = vpack.c.b16 %v832, %v830
        %v887 = vpack.c.b16 %v835, %v833
        %v888 = vpack.c.b16 %v836, %v834
        %v889 = vpack.c.b16 %v839, %v837
        %v890 = vpack.c.b16 %v840, %v838
        %v891 = vpack.c.b16 %v843, %v841
        %v892 = vpack.c.b16 %v844, %v842
        %v893 = vpack.c.b16 %v847, %v845
        %v894 = vpack.c.b16 %v848, %v846
        %v895 = vpack.c.b16 %v851, %v849
        %v896 = vpack.c.b16 %v852, %v850
        %v897 = vpack.c.b16 %v855, %v853
        %v898 = vpack.c.b16 %v856, %v854
        %v899 = vpack.c.b16 %v859, %v857
        %v900 = vpack.c.b16 %v860, %v858
        %v901 = vpack.c.b16 %v863, %v861
        %v902 = vpack.c.b16 %v864, %v862
        %v903 = vpack.c.b16 %v867, %v865
        %v904 = vpack.c.b16 %v868, %v866
        %v905 = vpack.c.b16 %v871, %v869
        %v906 = vpack.c.b16 %v872, %v870
        %v907 = vpack.c.b16 %v875, %v873
        %v908 = vpack.c.b16 %v876, %v874
        %941 = vmatpush.bf16.msra.mxu0 %v891
        %942 = vmatpush.bf16.msra.mxu0 %v889
        %943 = vmatpush.bf16.msra.mxu0 %v887
        %944 = vmatpush.bf16.msra.mxu0 %v885
        %945 = vmatpush.bf16.msra.mxu0 %v883
        %946 = vmatpush.bf16.msra.mxu0 %v881
        %947 = vmatpush.bf16.msra.mxu0 %v879
        %948 = vmatpush.bf16.msra.mxu0 %v877
        %949 = vmatmul.bf16.gmra.mxu0 %v759
        %v950 = vpop.f32.mrf.mxu0
        %v951 = vadd.f32 %v777, %v950
        %v952 = vpop.f32.mrf.mxu0
        %v953 = vadd.f32 %v777, %v952
        %954 = vmatmul.bf16.gmra.mxu0 %v761
        %v955 = vpop.f32.mrf.mxu0
        %v956 = vadd.f32 %v777, %v955
        %v957 = vpop.f32.mrf.mxu0
        %v958 = vadd.f32 %v777, %v957
        %959 = vmatmul.bf16.gmra.mxu0 %v763
        %v960 = vpop.f32.mrf.mxu0
        %v961 = vadd.f32 %v777, %v960
        %v962 = vpop.f32.mrf.mxu0
        %v963 = vadd.f32 %v777, %v962
        %964 = vmatmul.bf16.gmra.mxu0 %v765
        %v965 = vpop.f32.mrf.mxu0
        %v966 = vadd.f32 %v777, %v965
        %v967 = vpop.f32.mrf.mxu0
        %v968 = vadd.f32 %v777, %v967
        %969 = vmatmul.bf16.gmra.mxu0 %v767
        %v970 = vpop.f32.mrf.mxu0
        %v971 = vadd.f32 %v777, %v970
        %v972 = vpop.f32.mrf.mxu0
        %v973 = vadd.f32 %v777, %v972
        %974 = vmatmul.bf16.gmra.mxu0 %v769
        %v975 = vpop.f32.mrf.mxu0
        %v976 = vadd.f32 %v777, %v975
        %v977 = vpop.f32.mrf.mxu0
        %v978 = vadd.f32 %v777, %v977
        %979 = vmatmul.bf16.gmra.mxu0 %v771
        %v980 = vpop.f32.mrf.mxu0
        %v981 = vadd.f32 %v777, %v980
        %v982 = vpop.f32.mrf.mxu0
        %v983 = vadd.f32 %v777, %v982
        %984 = vmatmul.bf16.gmra.mxu0 %v773
        %v985 = vpop.f32.mrf.mxu0
        %v986 = vadd.f32 %v777, %v985
        %v987 = vpop.f32.mrf.mxu0
        %v988 = vadd.f32 %v777, %v987
        %989 = vdwg.mxu0
        %990 = vmatpush.bf16.msra.mxu0 %v907
        %991 = vmatpush.bf16.msra.mxu0 %v905
        %992 = vmatpush.bf16.msra.mxu0 %v903
        %993 = vmatpush.bf16.msra.mxu0 %v901
        %994 = vmatpush.bf16.msra.mxu0 %v899
        %995 = vmatpush.bf16.msra.mxu0 %v897
        %996 = vmatpush.bf16.msra.mxu0 %v895
        %997 = vmatpush.bf16.msra.mxu0 %v893
        %998 = vmatmul.bf16.gmra.mxu0 %v760
        %v999 = vpop.f32.mrf.mxu0
        %v1000 = vadd.f32 %v951, %v999
        %v1001 = vpop.f32.mrf.mxu0
        %v1002 = vadd.f32 %v953, %v1001
        %1003 = vmatmul.bf16.gmra.mxu0 %v762
        %v1004 = vpop.f32.mrf.mxu0
        %v1005 = vadd.f32 %v956, %v1004
        %v1006 = vpop.f32.mrf.mxu0
        %v1007 = vadd.f32 %v958, %v1006
        %1008 = vmatmul.bf16.gmra.mxu0 %v764
        %v1009 = vpop.f32.mrf.mxu0
        %v1010 = vadd.f32 %v961, %v1009
        %v1011 = vpop.f32.mrf.mxu0
        %v1012 = vadd.f32 %v963, %v1011
        %1013 = vmatmul.bf16.gmra.mxu0 %v766
        %v1014 = vpop.f32.mrf.mxu0
        %v1015 = vadd.f32 %v966, %v1014
        %v1016 = vpop.f32.mrf.mxu0
        %v1017 = vadd.f32 %v968, %v1016
        %1018 = vmatmul.bf16.gmra.mxu0 %v768
        %v1019 = vpop.f32.mrf.mxu0
        %v1020 = vadd.f32 %v971, %v1019
        %v1021 = vpop.f32.mrf.mxu0
        %v1022 = vadd.f32 %v973, %v1021
        %1023 = vmatmul.bf16.gmra.mxu0 %v770
        %v1024 = vpop.f32.mrf.mxu0
        %v1025 = vadd.f32 %v976, %v1024
        %v1026 = vpop.f32.mrf.mxu0
        %v1027 = vadd.f32 %v978, %v1026
        %1028 = vmatmul.bf16.gmra.mxu0 %v772
        %v1029 = vpop.f32.mrf.mxu0
        %v1030 = vadd.f32 %v981, %v1029
        %v1031 = vpop.f32.mrf.mxu0
        %v1032 = vadd.f32 %v983, %v1031
        %1033 = vmatmul.bf16.gmra.mxu0 %v774
        %v1034 = vpop.f32.mrf.mxu0
        %v1035 = vadd.f32 %v986, %v1034
        %v1036 = vpop.f32.mrf.mxu0
        %v1037 = vadd.f32 %v988, %v1036
        %1038 = vdwg.mxu0
        %1039 = vmatpush.bf16.msra.mxu0 %v892
        %1040 = vmatpush.bf16.msra.mxu0 %v890
        %1041 = vmatpush.bf16.msra.mxu0 %v888
        %1042 = vmatpush.bf16.msra.mxu0 %v886
        %1043 = vmatpush.bf16.msra.mxu0 %v884
        %1044 = vmatpush.bf16.msra.mxu0 %v882
        %1045 = vmatpush.bf16.msra.mxu0 %v880
        %1046 = vmatpush.bf16.msra.mxu0 %v878
        %1047 = vmatmul.bf16.gmra.mxu0 %v759
        %v1048 = vpop.f32.mrf.mxu0
        %v1049 = vadd.f32 %v778, %v1048
        %v1050 = vpop.f32.mrf.mxu0
        %v1051 = vadd.f32 %v778, %v1050
        %1052 = vmatmul.bf16.gmra.mxu0 %v761
        %v1053 = vpop.f32.mrf.mxu0
        %v1054 = vadd.f32 %v778, %v1053
        %v1055 = vpop.f32.mrf.mxu0
        %v1056 = vadd.f32 %v778, %v1055
        %1057 = vmatmul.bf16.gmra.mxu0 %v763
        %v1058 = vpop.f32.mrf.mxu0
        %v1059 = vadd.f32 %v778, %v1058
        %v1060 = vpop.f32.mrf.mxu0
        %v1061 = vadd.f32 %v778, %v1060
        %1062 = vmatmul.bf16.gmra.mxu0 %v765
        %v1063 = vpop.f32.mrf.mxu0
        %v1064 = vadd.f32 %v778, %v1063
        %v1065 = vpop.f32.mrf.mxu0
        %v1066 = vadd.f32 %v778, %v1065
        %1067 = vmatmul.bf16.gmra.mxu0 %v767
        %v1068 = vpop.f32.mrf.mxu0
        %v1069 = vadd.f32 %v778, %v1068
        %v1070 = vpop.f32.mrf.mxu0
        %v1071 = vadd.f32 %v778, %v1070
        %1072 = vmatmul.bf16.gmra.mxu0 %v769
        %v1073 = vpop.f32.mrf.mxu0
        %v1074 = vadd.f32 %v778, %v1073
        %v1075 = vpop.f32.mrf.mxu0
        %v1076 = vadd.f32 %v778, %v1075
        %1077 = vmatmul.bf16.gmra.mxu0 %v771
        %v1078 = vpop.f32.mrf.mxu0
        %v1079 = vadd.f32 %v778, %v1078
        %v1080 = vpop.f32.mrf.mxu0
        %v1081 = vadd.f32 %v778, %v1080
        %1082 = vmatmul.bf16.gmra.mxu0 %v773
        %v1083 = vpop.f32.mrf.mxu0
        %v1084 = vadd.f32 %v778, %v1083
        %v1085 = vpop.f32.mrf.mxu0
        %v1086 = vadd.f32 %v778, %v1085
        %1087 = vdwg.mxu0
        %1088 = vmatpush.bf16.msra.mxu0 %v908
        %1089 = vmatpush.bf16.msra.mxu0 %v906
        %1090 = vmatpush.bf16.msra.mxu0 %v904
        %1091 = vmatpush.bf16.msra.mxu0 %v902
        %1092 = vmatpush.bf16.msra.mxu0 %v900
        %1093 = vmatpush.bf16.msra.mxu0 %v898
        %1094 = vmatpush.bf16.msra.mxu0 %v896
        %1095 = vmatpush.bf16.msra.mxu0 %v894
        %1096 = vmatmul.bf16.gmra.mxu0 %v760
        %v1097 = vpop.f32.mrf.mxu0
        %v1098 = vadd.f32 %v1049, %v1097
        %v1099 = vpop.f32.mrf.mxu0
        %v1100 = vadd.f32 %v1051, %v1099
        %1101 = vmatmul.bf16.gmra.mxu0 %v762
        %v1102 = vpop.f32.mrf.mxu0
        %v1103 = vadd.f32 %v1054, %v1102
        %v1104 = vpop.f32.mrf.mxu0
        %v1105 = vadd.f32 %v1056, %v1104
        %1106 = vmatmul.bf16.gmra.mxu0 %v764
        %v1107 = vpop.f32.mrf.mxu0
        %v1108 = vadd.f32 %v1059, %v1107
        %v1109 = vpop.f32.mrf.mxu0
        %v1110 = vadd.f32 %v1061, %v1109
        %1111 = vmatmul.bf16.gmra.mxu0 %v766
        %v1112 = vpop.f32.mrf.mxu0
        %v1113 = vadd.f32 %v1064, %v1112
        %v1114 = vpop.f32.mrf.mxu0
        %v1115 = vadd.f32 %v1066, %v1114
        %1116 = vmatmul.bf16.gmra.mxu0 %v768
        %v1117 = vpop.f32.mrf.mxu0
        %v1118 = vadd.f32 %v1069, %v1117
        %v1119 = vpop.f32.mrf.mxu0
        %v1120 = vadd.f32 %v1071, %v1119
        %1121 = vmatmul.bf16.gmra.mxu0 %v770
        %v1122 = vpop.f32.mrf.mxu0
        %v1123 = vadd.f32 %v1074, %v1122
        %v1124 = vpop.f32.mrf.mxu0
        %v1125 = vadd.f32 %v1076, %v1124
        %1126 = vmatmul.bf16.gmra.mxu0 %v772
        %v1127 = vpop.f32.mrf.mxu0
        %v1128 = vadd.f32 %v1079, %v1127
        %v1129 = vpop.f32.mrf.mxu0
        %v1130 = vadd.f32 %v1081, %v1129
        %1131 = vmatmul.bf16.gmra.mxu0 %v774
        %v1132 = vpop.f32.mrf.mxu0
        %v1133 = vadd.f32 %v1084, %v1132
        %v1134 = vpop.f32.mrf.mxu0
        %v1135 = vadd.f32 %v1086, %v1134
        %1136 = vdwg.mxu0
        %v1137 = vpack.c.bf16 %v629, %v627
        %v1138 = vpack.c.bf16 %v630, %v628
        %v1139 = vld [vmem:[%s574] sm:$0xf]
        %v1141 = vperm.slane %v1139, 0
        %v1142 = vperm.slane %v1139, 1
        %v1143 = vperm.slane %v1139, 2
        %v1144 = vperm.slane %v1139, 3
        %v1213 = vunpack.c.l.b16 %v663
        %v1214 = vunpack.c.h.b16 %v663
        %v1215 = vunpack.c.l.b16 %v664
        %v1216 = vunpack.c.h.b16 %v664
        %v1217 = vunpack.c.l.b16 %v665
        %v1218 = vunpack.c.h.b16 %v665
        %v1219 = vunpack.c.l.b16 %v666
        %v1220 = vunpack.c.h.b16 %v666
        %v1221 = vunpack.c.l.b16 %v667
        %v1222 = vunpack.c.h.b16 %v667
        %v1223 = vunpack.c.l.b16 %v668
        %v1224 = vunpack.c.h.b16 %v668
        %v1225 = vunpack.c.l.b16 %v669
        %v1226 = vunpack.c.h.b16 %v669
        %v1227 = vunpack.c.l.b16 %v670
        %v1228 = vunpack.c.h.b16 %v670
        %v1229 = vunpack.c.l.b16 %v671
        %v1230 = vunpack.c.h.b16 %v671
        %v1231 = vunpack.c.l.b16 %v672
        %v1232 = vunpack.c.h.b16 %v672
        %v1233 = vunpack.c.l.b16 %v673
        %v1234 = vunpack.c.h.b16 %v673
        %v1235 = vunpack.c.l.b16 %v674
        %v1236 = vunpack.c.h.b16 %v674
        %v1237 = vunpack.c.l.b16 %v675
        %v1238 = vunpack.c.h.b16 %v675
        %v1239 = vunpack.c.l.b16 %v676
        %v1240 = vunpack.c.h.b16 %v676
        %v1241 = vunpack.c.l.b16 %v677
        %v1242 = vunpack.c.h.b16 %v677
        %v1243 = vunpack.c.l.b16 %v678
        %v1244 = vunpack.c.h.b16 %v678
        %v1245 = vunpack.c.l.b16 %v679
        %v1246 = vunpack.c.h.b16 %v679
        %v1247 = vunpack.c.l.b16 %v680
        %v1248 = vunpack.c.h.b16 %v680
        %v1249 = vunpack.c.l.b16 %v681
        %v1250 = vunpack.c.h.b16 %v681
        %v1251 = vunpack.c.l.b16 %v682
        %v1252 = vunpack.c.h.b16 %v682
        %v1253 = vunpack.c.l.b16 %v683
        %v1254 = vunpack.c.h.b16 %v683
        %v1255 = vunpack.c.l.b16 %v684
        %v1256 = vunpack.c.h.b16 %v684
        %v1257 = vunpack.c.l.b16 %v685
        %v1258 = vunpack.c.h.b16 %v685
        %v1259 = vunpack.c.l.b16 %v686
        %v1260 = vunpack.c.h.b16 %v686
        %v1261 = vunpack.c.l.b16 %v687
        %v1262 = vunpack.c.h.b16 %v687
        %v1263 = vunpack.c.l.b16 %v688
        %v1264 = vunpack.c.h.b16 %v688
        %v1265 = vunpack.c.l.b16 %v689
        %v1266 = vunpack.c.h.b16 %v689
        %v1267 = vunpack.c.l.b16 %v690
        %v1268 = vunpack.c.h.b16 %v690
        %v1269 = vunpack.c.l.b16 %v691
        %v1270 = vunpack.c.h.b16 %v691
        %v1271 = vunpack.c.l.b16 %v692
        %v1272 = vunpack.c.h.b16 %v692
        %v1273 = vunpack.c.l.b16 %v693
        %v1274 = vunpack.c.h.b16 %v693
        %v1275 = vunpack.c.l.b16 %v694
        %v1276 = vunpack.c.h.b16 %v694
        %v1277 = vunpack.c.l.b16 %v695
        %v1278 = vunpack.c.h.b16 %v695
        %v1279 = vunpack.c.l.b16 %v696
        %v1280 = vunpack.c.h.b16 %v696
        %v1281 = vunpack.c.l.b16 %v697
        %v1282 = vunpack.c.h.b16 %v697
        %v1283 = vunpack.c.l.b16 %v698
        %v1284 = vunpack.c.h.b16 %v698
        %v1285 = vunpack.c.l.b16 %v699
        %v1286 = vunpack.c.h.b16 %v699
        %v1287 = vunpack.c.l.b16 %v700
        %v1288 = vunpack.c.h.b16 %v700
        %v1289 = vunpack.c.l.b16 %v701
        %v1290 = vunpack.c.h.b16 %v701
        %v1291 = vunpack.c.l.b16 %v702
        %v1292 = vunpack.c.h.b16 %v702
        %v1293 = vunpack.c.l.b16 %v703
        %v1294 = vunpack.c.h.b16 %v703
        %v1295 = vunpack.c.l.b16 %v704
        %v1296 = vunpack.c.h.b16 %v704
        %v1297 = vunpack.c.l.b16 %v705
        %v1298 = vunpack.c.h.b16 %v705
        %v1299 = vunpack.c.l.b16 %v706
        %v1300 = vunpack.c.h.b16 %v706
        %v1301 = vunpack.c.l.b16 %v707
        %v1302 = vunpack.c.h.b16 %v707
        %v1303 = vunpack.c.l.b16 %v708
        %v1304 = vunpack.c.h.b16 %v708
        %v1305 = vunpack.c.l.b16 %v709
        %v1306 = vunpack.c.h.b16 %v709
        %v1307 = vunpack.c.l.b16 %v710
        %v1308 = vunpack.c.h.b16 %v710
        %v1309 = vunpack.c.l.b16 %v711
        %v1310 = vunpack.c.h.b16 %v711
        %v1311 = vunpack.c.l.b16 %v712
        %v1312 = vunpack.c.h.b16 %v712
        %v1313 = vunpack.c.l.b16 %v713
        %v1314 = vunpack.c.h.b16 %v713
        %v1315 = vunpack.c.l.b16 %v714
        %v1316 = vunpack.c.h.b16 %v714
        %v1317 = vunpack.c.l.b16 %v715
        %v1318 = vunpack.c.h.b16 %v715
        %v1319 = vunpack.c.l.b16 %v716
        %v1320 = vunpack.c.h.b16 %v716
        %v1321 = vunpack.c.l.b16 %v717
        %v1322 = vunpack.c.h.b16 %v717
        %v1323 = vunpack.c.l.b16 %v718
        %v1324 = vunpack.c.h.b16 %v718
        %v1325 = vunpack.c.l.b16 %v719
        %v1326 = vunpack.c.h.b16 %v719
        %v1327 = vunpack.c.l.b16 %v720
        %v1328 = vunpack.c.h.b16 %v720
        %v1329 = vunpack.c.l.b16 %v721
        %v1330 = vunpack.c.h.b16 %v721
        %v1331 = vunpack.c.l.b16 %v722
        %v1332 = vunpack.c.h.b16 %v722
        %v1333 = vunpack.c.l.b16 %v723
        %v1334 = vunpack.c.h.b16 %v723
        %v1335 = vunpack.c.l.b16 %v724
        %v1336 = vunpack.c.h.b16 %v724
        %v1337 = vunpack.c.l.b16 %v725
        %v1338 = vunpack.c.h.b16 %v725
        %v1339 = vunpack.c.l.b16 %v726
        %v1340 = vunpack.c.h.b16 %v726
        %v1341 = vpack.c.b16 %v1217, %v1213
        %v1342 = vpack.c.b16 %v1218, %v1214
        %v1343 = vpack.c.b16 %v1219, %v1215
        %v1344 = vpack.c.b16 %v1220, %v1216
        %v1345 = vpack.c.b16 %v1225, %v1221
        %v1346 = vpack.c.b16 %v1226, %v1222
        %v1347 = vpack.c.b16 %v1227, %v1223
        %v1348 = vpack.c.b16 %v1228, %v1224
        %v1349 = vpack.c.b16 %v1233, %v1229
        %v1350 = vpack.c.b16 %v1234, %v1230
        %v1351 = vpack.c.b16 %v1235, %v1231
        %v1352 = vpack.c.b16 %v1236, %v1232
        %v1353 = vpack.c.b16 %v1241, %v1237
        %v1354 = vpack.c.b16 %v1242, %v1238
        %v1355 = vpack.c.b16 %v1243, %v1239
        %v1356 = vpack.c.b16 %v1244, %v1240
        %v1357 = vpack.c.b16 %v1249, %v1245
        %v1358 = vpack.c.b16 %v1250, %v1246
        %v1359 = vpack.c.b16 %v1251, %v1247
        %v1360 = vpack.c.b16 %v1252, %v1248
        %v1361 = vpack.c.b16 %v1257, %v1253
        %v1362 = vpack.c.b16 %v1258, %v1254
        %v1363 = vpack.c.b16 %v1259, %v1255
        %v1364 = vpack.c.b16 %v1260, %v1256
        %v1365 = vpack.c.b16 %v1265, %v1261
        %v1366 = vpack.c.b16 %v1266, %v1262
        %v1367 = vpack.c.b16 %v1267, %v1263
        %v1368 = vpack.c.b16 %v1268, %v1264
        %v1369 = vpack.c.b16 %v1273, %v1269
        %v1370 = vpack.c.b16 %v1274, %v1270
        %v1371 = vpack.c.b16 %v1275, %v1271
        %v1372 = vpack.c.b16 %v1276, %v1272
        %v1373 = vpack.c.b16 %v1281, %v1277
        %v1374 = vpack.c.b16 %v1282, %v1278
        %v1375 = vpack.c.b16 %v1283, %v1279
        %v1376 = vpack.c.b16 %v1284, %v1280
        %v1377 = vpack.c.b16 %v1289, %v1285
        %v1378 = vpack.c.b16 %v1290, %v1286
        %v1379 = vpack.c.b16 %v1291, %v1287
        %v1380 = vpack.c.b16 %v1292, %v1288
        %v1381 = vpack.c.b16 %v1297, %v1293
        %v1382 = vpack.c.b16 %v1298, %v1294
        %v1383 = vpack.c.b16 %v1299, %v1295
        %v1384 = vpack.c.b16 %v1300, %v1296
        %v1385 = vpack.c.b16 %v1305, %v1301
        %v1386 = vpack.c.b16 %v1306, %v1302
        %v1387 = vpack.c.b16 %v1307, %v1303
        %v1388 = vpack.c.b16 %v1308, %v1304
        %v1389 = vpack.c.b16 %v1313, %v1309
        %v1390 = vpack.c.b16 %v1314, %v1310
        %v1391 = vpack.c.b16 %v1315, %v1311
        %v1392 = vpack.c.b16 %v1316, %v1312
        %v1393 = vpack.c.b16 %v1321, %v1317
        %v1394 = vpack.c.b16 %v1322, %v1318
        %v1395 = vpack.c.b16 %v1323, %v1319
        %v1396 = vpack.c.b16 %v1324, %v1320
        %v1397 = vpack.c.b16 %v1329, %v1325
        %v1398 = vpack.c.b16 %v1330, %v1326
        %v1399 = vpack.c.b16 %v1331, %v1327
        %v1400 = vpack.c.b16 %v1332, %v1328
        %v1401 = vpack.c.b16 %v1337, %v1333
        %v1402 = vpack.c.b16 %v1338, %v1334
        %v1403 = vpack.c.b16 %v1339, %v1335
        %v1404 = vpack.c.b16 %v1340, %v1336
        %1469 = vmatpush.bf16.msra.mxu0 %v1369
        %1470 = vmatpush.bf16.msra.mxu0 %v1365
        %1471 = vmatpush.bf16.msra.mxu0 %v1361
        %1472 = vmatpush.bf16.msra.mxu0 %v1357
        %1473 = vmatpush.bf16.msra.mxu0 %v1353
        %1474 = vmatpush.bf16.msra.mxu0 %v1349
        %1475 = vmatpush.bf16.msra.mxu0 %v1345
        %1476 = vmatpush.bf16.msra.mxu0 %v1341
        %1477 = vmatmul.bf16.gmra.mxu0 %v1137
        %v1478 = vpop.f32.mrf.mxu0
        %v1479 = vadd.f32 %v1141, %v1478
        %v1480 = vpop.f32.mrf.mxu0
        %v1481 = vadd.f32 %v1141, %v1480
        %1482 = vdwg.mxu0
        %1483 = vmatpush.bf16.msra.mxu0 %v1401
        %1484 = vmatpush.bf16.msra.mxu0 %v1397
        %1485 = vmatpush.bf16.msra.mxu0 %v1393
        %1486 = vmatpush.bf16.msra.mxu0 %v1389
        %1487 = vmatpush.bf16.msra.mxu0 %v1385
        %1488 = vmatpush.bf16.msra.mxu0 %v1381
        %1489 = vmatpush.bf16.msra.mxu0 %v1377
        %1490 = vmatpush.bf16.msra.mxu0 %v1373
        %1491 = vmatmul.bf16.gmra.mxu0 %v1138
        %v1492 = vpop.f32.mrf.mxu0
        %v1493 = vadd.f32 %v1479, %v1492
        %v1494 = vpop.f32.mrf.mxu0
        %v1495 = vadd.f32 %v1481, %v1494
        %1496 = vdwg.mxu0
        %1497 = vmatpush.bf16.msra.mxu0 %v1370
        %1498 = vmatpush.bf16.msra.mxu0 %v1366
        %1499 = vmatpush.bf16.msra.mxu0 %v1362
        %1500 = vmatpush.bf16.msra.mxu0 %v1358
        %1501 = vmatpush.bf16.msra.mxu0 %v1354
        %1502 = vmatpush.bf16.msra.mxu0 %v1350
        %1503 = vmatpush.bf16.msra.mxu0 %v1346
        %1504 = vmatpush.bf16.msra.mxu0 %v1342
        %1505 = vmatmul.bf16.gmra.mxu0 %v1137
        %v1506 = vpop.f32.mrf.mxu0
        %v1507 = vadd.f32 %v1142, %v1506
        %v1508 = vpop.f32.mrf.mxu0
        %v1509 = vadd.f32 %v1142, %v1508
        %1510 = vdwg.mxu0
        %1511 = vmatpush.bf16.msra.mxu0 %v1402
        %1512 = vmatpush.bf16.msra.mxu0 %v1398
        %1513 = vmatpush.bf16.msra.mxu0 %v1394
        %1514 = vmatpush.bf16.msra.mxu0 %v1390
        %1515 = vmatpush.bf16.msra.mxu0 %v1386
        %1516 = vmatpush.bf16.msra.mxu0 %v1382
        %1517 = vmatpush.bf16.msra.mxu0 %v1378
        %1518 = vmatpush.bf16.msra.mxu0 %v1374
        %1519 = vmatmul.bf16.gmra.mxu0 %v1138
        %v1520 = vpop.f32.mrf.mxu0
        %v1521 = vadd.f32 %v1507, %v1520
        %v1522 = vpop.f32.mrf.mxu0
        %v1523 = vadd.f32 %v1509, %v1522
        %1524 = vdwg.mxu0
        %1525 = vmatpush.bf16.msra.mxu0 %v1371
        %1526 = vmatpush.bf16.msra.mxu0 %v1367
        %1527 = vmatpush.bf16.msra.mxu0 %v1363
        %1528 = vmatpush.bf16.msra.mxu0 %v1359
        %1529 = vmatpush.bf16.msra.mxu0 %v1355
        %1530 = vmatpush.bf16.msra.mxu0 %v1351
        %1531 = vmatpush.bf16.msra.mxu0 %v1347
        %1532 = vmatpush.bf16.msra.mxu0 %v1343
        %1533 = vmatmul.bf16.gmra.mxu0 %v1137
        %v1534 = vpop.f32.mrf.mxu0
        %v1535 = vadd.f32 %v1143, %v1534
        %v1536 = vpop.f32.mrf.mxu0
        %v1537 = vadd.f32 %v1143, %v1536
        %1538 = vdwg.mxu0
        %1539 = vmatpush.bf16.msra.mxu0 %v1403
        %1540 = vmatpush.bf16.msra.mxu0 %v1399
        %1541 = vmatpush.bf16.msra.mxu0 %v1395
        %1542 = vmatpush.bf16.msra.mxu0 %v1391
        %1543 = vmatpush.bf16.msra.mxu0 %v1387
        %1544 = vmatpush.bf16.msra.mxu0 %v1383
        %1545 = vmatpush.bf16.msra.mxu0 %v1379
        %1546 = vmatpush.bf16.msra.mxu0 %v1375
        %1547 = vmatmul.bf16.gmra.mxu0 %v1138
        %v1548 = vpop.f32.mrf.mxu0
        %v1549 = vadd.f32 %v1535, %v1548
        %v1550 = vpop.f32.mrf.mxu0
        %v1551 = vadd.f32 %v1537, %v1550
        %1552 = vdwg.mxu0
        %1553 = vmatpush.bf16.msra.mxu0 %v1372
        %1554 = vmatpush.bf16.msra.mxu0 %v1368
        %1555 = vmatpush.bf16.msra.mxu0 %v1364
        %1556 = vmatpush.bf16.msra.mxu0 %v1360
        %1557 = vmatpush.bf16.msra.mxu0 %v1356
        %1558 = vmatpush.bf16.msra.mxu0 %v1352
        %1559 = vmatpush.bf16.msra.mxu0 %v1348
        %1560 = vmatpush.bf16.msra.mxu0 %v1344
        %1561 = vmatmul.bf16.gmra.mxu0 %v1137
        %v1562 = vpop.f32.mrf.mxu0
        %v1563 = vadd.f32 %v1144, %v1562
        %v1564 = vpop.f32.mrf.mxu0
        %v1565 = vadd.f32 %v1144, %v1564
        %1566 = vdwg.mxu0
        %1567 = vmatpush.bf16.msra.mxu0 %v1404
        %1568 = vmatpush.bf16.msra.mxu0 %v1400
        %1569 = vmatpush.bf16.msra.mxu0 %v1396
        %1570 = vmatpush.bf16.msra.mxu0 %v1392
        %1571 = vmatpush.bf16.msra.mxu0 %v1388
        %1572 = vmatpush.bf16.msra.mxu0 %v1384
        %1573 = vmatpush.bf16.msra.mxu0 %v1380
        %1574 = vmatpush.bf16.msra.mxu0 %v1376
        %1575 = vmatmul.bf16.gmra.mxu0 %v1138
        %v1576 = vpop.f32.mrf.mxu0
        %v1577 = vadd.f32 %v1563, %v1576
        %v1578 = vpop.f32.mrf.mxu0
        %v1579 = vadd.f32 %v1565, %v1578
        %1580 = vdwg.mxu0
        %1581 = vmatpush.xpose.msra.mxu0 0.0
        %1582 = vmatpush.xpose.msra.mxu0 0.0
        %1583 = vmatpush.xpose.msra.mxu0 0.0
        %1584 = vmatpush.xpose.msra.mxu0 0.0
        %1585 = vmatpush.xpose.msra.mxu0 0.0
        %1586 = vmatpush.xpose.msra.mxu0 0.0
        %1587 = vmatpush.xpose.msra.mxu0 0.0
        %1588 = vmatpush.xpose.msra.mxu0 0.0
        %1589 = vmatpush.xpose.msra.mxu0 0.0
        %1590 = vmatpush.xpose.msra.mxu0 0.0
        %1591 = vmatpush.xpose.msra.mxu0 0.0
        %1592 = vmatpush.xpose.msra.mxu0 0.0
        %1593 = vmatpush.xpose.msra.mxu0 0.0
        %1594 = vmatpush.xpose.msra.mxu0 0.0
        %1595 = vmatpush.xpose.msra.mxu0 %v1495
        %1596 = vmatpush.xpose.msra.mxu0 %v1493
        %1597 = vmatmul.f32.gmra.mxu0 %v1000
        %v1598 = vpop.f32.mrf.mxu0
        %v1599 = vadd.f32 0.0, %v1598
        %1600 = vmatmul.f32.gmra.mxu0 %v1002
        %v1601 = vpop.f32.mrf.mxu0
        %v1602 = vadd.f32 0.0, %v1601
        %1603 = vmatmul.f32.gmra.mxu0 %v1005
        %v1604 = vpop.f32.mrf.mxu0
        %v1605 = vadd.f32 0.0, %v1604
        %1606 = vmatmul.f32.gmra.mxu0 %v1007
        %v1607 = vpop.f32.mrf.mxu0
        %v1608 = vadd.f32 0.0, %v1607
        %1609 = vmatmul.f32.gmra.mxu0 %v1010
        %v1610 = vpop.f32.mrf.mxu0
        %v1611 = vadd.f32 0.0, %v1610
        %1612 = vmatmul.f32.gmra.mxu0 %v1012
        %v1613 = vpop.f32.mrf.mxu0
        %v1614 = vadd.f32 0.0, %v1613
        %1615 = vmatmul.f32.gmra.mxu0 %v1015
        %v1616 = vpop.f32.mrf.mxu0
        %v1617 = vadd.f32 0.0, %v1616
        %1618 = vmatmul.f32.gmra.mxu0 %v1017
        %v1619 = vpop.f32.mrf.mxu0
        %v1620 = vadd.f32 0.0, %v1619
        %1621 = vmatmul.f32.gmra.mxu0 %v1020
        %v1622 = vpop.f32.mrf.mxu0
        %v1623 = vadd.f32 0.0, %v1622
        %1624 = vmatmul.f32.gmra.mxu0 %v1022
        %v1625 = vpop.f32.mrf.mxu0
        %v1626 = vadd.f32 0.0, %v1625
        %1627 = vmatmul.f32.gmra.mxu0 %v1025
        %v1628 = vpop.f32.mrf.mxu0
        %v1629 = vadd.f32 0.0, %v1628
        %1630 = vmatmul.f32.gmra.mxu0 %v1027
        %v1631 = vpop.f32.mrf.mxu0
        %v1632 = vadd.f32 0.0, %v1631
        %1633 = vmatmul.f32.gmra.mxu0 %v1030
        %v1634 = vpop.f32.mrf.mxu0
        %v1635 = vadd.f32 0.0, %v1634
        %1636 = vmatmul.f32.gmra.mxu0 %v1032
        %v1637 = vpop.f32.mrf.mxu0
        %v1638 = vadd.f32 0.0, %v1637
        %1639 = vmatmul.f32.gmra.mxu0 %v1035
        %v1640 = vpop.f32.mrf.mxu0
        %v1641 = vadd.f32 0.0, %v1640
        %1642 = vmatmul.f32.gmra.mxu0 %v1037
        %v1643 = vpop.f32.mrf.mxu0
        %v1644 = vadd.f32 0.0, %v1643
        %1645 = vdwg.mxu0
        %1646 = vmatpush.xpose.msra.mxu0 0.0
        %1647 = vmatpush.xpose.msra.mxu0 0.0
        %1648 = vmatpush.xpose.msra.mxu0 0.0
        %1649 = vmatpush.xpose.msra.mxu0 0.0
        %1650 = vmatpush.xpose.msra.mxu0 0.0
        %1651 = vmatpush.xpose.msra.mxu0 0.0
        %1652 = vmatpush.xpose.msra.mxu0 0.0
        %1653 = vmatpush.xpose.msra.mxu0 0.0
        %1654 = vmatpush.xpose.msra.mxu0 0.0
        %1655 = vmatpush.xpose.msra.mxu0 0.0
        %1656 = vmatpush.xpose.msra.mxu0 0.0
        %1657 = vmatpush.xpose.msra.mxu0 0.0
        %1658 = vmatpush.xpose.msra.mxu0 0.0
        %1659 = vmatpush.xpose.msra.mxu0 0.0
        %1660 = vmatpush.xpose.msra.mxu0 %v1523
        %1661 = vmatpush.xpose.msra.mxu0 %v1521
        %1662 = vmatmul.f32.gmra.mxu0 %v1098
        %v1663 = vpop.f32.mrf.mxu0
        %v1664 = vadd.f32 %v1599, %v1663
        %1665 = vmatmul.f32.gmra.mxu0 %v1100
        %v1666 = vpop.f32.mrf.mxu0
        %v1667 = vadd.f32 %v1602, %v1666
        %1668 = vmatmul.f32.gmra.mxu0 %v1103
        %v1669 = vpop.f32.mrf.mxu0
        %v1670 = vadd.f32 %v1605, %v1669
        %1671 = vmatmul.f32.gmra.mxu0 %v1105
        %v1672 = vpop.f32.mrf.mxu0
        %v1673 = vadd.f32 %v1608, %v1672
        %1674 = vmatmul.f32.gmra.mxu0 %v1108
        %v1675 = vpop.f32.mrf.mxu0
        %v1676 = vadd.f32 %v1611, %v1675
        %1677 = vmatmul.f32.gmra.mxu0 %v1110
        %v1678 = vpop.f32.mrf.mxu0
        %v1679 = vadd.f32 %v1614, %v1678
        %1680 = vmatmul.f32.gmra.mxu0 %v1113
        %v1681 = vpop.f32.mrf.mxu0
        %v1682 = vadd.f32 %v1617, %v1681
        %1683 = vmatmul.f32.gmra.mxu0 %v1115
        %v1684 = vpop.f32.mrf.mxu0
        %v1685 = vadd.f32 %v1620, %v1684
        %1686 = vmatmul.f32.gmra.mxu0 %v1118
        %v1687 = vpop.f32.mrf.mxu0
        %v1688 = vadd.f32 %v1623, %v1687
        %1689 = vmatmul.f32.gmra.mxu0 %v1120
        %v1690 = vpop.f32.mrf.mxu0
        %v1691 = vadd.f32 %v1626, %v1690
        %1692 = vmatmul.f32.gmra.mxu0 %v1123
        %v1693 = vpop.f32.mrf.mxu0
        %v1694 = vadd.f32 %v1629, %v1693
        %1695 = vmatmul.f32.gmra.mxu0 %v1125
        %v1696 = vpop.f32.mrf.mxu0
        %v1697 = vadd.f32 %v1632, %v1696
        %1698 = vmatmul.f32.gmra.mxu0 %v1128
        %v1699 = vpop.f32.mrf.mxu0
        %v1700 = vadd.f32 %v1635, %v1699
        %1701 = vmatmul.f32.gmra.mxu0 %v1130
        %v1702 = vpop.f32.mrf.mxu0
        %v1703 = vadd.f32 %v1638, %v1702
        %1704 = vmatmul.f32.gmra.mxu0 %v1133
        %v1705 = vpop.f32.mrf.mxu0
        %v1706 = vadd.f32 %v1641, %v1705
        %1707 = vmatmul.f32.gmra.mxu0 %v1135
        %v1708 = vpop.f32.mrf.mxu0
        %v1709 = vadd.f32 %v1644, %v1708
        %1710 = vdwg.mxu0
        %v1711 = vmul.f32 %v1664, 0.0625
        %v1712 = vmul.f32 %v1667, 0.0625
        %v1713 = vmul.f32 %v1670, 0.0625
        %v1714 = vmul.f32 %v1673, 0.0625
        %v1715 = vmul.f32 %v1676, 0.0625
        %v1716 = vmul.f32 %v1679, 0.0625
        %v1717 = vmul.f32 %v1682, 0.0625
        %v1718 = vmul.f32 %v1685, 0.0625
        %v1719 = vmul.f32 %v1688, 0.0625
        %v1720 = vmul.f32 %v1691, 0.0625
        %v1721 = vmul.f32 %v1694, 0.0625
        %v1722 = vmul.f32 %v1697, 0.0625
        %v1723 = vmul.f32 %v1700, 0.0625
        %v1724 = vmul.f32 %v1703, 0.0625
        %v1725 = vmul.f32 %v1706, 0.0625
        %v1726 = vmul.f32 %v1709, 0.0625
        %v1727 = vlaneseq
        %v1728 = vand.u32 %v1727, 127
        %vm1729 = vcmp.lt.s32.totalorder %v1728, 6
        %v1730 = vsel %vm1729, %v1711, -1e+30
        %v1731 = vsel %vm1729, %v1712, -1e+30
        %v1732 = vsel %vm1729, %v1713, -1e+30
        %v1733 = vsel %vm1729, %v1714, -1e+30
        %v1734 = vsel %vm1729, %v1715, -1e+30
        %v1735 = vsel %vm1729, %v1716, -1e+30
        %v1736 = vsel %vm1729, %v1717, -1e+30
        %v1737 = vsel %vm1729, %v1718, -1e+30
        %v1738 = vsel %vm1729, %v1719, -1e+30
        %v1739 = vsel %vm1729, %v1720, -1e+30
        %v1740 = vsel %vm1729, %v1721, -1e+30
        %v1741 = vsel %vm1729, %v1722, -1e+30
        %v1742 = vsel %vm1729, %v1723, -1e+30
        %v1743 = vsel %vm1729, %v1724, -1e+30
        %v1744 = vsel %vm1729, %v1725, -1e+30
        %v1745 = vsel %vm1729, %v1726, -1e+30
        %vm1746 = vcmask 130048
        %v1747 = vsel %vm1746, %v1730, -inf
        %1748 = vmax.xlane.f32.xlu0 %v1747
        %v1749 = vpop.xlane.xlu0 %1748
        %v1750 = vsel %vm1746, %v1731, -inf
        %1751 = vmax.xlane.f32.xlu0 %v1750
        %v1752 = vpop.xlane.xlu0 %1751
        %v1753 = vsel %vm1746, %v1732, -inf
        %1754 = vmax.xlane.f32.xlu0 %v1753
        %v1755 = vpop.xlane.xlu0 %1754
        %v1756 = vsel %vm1746, %v1733, -inf
        %1757 = vmax.xlane.f32.xlu0 %v1756
        %v1758 = vpop.xlane.xlu0 %1757
        %v1759 = vsel %vm1746, %v1734, -inf
        %1760 = vmax.xlane.f32.xlu0 %v1759
        %v1761 = vpop.xlane.xlu0 %1760
        %v1762 = vsel %vm1746, %v1735, -inf
        %1763 = vmax.xlane.f32.xlu0 %v1762
        %v1764 = vpop.xlane.xlu0 %1763
        %v1765 = vsel %vm1746, %v1736, -inf
        %1766 = vmax.xlane.f32.xlu0 %v1765
        %v1767 = vpop.xlane.xlu0 %1766
        %v1768 = vsel %vm1746, %v1737, -inf
        %1769 = vmax.xlane.f32.xlu0 %v1768
        %v1770 = vpop.xlane.xlu0 %1769
        %v1771 = vsel %vm1746, %v1738, -inf
        %1772 = vmax.xlane.f32.xlu0 %v1771
        %v1773 = vpop.xlane.xlu0 %1772
        %v1774 = vsel %vm1746, %v1739, -inf
        %1775 = vmax.xlane.f32.xlu0 %v1774
        %v1776 = vpop.xlane.xlu0 %1775
        %v1777 = vsel %vm1746, %v1740, -inf
        %1778 = vmax.xlane.f32.xlu0 %v1777
        %v1779 = vpop.xlane.xlu0 %1778
        %v1780 = vsel %vm1746, %v1741, -inf
        %1781 = vmax.xlane.f32.xlu0 %v1780
        %v1782 = vpop.xlane.xlu0 %1781
        %v1783 = vsel %vm1746, %v1742, -inf
        %1784 = vmax.xlane.f32.xlu0 %v1783
        %v1785 = vpop.xlane.xlu0 %1784
        %v1786 = vsel %vm1746, %v1743, -inf
        %1787 = vmax.xlane.f32.xlu0 %v1786
        %v1788 = vpop.xlane.xlu0 %1787
        %v1789 = vsel %vm1746, %v1744, -inf
        %1790 = vmax.xlane.f32.xlu0 %v1789
        %v1791 = vpop.xlane.xlu0 %1790
        %v1792 = vsel %vm1746, %v1745, -inf
        %1793 = vmax.xlane.f32.xlu0 %v1792
        %v1794 = vpop.xlane.xlu0 %1793
        %v1795 = vsub.f32 %v1730, %v1749
        %v1796 = vsub.f32 %v1731, %v1752
        %v1797 = vsub.f32 %v1732, %v1755
        %v1798 = vsub.f32 %v1733, %v1758
        %v1799 = vsub.f32 %v1734, %v1761
        %v1800 = vsub.f32 %v1735, %v1764
        %v1801 = vsub.f32 %v1736, %v1767
        %v1802 = vsub.f32 %v1737, %v1770
        %v1803 = vsub.f32 %v1738, %v1773
        %v1804 = vsub.f32 %v1739, %v1776
        %v1805 = vsub.f32 %v1740, %v1779
        %v1806 = vsub.f32 %v1741, %v1782
        %v1807 = vsub.f32 %v1742, %v1785
        %v1808 = vsub.f32 %v1743, %v1788
        %v1809 = vsub.f32 %v1744, %v1791
        %v1810 = vsub.f32 %v1745, %v1794
        %v1811 = vmul.f32 %v1795, 1.442695
        %v1812 = vpow.pop %v1811
        %v1813 = vmul.f32 %v1796, 1.442695
        %v1814 = vpow.pop %v1813
        %v1815 = vmul.f32 %v1797, 1.442695
        %v1816 = vpow.pop %v1815
        %v1817 = vmul.f32 %v1798, 1.442695
        %v1818 = vpow.pop %v1817
        %v1819 = vmul.f32 %v1799, 1.442695
        %v1820 = vpow.pop %v1819
        %v1821 = vmul.f32 %v1800, 1.442695
        %v1822 = vpow.pop %v1821
        %v1823 = vmul.f32 %v1801, 1.442695
        %v1824 = vpow.pop %v1823
        %v1825 = vmul.f32 %v1802, 1.442695
        %v1826 = vpow.pop %v1825
        %v1827 = vmul.f32 %v1803, 1.442695
        %v1828 = vpow.pop %v1827
        %v1829 = vmul.f32 %v1804, 1.442695
        %v1830 = vpow.pop %v1829
        %v1831 = vmul.f32 %v1805, 1.442695
        %v1832 = vpow.pop %v1831
        %v1833 = vmul.f32 %v1806, 1.442695
        %v1834 = vpow.pop %v1833
        %v1835 = vmul.f32 %v1807, 1.442695
        %v1836 = vpow.pop %v1835
        %v1837 = vmul.f32 %v1808, 1.442695
        %v1838 = vpow.pop %v1837
        %v1839 = vmul.f32 %v1809, 1.442695
        %v1840 = vpow.pop %v1839
        %v1841 = vmul.f32 %v1810, 1.442695
        %v1842 = vpow.pop %v1841
        %v1843 = vsel %vm1746, %v1812, 0.0
        %1844 = vadd.xlane.f32.xlu0 %v1843
        %v1845 = vpop.xlane.xlu0 %1844
        %v1846 = vsel %vm1746, %v1814, 0.0
        %1847 = vadd.xlane.f32.xlu0 %v1846
        %v1848 = vpop.xlane.xlu0 %1847
        %v1849 = vsel %vm1746, %v1816, 0.0
        %1850 = vadd.xlane.f32.xlu0 %v1849
        %v1851 = vpop.xlane.xlu0 %1850
        %v1852 = vsel %vm1746, %v1818, 0.0
        %1853 = vadd.xlane.f32.xlu0 %v1852
        %v1854 = vpop.xlane.xlu0 %1853
        %v1855 = vsel %vm1746, %v1820, 0.0
        %1856 = vadd.xlane.f32.xlu0 %v1855
        %v1857 = vpop.xlane.xlu0 %1856
        %v1858 = vsel %vm1746, %v1822, 0.0
        %1859 = vadd.xlane.f32.xlu0 %v1858
        %v1860 = vpop.xlane.xlu0 %1859
        %v1861 = vsel %vm1746, %v1824, 0.0
        %1862 = vadd.xlane.f32.xlu0 %v1861
        %v1863 = vpop.xlane.xlu0 %1862
        %v1864 = vsel %vm1746, %v1826, 0.0
        %1865 = vadd.xlane.f32.xlu0 %v1864
        %v1866 = vpop.xlane.xlu0 %1865
        %v1867 = vsel %vm1746, %v1828, 0.0
        %1868 = vadd.xlane.f32.xlu0 %v1867
        %v1869 = vpop.xlane.xlu0 %1868
        %v1870 = vsel %vm1746, %v1830, 0.0
        %1871 = vadd.xlane.f32.xlu0 %v1870
        %v1872 = vpop.xlane.xlu0 %1871
        %v1873 = vsel %vm1746, %v1832, 0.0
        %1874 = vadd.xlane.f32.xlu0 %v1873
        %v1875 = vpop.xlane.xlu0 %1874
        %v1876 = vsel %vm1746, %v1834, 0.0
        %1877 = vadd.xlane.f32.xlu0 %v1876
        %v1878 = vpop.xlane.xlu0 %1877
        %v1879 = vsel %vm1746, %v1836, 0.0
        %1880 = vadd.xlane.f32.xlu0 %v1879
        %v1881 = vpop.xlane.xlu0 %1880
        %v1882 = vsel %vm1746, %v1838, 0.0
        %1883 = vadd.xlane.f32.xlu0 %v1882
        %v1884 = vpop.xlane.xlu0 %1883
        %v1885 = vsel %vm1746, %v1840, 0.0
        %1886 = vadd.xlane.f32.xlu0 %v1885
        %v1887 = vpop.xlane.xlu0 %1886
        %v1888 = vsel %vm1746, %v1842, 0.0
        %1889 = vadd.xlane.f32.xlu0 %v1888
        %v1890 = vpop.xlane.xlu0 %1889
        %v1891 = vrcp.pop %v1845
        %v1892 = vmul.f32 %v1845, %v1891
        %v1893 = vsub.f32 1.0, %v1892
        %v1894 = vmul.f32 %v1891, %v1893
        %v1895 = vadd.f32 %v1891, %v1894
        %vm1896 = vweird.f32 %v1845
        %vm1897 = vweird.f32 %v1891
        %vm1898 = vmor %vm1896, %vm1897
        %v1899 = vsel %vm1898, %v1891, %v1895
        %v1900 = vand.u32 2147483647, %v1845
        %vm1901 = vcmp.eq.f32.partialorder %v1900, 8.507059e+37
        %v1902 = vand.u32 %v1845, 2147483648
        %v1903 = vor.u32 1.1754944e-38, %v1902
        %v1904 = vsel %vm1901, %v1903, %v1899
        %v1905 = vmul.f32 %v1812, %v1904
        %v1906 = vrcp.pop %v1848
        %v1907 = vmul.f32 %v1848, %v1906
        %v1908 = vsub.f32 1.0, %v1907
        %v1909 = vmul.f32 %v1906, %v1908
        %v1910 = vadd.f32 %v1906, %v1909
        %vm1911 = vweird.f32 %v1848
        %vm1912 = vweird.f32 %v1906
        %vm1913 = vmor %vm1911, %vm1912
        %v1914 = vsel %vm1913, %v1906, %v1910
        %v1915 = vand.u32 2147483647, %v1848
        %vm1916 = vcmp.eq.f32.partialorder %v1915, 8.507059e+37
        %v1917 = vand.u32 %v1848, 2147483648
        %v1918 = vor.u32 1.1754944e-38, %v1917
        %v1919 = vsel %vm1916, %v1918, %v1914
        %v1920 = vmul.f32 %v1814, %v1919
        %v1921 = vrcp.pop %v1851
        %v1922 = vmul.f32 %v1851, %v1921
        %v1923 = vsub.f32 1.0, %v1922
        %v1924 = vmul.f32 %v1921, %v1923
        %v1925 = vadd.f32 %v1921, %v1924
        %vm1926 = vweird.f32 %v1851
        %vm1927 = vweird.f32 %v1921
        %vm1928 = vmor %vm1926, %vm1927
        %v1929 = vsel %vm1928, %v1921, %v1925
        %v1930 = vand.u32 2147483647, %v1851
        %vm1931 = vcmp.eq.f32.partialorder %v1930, 8.507059e+37
        %v1932 = vand.u32 %v1851, 2147483648
        %v1933 = vor.u32 1.1754944e-38, %v1932
        %v1934 = vsel %vm1931, %v1933, %v1929
        %v1935 = vmul.f32 %v1816, %v1934
        %v1936 = vrcp.pop %v1854
        %v1937 = vmul.f32 %v1854, %v1936
        %v1938 = vsub.f32 1.0, %v1937
        %v1939 = vmul.f32 %v1936, %v1938
        %v1940 = vadd.f32 %v1936, %v1939
        %vm1941 = vweird.f32 %v1854
        %vm1942 = vweird.f32 %v1936
        %vm1943 = vmor %vm1941, %vm1942
        %v1944 = vsel %vm1943, %v1936, %v1940
        %v1945 = vand.u32 2147483647, %v1854
        %vm1946 = vcmp.eq.f32.partialorder %v1945, 8.507059e+37
        %v1947 = vand.u32 %v1854, 2147483648
        %v1948 = vor.u32 1.1754944e-38, %v1947
        %v1949 = vsel %vm1946, %v1948, %v1944
        %v1950 = vmul.f32 %v1818, %v1949
        %v1951 = vrcp.pop %v1857
        %v1952 = vmul.f32 %v1857, %v1951
        %v1953 = vsub.f32 1.0, %v1952
        %v1954 = vmul.f32 %v1951, %v1953
        %v1955 = vadd.f32 %v1951, %v1954
        %vm1956 = vweird.f32 %v1857
        %vm1957 = vweird.f32 %v1951
        %vm1958 = vmor %vm1956, %vm1957
        %v1959 = vsel %vm1958, %v1951, %v1955
        %v1960 = vand.u32 2147483647, %v1857
        %vm1961 = vcmp.eq.f32.partialorder %v1960, 8.507059e+37
        %v1962 = vand.u32 %v1857, 2147483648
        %v1963 = vor.u32 1.1754944e-38, %v1962
        %v1964 = vsel %vm1961, %v1963, %v1959
        %v1965 = vmul.f32 %v1820, %v1964
        %v1966 = vrcp.pop %v1860
        %v1967 = vmul.f32 %v1860, %v1966
        %v1968 = vsub.f32 1.0, %v1967
        %v1969 = vmul.f32 %v1966, %v1968
        %v1970 = vadd.f32 %v1966, %v1969
        %vm1971 = vweird.f32 %v1860
        %vm1972 = vweird.f32 %v1966
        %vm1973 = vmor %vm1971, %vm1972
        %v1974 = vsel %vm1973, %v1966, %v1970
        %v1975 = vand.u32 2147483647, %v1860
        %vm1976 = vcmp.eq.f32.partialorder %v1975, 8.507059e+37
        %v1977 = vand.u32 %v1860, 2147483648
        %v1978 = vor.u32 1.1754944e-38, %v1977
        %v1979 = vsel %vm1976, %v1978, %v1974
        %v1980 = vmul.f32 %v1822, %v1979
        %v1981 = vrcp.pop %v1863
        %v1982 = vmul.f32 %v1863, %v1981
        %v1983 = vsub.f32 1.0, %v1982
        %v1984 = vmul.f32 %v1981, %v1983
        %v1985 = vadd.f32 %v1981, %v1984
        %vm1986 = vweird.f32 %v1863
        %vm1987 = vweird.f32 %v1981
        %vm1988 = vmor %vm1986, %vm1987
        %v1989 = vsel %vm1988, %v1981, %v1985
        %v1990 = vand.u32 2147483647, %v1863
        %vm1991 = vcmp.eq.f32.partialorder %v1990, 8.507059e+37
        %v1992 = vand.u32 %v1863, 2147483648
        %v1993 = vor.u32 1.1754944e-38, %v1992
        %v1994 = vsel %vm1991, %v1993, %v1989
        %v1995 = vmul.f32 %v1824, %v1994
        %v1996 = vrcp.pop %v1866
        %v1997 = vmul.f32 %v1866, %v1996
        %v1998 = vsub.f32 1.0, %v1997
        %v1999 = vmul.f32 %v1996, %v1998
        %v2000 = vadd.f32 %v1996, %v1999
        %vm2001 = vweird.f32 %v1866
        %vm2002 = vweird.f32 %v1996
        %vm2003 = vmor %vm2001, %vm2002
        %v2004 = vsel %vm2003, %v1996, %v2000
        %v2005 = vand.u32 2147483647, %v1866
        %vm2006 = vcmp.eq.f32.partialorder %v2005, 8.507059e+37
        %v2007 = vand.u32 %v1866, 2147483648
        %v2008 = vor.u32 1.1754944e-38, %v2007
        %v2009 = vsel %vm2006, %v2008, %v2004
        %v2010 = vmul.f32 %v1826, %v2009
        %v2011 = vrcp.pop %v1869
        %v2012 = vmul.f32 %v1869, %v2011
        %v2013 = vsub.f32 1.0, %v2012
        %v2014 = vmul.f32 %v2011, %v2013
        %v2015 = vadd.f32 %v2011, %v2014
        %vm2016 = vweird.f32 %v1869
        %vm2017 = vweird.f32 %v2011
        %vm2018 = vmor %vm2016, %vm2017
        %v2019 = vsel %vm2018, %v2011, %v2015
        %v2020 = vand.u32 2147483647, %v1869
        %vm2021 = vcmp.eq.f32.partialorder %v2020, 8.507059e+37
        %v2022 = vand.u32 %v1869, 2147483648
        %v2023 = vor.u32 1.1754944e-38, %v2022
        %v2024 = vsel %vm2021, %v2023, %v2019
        %v2025 = vmul.f32 %v1828, %v2024
        %v2026 = vrcp.pop %v1872
        %v2027 = vmul.f32 %v1872, %v2026
        %v2028 = vsub.f32 1.0, %v2027
        %v2029 = vmul.f32 %v2026, %v2028
        %v2030 = vadd.f32 %v2026, %v2029
        %vm2031 = vweird.f32 %v1872
        %vm2032 = vweird.f32 %v2026
        %vm2033 = vmor %vm2031, %vm2032
        %v2034 = vsel %vm2033, %v2026, %v2030
        %v2035 = vand.u32 2147483647, %v1872
        %vm2036 = vcmp.eq.f32.partialorder %v2035, 8.507059e+37
        %v2037 = vand.u32 %v1872, 2147483648
        %v2038 = vor.u32 1.1754944e-38, %v2037
        %v2039 = vsel %vm2036, %v2038, %v2034
        %v2040 = vmul.f32 %v1830, %v2039
        %v2041 = vrcp.pop %v1875
        %v2042 = vmul.f32 %v1875, %v2041
        %v2043 = vsub.f32 1.0, %v2042
        %v2044 = vmul.f32 %v2041, %v2043
        %v2045 = vadd.f32 %v2041, %v2044
        %vm2046 = vweird.f32 %v1875
        %vm2047 = vweird.f32 %v2041
        %vm2048 = vmor %vm2046, %vm2047
        %v2049 = vsel %vm2048, %v2041, %v2045
        %v2050 = vand.u32 2147483647, %v1875
        %vm2051 = vcmp.eq.f32.partialorder %v2050, 8.507059e+37
        %v2052 = vand.u32 %v1875, 2147483648
        %v2053 = vor.u32 1.1754944e-38, %v2052
        %v2054 = vsel %vm2051, %v2053, %v2049
        %v2055 = vmul.f32 %v1832, %v2054
        %v2056 = vrcp.pop %v1878
        %v2057 = vmul.f32 %v1878, %v2056
        %v2058 = vsub.f32 1.0, %v2057
        %v2059 = vmul.f32 %v2056, %v2058
        %v2060 = vadd.f32 %v2056, %v2059
        %vm2061 = vweird.f32 %v1878
        %vm2062 = vweird.f32 %v2056
        %vm2063 = vmor %vm2061, %vm2062
        %v2064 = vsel %vm2063, %v2056, %v2060
        %v2065 = vand.u32 2147483647, %v1878
        %vm2066 = vcmp.eq.f32.partialorder %v2065, 8.507059e+37
        %v2067 = vand.u32 %v1878, 2147483648
        %v2068 = vor.u32 1.1754944e-38, %v2067
        %v2069 = vsel %vm2066, %v2068, %v2064
        %v2070 = vmul.f32 %v1834, %v2069
        %v2071 = vrcp.pop %v1881
        %v2072 = vmul.f32 %v1881, %v2071
        %v2073 = vsub.f32 1.0, %v2072
        %v2074 = vmul.f32 %v2071, %v2073
        %v2075 = vadd.f32 %v2071, %v2074
        %vm2076 = vweird.f32 %v1881
        %vm2077 = vweird.f32 %v2071
        %vm2078 = vmor %vm2076, %vm2077
        %v2079 = vsel %vm2078, %v2071, %v2075
        %v2080 = vand.u32 2147483647, %v1881
        %vm2081 = vcmp.eq.f32.partialorder %v2080, 8.507059e+37
        %v2082 = vand.u32 %v1881, 2147483648
        %v2083 = vor.u32 1.1754944e-38, %v2082
        %v2084 = vsel %vm2081, %v2083, %v2079
        %v2085 = vmul.f32 %v1836, %v2084
        %v2086 = vrcp.pop %v1884
        %v2087 = vmul.f32 %v1884, %v2086
        %v2088 = vsub.f32 1.0, %v2087
        %v2089 = vmul.f32 %v2086, %v2088
        %v2090 = vadd.f32 %v2086, %v2089
        %vm2091 = vweird.f32 %v1884
        %vm2092 = vweird.f32 %v2086
        %vm2093 = vmor %vm2091, %vm2092
        %v2094 = vsel %vm2093, %v2086, %v2090
        %v2095 = vand.u32 2147483647, %v1884
        %vm2096 = vcmp.eq.f32.partialorder %v2095, 8.507059e+37
        %v2097 = vand.u32 %v1884, 2147483648
        %v2098 = vor.u32 1.1754944e-38, %v2097
        %v2099 = vsel %vm2096, %v2098, %v2094
        %v2100 = vmul.f32 %v1838, %v2099
        %v2101 = vrcp.pop %v1887
        %v2102 = vmul.f32 %v1887, %v2101
        %v2103 = vsub.f32 1.0, %v2102
        %v2104 = vmul.f32 %v2101, %v2103
        %v2105 = vadd.f32 %v2101, %v2104
        %vm2106 = vweird.f32 %v1887
        %vm2107 = vweird.f32 %v2101
        %vm2108 = vmor %vm2106, %vm2107
        %v2109 = vsel %vm2108, %v2101, %v2105
        %v2110 = vand.u32 2147483647, %v1887
        %vm2111 = vcmp.eq.f32.partialorder %v2110, 8.507059e+37
        %v2112 = vand.u32 %v1887, 2147483648
        %v2113 = vor.u32 1.1754944e-38, %v2112
        %v2114 = vsel %vm2111, %v2113, %v2109
        %v2115 = vmul.f32 %v1840, %v2114
        %v2116 = vrcp.pop %v1890
        %v2117 = vmul.f32 %v1890, %v2116
        %v2118 = vsub.f32 1.0, %v2117
        %v2119 = vmul.f32 %v2116, %v2118
        %v2120 = vadd.f32 %v2116, %v2119
        %vm2121 = vweird.f32 %v1890
        %vm2122 = vweird.f32 %v2116
        %vm2123 = vmor %vm2121, %vm2122
        %v2124 = vsel %vm2123, %v2116, %v2120
        %v2125 = vand.u32 2147483647, %v1890
        %vm2126 = vcmp.eq.f32.partialorder %v2125, 8.507059e+37
        %v2127 = vand.u32 %v1890, 2147483648
        %v2128 = vor.u32 1.1754944e-38, %v2127
        %v2129 = vsel %vm2126, %v2128, %v2124
        %v2130 = vmul.f32 %v1842, %v2129
        %v2132 = vsel %vm1746, %v1905, 0
        %v2135 = vsel %vm1746, %v1920, 0
        %v2138 = vsel %vm1746, %v1935, 0
        %v2141 = vsel %vm1746, %v1950, 0
        %v2144 = vsel %vm1746, %v1965, 0
        %v2147 = vsel %vm1746, %v1980, 0
        %v2150 = vsel %vm1746, %v1995, 0
        %v2153 = vsel %vm1746, %v2010, 0
        %v2156 = vsel %vm1746, %v2025, 0
        %v2159 = vsel %vm1746, %v2040, 0
        %v2162 = vsel %vm1746, %v2055, 0
        %v2165 = vsel %vm1746, %v2070, 0
        %v2168 = vsel %vm1746, %v2085, 0
        %v2171 = vsel %vm1746, %v2100, 0
        %v2174 = vsel %vm1746, %v2115, 0
        %v2177 = vsel %vm1746, %v2130, 0
        %2179 = vmatpush.msra.mxu0 0.0
        %2180 = vmatpush.msra.mxu0 0.0
        %2181 = vmatpush.msra.mxu0 0.0
        %2182 = vmatpush.msra.mxu0 0.0
        %2183 = vmatpush.msra.mxu0 0.0
        %2184 = vmatpush.msra.mxu0 0.0
        %2185 = vmatpush.msra.mxu0 0.0
        %2186 = vmatpush.msra.mxu0 0.0
        %2187 = vmatpush.msra.mxu0 0.0
        %2188 = vmatpush.msra.mxu0 0.0
        %2189 = vmatpush.msra.mxu0 0.0
        %2190 = vmatpush.msra.mxu0 0.0
        %2191 = vmatpush.msra.mxu0 0.0
        %2192 = vmatpush.msra.mxu0 0.0
        %2193 = vmatpush.msra.mxu0 %v1551
        %2194 = vmatpush.msra.mxu0 %v1549
        %2195 = vmatmul.f32.gmra.mxu0 %v2132
        %v2196 = vpop.f32.mrf.mxu0
        %v2197 = vadd.f32 0.0, %v2196
        %2198 = vmatmul.f32.gmra.mxu0 %v2135
        %v2199 = vpop.f32.mrf.mxu0
        %v2200 = vadd.f32 0.0, %v2199
        %2201 = vmatmul.f32.gmra.mxu0 %v2138
        %v2202 = vpop.f32.mrf.mxu0
        %v2203 = vadd.f32 0.0, %v2202
        %2204 = vmatmul.f32.gmra.mxu0 %v2141
        %v2205 = vpop.f32.mrf.mxu0
        %v2206 = vadd.f32 0.0, %v2205
        %2207 = vmatmul.f32.gmra.mxu0 %v2144
        %v2208 = vpop.f32.mrf.mxu0
        %v2209 = vadd.f32 0.0, %v2208
        %2210 = vmatmul.f32.gmra.mxu0 %v2147
        %v2211 = vpop.f32.mrf.mxu0
        %v2212 = vadd.f32 0.0, %v2211
        %2213 = vmatmul.f32.gmra.mxu0 %v2150
        %v2214 = vpop.f32.mrf.mxu0
        %v2215 = vadd.f32 0.0, %v2214
        %2216 = vmatmul.f32.gmra.mxu0 %v2153
        %v2217 = vpop.f32.mrf.mxu0
        %v2218 = vadd.f32 0.0, %v2217
        %2219 = vmatmul.f32.gmra.mxu0 %v2156
        %v2220 = vpop.f32.mrf.mxu0
        %v2221 = vadd.f32 0.0, %v2220
        %2222 = vmatmul.f32.gmra.mxu0 %v2159
        %v2223 = vpop.f32.mrf.mxu0
        %v2224 = vadd.f32 0.0, %v2223
        %2225 = vmatmul.f32.gmra.mxu0 %v2162
        %v2226 = vpop.f32.mrf.mxu0
        %v2227 = vadd.f32 0.0, %v2226
        %2228 = vmatmul.f32.gmra.mxu0 %v2165
        %v2229 = vpop.f32.mrf.mxu0
        %v2230 = vadd.f32 0.0, %v2229
        %2231 = vmatmul.f32.gmra.mxu0 %v2168
        %v2232 = vpop.f32.mrf.mxu0
        %v2233 = vadd.f32 0.0, %v2232
        %2234 = vmatmul.f32.gmra.mxu0 %v2171
        %v2235 = vpop.f32.mrf.mxu0
        %v2236 = vadd.f32 0.0, %v2235
        %2237 = vmatmul.f32.gmra.mxu0 %v2174
        %v2238 = vpop.f32.mrf.mxu0
        %v2239 = vadd.f32 0.0, %v2238
        %2240 = vmatmul.f32.gmra.mxu0 %v2177
        %v2241 = vpop.f32.mrf.mxu0
        %v2242 = vadd.f32 0.0, %v2241
        %2243 = vdwg.mxu0
        %2244 = vmatpush.msra.mxu0 0.0
        %2245 = vmatpush.msra.mxu0 0.0
        %2246 = vmatpush.msra.mxu0 0.0
        %2247 = vmatpush.msra.mxu0 0.0
        %2248 = vmatpush.msra.mxu0 0.0
        %2249 = vmatpush.msra.mxu0 0.0
        %2250 = vmatpush.msra.mxu0 0.0
        %2251 = vmatpush.msra.mxu0 0.0
        %2252 = vmatpush.msra.mxu0 0.0
        %2253 = vmatpush.msra.mxu0 0.0
        %2254 = vmatpush.msra.mxu0 0.0
        %2255 = vmatpush.msra.mxu0 0.0
        %2256 = vmatpush.msra.mxu0 0.0
        %2257 = vmatpush.msra.mxu0 0.0
        %2258 = vmatpush.msra.mxu0 %v1579
        %2259 = vmatpush.msra.mxu0 %v1577
        %2260 = vmatmul.f32.gmra.mxu0 %v2132
        %v2261 = vpop.f32.mrf.mxu0
        %v2262 = vadd.f32 0.0, %v2261
        %2263 = vmatmul.f32.gmra.mxu0 %v2135
        %v2264 = vpop.f32.mrf.mxu0
        %v2265 = vadd.f32 0.0, %v2264
        %2266 = vmatmul.f32.gmra.mxu0 %v2138
        %v2267 = vpop.f32.mrf.mxu0
        %v2268 = vadd.f32 0.0, %v2267
        %2269 = vmatmul.f32.gmra.mxu0 %v2141
        %v2270 = vpop.f32.mrf.mxu0
        %v2271 = vadd.f32 0.0, %v2270
        %2272 = vmatmul.f32.gmra.mxu0 %v2144
        %v2273 = vpop.f32.mrf.mxu0
        %v2274 = vadd.f32 0.0, %v2273
        %2275 = vmatmul.f32.gmra.mxu0 %v2147
        %v2276 = vpop.f32.mrf.mxu0
        %v2277 = vadd.f32 0.0, %v2276
        %2278 = vmatmul.f32.gmra.mxu0 %v2150
        %v2279 = vpop.f32.mrf.mxu0
        %v2280 = vadd.f32 0.0, %v2279
        %2281 = vmatmul.f32.gmra.mxu0 %v2153
        %v2282 = vpop.f32.mrf.mxu0
        %v2283 = vadd.f32 0.0, %v2282
        %2284 = vmatmul.f32.gmra.mxu0 %v2156
        %v2285 = vpop.f32.mrf.mxu0
        %v2286 = vadd.f32 0.0, %v2285
        %2287 = vmatmul.f32.gmra.mxu0 %v2159
        %v2288 = vpop.f32.mrf.mxu0
        %v2289 = vadd.f32 0.0, %v2288
        %2290 = vmatmul.f32.gmra.mxu0 %v2162
        %v2291 = vpop.f32.mrf.mxu0
        %v2292 = vadd.f32 0.0, %v2291
        %2293 = vmatmul.f32.gmra.mxu0 %v2165
        %v2294 = vpop.f32.mrf.mxu0
        %v2295 = vadd.f32 0.0, %v2294
        %2296 = vmatmul.f32.gmra.mxu0 %v2168
        %v2297 = vpop.f32.mrf.mxu0
        %v2298 = vadd.f32 0.0, %v2297
        %2299 = vmatmul.f32.gmra.mxu0 %v2171
        %v2300 = vpop.f32.mrf.mxu0
        %v2301 = vadd.f32 0.0, %v2300
        %2302 = vmatmul.f32.gmra.mxu0 %v2174
        %v2303 = vpop.f32.mrf.mxu0
        %v2304 = vadd.f32 0.0, %v2303
        %2305 = vmatmul.f32.gmra.mxu0 %v2177
        %v2306 = vpop.f32.mrf.mxu0
        %v2307 = vadd.f32 0.0, %v2306
        %2308 = vdwg.mxu0
        %v2309 = vpack.c.bf16 %v2200, %v2197
        %v2310 = vpack.c.bf16 %v2265, %v2262
        %v2311 = vpack.c.bf16 %v2206, %v2203
        %v2312 = vpack.c.bf16 %v2271, %v2268
        %v2313 = vpack.c.bf16 %v2212, %v2209
        %v2314 = vpack.c.bf16 %v2277, %v2274
        %v2315 = vpack.c.bf16 %v2218, %v2215
        %v2316 = vpack.c.bf16 %v2283, %v2280
        %v2317 = vpack.c.bf16 %v2224, %v2221
        %v2318 = vpack.c.bf16 %v2289, %v2286
        %v2319 = vpack.c.bf16 %v2230, %v2227
        %v2320 = vpack.c.bf16 %v2295, %v2292
        %v2321 = vpack.c.bf16 %v2236, %v2233
        %v2322 = vpack.c.bf16 %v2301, %v2298
        %v2323 = vpack.c.bf16 %v2242, %v2239
        %v2324 = vpack.c.bf16 %v2307, %v2304
        %v2325 = vld [vmem:[%s578] sm:$0x3]
        %v2327 = vperm.slane %v2325, 0
        %v2328 = vperm.slane %v2325, 1
        %v2363 = vunpack.c.l.b16 %v727
        %v2364 = vunpack.c.h.b16 %v727
        %v2365 = vunpack.c.l.b16 %v728
        %v2366 = vunpack.c.h.b16 %v728
        %v2367 = vunpack.c.l.b16 %v729
        %v2368 = vunpack.c.h.b16 %v729
        %v2369 = vunpack.c.l.b16 %v730
        %v2370 = vunpack.c.h.b16 %v730
        %v2371 = vunpack.c.l.b16 %v731
        %v2372 = vunpack.c.h.b16 %v731
        %v2373 = vunpack.c.l.b16 %v732
        %v2374 = vunpack.c.h.b16 %v732
        %v2375 = vunpack.c.l.b16 %v733
        %v2376 = vunpack.c.h.b16 %v733
        %v2377 = vunpack.c.l.b16 %v734
        %v2378 = vunpack.c.h.b16 %v734
        %v2379 = vunpack.c.l.b16 %v735
        %v2380 = vunpack.c.h.b16 %v735
        %v2381 = vunpack.c.l.b16 %v736
        %v2382 = vunpack.c.h.b16 %v736
        %v2383 = vunpack.c.l.b16 %v737
        %v2384 = vunpack.c.h.b16 %v737
        %v2385 = vunpack.c.l.b16 %v738
        %v2386 = vunpack.c.h.b16 %v738
        %v2387 = vunpack.c.l.b16 %v739
        %v2388 = vunpack.c.h.b16 %v739
        %v2389 = vunpack.c.l.b16 %v740
        %v2390 = vunpack.c.h.b16 %v740
        %v2391 = vunpack.c.l.b16 %v741
        %v2392 = vunpack.c.h.b16 %v741
        %v2393 = vunpack.c.l.b16 %v742
        %v2394 = vunpack.c.h.b16 %v742
        %v2395 = vunpack.c.l.b16 %v743
        %v2396 = vunpack.c.h.b16 %v743
        %v2397 = vunpack.c.l.b16 %v744
        %v2398 = vunpack.c.h.b16 %v744
        %v2399 = vunpack.c.l.b16 %v745
        %v2400 = vunpack.c.h.b16 %v745
        %v2401 = vunpack.c.l.b16 %v746
        %v2402 = vunpack.c.h.b16 %v746
        %v2403 = vunpack.c.l.b16 %v747
        %v2404 = vunpack.c.h.b16 %v747
        %v2405 = vunpack.c.l.b16 %v748
        %v2406 = vunpack.c.h.b16 %v748
        %v2407 = vunpack.c.l.b16 %v749
        %v2408 = vunpack.c.h.b16 %v749
        %v2409 = vunpack.c.l.b16 %v750
        %v2410 = vunpack.c.h.b16 %v750
        %v2411 = vunpack.c.l.b16 %v751
        %v2412 = vunpack.c.h.b16 %v751
        %v2413 = vunpack.c.l.b16 %v752
        %v2414 = vunpack.c.h.b16 %v752
        %v2415 = vunpack.c.l.b16 %v753
        %v2416 = vunpack.c.h.b16 %v753
        %v2417 = vunpack.c.l.b16 %v754
        %v2418 = vunpack.c.h.b16 %v754
        %v2419 = vunpack.c.l.b16 %v755
        %v2420 = vunpack.c.h.b16 %v755
        %v2421 = vunpack.c.l.b16 %v756
        %v2422 = vunpack.c.h.b16 %v756
        %v2423 = vunpack.c.l.b16 %v757
        %v2424 = vunpack.c.h.b16 %v757
        %v2425 = vunpack.c.l.b16 %v758
        %v2426 = vunpack.c.h.b16 %v758
        %v2427 = vpack.c.b16 %v2365, %v2363
        %v2428 = vpack.c.b16 %v2366, %v2364
        %v2429 = vpack.c.b16 %v2369, %v2367
        %v2430 = vpack.c.b16 %v2370, %v2368
        %v2431 = vpack.c.b16 %v2373, %v2371
        %v2432 = vpack.c.b16 %v2374, %v2372
        %v2433 = vpack.c.b16 %v2377, %v2375
        %v2434 = vpack.c.b16 %v2378, %v2376
        %v2435 = vpack.c.b16 %v2381, %v2379
        %v2436 = vpack.c.b16 %v2382, %v2380
        %v2437 = vpack.c.b16 %v2385, %v2383
        %v2438 = vpack.c.b16 %v2386, %v2384
        %v2439 = vpack.c.b16 %v2389, %v2387
        %v2440 = vpack.c.b16 %v2390, %v2388
        %v2441 = vpack.c.b16 %v2393, %v2391
        %v2442 = vpack.c.b16 %v2394, %v2392
        %v2443 = vpack.c.b16 %v2397, %v2395
        %v2444 = vpack.c.b16 %v2398, %v2396
        %v2445 = vpack.c.b16 %v2401, %v2399
        %v2446 = vpack.c.b16 %v2402, %v2400
        %v2447 = vpack.c.b16 %v2405, %v2403
        %v2448 = vpack.c.b16 %v2406, %v2404
        %v2449 = vpack.c.b16 %v2409, %v2407
        %v2450 = vpack.c.b16 %v2410, %v2408
        %v2451 = vpack.c.b16 %v2413, %v2411
        %v2452 = vpack.c.b16 %v2414, %v2412
        %v2453 = vpack.c.b16 %v2417, %v2415
        %v2454 = vpack.c.b16 %v2418, %v2416
        %v2455 = vpack.c.b16 %v2421, %v2419
        %v2456 = vpack.c.b16 %v2422, %v2420
        %v2457 = vpack.c.b16 %v2425, %v2423
        %v2458 = vpack.c.b16 %v2426, %v2424
        %2491 = vmatpush.bf16.msra.mxu0 %v2441
        %2492 = vmatpush.bf16.msra.mxu0 %v2439
        %2493 = vmatpush.bf16.msra.mxu0 %v2437
        %2494 = vmatpush.bf16.msra.mxu0 %v2435
        %2495 = vmatpush.bf16.msra.mxu0 %v2433
        %2496 = vmatpush.bf16.msra.mxu0 %v2431
        %2497 = vmatpush.bf16.msra.mxu0 %v2429
        %2498 = vmatpush.bf16.msra.mxu0 %v2427
        %2499 = vmatmul.bf16.gmra.mxu0 %v2309
        %v2500 = vpop.f32.mrf.mxu0
        %v2501 = vadd.f32 %v2327, %v2500
        %v2502 = vpop.f32.mrf.mxu0
        %v2503 = vadd.f32 %v2327, %v2502
        %2504 = vmatmul.bf16.gmra.mxu0 %v2311
        %v2505 = vpop.f32.mrf.mxu0
        %v2506 = vadd.f32 %v2327, %v2505
        %v2507 = vpop.f32.mrf.mxu0
        %v2508 = vadd.f32 %v2327, %v2507
        %2509 = vmatmul.bf16.gmra.mxu0 %v2313
        %v2510 = vpop.f32.mrf.mxu0
        %v2511 = vadd.f32 %v2327, %v2510
        %v2512 = vpop.f32.mrf.mxu0
        %v2513 = vadd.f32 %v2327, %v2512
        %2514 = vmatmul.bf16.gmra.mxu0 %v2315
        %v2515 = vpop.f32.mrf.mxu0
        %v2516 = vadd.f32 %v2327, %v2515
        %v2517 = vpop.f32.mrf.mxu0
        %v2518 = vadd.f32 %v2327, %v2517
        %2519 = vmatmul.bf16.gmra.mxu0 %v2317
        %v2520 = vpop.f32.mrf.mxu0
        %v2521 = vadd.f32 %v2327, %v2520
        %v2522 = vpop.f32.mrf.mxu0
        %v2523 = vadd.f32 %v2327, %v2522
        %2524 = vmatmul.bf16.gmra.mxu0 %v2319
        %v2525 = vpop.f32.mrf.mxu0
        %v2526 = vadd.f32 %v2327, %v2525
        %v2527 = vpop.f32.mrf.mxu0
        %v2528 = vadd.f32 %v2327, %v2527
        %2529 = vmatmul.bf16.gmra.mxu0 %v2321
        %v2530 = vpop.f32.mrf.mxu0
        %v2531 = vadd.f32 %v2327, %v2530
        %v2532 = vpop.f32.mrf.mxu0
        %v2533 = vadd.f32 %v2327, %v2532
        %2534 = vmatmul.bf16.gmra.mxu0 %v2323
        %v2535 = vpop.f32.mrf.mxu0
        %v2536 = vadd.f32 %v2327, %v2535
        %v2537 = vpop.f32.mrf.mxu0
        %v2538 = vadd.f32 %v2327, %v2537
        %2539 = vdwg.mxu0
        %2540 = vmatpush.bf16.msra.mxu0 %v2457
        %2541 = vmatpush.bf16.msra.mxu0 %v2455
        %2542 = vmatpush.bf16.msra.mxu0 %v2453
        %2543 = vmatpush.bf16.msra.mxu0 %v2451
        %2544 = vmatpush.bf16.msra.mxu0 %v2449
        %2545 = vmatpush.bf16.msra.mxu0 %v2447
        %2546 = vmatpush.bf16.msra.mxu0 %v2445
        %2547 = vmatpush.bf16.msra.mxu0 %v2443
        %2548 = vmatmul.bf16.gmra.mxu0 %v2310
        %v2549 = vpop.f32.mrf.mxu0
        %v2550 = vadd.f32 %v2501, %v2549
        %v2551 = vpop.f32.mrf.mxu0
        %v2552 = vadd.f32 %v2503, %v2551
        %2553 = vmatmul.bf16.gmra.mxu0 %v2312
        %v2554 = vpop.f32.mrf.mxu0
        %v2555 = vadd.f32 %v2506, %v2554
        %v2556 = vpop.f32.mrf.mxu0
        %v2557 = vadd.f32 %v2508, %v2556
        %2558 = vmatmul.bf16.gmra.mxu0 %v2314
        %v2559 = vpop.f32.mrf.mxu0
        %v2560 = vadd.f32 %v2511, %v2559
        %v2561 = vpop.f32.mrf.mxu0
        %v2562 = vadd.f32 %v2513, %v2561
        %2563 = vmatmul.bf16.gmra.mxu0 %v2316
        %v2564 = vpop.f32.mrf.mxu0
        %v2565 = vadd.f32 %v2516, %v2564
        %v2566 = vpop.f32.mrf.mxu0
        %v2567 = vadd.f32 %v2518, %v2566
        %2568 = vmatmul.bf16.gmra.mxu0 %v2318
        %v2569 = vpop.f32.mrf.mxu0
        %v2570 = vadd.f32 %v2521, %v2569
        %v2571 = vpop.f32.mrf.mxu0
        %v2572 = vadd.f32 %v2523, %v2571
        %2573 = vmatmul.bf16.gmra.mxu0 %v2320
        %v2574 = vpop.f32.mrf.mxu0
        %v2575 = vadd.f32 %v2526, %v2574
        %v2576 = vpop.f32.mrf.mxu0
        %v2577 = vadd.f32 %v2528, %v2576
        %2578 = vmatmul.bf16.gmra.mxu0 %v2322
        %v2579 = vpop.f32.mrf.mxu0
        %v2580 = vadd.f32 %v2531, %v2579
        %v2581 = vpop.f32.mrf.mxu0
        %v2582 = vadd.f32 %v2533, %v2581
        %2583 = vmatmul.bf16.gmra.mxu0 %v2324
        %v2584 = vpop.f32.mrf.mxu0
        %v2585 = vadd.f32 %v2536, %v2584
        %v2586 = vpop.f32.mrf.mxu0
        %v2587 = vadd.f32 %v2538, %v2586
        %2588 = vdwg.mxu0
        %2589 = vmatpush.bf16.msra.mxu0 %v2442
        %2590 = vmatpush.bf16.msra.mxu0 %v2440
        %2591 = vmatpush.bf16.msra.mxu0 %v2438
        %2592 = vmatpush.bf16.msra.mxu0 %v2436
        %2593 = vmatpush.bf16.msra.mxu0 %v2434
        %2594 = vmatpush.bf16.msra.mxu0 %v2432
        %2595 = vmatpush.bf16.msra.mxu0 %v2430
        %2596 = vmatpush.bf16.msra.mxu0 %v2428
        %2597 = vmatmul.bf16.gmra.mxu0 %v2309
        %v2598 = vpop.f32.mrf.mxu0
        %v2599 = vadd.f32 %v2328, %v2598
        %v2600 = vpop.f32.mrf.mxu0
        %v2601 = vadd.f32 %v2328, %v2600
        %2602 = vmatmul.bf16.gmra.mxu0 %v2311
        %v2603 = vpop.f32.mrf.mxu0
        %v2604 = vadd.f32 %v2328, %v2603
        %v2605 = vpop.f32.mrf.mxu0
        %v2606 = vadd.f32 %v2328, %v2605
        %2607 = vmatmul.bf16.gmra.mxu0 %v2313
        %v2608 = vpop.f32.mrf.mxu0
        %v2609 = vadd.f32 %v2328, %v2608
        %v2610 = vpop.f32.mrf.mxu0
        %v2611 = vadd.f32 %v2328, %v2610
        %2612 = vmatmul.bf16.gmra.mxu0 %v2315
        %v2613 = vpop.f32.mrf.mxu0
        %v2614 = vadd.f32 %v2328, %v2613
        %v2615 = vpop.f32.mrf.mxu0
        %v2616 = vadd.f32 %v2328, %v2615
        %2617 = vmatmul.bf16.gmra.mxu0 %v2317
        %v2618 = vpop.f32.mrf.mxu0
        %v2619 = vadd.f32 %v2328, %v2618
        %v2620 = vpop.f32.mrf.mxu0
        %v2621 = vadd.f32 %v2328, %v2620
        %2622 = vmatmul.bf16.gmra.mxu0 %v2319
        %v2623 = vpop.f32.mrf.mxu0
        %v2624 = vadd.f32 %v2328, %v2623
        %v2625 = vpop.f32.mrf.mxu0
        %v2626 = vadd.f32 %v2328, %v2625
        %2627 = vmatmul.bf16.gmra.mxu0 %v2321
        %v2628 = vpop.f32.mrf.mxu0
        %v2629 = vadd.f32 %v2328, %v2628
        %v2630 = vpop.f32.mrf.mxu0
        %v2631 = vadd.f32 %v2328, %v2630
        %2632 = vmatmul.bf16.gmra.mxu0 %v2323
        %v2633 = vpop.f32.mrf.mxu0
        %v2634 = vadd.f32 %v2328, %v2633
        %v2635 = vpop.f32.mrf.mxu0
        %v2636 = vadd.f32 %v2328, %v2635
        %2637 = vdwg.mxu0
        %2638 = vmatpush.bf16.msra.mxu0 %v2458
        %2639 = vmatpush.bf16.msra.mxu0 %v2456
        %2640 = vmatpush.bf16.msra.mxu0 %v2454
        %2641 = vmatpush.bf16.msra.mxu0 %v2452
        %2642 = vmatpush.bf16.msra.mxu0 %v2450
        %2643 = vmatpush.bf16.msra.mxu0 %v2448
        %2644 = vmatpush.bf16.msra.mxu0 %v2446
        %2645 = vmatpush.bf16.msra.mxu0 %v2444
        %2646 = vmatmul.bf16.gmra.mxu0 %v2310
        %v2647 = vpop.f32.mrf.mxu0
        %v2648 = vadd.f32 %v2599, %v2647
        %v2649 = vpop.f32.mrf.mxu0
        %v2650 = vadd.f32 %v2601, %v2649
        %2651 = vmatmul.bf16.gmra.mxu0 %v2312
        %v2652 = vpop.f32.mrf.mxu0
        %v2653 = vadd.f32 %v2604, %v2652
        %v2654 = vpop.f32.mrf.mxu0
        %v2655 = vadd.f32 %v2606, %v2654
        %2656 = vmatmul.bf16.gmra.mxu0 %v2314
        %v2657 = vpop.f32.mrf.mxu0
        %v2658 = vadd.f32 %v2609, %v2657
        %v2659 = vpop.f32.mrf.mxu0
        %v2660 = vadd.f32 %v2611, %v2659
        %2661 = vmatmul.bf16.gmra.mxu0 %v2316
        %v2662 = vpop.f32.mrf.mxu0
        %v2663 = vadd.f32 %v2614, %v2662
        %v2664 = vpop.f32.mrf.mxu0
        %v2665 = vadd.f32 %v2616, %v2664
        %2666 = vmatmul.bf16.gmra.mxu0 %v2318
        %v2667 = vpop.f32.mrf.mxu0
        %v2668 = vadd.f32 %v2619, %v2667
        %v2669 = vpop.f32.mrf.mxu0
        %v2670 = vadd.f32 %v2621, %v2669
        %2671 = vmatmul.bf16.gmra.mxu0 %v2320
        %v2672 = vpop.f32.mrf.mxu0
        %v2673 = vadd.f32 %v2624, %v2672
        %v2674 = vpop.f32.mrf.mxu0
        %v2675 = vadd.f32 %v2626, %v2674
        %2676 = vmatmul.bf16.gmra.mxu0 %v2322
        %v2677 = vpop.f32.mrf.mxu0
        %v2678 = vadd.f32 %v2629, %v2677
        %v2679 = vpop.f32.mrf.mxu0
        %v2680 = vadd.f32 %v2631, %v2679
        %2681 = vmatmul.bf16.gmra.mxu0 %v2324
        %v2682 = vpop.f32.mrf.mxu0
        %v2683 = vadd.f32 %v2634, %v2682
        %v2684 = vpop.f32.mrf.mxu0
        %v2685 = vadd.f32 %v2636, %v2684
        %2686 = vdwg.mxu0
        %v2687 = vpack.c.bf16 %v2552, %v2550
        %v2688 = vpack.c.bf16 %v2650, %v2648
        %v2689 = vpack.c.bf16 %v2557, %v2555
        %v2690 = vpack.c.bf16 %v2655, %v2653
        %v2691 = vpack.c.bf16 %v2562, %v2560
        %v2692 = vpack.c.bf16 %v2660, %v2658
        %v2693 = vpack.c.bf16 %v2567, %v2565
        %v2694 = vpack.c.bf16 %v2665, %v2663
        %v2695 = vpack.c.bf16 %v2572, %v2570
        %v2696 = vpack.c.bf16 %v2670, %v2668
        %v2697 = vpack.c.bf16 %v2577, %v2575
        %v2698 = vpack.c.bf16 %v2675, %v2673
        %v2699 = vpack.c.bf16 %v2582, %v2580
        %v2700 = vpack.c.bf16 %v2680, %v2678
        %v2701 = vpack.c.bf16 %v2587, %v2585
        %v2702 = vpack.c.bf16 %v2685, %v2683
        %v2703 = vld [vmem:[%s8] sm:$0xff]
        %v2704 = vld [vmem:[%s8 + $0x8] sm:$0xff]
        %v2705 = vld [vmem:[%s8 + $0x10] sm:$0xff]
        %v2706 = vld [vmem:[%s8 + $0x18] sm:$0xff]
        %v2707 = vld [vmem:[%s8 + $0x20] sm:$0xff]
        %v2708 = vld [vmem:[%s8 + $0x28] sm:$0xff]
        %v2709 = vld [vmem:[%s8 + $0x30] sm:$0xff]
        %v2710 = vld [vmem:[%s8 + $0x38] sm:$0xff]
        %v2711 = vld [vmem:[%s8 + $0x40] sm:$0xff]
        %v2712 = vld [vmem:[%s8 + $0x48] sm:$0xff]
        %v2713 = vld [vmem:[%s8 + $0x50] sm:$0xff]
        %v2714 = vld [vmem:[%s8 + $0x58] sm:$0xff]
        %v2715 = vld [vmem:[%s8 + $0x60] sm:$0xff]
        %v2716 = vld [vmem:[%s8 + $0x68] sm:$0xff]
        %v2717 = vld [vmem:[%s8 + $0x70] sm:$0xff]
        %v2718 = vld [vmem:[%s8 + $0x78] sm:$0xff]
        %v2719 = vld [vmem:[%s8 + $0x80] sm:$0xff]
        %v2720 = vld [vmem:[%s8 + $0x88] sm:$0xff]
        %v2721 = vld [vmem:[%s8 + $0x90] sm:$0xff]
        %v2722 = vld [vmem:[%s8 + $0x98] sm:$0xff]
        %v2723 = vld [vmem:[%s8 + $0xa0] sm:$0xff]
        %v2724 = vld [vmem:[%s8 + $0xa8] sm:$0xff]
        %v2725 = vld [vmem:[%s8 + $0xb0] sm:$0xff]
        %v2726 = vld [vmem:[%s8 + $0xb8] sm:$0xff]
        %v2727 = vld [vmem:[%s8 + $0xc0] sm:$0xff]
        %v2728 = vld [vmem:[%s8 + $0xc8] sm:$0xff]
        %v2729 = vld [vmem:[%s8 + $0xd0] sm:$0xff]
        %v2730 = vld [vmem:[%s8 + $0xd8] sm:$0xff]
        %v2731 = vld [vmem:[%s8 + $0xe0] sm:$0xff]
        %v2732 = vld [vmem:[%s8 + $0xe8] sm:$0xff]
        %v2733 = vld [vmem:[%s8 + $0xf0] sm:$0xff]
        %v2734 = vld [vmem:[%s8 + $0xf8] sm:$0xff]
        %v2735 = vld [vmem:[%s8 + $0x100] sm:$0xff]
        %v2736 = vld [vmem:[%s8 + $0x108] sm:$0xff]
        %v2737 = vld [vmem:[%s8 + $0x110] sm:$0xff]
        %v2738 = vld [vmem:[%s8 + $0x118] sm:$0xff]
        %v2739 = vld [vmem:[%s8 + $0x120] sm:$0xff]
        %v2740 = vld [vmem:[%s8 + $0x128] sm:$0xff]
        %v2741 = vld [vmem:[%s8 + $0x130] sm:$0xff]
        %v2742 = vld [vmem:[%s8 + $0x138] sm:$0xff]
        %v2743 = vld [vmem:[%s8 + $0x140] sm:$0xff]
        %v2744 = vld [vmem:[%s8 + $0x148] sm:$0xff]
        %v2745 = vld [vmem:[%s8 + $0x150] sm:$0xff]
        %v2746 = vld [vmem:[%s8 + $0x158] sm:$0xff]
        %v2747 = vld [vmem:[%s8 + $0x160] sm:$0xff]
        %v2748 = vld [vmem:[%s8 + $0x168] sm:$0xff]
        %v2749 = vld [vmem:[%s8 + $0x170] sm:$0xff]
        %v2750 = vld [vmem:[%s8 + $0x178] sm:$0xff]
        %v2751 = vld [vmem:[%s8 + $0x180] sm:$0xff]
        %v2752 = vld [vmem:[%s8 + $0x188] sm:$0xff]
        %v2753 = vld [vmem:[%s8 + $0x190] sm:$0xff]
        %v2754 = vld [vmem:[%s8 + $0x198] sm:$0xff]
        %v2755 = vld [vmem:[%s8 + $0x1a0] sm:$0xff]
        %v2756 = vld [vmem:[%s8 + $0x1a8] sm:$0xff]
        %v2757 = vld [vmem:[%s8 + $0x1b0] sm:$0xff]
        %v2758 = vld [vmem:[%s8 + $0x1b8] sm:$0xff]
        %v2759 = vld [vmem:[%s8 + $0x1c0] sm:$0xff]
        %v2760 = vld [vmem:[%s8 + $0x1c8] sm:$0xff]
        %v2761 = vld [vmem:[%s8 + $0x1d0] sm:$0xff]
        %v2762 = vld [vmem:[%s8 + $0x1d8] sm:$0xff]
        %v2763 = vld [vmem:[%s8 + $0x1e0] sm:$0xff]
        %v2764 = vld [vmem:[%s8 + $0x1e8] sm:$0xff]
        %v2765 = vld [vmem:[%s8 + $0x1f0] sm:$0xff]
        %v2766 = vld [vmem:[%s8 + $0x1f8] sm:$0xff]
        %v2767 = vld [vmem:[%s9] sm:$0xf]
        %v2769 = vperm.slane %v2767, 0
        %v2770 = vperm.slane %v2767, 1
        %v2771 = vperm.slane %v2767, 2
        %v2772 = vperm.slane %v2767, 3
        %v2841 = vunpack.c.l.b16 %v2703
        %v2842 = vunpack.c.h.b16 %v2703
        %v2843 = vunpack.c.l.b16 %v2704
        %v2844 = vunpack.c.h.b16 %v2704
        %v2845 = vunpack.c.l.b16 %v2705
        %v2846 = vunpack.c.h.b16 %v2705
        %v2847 = vunpack.c.l.b16 %v2706
        %v2848 = vunpack.c.h.b16 %v2706
        %v2849 = vunpack.c.l.b16 %v2707
        %v2850 = vunpack.c.h.b16 %v2707
        %v2851 = vunpack.c.l.b16 %v2708
        %v2852 = vunpack.c.h.b16 %v2708
        %v2853 = vunpack.c.l.b16 %v2709
        %v2854 = vunpack.c.h.b16 %v2709
        %v2855 = vunpack.c.l.b16 %v2710
        %v2856 = vunpack.c.h.b16 %v2710
        %v2857 = vunpack.c.l.b16 %v2711
        %v2858 = vunpack.c.h.b16 %v2711
        %v2859 = vunpack.c.l.b16 %v2712
        %v2860 = vunpack.c.h.b16 %v2712
        %v2861 = vunpack.c.l.b16 %v2713
        %v2862 = vunpack.c.h.b16 %v2713
        %v2863 = vunpack.c.l.b16 %v2714
        %v2864 = vunpack.c.h.b16 %v2714
        %v2865 = vunpack.c.l.b16 %v2715
        %v2866 = vunpack.c.h.b16 %v2715
        %v2867 = vunpack.c.l.b16 %v2716
        %v2868 = vunpack.c.h.b16 %v2716
        %v2869 = vunpack.c.l.b16 %v2717
        %v2870 = vunpack.c.h.b16 %v2717
        %v2871 = vunpack.c.l.b16 %v2718
        %v2872 = vunpack.c.h.b16 %v2718
        %v2873 = vunpack.c.l.b16 %v2719
        %v2874 = vunpack.c.h.b16 %v2719
        %v2875 = vunpack.c.l.b16 %v2720
        %v2876 = vunpack.c.h.b16 %v2720
        %v2877 = vunpack.c.l.b16 %v2721
        %v2878 = vunpack.c.h.b16 %v2721
        %v2879 = vunpack.c.l.b16 %v2722
        %v2880 = vunpack.c.h.b16 %v2722
        %v2881 = vunpack.c.l.b16 %v2723
        %v2882 = vunpack.c.h.b16 %v2723
        %v2883 = vunpack.c.l.b16 %v2724
        %v2884 = vunpack.c.h.b16 %v2724
        %v2885 = vunpack.c.l.b16 %v2725
        %v2886 = vunpack.c.h.b16 %v2725
        %v2887 = vunpack.c.l.b16 %v2726
        %v2888 = vunpack.c.h.b16 %v2726
        %v2889 = vunpack.c.l.b16 %v2727
        %v2890 = vunpack.c.h.b16 %v2727
        %v2891 = vunpack.c.l.b16 %v2728
        %v2892 = vunpack.c.h.b16 %v2728
        %v2893 = vunpack.c.l.b16 %v2729
        %v2894 = vunpack.c.h.b16 %v2729
        %v2895 = vunpack.c.l.b16 %v2730
        %v2896 = vunpack.c.h.b16 %v2730
        %v2897 = vunpack.c.l.b16 %v2731
        %v2898 = vunpack.c.h.b16 %v2731
        %v2899 = vunpack.c.l.b16 %v2732
        %v2900 = vunpack.c.h.b16 %v2732
        %v2901 = vunpack.c.l.b16 %v2733
        %v2902 = vunpack.c.h.b16 %v2733
        %v2903 = vunpack.c.l.b16 %v2734
        %v2904 = vunpack.c.h.b16 %v2734
        %v2905 = vunpack.c.l.b16 %v2735
        %v2906 = vunpack.c.h.b16 %v2735
        %v2907 = vunpack.c.l.b16 %v2736
        %v2908 = vunpack.c.h.b16 %v2736
        %v2909 = vunpack.c.l.b16 %v2737
        %v2910 = vunpack.c.h.b16 %v2737
        %v2911 = vunpack.c.l.b16 %v2738
        %v2912 = vunpack.c.h.b16 %v2738
        %v2913 = vunpack.c.l.b16 %v2739
        %v2914 = vunpack.c.h.b16 %v2739
        %v2915 = vunpack.c.l.b16 %v2740
        %v2916 = vunpack.c.h.b16 %v2740
        %v2917 = vunpack.c.l.b16 %v2741
        %v2918 = vunpack.c.h.b16 %v2741
        %v2919 = vunpack.c.l.b16 %v2742
        %v2920 = vunpack.c.h.b16 %v2742
        %v2921 = vunpack.c.l.b16 %v2743
        %v2922 = vunpack.c.h.b16 %v2743
        %v2923 = vunpack.c.l.b16 %v2744
        %v2924 = vunpack.c.h.b16 %v2744
        %v2925 = vunpack.c.l.b16 %v2745
        %v2926 = vunpack.c.h.b16 %v2745
        %v2927 = vunpack.c.l.b16 %v2746
        %v2928 = vunpack.c.h.b16 %v2746
        %v2929 = vunpack.c.l.b16 %v2747
        %v2930 = vunpack.c.h.b16 %v2747
        %v2931 = vunpack.c.l.b16 %v2748
        %v2932 = vunpack.c.h.b16 %v2748
        %v2933 = vunpack.c.l.b16 %v2749
        %v2934 = vunpack.c.h.b16 %v2749
        %v2935 = vunpack.c.l.b16 %v2750
        %v2936 = vunpack.c.h.b16 %v2750
        %v2937 = vunpack.c.l.b16 %v2751
        %v2938 = vunpack.c.h.b16 %v2751
        %v2939 = vunpack.c.l.b16 %v2752
        %v2940 = vunpack.c.h.b16 %v2752
        %v2941 = vunpack.c.l.b16 %v2753
        %v2942 = vunpack.c.h.b16 %v2753
        %v2943 = vunpack.c.l.b16 %v2754
        %v2944 = vunpack.c.h.b16 %v2754
        %v2945 = vunpack.c.l.b16 %v2755
        %v2946 = vunpack.c.h.b16 %v2755
        %v2947 = vunpack.c.l.b16 %v2756
        %v2948 = vunpack.c.h.b16 %v2756
        %v2949 = vunpack.c.l.b16 %v2757
        %v2950 = vunpack.c.h.b16 %v2757
        %v2951 = vunpack.c.l.b16 %v2758
        %v2952 = vunpack.c.h.b16 %v2758
        %v2953 = vunpack.c.l.b16 %v2759
        %v2954 = vunpack.c.h.b16 %v2759
        %v2955 = vunpack.c.l.b16 %v2760
        %v2956 = vunpack.c.h.b16 %v2760
        %v2957 = vunpack.c.l.b16 %v2761
        %v2958 = vunpack.c.h.b16 %v2761
        %v2959 = vunpack.c.l.b16 %v2762
        %v2960 = vunpack.c.h.b16 %v2762
        %v2961 = vunpack.c.l.b16 %v2763
        %v2962 = vunpack.c.h.b16 %v2763
        %v2963 = vunpack.c.l.b16 %v2764
        %v2964 = vunpack.c.h.b16 %v2764
        %v2965 = vunpack.c.l.b16 %v2765
        %v2966 = vunpack.c.h.b16 %v2765
        %v2967 = vunpack.c.l.b16 %v2766
        %v2968 = vunpack.c.h.b16 %v2766
        %v2969 = vpack.c.b16 %v2845, %v2841
        %v2970 = vpack.c.b16 %v2846, %v2842
        %v2971 = vpack.c.b16 %v2847, %v2843
        %v2972 = vpack.c.b16 %v2848, %v2844
        %v2973 = vpack.c.b16 %v2853, %v2849
        %v2974 = vpack.c.b16 %v2854, %v2850
        %v2975 = vpack.c.b16 %v2855, %v2851
        %v2976 = vpack.c.b16 %v2856, %v2852
        %v2977 = vpack.c.b16 %v2861, %v2857
        %v2978 = vpack.c.b16 %v2862, %v2858
        %v2979 = vpack.c.b16 %v2863, %v2859
        %v2980 = vpack.c.b16 %v2864, %v2860
        %v2981 = vpack.c.b16 %v2869, %v2865
        %v2982 = vpack.c.b16 %v2870, %v2866
        %v2983 = vpack.c.b16 %v2871, %v2867
        %v2984 = vpack.c.b16 %v2872, %v2868
        %v2985 = vpack.c.b16 %v2877, %v2873
        %v2986 = vpack.c.b16 %v2878, %v2874
        %v2987 = vpack.c.b16 %v2879, %v2875
        %v2988 = vpack.c.b16 %v2880, %v2876
        %v2989 = vpack.c.b16 %v2885, %v2881
        %v2990 = vpack.c.b16 %v2886, %v2882
        %v2991 = vpack.c.b16 %v2887, %v2883
        %v2992 = vpack.c.b16 %v2888, %v2884
        %v2993 = vpack.c.b16 %v2893, %v2889
        %v2994 = vpack.c.b16 %v2894, %v2890
        %v2995 = vpack.c.b16 %v2895, %v2891
        %v2996 = vpack.c.b16 %v2896, %v2892
        %v2997 = vpack.c.b16 %v2901, %v2897
        %v2998 = vpack.c.b16 %v2902, %v2898
        %v2999 = vpack.c.b16 %v2903, %v2899
        %v3000 = vpack.c.b16 %v2904, %v2900
        %v3001 = vpack.c.b16 %v2909, %v2905
        %v3002 = vpack.c.b16 %v2910, %v2906
        %v3003 = vpack.c.b16 %v2911, %v2907
        %v3004 = vpack.c.b16 %v2912, %v2908
        %v3005 = vpack.c.b16 %v2917, %v2913
        %v3006 = vpack.c.b16 %v2918, %v2914
        %v3007 = vpack.c.b16 %v2919, %v2915
        %v3008 = vpack.c.b16 %v2920, %v2916
        %v3009 = vpack.c.b16 %v2925, %v2921
        %v3010 = vpack.c.b16 %v2926, %v2922
        %v3011 = vpack.c.b16 %v2927, %v2923
        %v3012 = vpack.c.b16 %v2928, %v2924
        %v3013 = vpack.c.b16 %v2933, %v2929
        %v3014 = vpack.c.b16 %v2934, %v2930
        %v3015 = vpack.c.b16 %v2935, %v2931
        %v3016 = vpack.c.b16 %v2936, %v2932
        %v3017 = vpack.c.b16 %v2941, %v2937
        %v3018 = vpack.c.b16 %v2942, %v2938
        %v3019 = vpack.c.b16 %v2943, %v2939
        %v3020 = vpack.c.b16 %v2944, %v2940
        %v3021 = vpack.c.b16 %v2949, %v2945
        %v3022 = vpack.c.b16 %v2950, %v2946
        %v3023 = vpack.c.b16 %v2951, %v2947
        %v3024 = vpack.c.b16 %v2952, %v2948
        %v3025 = vpack.c.b16 %v2957, %v2953
        %v3026 = vpack.c.b16 %v2958, %v2954
        %v3027 = vpack.c.b16 %v2959, %v2955
        %v3028 = vpack.c.b16 %v2960, %v2956
        %v3029 = vpack.c.b16 %v2965, %v2961
        %v3030 = vpack.c.b16 %v2966, %v2962
        %v3031 = vpack.c.b16 %v2967, %v2963
        %v3032 = vpack.c.b16 %v2968, %v2964
        %3097 = vmatpush.bf16.msra.mxu0 %v2997
        %3098 = vmatpush.bf16.msra.mxu0 %v2993
        %3099 = vmatpush.bf16.msra.mxu0 %v2989
        %3100 = vmatpush.bf16.msra.mxu0 %v2985
        %3101 = vmatpush.bf16.msra.mxu0 %v2981
        %3102 = vmatpush.bf16.msra.mxu0 %v2977
        %3103 = vmatpush.bf16.msra.mxu0 %v2973
        %3104 = vmatpush.bf16.msra.mxu0 %v2969
        %3105 = vmatmul.bf16.gmra.mxu0 %v2687
        %v3106 = vpop.f32.mrf.mxu0
        %v3107 = vadd.f32 %v2769, %v3106
        %v3108 = vpop.f32.mrf.mxu0
        %v3109 = vadd.f32 %v2769, %v3108
        %3110 = vmatmul.bf16.gmra.mxu0 %v2689
        %v3111 = vpop.f32.mrf.mxu0
        %v3112 = vadd.f32 %v2769, %v3111
        %v3113 = vpop.f32.mrf.mxu0
        %v3114 = vadd.f32 %v2769, %v3113
        %3115 = vmatmul.bf16.gmra.mxu0 %v2691
        %v3116 = vpop.f32.mrf.mxu0
        %v3117 = vadd.f32 %v2769, %v3116
        %v3118 = vpop.f32.mrf.mxu0
        %v3119 = vadd.f32 %v2769, %v3118
        %3120 = vmatmul.bf16.gmra.mxu0 %v2693
        %v3121 = vpop.f32.mrf.mxu0
        %v3122 = vadd.f32 %v2769, %v3121
        %v3123 = vpop.f32.mrf.mxu0
        %v3124 = vadd.f32 %v2769, %v3123
        %3125 = vmatmul.bf16.gmra.mxu0 %v2695
        %v3126 = vpop.f32.mrf.mxu0
        %v3127 = vadd.f32 %v2769, %v3126
        %v3128 = vpop.f32.mrf.mxu0
        %v3129 = vadd.f32 %v2769, %v3128
        %3130 = vmatmul.bf16.gmra.mxu0 %v2697
        %v3131 = vpop.f32.mrf.mxu0
        %v3132 = vadd.f32 %v2769, %v3131
        %v3133 = vpop.f32.mrf.mxu0
        %v3134 = vadd.f32 %v2769, %v3133
        %3135 = vmatmul.bf16.gmra.mxu0 %v2699
        %v3136 = vpop.f32.mrf.mxu0
        %v3137 = vadd.f32 %v2769, %v3136
        %v3138 = vpop.f32.mrf.mxu0
        %v3139 = vadd.f32 %v2769, %v3138
        %3140 = vmatmul.bf16.gmra.mxu0 %v2701
        %v3141 = vpop.f32.mrf.mxu0
        %v3142 = vadd.f32 %v2769, %v3141
        %v3143 = vpop.f32.mrf.mxu0
        %v3144 = vadd.f32 %v2769, %v3143
        %3145 = vdwg.mxu0
        %3146 = vmatpush.bf16.msra.mxu0 %v3029
        %3147 = vmatpush.bf16.msra.mxu0 %v3025
        %3148 = vmatpush.bf16.msra.mxu0 %v3021
        %3149 = vmatpush.bf16.msra.mxu0 %v3017
        %3150 = vmatpush.bf16.msra.mxu0 %v3013
        %3151 = vmatpush.bf16.msra.mxu0 %v3009
        %3152 = vmatpush.bf16.msra.mxu0 %v3005
        %3153 = vmatpush.bf16.msra.mxu0 %v3001
        %3154 = vmatmul.bf16.gmra.mxu0 %v2688
        %v3155 = vpop.f32.mrf.mxu0
        %v3156 = vadd.f32 %v3107, %v3155
        %v3157 = vpop.f32.mrf.mxu0
        %v3158 = vadd.f32 %v3109, %v3157
        %3159 = vmatmul.bf16.gmra.mxu0 %v2690
        %v3160 = vpop.f32.mrf.mxu0
        %v3161 = vadd.f32 %v3112, %v3160
        %v3162 = vpop.f32.mrf.mxu0
        %v3163 = vadd.f32 %v3114, %v3162
        %3164 = vmatmul.bf16.gmra.mxu0 %v2692
        %v3165 = vpop.f32.mrf.mxu0
        %v3166 = vadd.f32 %v3117, %v3165
        %v3167 = vpop.f32.mrf.mxu0
        %v3168 = vadd.f32 %v3119, %v3167
        %3169 = vmatmul.bf16.gmra.mxu0 %v2694
        %v3170 = vpop.f32.mrf.mxu0
        %v3171 = vadd.f32 %v3122, %v3170
        %v3172 = vpop.f32.mrf.mxu0
        %v3173 = vadd.f32 %v3124, %v3172
        %3174 = vmatmul.bf16.gmra.mxu0 %v2696
        %v3175 = vpop.f32.mrf.mxu0
        %v3176 = vadd.f32 %v3127, %v3175
        %v3177 = vpop.f32.mrf.mxu0
        %v3178 = vadd.f32 %v3129, %v3177
        %3179 = vmatmul.bf16.gmra.mxu0 %v2698
        %v3180 = vpop.f32.mrf.mxu0
        %v3181 = vadd.f32 %v3132, %v3180
        %v3182 = vpop.f32.mrf.mxu0
        %v3183 = vadd.f32 %v3134, %v3182
        %3184 = vmatmul.bf16.gmra.mxu0 %v2700
        %v3185 = vpop.f32.mrf.mxu0
        %v3186 = vadd.f32 %v3137, %v3185
        %v3187 = vpop.f32.mrf.mxu0
        %v3188 = vadd.f32 %v3139, %v3187
        %3189 = vmatmul.bf16.gmra.mxu0 %v2702
        %v3190 = vpop.f32.mrf.mxu0
        %v3191 = vadd.f32 %v3142, %v3190
        %v3192 = vpop.f32.mrf.mxu0
        %v3193 = vadd.f32 %v3144, %v3192
        %3194 = vdwg.mxu0
        %3195 = vmatpush.bf16.msra.mxu0 %v2998
        %3196 = vmatpush.bf16.msra.mxu0 %v2994
        %3197 = vmatpush.bf16.msra.mxu0 %v2990
        %3198 = vmatpush.bf16.msra.mxu0 %v2986
        %3199 = vmatpush.bf16.msra.mxu0 %v2982
        %3200 = vmatpush.bf16.msra.mxu0 %v2978
        %3201 = vmatpush.bf16.msra.mxu0 %v2974
        %3202 = vmatpush.bf16.msra.mxu0 %v2970
        %3203 = vmatmul.bf16.gmra.mxu0 %v2687
        %v3204 = vpop.f32.mrf.mxu0
        %v3205 = vadd.f32 %v2770, %v3204
        %v3206 = vpop.f32.mrf.mxu0
        %v3207 = vadd.f32 %v2770, %v3206
        %3208 = vmatmul.bf16.gmra.mxu0 %v2689
        %v3209 = vpop.f32.mrf.mxu0
        %v3210 = vadd.f32 %v2770, %v3209
        %v3211 = vpop.f32.mrf.mxu0
        %v3212 = vadd.f32 %v2770, %v3211
        %3213 = vmatmul.bf16.gmra.mxu0 %v2691
        %v3214 = vpop.f32.mrf.mxu0
        %v3215 = vadd.f32 %v2770, %v3214
        %v3216 = vpop.f32.mrf.mxu0
        %v3217 = vadd.f32 %v2770, %v3216
        %3218 = vmatmul.bf16.gmra.mxu0 %v2693
        %v3219 = vpop.f32.mrf.mxu0
        %v3220 = vadd.f32 %v2770, %v3219
        %v3221 = vpop.f32.mrf.mxu0
        %v3222 = vadd.f32 %v2770, %v3221
        %3223 = vmatmul.bf16.gmra.mxu0 %v2695
        %v3224 = vpop.f32.mrf.mxu0
        %v3225 = vadd.f32 %v2770, %v3224
        %v3226 = vpop.f32.mrf.mxu0
        %v3227 = vadd.f32 %v2770, %v3226
        %3228 = vmatmul.bf16.gmra.mxu0 %v2697
        %v3229 = vpop.f32.mrf.mxu0
        %v3230 = vadd.f32 %v2770, %v3229
        %v3231 = vpop.f32.mrf.mxu0
        %v3232 = vadd.f32 %v2770, %v3231
        %3233 = vmatmul.bf16.gmra.mxu0 %v2699
        %v3234 = vpop.f32.mrf.mxu0
        %v3235 = vadd.f32 %v2770, %v3234
        %v3236 = vpop.f32.mrf.mxu0
        %v3237 = vadd.f32 %v2770, %v3236
        %3238 = vmatmul.bf16.gmra.mxu0 %v2701
        %v3239 = vpop.f32.mrf.mxu0
        %v3240 = vadd.f32 %v2770, %v3239
        %v3241 = vpop.f32.mrf.mxu0
        %v3242 = vadd.f32 %v2770, %v3241
        %3243 = vdwg.mxu0
        %3244 = vmatpush.bf16.msra.mxu0 %v3030
        %3245 = vmatpush.bf16.msra.mxu0 %v3026
        %3246 = vmatpush.bf16.msra.mxu0 %v3022
        %3247 = vmatpush.bf16.msra.mxu0 %v3018
        %3248 = vmatpush.bf16.msra.mxu0 %v3014
        %3249 = vmatpush.bf16.msra.mxu0 %v3010
        %3250 = vmatpush.bf16.msra.mxu0 %v3006
        %3251 = vmatpush.bf16.msra.mxu0 %v3002
        %3252 = vmatmul.bf16.gmra.mxu0 %v2688
        %v3253 = vpop.f32.mrf.mxu0
        %v3254 = vadd.f32 %v3205, %v3253
        %v3255 = vpop.f32.mrf.mxu0
        %v3256 = vadd.f32 %v3207, %v3255
        %3257 = vmatmul.bf16.gmra.mxu0 %v2690
        %v3258 = vpop.f32.mrf.mxu0
        %v3259 = vadd.f32 %v3210, %v3258
        %v3260 = vpop.f32.mrf.mxu0
        %v3261 = vadd.f32 %v3212, %v3260
        %3262 = vmatmul.bf16.gmra.mxu0 %v2692
        %v3263 = vpop.f32.mrf.mxu0
        %v3264 = vadd.f32 %v3215, %v3263
        %v3265 = vpop.f32.mrf.mxu0
        %v3266 = vadd.f32 %v3217, %v3265
        %3267 = vmatmul.bf16.gmra.mxu0 %v2694
        %v3268 = vpop.f32.mrf.mxu0
        %v3269 = vadd.f32 %v3220, %v3268
        %v3270 = vpop.f32.mrf.mxu0
        %v3271 = vadd.f32 %v3222, %v3270
        %3272 = vmatmul.bf16.gmra.mxu0 %v2696
        %v3273 = vpop.f32.mrf.mxu0
        %v3274 = vadd.f32 %v3225, %v3273
        %v3275 = vpop.f32.mrf.mxu0
        %v3276 = vadd.f32 %v3227, %v3275
        %3277 = vmatmul.bf16.gmra.mxu0 %v2698
        %v3278 = vpop.f32.mrf.mxu0
        %v3279 = vadd.f32 %v3230, %v3278
        %v3280 = vpop.f32.mrf.mxu0
        %v3281 = vadd.f32 %v3232, %v3280
        %3282 = vmatmul.bf16.gmra.mxu0 %v2700
        %v3283 = vpop.f32.mrf.mxu0
        %v3284 = vadd.f32 %v3235, %v3283
        %v3285 = vpop.f32.mrf.mxu0
        %v3286 = vadd.f32 %v3237, %v3285
        %3287 = vmatmul.bf16.gmra.mxu0 %v2702
        %v3288 = vpop.f32.mrf.mxu0
        %v3289 = vadd.f32 %v3240, %v3288
        %v3290 = vpop.f32.mrf.mxu0
        %v3291 = vadd.f32 %v3242, %v3290
        %3292 = vdwg.mxu0
        %3293 = vmatpush.bf16.msra.mxu0 %v2999
        %3294 = vmatpush.bf16.msra.mxu0 %v2995
        %3295 = vmatpush.bf16.msra.mxu0 %v2991
        %3296 = vmatpush.bf16.msra.mxu0 %v2987
        %3297 = vmatpush.bf16.msra.mxu0 %v2983
        %3298 = vmatpush.bf16.msra.mxu0 %v2979
        %3299 = vmatpush.bf16.msra.mxu0 %v2975
        %3300 = vmatpush.bf16.msra.mxu0 %v2971
        %3301 = vmatmul.bf16.gmra.mxu0 %v2687
        %v3302 = vpop.f32.mrf.mxu0
        %v3303 = vadd.f32 %v2771, %v3302
        %v3304 = vpop.f32.mrf.mxu0
        %v3305 = vadd.f32 %v2771, %v3304
        %3306 = vmatmul.bf16.gmra.mxu0 %v2689
        %v3307 = vpop.f32.mrf.mxu0
        %v3308 = vadd.f32 %v2771, %v3307
        %v3309 = vpop.f32.mrf.mxu0
        %v3310 = vadd.f32 %v2771, %v3309
        %3311 = vmatmul.bf16.gmra.mxu0 %v2691
        %v3312 = vpop.f32.mrf.mxu0
        %v3313 = vadd.f32 %v2771, %v3312
        %v3314 = vpop.f32.mrf.mxu0
        %v3315 = vadd.f32 %v2771, %v3314
        %3316 = vmatmul.bf16.gmra.mxu0 %v2693
        %v3317 = vpop.f32.mrf.mxu0
        %v3318 = vadd.f32 %v2771, %v3317
        %v3319 = vpop.f32.mrf.mxu0
        %v3320 = vadd.f32 %v2771, %v3319
        %3321 = vmatmul.bf16.gmra.mxu0 %v2695
        %v3322 = vpop.f32.mrf.mxu0
        %v3323 = vadd.f32 %v2771, %v3322
        %v3324 = vpop.f32.mrf.mxu0
        %v3325 = vadd.f32 %v2771, %v3324
        %3326 = vmatmul.bf16.gmra.mxu0 %v2697
        %v3327 = vpop.f32.mrf.mxu0
        %v3328 = vadd.f32 %v2771, %v3327
        %v3329 = vpop.f32.mrf.mxu0
        %v3330 = vadd.f32 %v2771, %v3329
        %3331 = vmatmul.bf16.gmra.mxu0 %v2699
        %v3332 = vpop.f32.mrf.mxu0
        %v3333 = vadd.f32 %v2771, %v3332
        %v3334 = vpop.f32.mrf.mxu0
        %v3335 = vadd.f32 %v2771, %v3334
        %3336 = vmatmul.bf16.gmra.mxu0 %v2701
        %v3337 = vpop.f32.mrf.mxu0
        %v3338 = vadd.f32 %v2771, %v3337
        %v3339 = vpop.f32.mrf.mxu0
        %v3340 = vadd.f32 %v2771, %v3339
        %3341 = vdwg.mxu0
        %3342 = vmatpush.bf16.msra.mxu0 %v3031
        %3343 = vmatpush.bf16.msra.mxu0 %v3027
        %3344 = vmatpush.bf16.msra.mxu0 %v3023
        %3345 = vmatpush.bf16.msra.mxu0 %v3019
        %3346 = vmatpush.bf16.msra.mxu0 %v3015
        %3347 = vmatpush.bf16.msra.mxu0 %v3011
        %3348 = vmatpush.bf16.msra.mxu0 %v3007
        %3349 = vmatpush.bf16.msra.mxu0 %v3003
        %3350 = vmatmul.bf16.gmra.mxu0 %v2688
        %v3351 = vpop.f32.mrf.mxu0
        %v3352 = vadd.f32 %v3303, %v3351
        %v3353 = vpop.f32.mrf.mxu0
        %v3354 = vadd.f32 %v3305, %v3353
        %3355 = vmatmul.bf16.gmra.mxu0 %v2690
        %v3356 = vpop.f32.mrf.mxu0
        %v3357 = vadd.f32 %v3308, %v3356
        %v3358 = vpop.f32.mrf.mxu0
        %v3359 = vadd.f32 %v3310, %v3358
        %3360 = vmatmul.bf16.gmra.mxu0 %v2692
        %v3361 = vpop.f32.mrf.mxu0
        %v3362 = vadd.f32 %v3313, %v3361
        %v3363 = vpop.f32.mrf.mxu0
        %v3364 = vadd.f32 %v3315, %v3363
        %3365 = vmatmul.bf16.gmra.mxu0 %v2694
        %v3366 = vpop.f32.mrf.mxu0
        %v3367 = vadd.f32 %v3318, %v3366
        %v3368 = vpop.f32.mrf.mxu0
        %v3369 = vadd.f32 %v3320, %v3368
        %3370 = vmatmul.bf16.gmra.mxu0 %v2696
        %v3371 = vpop.f32.mrf.mxu0
        %v3372 = vadd.f32 %v3323, %v3371
        %v3373 = vpop.f32.mrf.mxu0
        %v3374 = vadd.f32 %v3325, %v3373
        %3375 = vmatmul.bf16.gmra.mxu0 %v2698
        %v3376 = vpop.f32.mrf.mxu0
        %v3377 = vadd.f32 %v3328, %v3376
        %v3378 = vpop.f32.mrf.mxu0
        %v3379 = vadd.f32 %v3330, %v3378
        %3380 = vmatmul.bf16.gmra.mxu0 %v2700
        %v3381 = vpop.f32.mrf.mxu0
        %v3382 = vadd.f32 %v3333, %v3381
        %v3383 = vpop.f32.mrf.mxu0
        %v3384 = vadd.f32 %v3335, %v3383
        %3385 = vmatmul.bf16.gmra.mxu0 %v2702
        %v3386 = vpop.f32.mrf.mxu0
        %v3387 = vadd.f32 %v3338, %v3386
        %v3388 = vpop.f32.mrf.mxu0
        %v3389 = vadd.f32 %v3340, %v3388
        %3390 = vdwg.mxu0
        %3391 = vmatpush.bf16.msra.mxu0 %v3000
        %3392 = vmatpush.bf16.msra.mxu0 %v2996
        %3393 = vmatpush.bf16.msra.mxu0 %v2992
        %3394 = vmatpush.bf16.msra.mxu0 %v2988
        %3395 = vmatpush.bf16.msra.mxu0 %v2984
        %3396 = vmatpush.bf16.msra.mxu0 %v2980
        %3397 = vmatpush.bf16.msra.mxu0 %v2976
        %3398 = vmatpush.bf16.msra.mxu0 %v2972
        %3399 = vmatmul.bf16.gmra.mxu0 %v2687
        %v3400 = vpop.f32.mrf.mxu0
        %v3401 = vadd.f32 %v2772, %v3400
        %v3402 = vpop.f32.mrf.mxu0
        %v3403 = vadd.f32 %v2772, %v3402
        %3404 = vmatmul.bf16.gmra.mxu0 %v2689
        %v3405 = vpop.f32.mrf.mxu0
        %v3406 = vadd.f32 %v2772, %v3405
        %v3407 = vpop.f32.mrf.mxu0
        %v3408 = vadd.f32 %v2772, %v3407
        %3409 = vmatmul.bf16.gmra.mxu0 %v2691
        %v3410 = vpop.f32.mrf.mxu0
        %v3411 = vadd.f32 %v2772, %v3410
        %v3412 = vpop.f32.mrf.mxu0
        %v3413 = vadd.f32 %v2772, %v3412
        %3414 = vmatmul.bf16.gmra.mxu0 %v2693
        %v3415 = vpop.f32.mrf.mxu0
        %v3416 = vadd.f32 %v2772, %v3415
        %v3417 = vpop.f32.mrf.mxu0
        %v3418 = vadd.f32 %v2772, %v3417
        %3419 = vmatmul.bf16.gmra.mxu0 %v2695
        %v3420 = vpop.f32.mrf.mxu0
        %v3421 = vadd.f32 %v2772, %v3420
        %v3422 = vpop.f32.mrf.mxu0
        %v3423 = vadd.f32 %v2772, %v3422
        %3424 = vmatmul.bf16.gmra.mxu0 %v2697
        %v3425 = vpop.f32.mrf.mxu0
        %v3426 = vadd.f32 %v2772, %v3425
        %v3427 = vpop.f32.mrf.mxu0
        %v3428 = vadd.f32 %v2772, %v3427
        %3429 = vmatmul.bf16.gmra.mxu0 %v2699
        %v3430 = vpop.f32.mrf.mxu0
        %v3431 = vadd.f32 %v2772, %v3430
        %v3432 = vpop.f32.mrf.mxu0
        %v3433 = vadd.f32 %v2772, %v3432
        %3434 = vmatmul.bf16.gmra.mxu0 %v2701
        %v3435 = vpop.f32.mrf.mxu0
        %v3436 = vadd.f32 %v2772, %v3435
        %v3437 = vpop.f32.mrf.mxu0
        %v3438 = vadd.f32 %v2772, %v3437
        %3439 = vdwg.mxu0
        %3440 = vmatpush.bf16.msra.mxu0 %v3032
        %3441 = vmatpush.bf16.msra.mxu0 %v3028
        %3442 = vmatpush.bf16.msra.mxu0 %v3024
        %3443 = vmatpush.bf16.msra.mxu0 %v3020
        %3444 = vmatpush.bf16.msra.mxu0 %v3016
        %3445 = vmatpush.bf16.msra.mxu0 %v3012
        %3446 = vmatpush.bf16.msra.mxu0 %v3008
        %3447 = vmatpush.bf16.msra.mxu0 %v3004
        %3448 = vmatmul.bf16.gmra.mxu0 %v2688
        %v3449 = vpop.f32.mrf.mxu0
        %v3450 = vadd.f32 %v3401, %v3449
        %v3451 = vpop.f32.mrf.mxu0
        %v3452 = vadd.f32 %v3403, %v3451
        %3453 = vmatmul.bf16.gmra.mxu0 %v2690
        %v3454 = vpop.f32.mrf.mxu0
        %v3455 = vadd.f32 %v3406, %v3454
        %v3456 = vpop.f32.mrf.mxu0
        %v3457 = vadd.f32 %v3408, %v3456
        %3458 = vmatmul.bf16.gmra.mxu0 %v2692
        %v3459 = vpop.f32.mrf.mxu0
        %v3460 = vadd.f32 %v3411, %v3459
        %v3461 = vpop.f32.mrf.mxu0
        %v3462 = vadd.f32 %v3413, %v3461
        %3463 = vmatmul.bf16.gmra.mxu0 %v2694
        %v3464 = vpop.f32.mrf.mxu0
        %v3465 = vadd.f32 %v3416, %v3464
        %v3466 = vpop.f32.mrf.mxu0
        %v3467 = vadd.f32 %v3418, %v3466
        %3468 = vmatmul.bf16.gmra.mxu0 %v2696
        %v3469 = vpop.f32.mrf.mxu0
        %v3470 = vadd.f32 %v3421, %v3469
        %v3471 = vpop.f32.mrf.mxu0
        %v3472 = vadd.f32 %v3423, %v3471
        %3473 = vmatmul.bf16.gmra.mxu0 %v2698
        %v3474 = vpop.f32.mrf.mxu0
        %v3475 = vadd.f32 %v3426, %v3474
        %v3476 = vpop.f32.mrf.mxu0
        %v3477 = vadd.f32 %v3428, %v3476
        %3478 = vmatmul.bf16.gmra.mxu0 %v2700
        %v3479 = vpop.f32.mrf.mxu0
        %v3480 = vadd.f32 %v3431, %v3479
        %v3481 = vpop.f32.mrf.mxu0
        %v3482 = vadd.f32 %v3433, %v3481
        %3483 = vmatmul.bf16.gmra.mxu0 %v2702
        %v3484 = vpop.f32.mrf.mxu0
        %v3485 = vadd.f32 %v3436, %v3484
        %v3486 = vpop.f32.mrf.mxu0
        %v3487 = vadd.f32 %v3438, %v3486
        %3488 = vdwg.mxu0
        %v3489 = vtanh.pop %v3156
        %v3490 = vtanh.pop %v3254
        %v3491 = vtanh.pop %v3158
        %v3492 = vtanh.pop %v3256
        %v3493 = vtanh.pop %v3161
        %v3494 = vtanh.pop %v3259
        %v3495 = vtanh.pop %v3163
        %v3496 = vtanh.pop %v3261
        %v3497 = vtanh.pop %v3166
        %v3498 = vtanh.pop %v3264
        %v3499 = vtanh.pop %v3168
        %v3500 = vtanh.pop %v3266
        %v3501 = vtanh.pop %v3171
        %v3502 = vtanh.pop %v3269
        %v3503 = vtanh.pop %v3173
        %v3504 = vtanh.pop %v3271
        %v3505 = vtanh.pop %v3176
        %v3506 = vtanh.pop %v3274
        %v3507 = vtanh.pop %v3178
        %v3508 = vtanh.pop %v3276
        %v3509 = vtanh.pop %v3181
        %v3510 = vtanh.pop %v3279
        %v3511 = vtanh.pop %v3183
        %v3512 = vtanh.pop %v3281
        %v3513 = vtanh.pop %v3186
        %v3514 = vtanh.pop %v3284
        %v3515 = vtanh.pop %v3188
        %v3516 = vtanh.pop %v3286
        %v3517 = vtanh.pop %v3191
        %v3518 = vtanh.pop %v3289
        %v3519 = vtanh.pop %v3193
        %v3520 = vtanh.pop %v3291
        %v3521 = vxor.u32 %v3352, 2147483648
        %v3522 = vxor.u32 %v3450, 2147483648
        %v3523 = vxor.u32 %v3354, 2147483648
        %v3524 = vxor.u32 %v3452, 2147483648
        %v3525 = vxor.u32 %v3357, 2147483648
        %v3526 = vxor.u32 %v3455, 2147483648
        %v3527 = vxor.u32 %v3359, 2147483648
        %v3528 = vxor.u32 %v3457, 2147483648
        %v3529 = vxor.u32 %v3362, 2147483648
        %v3530 = vxor.u32 %v3460, 2147483648
        %v3531 = vxor.u32 %v3364, 2147483648
        %v3532 = vxor.u32 %v3462, 2147483648
        %v3533 = vxor.u32 %v3367, 2147483648
        %v3534 = vxor.u32 %v3465, 2147483648
        %v3535 = vxor.u32 %v3369, 2147483648
        %v3536 = vxor.u32 %v3467, 2147483648
        %v3537 = vxor.u32 %v3372, 2147483648
        %v3538 = vxor.u32 %v3470, 2147483648
        %v3539 = vxor.u32 %v3374, 2147483648
        %v3540 = vxor.u32 %v3472, 2147483648
        %v3541 = vxor.u32 %v3377, 2147483648
        %v3542 = vxor.u32 %v3475, 2147483648
        %v3543 = vxor.u32 %v3379, 2147483648
        %v3544 = vxor.u32 %v3477, 2147483648
        %v3545 = vxor.u32 %v3382, 2147483648
        %v3546 = vxor.u32 %v3480, 2147483648
        %v3547 = vxor.u32 %v3384, 2147483648
        %v3548 = vxor.u32 %v3482, 2147483648
        %v3549 = vxor.u32 %v3387, 2147483648
        %v3550 = vxor.u32 %v3485, 2147483648
        %v3551 = vxor.u32 %v3389, 2147483648
        %v3552 = vxor.u32 %v3487, 2147483648
        %v3553 = vmul.f32 %v3521, 1.442695
        %v3554 = vpow.pop %v3553
        %v3555 = vmul.f32 %v3522, 1.442695
        %v3556 = vpow.pop %v3555
        %v3557 = vmul.f32 %v3523, 1.442695
        %v3558 = vpow.pop %v3557
        %v3559 = vmul.f32 %v3524, 1.442695
        %v3560 = vpow.pop %v3559
        %v3561 = vmul.f32 %v3525, 1.442695
        %v3562 = vpow.pop %v3561
        %v3563 = vmul.f32 %v3526, 1.442695
        %v3564 = vpow.pop %v3563
        %v3565 = vmul.f32 %v3527, 1.442695
        %v3566 = vpow.pop %v3565
        %v3567 = vmul.f32 %v3528, 1.442695
        %v3568 = vpow.pop %v3567
        %v3569 = vmul.f32 %v3529, 1.442695
        %v3570 = vpow.pop %v3569
        %v3571 = vmul.f32 %v3530, 1.442695
        %v3572 = vpow.pop %v3571
        %v3573 = vmul.f32 %v3531, 1.442695
        %v3574 = vpow.pop %v3573
        %v3575 = vmul.f32 %v3532, 1.442695
        %v3576 = vpow.pop %v3575
        %v3577 = vmul.f32 %v3533, 1.442695
        %v3578 = vpow.pop %v3577
        %v3579 = vmul.f32 %v3534, 1.442695
        %v3580 = vpow.pop %v3579
        %v3581 = vmul.f32 %v3535, 1.442695
        %v3582 = vpow.pop %v3581
        %v3583 = vmul.f32 %v3536, 1.442695
        %v3584 = vpow.pop %v3583
        %v3585 = vmul.f32 %v3537, 1.442695
        %v3586 = vpow.pop %v3585
        %v3587 = vmul.f32 %v3538, 1.442695
        %v3588 = vpow.pop %v3587
        %v3589 = vmul.f32 %v3539, 1.442695
        %v3590 = vpow.pop %v3589
        %v3591 = vmul.f32 %v3540, 1.442695
        %v3592 = vpow.pop %v3591
        %v3593 = vmul.f32 %v3541, 1.442695
        %v3594 = vpow.pop %v3593
        %v3595 = vmul.f32 %v3542, 1.442695
        %v3596 = vpow.pop %v3595
        %v3597 = vmul.f32 %v3543, 1.442695
        %v3598 = vpow.pop %v3597
        %v3599 = vmul.f32 %v3544, 1.442695
        %v3600 = vpow.pop %v3599
        %v3601 = vmul.f32 %v3545, 1.442695
        %v3602 = vpow.pop %v3601
        %v3603 = vmul.f32 %v3546, 1.442695
        %v3604 = vpow.pop %v3603
        %v3605 = vmul.f32 %v3547, 1.442695
        %v3606 = vpow.pop %v3605
        %v3607 = vmul.f32 %v3548, 1.442695
        %v3608 = vpow.pop %v3607
        %v3609 = vmul.f32 %v3549, 1.442695
        %v3610 = vpow.pop %v3609
        %v3611 = vmul.f32 %v3550, 1.442695
        %v3612 = vpow.pop %v3611
        %v3613 = vmul.f32 %v3551, 1.442695
        %v3614 = vpow.pop %v3613
        %v3615 = vmul.f32 %v3552, 1.442695
        %v3616 = vpow.pop %v3615
        %v3617 = vadd.f32 %v3554, 1.0
        %v3618 = vadd.f32 %v3556, 1.0
        %v3619 = vadd.f32 %v3558, 1.0
        %v3620 = vadd.f32 %v3560, 1.0
        %v3621 = vadd.f32 %v3562, 1.0
        %v3622 = vadd.f32 %v3564, 1.0
        %v3623 = vadd.f32 %v3566, 1.0
        %v3624 = vadd.f32 %v3568, 1.0
        %v3625 = vadd.f32 %v3570, 1.0
        %v3626 = vadd.f32 %v3572, 1.0
        %v3627 = vadd.f32 %v3574, 1.0
        %v3628 = vadd.f32 %v3576, 1.0
        %v3629 = vadd.f32 %v3578, 1.0
        %v3630 = vadd.f32 %v3580, 1.0
        %v3631 = vadd.f32 %v3582, 1.0
        %v3632 = vadd.f32 %v3584, 1.0
        %v3633 = vadd.f32 %v3586, 1.0
        %v3634 = vadd.f32 %v3588, 1.0
        %v3635 = vadd.f32 %v3590, 1.0
        %v3636 = vadd.f32 %v3592, 1.0
        %v3637 = vadd.f32 %v3594, 1.0
        %v3638 = vadd.f32 %v3596, 1.0
        %v3639 = vadd.f32 %v3598, 1.0
        %v3640 = vadd.f32 %v3600, 1.0
        %v3641 = vadd.f32 %v3602, 1.0
        %v3642 = vadd.f32 %v3604, 1.0
        %v3643 = vadd.f32 %v3606, 1.0
        %v3644 = vadd.f32 %v3608, 1.0
        %v3645 = vadd.f32 %v3610, 1.0
        %v3646 = vadd.f32 %v3612, 1.0
        %v3647 = vadd.f32 %v3614, 1.0
        %v3648 = vadd.f32 %v3616, 1.0
        %v3649 = vrcp.pop %v3617
        %v3650 = vmul.f32 %v3617, %v3649
        %v3651 = vsub.f32 1.0, %v3650
        %v3652 = vmul.f32 %v3649, %v3651
        %v3653 = vadd.f32 %v3649, %v3652
        %vm3654 = vweird.f32 %v3617
        %vm3655 = vweird.f32 %v3649
        %vm3656 = vmor %vm3654, %vm3655
        %v3657 = vsel %vm3656, %v3649, %v3653
        %v3658 = vand.u32 2147483647, %v3617
        %vm3659 = vcmp.eq.f32.partialorder %v3658, 8.507059e+37
        %v3660 = vand.u32 %v3617, 2147483648
        %v3661 = vor.u32 1.1754944e-38, %v3660
        %v3662 = vsel %vm3659, %v3661, %v3657
        %v3663 = vmul.f32 1.0, %v3662
        %v3664 = vrcp.pop %v3618
        %v3665 = vmul.f32 %v3618, %v3664
        %v3666 = vsub.f32 1.0, %v3665
        %v3667 = vmul.f32 %v3664, %v3666
        %v3668 = vadd.f32 %v3664, %v3667
        %vm3669 = vweird.f32 %v3618
        %vm3670 = vweird.f32 %v3664
        %vm3671 = vmor %vm3669, %vm3670
        %v3672 = vsel %vm3671, %v3664, %v3668
        %v3673 = vand.u32 2147483647, %v3618
        %vm3674 = vcmp.eq.f32.partialorder %v3673, 8.507059e+37
        %v3675 = vand.u32 %v3618, 2147483648
        %v3676 = vor.u32 1.1754944e-38, %v3675
        %v3677 = vsel %vm3674, %v3676, %v3672
        %v3678 = vmul.f32 1.0, %v3677
        %v3679 = vrcp.pop %v3619
        %v3680 = vmul.f32 %v3619, %v3679
        %v3681 = vsub.f32 1.0, %v3680
        %v3682 = vmul.f32 %v3679, %v3681
        %v3683 = vadd.f32 %v3679, %v3682
        %vm3684 = vweird.f32 %v3619
        %vm3685 = vweird.f32 %v3679
        %vm3686 = vmor %vm3684, %vm3685
        %v3687 = vsel %vm3686, %v3679, %v3683
        %v3688 = vand.u32 2147483647, %v3619
        %vm3689 = vcmp.eq.f32.partialorder %v3688, 8.507059e+37
        %v3690 = vand.u32 %v3619, 2147483648
        %v3691 = vor.u32 1.1754944e-38, %v3690
        %v3692 = vsel %vm3689, %v3691, %v3687
        %v3693 = vmul.f32 1.0, %v3692
        %v3694 = vrcp.pop %v3620
        %v3695 = vmul.f32 %v3620, %v3694
        %v3696 = vsub.f32 1.0, %v3695
        %v3697 = vmul.f32 %v3694, %v3696
        %v3698 = vadd.f32 %v3694, %v3697
        %vm3699 = vweird.f32 %v3620
        %vm3700 = vweird.f32 %v3694
        %vm3701 = vmor %vm3699, %vm3700
        %v3702 = vsel %vm3701, %v3694, %v3698
        %v3703 = vand.u32 2147483647, %v3620
        %vm3704 = vcmp.eq.f32.partialorder %v3703, 8.507059e+37
        %v3705 = vand.u32 %v3620, 2147483648
        %v3706 = vor.u32 1.1754944e-38, %v3705
        %v3707 = vsel %vm3704, %v3706, %v3702
        %v3708 = vmul.f32 1.0, %v3707
        %v3709 = vrcp.pop %v3621
        %v3710 = vmul.f32 %v3621, %v3709
        %v3711 = vsub.f32 1.0, %v3710
        %v3712 = vmul.f32 %v3709, %v3711
        %v3713 = vadd.f32 %v3709, %v3712
        %vm3714 = vweird.f32 %v3621
        %vm3715 = vweird.f32 %v3709
        %vm3716 = vmor %vm3714, %vm3715
        %v3717 = vsel %vm3716, %v3709, %v3713
        %v3718 = vand.u32 2147483647, %v3621
        %vm3719 = vcmp.eq.f32.partialorder %v3718, 8.507059e+37
        %v3720 = vand.u32 %v3621, 2147483648
        %v3721 = vor.u32 1.1754944e-38, %v3720
        %v3722 = vsel %vm3719, %v3721, %v3717
        %v3723 = vmul.f32 1.0, %v3722
        %v3724 = vrcp.pop %v3622
        %v3725 = vmul.f32 %v3622, %v3724
        %v3726 = vsub.f32 1.0, %v3725
        %v3727 = vmul.f32 %v3724, %v3726
        %v3728 = vadd.f32 %v3724, %v3727
        %vm3729 = vweird.f32 %v3622
        %vm3730 = vweird.f32 %v3724
        %vm3731 = vmor %vm3729, %vm3730
        %v3732 = vsel %vm3731, %v3724, %v3728
        %v3733 = vand.u32 2147483647, %v3622
        %vm3734 = vcmp.eq.f32.partialorder %v3733, 8.507059e+37
        %v3735 = vand.u32 %v3622, 2147483648
        %v3736 = vor.u32 1.1754944e-38, %v3735
        %v3737 = vsel %vm3734, %v3736, %v3732
        %v3738 = vmul.f32 1.0, %v3737
        %v3739 = vrcp.pop %v3623
        %v3740 = vmul.f32 %v3623, %v3739
        %v3741 = vsub.f32 1.0, %v3740
        %v3742 = vmul.f32 %v3739, %v3741
        %v3743 = vadd.f32 %v3739, %v3742
        %vm3744 = vweird.f32 %v3623
        %vm3745 = vweird.f32 %v3739
        %vm3746 = vmor %vm3744, %vm3745
        %v3747 = vsel %vm3746, %v3739, %v3743
        %v3748 = vand.u32 2147483647, %v3623
        %vm3749 = vcmp.eq.f32.partialorder %v3748, 8.507059e+37
        %v3750 = vand.u32 %v3623, 2147483648
        %v3751 = vor.u32 1.1754944e-38, %v3750
        %v3752 = vsel %vm3749, %v3751, %v3747
        %v3753 = vmul.f32 1.0, %v3752
        %v3754 = vrcp.pop %v3624
        %v3755 = vmul.f32 %v3624, %v3754
        %v3756 = vsub.f32 1.0, %v3755
        %v3757 = vmul.f32 %v3754, %v3756
        %v3758 = vadd.f32 %v3754, %v3757
        %vm3759 = vweird.f32 %v3624
        %vm3760 = vweird.f32 %v3754
        %vm3761 = vmor %vm3759, %vm3760
        %v3762 = vsel %vm3761, %v3754, %v3758
        %v3763 = vand.u32 2147483647, %v3624
        %vm3764 = vcmp.eq.f32.partialorder %v3763, 8.507059e+37
        %v3765 = vand.u32 %v3624, 2147483648
        %v3766 = vor.u32 1.1754944e-38, %v3765
        %v3767 = vsel %vm3764, %v3766, %v3762
        %v3768 = vmul.f32 1.0, %v3767
        %v3769 = vrcp.pop %v3625
        %v3770 = vmul.f32 %v3625, %v3769
        %v3771 = vsub.f32 1.0, %v3770
        %v3772 = vmul.f32 %v3769, %v3771
        %v3773 = vadd.f32 %v3769, %v3772
        %vm3774 = vweird.f32 %v3625
        %vm3775 = vweird.f32 %v3769
        %vm3776 = vmor %vm3774, %vm3775
        %v3777 = vsel %vm3776, %v3769, %v3773
        %v3778 = vand.u32 2147483647, %v3625
        %vm3779 = vcmp.eq.f32.partialorder %v3778, 8.507059e+37
        %v3780 = vand.u32 %v3625, 2147483648
        %v3781 = vor.u32 1.1754944e-38, %v3780
        %v3782 = vsel %vm3779, %v3781, %v3777
        %v3783 = vmul.f32 1.0, %v3782
        %v3784 = vrcp.pop %v3626
        %v3785 = vmul.f32 %v3626, %v3784
        %v3786 = vsub.f32 1.0, %v3785
        %v3787 = vmul.f32 %v3784, %v3786
        %v3788 = vadd.f32 %v3784, %v3787
        %vm3789 = vweird.f32 %v3626
        %vm3790 = vweird.f32 %v3784
        %vm3791 = vmor %vm3789, %vm3790
        %v3792 = vsel %vm3791, %v3784, %v3788
        %v3793 = vand.u32 2147483647, %v3626
        %vm3794 = vcmp.eq.f32.partialorder %v3793, 8.507059e+37
        %v3795 = vand.u32 %v3626, 2147483648
        %v3796 = vor.u32 1.1754944e-38, %v3795
        %v3797 = vsel %vm3794, %v3796, %v3792
        %v3798 = vmul.f32 1.0, %v3797
        %v3799 = vrcp.pop %v3627
        %v3800 = vmul.f32 %v3627, %v3799
        %v3801 = vsub.f32 1.0, %v3800
        %v3802 = vmul.f32 %v3799, %v3801
        %v3803 = vadd.f32 %v3799, %v3802
        %vm3804 = vweird.f32 %v3627
        %vm3805 = vweird.f32 %v3799
        %vm3806 = vmor %vm3804, %vm3805
        %v3807 = vsel %vm3806, %v3799, %v3803
        %v3808 = vand.u32 2147483647, %v3627
        %vm3809 = vcmp.eq.f32.partialorder %v3808, 8.507059e+37
        %v3810 = vand.u32 %v3627, 2147483648
        %v3811 = vor.u32 1.1754944e-38, %v3810
        %v3812 = vsel %vm3809, %v3811, %v3807
        %v3813 = vmul.f32 1.0, %v3812
        %v3814 = vrcp.pop %v3628
        %v3815 = vmul.f32 %v3628, %v3814
        %v3816 = vsub.f32 1.0, %v3815
        %v3817 = vmul.f32 %v3814, %v3816
        %v3818 = vadd.f32 %v3814, %v3817
        %vm3819 = vweird.f32 %v3628
        %vm3820 = vweird.f32 %v3814
        %vm3821 = vmor %vm3819, %vm3820
        %v3822 = vsel %vm3821, %v3814, %v3818
        %v3823 = vand.u32 2147483647, %v3628
        %vm3824 = vcmp.eq.f32.partialorder %v3823, 8.507059e+37
        %v3825 = vand.u32 %v3628, 2147483648
        %v3826 = vor.u32 1.1754944e-38, %v3825
        %v3827 = vsel %vm3824, %v3826, %v3822
        %v3828 = vmul.f32 1.0, %v3827
        %v3829 = vrcp.pop %v3629
        %v3830 = vmul.f32 %v3629, %v3829
        %v3831 = vsub.f32 1.0, %v3830
        %v3832 = vmul.f32 %v3829, %v3831
        %v3833 = vadd.f32 %v3829, %v3832
        %vm3834 = vweird.f32 %v3629
        %vm3835 = vweird.f32 %v3829
        %vm3836 = vmor %vm3834, %vm3835
        %v3837 = vsel %vm3836, %v3829, %v3833
        %v3838 = vand.u32 2147483647, %v3629
        %vm3839 = vcmp.eq.f32.partialorder %v3838, 8.507059e+37
        %v3840 = vand.u32 %v3629, 2147483648
        %v3841 = vor.u32 1.1754944e-38, %v3840
        %v3842 = vsel %vm3839, %v3841, %v3837
        %v3843 = vmul.f32 1.0, %v3842
        %v3844 = vrcp.pop %v3630
        %v3845 = vmul.f32 %v3630, %v3844
        %v3846 = vsub.f32 1.0, %v3845
        %v3847 = vmul.f32 %v3844, %v3846
        %v3848 = vadd.f32 %v3844, %v3847
        %vm3849 = vweird.f32 %v3630
        %vm3850 = vweird.f32 %v3844
        %vm3851 = vmor %vm3849, %vm3850
        %v3852 = vsel %vm3851, %v3844, %v3848
        %v3853 = vand.u32 2147483647, %v3630
        %vm3854 = vcmp.eq.f32.partialorder %v3853, 8.507059e+37
        %v3855 = vand.u32 %v3630, 2147483648
        %v3856 = vor.u32 1.1754944e-38, %v3855
        %v3857 = vsel %vm3854, %v3856, %v3852
        %v3858 = vmul.f32 1.0, %v3857
        %v3859 = vrcp.pop %v3631
        %v3860 = vmul.f32 %v3631, %v3859
        %v3861 = vsub.f32 1.0, %v3860
        %v3862 = vmul.f32 %v3859, %v3861
        %v3863 = vadd.f32 %v3859, %v3862
        %vm3864 = vweird.f32 %v3631
        %vm3865 = vweird.f32 %v3859
        %vm3866 = vmor %vm3864, %vm3865
        %v3867 = vsel %vm3866, %v3859, %v3863
        %v3868 = vand.u32 2147483647, %v3631
        %vm3869 = vcmp.eq.f32.partialorder %v3868, 8.507059e+37
        %v3870 = vand.u32 %v3631, 2147483648
        %v3871 = vor.u32 1.1754944e-38, %v3870
        %v3872 = vsel %vm3869, %v3871, %v3867
        %v3873 = vmul.f32 1.0, %v3872
        %v3874 = vrcp.pop %v3632
        %v3875 = vmul.f32 %v3632, %v3874
        %v3876 = vsub.f32 1.0, %v3875
        %v3877 = vmul.f32 %v3874, %v3876
        %v3878 = vadd.f32 %v3874, %v3877
        %vm3879 = vweird.f32 %v3632
        %vm3880 = vweird.f32 %v3874
        %vm3881 = vmor %vm3879, %vm3880
        %v3882 = vsel %vm3881, %v3874, %v3878
        %v3883 = vand.u32 2147483647, %v3632
        %vm3884 = vcmp.eq.f32.partialorder %v3883, 8.507059e+37
        %v3885 = vand.u32 %v3632, 2147483648
        %v3886 = vor.u32 1.1754944e-38, %v3885
        %v3887 = vsel %vm3884, %v3886, %v3882
        %v3888 = vmul.f32 1.0, %v3887
        %v3889 = vrcp.pop %v3633
        %v3890 = vmul.f32 %v3633, %v3889
        %v3891 = vsub.f32 1.0, %v3890
        %v3892 = vmul.f32 %v3889, %v3891
        %v3893 = vadd.f32 %v3889, %v3892
        %vm3894 = vweird.f32 %v3633
        %vm3895 = vweird.f32 %v3889
        %vm3896 = vmor %vm3894, %vm3895
        %v3897 = vsel %vm3896, %v3889, %v3893
        %v3898 = vand.u32 2147483647, %v3633
        %vm3899 = vcmp.eq.f32.partialorder %v3898, 8.507059e+37
        %v3900 = vand.u32 %v3633, 2147483648
        %v3901 = vor.u32 1.1754944e-38, %v3900
        %v3902 = vsel %vm3899, %v3901, %v3897
        %v3903 = vmul.f32 1.0, %v3902
        %v3904 = vrcp.pop %v3634
        %v3905 = vmul.f32 %v3634, %v3904
        %v3906 = vsub.f32 1.0, %v3905
        %v3907 = vmul.f32 %v3904, %v3906
        %v3908 = vadd.f32 %v3904, %v3907
        %vm3909 = vweird.f32 %v3634
        %vm3910 = vweird.f32 %v3904
        %vm3911 = vmor %vm3909, %vm3910
        %v3912 = vsel %vm3911, %v3904, %v3908
        %v3913 = vand.u32 2147483647, %v3634
        %vm3914 = vcmp.eq.f32.partialorder %v3913, 8.507059e+37
        %v3915 = vand.u32 %v3634, 2147483648
        %v3916 = vor.u32 1.1754944e-38, %v3915
        %v3917 = vsel %vm3914, %v3916, %v3912
        %v3918 = vmul.f32 1.0, %v3917
        %v3919 = vrcp.pop %v3635
        %v3920 = vmul.f32 %v3635, %v3919
        %v3921 = vsub.f32 1.0, %v3920
        %v3922 = vmul.f32 %v3919, %v3921
        %v3923 = vadd.f32 %v3919, %v3922
        %vm3924 = vweird.f32 %v3635
        %vm3925 = vweird.f32 %v3919
        %vm3926 = vmor %vm3924, %vm3925
        %v3927 = vsel %vm3926, %v3919, %v3923
        %v3928 = vand.u32 2147483647, %v3635
        %vm3929 = vcmp.eq.f32.partialorder %v3928, 8.507059e+37
        %v3930 = vand.u32 %v3635, 2147483648
        %v3931 = vor.u32 1.1754944e-38, %v3930
        %v3932 = vsel %vm3929, %v3931, %v3927
        %v3933 = vmul.f32 1.0, %v3932
        %v3934 = vrcp.pop %v3636
        %v3935 = vmul.f32 %v3636, %v3934
        %v3936 = vsub.f32 1.0, %v3935
        %v3937 = vmul.f32 %v3934, %v3936
        %v3938 = vadd.f32 %v3934, %v3937
        %vm3939 = vweird.f32 %v3636
        %vm3940 = vweird.f32 %v3934
        %vm3941 = vmor %vm3939, %vm3940
        %v3942 = vsel %vm3941, %v3934, %v3938
        %v3943 = vand.u32 2147483647, %v3636
        %vm3944 = vcmp.eq.f32.partialorder %v3943, 8.507059e+37
        %v3945 = vand.u32 %v3636, 2147483648
        %v3946 = vor.u32 1.1754944e-38, %v3945
        %v3947 = vsel %vm3944, %v3946, %v3942
        %v3948 = vmul.f32 1.0, %v3947
        %v3949 = vrcp.pop %v3637
        %v3950 = vmul.f32 %v3637, %v3949
        %v3951 = vsub.f32 1.0, %v3950
        %v3952 = vmul.f32 %v3949, %v3951
        %v3953 = vadd.f32 %v3949, %v3952
        %vm3954 = vweird.f32 %v3637
        %vm3955 = vweird.f32 %v3949
        %vm3956 = vmor %vm3954, %vm3955
        %v3957 = vsel %vm3956, %v3949, %v3953
        %v3958 = vand.u32 2147483647, %v3637
        %vm3959 = vcmp.eq.f32.partialorder %v3958, 8.507059e+37
        %v3960 = vand.u32 %v3637, 2147483648
        %v3961 = vor.u32 1.1754944e-38, %v3960
        %v3962 = vsel %vm3959, %v3961, %v3957
        %v3963 = vmul.f32 1.0, %v3962
        %v3964 = vrcp.pop %v3638
        %v3965 = vmul.f32 %v3638, %v3964
        %v3966 = vsub.f32 1.0, %v3965
        %v3967 = vmul.f32 %v3964, %v3966
        %v3968 = vadd.f32 %v3964, %v3967
        %vm3969 = vweird.f32 %v3638
        %vm3970 = vweird.f32 %v3964
        %vm3971 = vmor %vm3969, %vm3970
        %v3972 = vsel %vm3971, %v3964, %v3968
        %v3973 = vand.u32 2147483647, %v3638
        %vm3974 = vcmp.eq.f32.partialorder %v3973, 8.507059e+37
        %v3975 = vand.u32 %v3638, 2147483648
        %v3976 = vor.u32 1.1754944e-38, %v3975
        %v3977 = vsel %vm3974, %v3976, %v3972
        %v3978 = vmul.f32 1.0, %v3977
        %v3979 = vrcp.pop %v3639
        %v3980 = vmul.f32 %v3639, %v3979
        %v3981 = vsub.f32 1.0, %v3980
        %v3982 = vmul.f32 %v3979, %v3981
        %v3983 = vadd.f32 %v3979, %v3982
        %vm3984 = vweird.f32 %v3639
        %vm3985 = vweird.f32 %v3979
        %vm3986 = vmor %vm3984, %vm3985
        %v3987 = vsel %vm3986, %v3979, %v3983
        %v3988 = vand.u32 2147483647, %v3639
        %vm3989 = vcmp.eq.f32.partialorder %v3988, 8.507059e+37
        %v3990 = vand.u32 %v3639, 2147483648
        %v3991 = vor.u32 1.1754944e-38, %v3990
        %v3992 = vsel %vm3989, %v3991, %v3987
        %v3993 = vmul.f32 1.0, %v3992
        %v3994 = vrcp.pop %v3640
        %v3995 = vmul.f32 %v3640, %v3994
        %v3996 = vsub.f32 1.0, %v3995
        %v3997 = vmul.f32 %v3994, %v3996
        %v3998 = vadd.f32 %v3994, %v3997
        %vm3999 = vweird.f32 %v3640
        %vm4000 = vweird.f32 %v3994
        %vm4001 = vmor %vm3999, %vm4000
        %v4002 = vsel %vm4001, %v3994, %v3998
        %v4003 = vand.u32 2147483647, %v3640
        %vm4004 = vcmp.eq.f32.partialorder %v4003, 8.507059e+37
        %v4005 = vand.u32 %v3640, 2147483648
        %v4006 = vor.u32 1.1754944e-38, %v4005
        %v4007 = vsel %vm4004, %v4006, %v4002
        %v4008 = vmul.f32 1.0, %v4007
        %v4009 = vrcp.pop %v3641
        %v4010 = vmul.f32 %v3641, %v4009
        %v4011 = vsub.f32 1.0, %v4010
        %v4012 = vmul.f32 %v4009, %v4011
        %v4013 = vadd.f32 %v4009, %v4012
        %vm4014 = vweird.f32 %v3641
        %vm4015 = vweird.f32 %v4009
        %vm4016 = vmor %vm4014, %vm4015
        %v4017 = vsel %vm4016, %v4009, %v4013
        %v4018 = vand.u32 2147483647, %v3641
        %vm4019 = vcmp.eq.f32.partialorder %v4018, 8.507059e+37
        %v4020 = vand.u32 %v3641, 2147483648
        %v4021 = vor.u32 1.1754944e-38, %v4020
        %v4022 = vsel %vm4019, %v4021, %v4017
        %v4023 = vmul.f32 1.0, %v4022
        %v4024 = vrcp.pop %v3642
        %v4025 = vmul.f32 %v3642, %v4024
        %v4026 = vsub.f32 1.0, %v4025
        %v4027 = vmul.f32 %v4024, %v4026
        %v4028 = vadd.f32 %v4024, %v4027
        %vm4029 = vweird.f32 %v3642
        %vm4030 = vweird.f32 %v4024
        %vm4031 = vmor %vm4029, %vm4030
        %v4032 = vsel %vm4031, %v4024, %v4028
        %v4033 = vand.u32 2147483647, %v3642
        %vm4034 = vcmp.eq.f32.partialorder %v4033, 8.507059e+37
        %v4035 = vand.u32 %v3642, 2147483648
        %v4036 = vor.u32 1.1754944e-38, %v4035
        %v4037 = vsel %vm4034, %v4036, %v4032
        %v4038 = vmul.f32 1.0, %v4037
        %v4039 = vrcp.pop %v3643
        %v4040 = vmul.f32 %v3643, %v4039
        %v4041 = vsub.f32 1.0, %v4040
        %v4042 = vmul.f32 %v4039, %v4041
        %v4043 = vadd.f32 %v4039, %v4042
        %vm4044 = vweird.f32 %v3643
        %vm4045 = vweird.f32 %v4039
        %vm4046 = vmor %vm4044, %vm4045
        %v4047 = vsel %vm4046, %v4039, %v4043
        %v4048 = vand.u32 2147483647, %v3643
        %vm4049 = vcmp.eq.f32.partialorder %v4048, 8.507059e+37
        %v4050 = vand.u32 %v3643, 2147483648
        %v4051 = vor.u32 1.1754944e-38, %v4050
        %v4052 = vsel %vm4049, %v4051, %v4047
        %v4053 = vmul.f32 1.0, %v4052
        %v4054 = vrcp.pop %v3644
        %v4055 = vmul.f32 %v3644, %v4054
        %v4056 = vsub.f32 1.0, %v4055
        %v4057 = vmul.f32 %v4054, %v4056
        %v4058 = vadd.f32 %v4054, %v4057
        %vm4059 = vweird.f32 %v3644
        %vm4060 = vweird.f32 %v4054
        %vm4061 = vmor %vm4059, %vm4060
        %v4062 = vsel %vm4061, %v4054, %v4058
        %v4063 = vand.u32 2147483647, %v3644
        %vm4064 = vcmp.eq.f32.partialorder %v4063, 8.507059e+37
        %v4065 = vand.u32 %v3644, 2147483648
        %v4066 = vor.u32 1.1754944e-38, %v4065
        %v4067 = vsel %vm4064, %v4066, %v4062
        %v4068 = vmul.f32 1.0, %v4067
        %v4069 = vrcp.pop %v3645
        %v4070 = vmul.f32 %v3645, %v4069
        %v4071 = vsub.f32 1.0, %v4070
        %v4072 = vmul.f32 %v4069, %v4071
        %v4073 = vadd.f32 %v4069, %v4072
        %vm4074 = vweird.f32 %v3645
        %vm4075 = vweird.f32 %v4069
        %vm4076 = vmor %vm4074, %vm4075
        %v4077 = vsel %vm4076, %v4069, %v4073
        %v4078 = vand.u32 2147483647, %v3645
        %vm4079 = vcmp.eq.f32.partialorder %v4078, 8.507059e+37
        %v4080 = vand.u32 %v3645, 2147483648
        %v4081 = vor.u32 1.1754944e-38, %v4080
        %v4082 = vsel %vm4079, %v4081, %v4077
        %v4083 = vmul.f32 1.0, %v4082
        %v4084 = vrcp.pop %v3646
        %v4085 = vmul.f32 %v3646, %v4084
        %v4086 = vsub.f32 1.0, %v4085
        %v4087 = vmul.f32 %v4084, %v4086
        %v4088 = vadd.f32 %v4084, %v4087
        %vm4089 = vweird.f32 %v3646
        %vm4090 = vweird.f32 %v4084
        %vm4091 = vmor %vm4089, %vm4090
        %v4092 = vsel %vm4091, %v4084, %v4088
        %v4093 = vand.u32 2147483647, %v3646
        %vm4094 = vcmp.eq.f32.partialorder %v4093, 8.507059e+37
        %v4095 = vand.u32 %v3646, 2147483648
        %v4096 = vor.u32 1.1754944e-38, %v4095
        %v4097 = vsel %vm4094, %v4096, %v4092
        %v4098 = vmul.f32 1.0, %v4097
        %v4099 = vrcp.pop %v3647
        %v4100 = vmul.f32 %v3647, %v4099
        %v4101 = vsub.f32 1.0, %v4100
        %v4102 = vmul.f32 %v4099, %v4101
        %v4103 = vadd.f32 %v4099, %v4102
        %vm4104 = vweird.f32 %v3647
        %vm4105 = vweird.f32 %v4099
        %vm4106 = vmor %vm4104, %vm4105
        %v4107 = vsel %vm4106, %v4099, %v4103
        %v4108 = vand.u32 2147483647, %v3647
        %vm4109 = vcmp.eq.f32.partialorder %v4108, 8.507059e+37
        %v4110 = vand.u32 %v3647, 2147483648
        %v4111 = vor.u32 1.1754944e-38, %v4110
        %v4112 = vsel %vm4109, %v4111, %v4107
        %v4113 = vmul.f32 1.0, %v4112
        %v4114 = vrcp.pop %v3648
        %v4115 = vmul.f32 %v3648, %v4114
        %v4116 = vsub.f32 1.0, %v4115
        %v4117 = vmul.f32 %v4114, %v4116
        %v4118 = vadd.f32 %v4114, %v4117
        %vm4119 = vweird.f32 %v3648
        %vm4120 = vweird.f32 %v4114
        %vm4121 = vmor %vm4119, %vm4120
        %v4122 = vsel %vm4121, %v4114, %v4118
        %v4123 = vand.u32 2147483647, %v3648
        %vm4124 = vcmp.eq.f32.partialorder %v4123, 8.507059e+37
        %v4125 = vand.u32 %v3648, 2147483648
        %v4126 = vor.u32 1.1754944e-38, %v4125
        %v4127 = vsel %vm4124, %v4126, %v4122
        %v4128 = vmul.f32 1.0, %v4127
        %v4129 = vmul.f32 %v3489, %v3663
        %v4130 = vmul.f32 %v3490, %v3678
        %v4131 = vmul.f32 %v3491, %v3693
        %v4132 = vmul.f32 %v3492, %v3708
        %v4133 = vmul.f32 %v3493, %v3723
        %v4134 = vmul.f32 %v3494, %v3738
        %v4135 = vmul.f32 %v3495, %v3753
        %v4136 = vmul.f32 %v3496, %v3768
        %v4137 = vmul.f32 %v3497, %v3783
        %v4138 = vmul.f32 %v3498, %v3798
        %v4139 = vmul.f32 %v3499, %v3813
        %v4140 = vmul.f32 %v3500, %v3828
        %v4141 = vmul.f32 %v3501, %v3843
        %v4142 = vmul.f32 %v3502, %v3858
        %v4143 = vmul.f32 %v3503, %v3873
        %v4144 = vmul.f32 %v3504, %v3888
        %v4145 = vmul.f32 %v3505, %v3903
        %v4146 = vmul.f32 %v3506, %v3918
        %v4147 = vmul.f32 %v3507, %v3933
        %v4148 = vmul.f32 %v3508, %v3948
        %v4149 = vmul.f32 %v3509, %v3963
        %v4150 = vmul.f32 %v3510, %v3978
        %v4151 = vmul.f32 %v3511, %v3993
        %v4152 = vmul.f32 %v3512, %v4008
        %v4153 = vmul.f32 %v3513, %v4023
        %v4154 = vmul.f32 %v3514, %v4038
        %v4155 = vmul.f32 %v3515, %v4053
        %v4156 = vmul.f32 %v3516, %v4068
        %v4157 = vmul.f32 %v3517, %v4083
        %v4158 = vmul.f32 %v3518, %v4098
        %v4159 = vmul.f32 %v3519, %v4113
        %v4160 = vmul.f32 %v3520, %v4128
        %v4161 = vld [vmem:[%s10] sm:$0x3]
        %v4162 = vpack.c.bf16 %v4131, %v4129
        %v4163 = vpack.c.bf16 %v4132, %v4130
        %v4164 = vpack.c.bf16 %v4135, %v4133
        %v4165 = vpack.c.bf16 %v4136, %v4134
        %v4166 = vpack.c.bf16 %v4139, %v4137
        %v4167 = vpack.c.bf16 %v4140, %v4138
        %v4168 = vpack.c.bf16 %v4143, %v4141
        %v4169 = vpack.c.bf16 %v4144, %v4142
        %v4170 = vpack.c.bf16 %v4147, %v4145
        %v4171 = vpack.c.bf16 %v4148, %v4146
        %v4172 = vpack.c.bf16 %v4151, %v4149
        %v4173 = vpack.c.bf16 %v4152, %v4150
        %v4174 = vpack.c.bf16 %v4155, %v4153
        %v4175 = vpack.c.bf16 %v4156, %v4154
        %v4176 = vpack.c.bf16 %v4159, %v4157
        %v4177 = vpack.c.bf16 %v4160, %v4158
        %s4178 = sld [smem:[#allocation5]]
        %v4179 = vstv %s4178
        %4181 = vst [vmem:[#allocation1] ss:$9 sm:$0xff] %v4161
        %v4182 = vld [vmem:[#allocation1] sm:$0xff]
        %v4183 = vld [vmem:[#allocation1 + $0x9] sm:$0xff]
        %4186 = vmatpush.bf16.xpose.msra.mxu0 %v4176
        %4187 = vmatpush.bf16.xpose.msra.mxu0 %v4174
        %4188 = vmatpush.bf16.xpose.msra.mxu0 %v4172
        %4189 = vmatpush.bf16.xpose.msra.mxu0 %v4170
        %4190 = vmatpush.bf16.xpose.msra.mxu0 %v4168
        %4191 = vmatpush.bf16.xpose.msra.mxu0 %v4166
        %4192 = vmatpush.bf16.xpose.msra.mxu0 %v4164
        %4193 = vmatpush.bf16.xpose.msra.mxu0 %v4162
        %4194 = vmatmul.bf16.gmra.mxu0 %v4182
        %v4195 = vpop.f32.mrf.mxu0
        %v4196 = vadd.f32 %v4179, %v4195
        %v4197 = vpop.f32.mrf.mxu0
        %4198 = vdwg.mxu0
        %4199 = vmatpush.bf16.xpose.msra.mxu0 %v4177
        %4200 = vmatpush.bf16.xpose.msra.mxu0 %v4175
        %4201 = vmatpush.bf16.xpose.msra.mxu0 %v4173
        %4202 = vmatpush.bf16.xpose.msra.mxu0 %v4171
        %4203 = vmatpush.bf16.xpose.msra.mxu0 %v4169
        %4204 = vmatpush.bf16.xpose.msra.mxu0 %v4167
        %4205 = vmatpush.bf16.xpose.msra.mxu0 %v4165
        %4206 = vmatpush.bf16.xpose.msra.mxu0 %v4163
        %4207 = vmatmul.bf16.gmra.mxu0 %v4183
        %v4208 = vpop.f32.mrf.mxu0
        %v4209 = vadd.f32 %v4196, %v4208
        %v4210 = vpop.f32.mrf.mxu0
        %4211 = vdwg.mxu0
        %v4212 = vld [vmem:[#allocation2] sm:$0x1]
        %vm4213 = vcmask 1040384
        %v4214 = vsel %vm4213, %v4209, -inf
        %4215 = vmax.xlane.f32.xlu0 %v4214
        %v4216 = vpop.xlane.xlu0 %4215
        %v4217 = vmax.f32 %v4212, %v4216
        %v4218 = vsub.f32 %v4212, %v4217
        %v4219 = vmul.f32 %v4218, 1.442695
        %v4220 = vpow.pop %v4219
        %4222 = vset.pattern.permute.xlu0 0
        %4223 = vperm.xlu0 %4222, %v4217
        %v4224 = vpop.permute.xlu0 %4223
        %v4226 = vperm.slane %v4224, 0
        %v4227 = vsub.f32 %v4209, %v4226
        %v4228 = vmul.f32 %v4227, 1.442695
        %v4229 = vpow.pop %v4228
        %v4230 = vld [vmem:[#allocation3] sm:$0x1]
        %v4231 = vmul.f32 %v4220, %v4230
        %v4232 = vsel %vm4213, %v4229, 0.0
        %4233 = vadd.xlane.f32.xlu0 %v4232
        %v4234 = vpop.xlane.xlu0 %4233
        %v4235 = vadd.f32 %v4231, %v4234
        %vm4236 = vcmask 0
        %4237 = vst.msk [vmem:[#allocation3] sm:$0x1] %vm4236, %v4235
        %v4238 = vld [vmem:[#allocation4] sm:$0x3]
        %4240 = vset.pattern.permute.xlu0 0
        %4241 = vperm.xlu0 %4240, %v4220
        %v4242 = vpop.permute.xlu0 %4241
        %v4244 = vperm.slane %v4242, 0
        %v4245 = vmul.f32 %v4244, %v4238
        %4246 = vmatpush.msra.mxu0 %v2587
        %4247 = vmatpush.msra.mxu0 %v2585
        %4248 = vmatpush.msra.mxu0 %v2582
        %4249 = vmatpush.msra.mxu0 %v2580
        %4250 = vmatpush.msra.mxu0 %v2577
        %4251 = vmatpush.msra.mxu0 %v2575
        %4252 = vmatpush.msra.mxu0 %v2572
        %4253 = vmatpush.msra.mxu0 %v2570
        %4254 = vmatpush.msra.mxu0 %v2567
        %4255 = vmatpush.msra.mxu0 %v2565
        %4256 = vmatpush.msra.mxu0 %v2562
        %4257 = vmatpush.msra.mxu0 %v2560
        %4258 = vmatpush.msra.mxu0 %v2557
        %4259 = vmatpush.msra.mxu0 %v2555
        %4260 = vmatpush.msra.mxu0 %v2552
        %4261 = vmatpush.msra.mxu0 %v2550
        %4262 = vmatmul.f32.gmra.mxu0 %v4229
        %v4263 = vpop.f32.mrf.mxu0
        %v4264 = vadd.f32 0.0, %v4263
        %4265 = vdwg.mxu0
        %4266 = vmatpush.msra.mxu0 %v2685
        %4267 = vmatpush.msra.mxu0 %v2683
        %4268 = vmatpush.msra.mxu0 %v2680
        %4269 = vmatpush.msra.mxu0 %v2678
        %4270 = vmatpush.msra.mxu0 %v2675
        %4271 = vmatpush.msra.mxu0 %v2673
        %4272 = vmatpush.msra.mxu0 %v2670
        %4273 = vmatpush.msra.mxu0 %v2668
        %4274 = vmatpush.msra.mxu0 %v2665
        %4275 = vmatpush.msra.mxu0 %v2663
        %4276 = vmatpush.msra.mxu0 %v2660
        %4277 = vmatpush.msra.mxu0 %v2658
        %4278 = vmatpush.msra.mxu0 %v2655
        %4279 = vmatpush.msra.mxu0 %v2653
        %4280 = vmatpush.msra.mxu0 %v2650
        %4281 = vmatpush.msra.mxu0 %v2648
        %4282 = vmatmul.f32.gmra.mxu0 %v4229
        %v4283 = vpop.f32.mrf.mxu0
        %v4284 = vadd.f32 0.0, %v4283
        %4285 = vdwg.mxu0
        %v4288 = vrot.slane %v4284, 7
        %v4289 = vsel %vm4213, %v4264, %v4288
        %v4291 = vadd.f32 %v4245, %v4289
        %v4292 = vlaneseq
        %vm4293 = vcmp.ge.s32.totalorder %v4292, 0
        %vm4294 = vcmp.lt.s32.totalorder %v4292, 256
        %vm4295 = vmand %vm4293, %vm4294
        %4296 = vst.msk [vmem:[#allocation4] sm:$0x3] %vm4295, %v4291
        %4297 = vst.msk [vmem:[#allocation2] sm:$0x1] %vm4236, %v4217
        // Predicated region
        $region77: #{msad_forward.5} parent=67 // pred_check
          %p4298 = pneg %p583
        $region78: #{msad_forward.5} parent=67 // pred_check_branch
          %4300 = sbr.rel (%p4298) target = $region80
        $region79: #{msad_forward.5} parent=67 // pred_region
          %v4301 = vld [vmem:[#allocation4] sm:$0x3]
          %v4302 = vld [vmem:[#allocation3] sm:$0x1]
          %4304 = vset.pattern.permute.xlu0 0
          %4305 = vperm.xlu0 %4304, %v4302
          %v4306 = vpop.permute.xlu0 %4305
          %v4308 = vperm.slane %v4306, 0
          %v4309 = vrcp.pop %v4308
          %v4310 = vmul.f32 %v4308, %v4309
          %v4311 = vsub.f32 1.0, %v4310
          %v4312 = vmul.f32 %v4309, %v4311
          %v4313 = vadd.f32 %v4309, %v4312
          %vm4314 = vweird.f32 %v4308
          %vm4315 = vweird.f32 %v4309
          %vm4316 = vmor %vm4314, %vm4315
          %v4317 = vsel %vm4316, %v4309, %v4313
          %v4318 = vand.u32 2147483647, %v4308
          %vm4319 = vcmp.eq.f32.partialorder %v4318, 8.507059e+37
          %v4320 = vand.u32 %v4308, 2147483648
          %v4321 = vor.u32 1.1754944e-38, %v4320
          %v4322 = vsel %vm4319, %v4321, %v4317
          %v4323 = vmul.f32 %v4301, %v4322
          %4324 = vst.msk [vmem:[%s582] sm:$0x3] %vm4295, %v4323
        $region80: #{msad_forward.5} parent=67 // pred_fallthru
          _
        %p4325 = scmp.lt.s32.totalorder %s31, 2
        %s4326 = scalar_select %p4325, %s31, 2
        %s4327 = smul.addr %s4326, 2
        %s4328 = scalar_lea.vmem %s12, %s4327
        // Predicated region
        $region81: #{msad_forward.5} parent=67 // pred_check
          %p4329 = pneg %p349
        $region82: #{msad_forward.5} parent=67 // pred_check_branch
          %4331 = sbr.rel (%p4329) target = $region84
        $region83: #{msad_forward.5} parent=67 // pred_region
          _
        $region84: #{msad_forward.5} parent=67 // pred_fallthru
          _
      $region68: #{msad_forward.5} parent=5 // pred_fallthru
        _
      %p4332 = scmp.le.s32.totalorder 2, %s22
      // Predicated region
      $region85: #{msad_forward.5} parent=5 // pred_check
        %p4333 = pneg %p4332
      $region86: #{msad_forward.5} parent=5 // pred_check_branch
        %4335 = sbr.rel (%p4333) target = $region88
      $region87: #{msad_forward.5} parent=5 // pred_region
        %s4336 = ssub.s32 %s22, 2
        // Predicated region
        $region89: #{msad_forward.5} parent=87 // pred_check
          %p4337 = pneg %p355
        $region90: #{msad_forward.5} parent=87 // pred_check_branch
          %4339 = sbr.rel (%p4337) target = $region92
        $region91: #{msad_forward.5} parent=87 // pred_region
          %p4340 = scmp.lt.s32.totalorder %s33, 2
          %s4341 = scalar_select %p4340, %s33, 2
          %s4342 = smul.addr %s4341, 2
          %s4343 = scalar_lea.vmem %s12, %s4342
        $region92: #{msad_forward.5} parent=87 // pred_fallthru
          _
      $region88: #{msad_forward.5} parent=5 // pred_fallthru
        _
    $region6: #{msad_forward.5} parent=1 // loop_footer
      %s26 = sadd.s32 1, %s22
    $region7: #{msad_forward.5} parent=1 // loop_footer_branch
      %21 = sbr.rel target = $region3
    $region8: #{msad_forward.5} parent=1 // loop_exit
      _
    %4344 = vsyncpa [#allocation7], 1
    %s4345 = scalar_lea.sflag [#allocation7], 1
    %4346 = vsyncpa %s4345, 1

</llo_original>
